<compile_context>
chip_gen: v6e
topology: v6e:2x2x1
jax: 0.10.0
libtpu: 0.0.40
codegen_flags: <defaults>
</compile_context>

<pallas_src>
import jax
import jax.numpy as jnp
from jax import lax
from jax.experimental import pallas as pl
from jax.experimental.pallas import tpu as pltpu

N = 2            # batch
HIDDEN = 1024
OUT_F = 1
TH = 512         # column tile for Linear(3872->1024) == K tile for Linear(1024->1024)
H_IN = 28        # 28 -> conv3x3 -> 26 -> pool2x2 -> 13 -> conv3x3 -> 11
H1, P1, H2 = 26, 13, 11
C1, C2 = 64, 32
FLAT = C2 * H2 * H2      # 3872


# ---------------- Kernel A: Conv2d(1->64, 3x3) fused with MaxPool2d(2,2) -----
# Patches are pre-gathered (glue) per pooling phase (rp, cp) in {0,1}^2 so the
# pool becomes an in-kernel max over the matmul results of the four phases.
# (Kept as 4 small dots: merging them into one dot needs a sublane-dim reshape
# of a non-8-multiple row count; the conv path is <1% of bytes/flops anyway.)
def conv1_pool_kernel(p_ref, w_ref, b_ref, o_ref):
    acc = jnp.dot(p_ref[0], w_ref[...], preferred_element_type=jnp.float32)
    for ph in range(1, 4):
        y = jnp.dot(p_ref[ph], w_ref[...], preferred_element_type=jnp.float32)
        acc = jnp.maximum(acc, y)          # 2x2 max-pool reduction
    o_ref[...] = acc + b_ref[...]          # bias commutes with the max


def conv1_pool(patches, w1mat, b1m):
    n_rows = patches.shape[1]
    return pl.pallas_call(
        conv1_pool_kernel,
        out_shape=jax.ShapeDtypeStruct((n_rows, C1), jnp.float32),
        grid=(1,),
        in_specs=[
            pl.BlockSpec((4, n_rows, 9), lambda i: (0, 0, 0)),
            pl.BlockSpec((9, C1), lambda i: (0, 0)),
            pl.BlockSpec((1, C1), lambda i: (0, 0)),
        ],
        out_specs=pl.BlockSpec((n_rows, C1), lambda i: (0, 0)),
    )(patches, w1mat, b1m)


# ---------------- Kernel B: Conv2d(64->32, 3x3) as im2col matmul -------------
def conv2_kernel(p_ref, w_ref, b_ref, o_ref):
    o_ref[...] = (jnp.dot(p_ref[...], w_ref[...],
                          preferred_element_type=jnp.float32) + b_ref[...])


def conv2(patches, w2mat, b2m):
    n_rows, k = patches.shape
    return pl.pallas_call(
        conv2_kernel,
        out_shape=jax.ShapeDtypeStruct((n_rows, C2), jnp.float32),
        grid=(1,),
        in_specs=[
            pl.BlockSpec((n_rows, k), lambda i: (0, 0)),
            pl.BlockSpec((k, C2), lambda i: (0, 0)),
            pl.BlockSpec((1, C2), lambda i: (0, 0)),
        ],
        out_specs=pl.BlockSpec((n_rows, C2), lambda i: (0, 0)),
    )(patches, w2mat, b2m)


# -------- Kernel C: Linear(3872->1024) -> Linear(1024->1024) -> Linear(1024->1)
# Dropout() layers are identity at inference time.
# Grid axis j tiles BOTH the output columns of w3 AND the contraction (K) dim
# of w4: per step  h_blk = (x @ deq(w3[:, blk])) * s3[blk] + b3[blk]
#                  acc  += h_blk @ deq(w4[blk, :])
# so w3 and w4 both stream block-by-block as int8 (half the bf16 bytes).  The
# per-output-column w4 scale factors out of the K-sum, so it (plus b4 and the
# tiny 1024->1 matmul) is applied in the finalize step of the last iteration.
def mlp_kernel(x_ref, w3_ref, w3s_ref, b3_ref, w4_ref, w4s_ref, b4_ref,
               w5_ref, b5_ref, o_ref, acc_ref):
    j = pl.program_id(0)

    @pl.when(j == 0)
    def _():
        acc_ref[...] = jnp.zeros_like(acc_ref)

    # int8 -> bf16 widen is exact (|q| <= 127); scales applied post-dot in f32.
    w3_bf = w3_ref[...].astype(jnp.bfloat16)
    h_raw = jnp.dot(x_ref[...], w3_bf, preferred_element_type=jnp.float32)
    h_blk = h_raw * w3s_ref[...] + b3_ref[...]
    # TODO(synk): training-mode Dropout (p=0.5) with pltpu PRNG not implemented;
    # forward here matches eval/inference semantics (identity).
    w4_bf = w4_ref[...].astype(jnp.bfloat16)
    acc_ref[...] += jnp.dot(h_blk.astype(jnp.bfloat16), w4_bf,
                            preferred_element_type=jnp.float32)

    @pl.when(j == pl.num_programs(0) - 1)
    def _():
        h2 = acc_ref[...] * w4s_ref[...] + b4_ref[...]
        o_ref[...] = (jnp.dot(h2, w5_ref[...],
                              preferred_element_type=jnp.float32) + b5_ref[...])


def mlp(x_bf, w3_i8, w3s, b3m, w4_i8, w4s, b4m, w5t, b5m):
    n = x_bf.shape[0]
    return pl.pallas_call(
        mlp_kernel,
        out_shape=jax.ShapeDtypeStruct((n, OUT_F), jnp.float32),
        grid=(HIDDEN // TH,),
        in_specs=[
            pl.BlockSpec((n, FLAT), lambda j: (0, 0)),          # activations (bf16)
            pl.BlockSpec((FLAT, TH), lambda j: (0, j)),          # w3 column tile (int8)
            pl.BlockSpec((1, TH), lambda j: (0, j)),             # w3 per-col scale
            pl.BlockSpec((1, TH), lambda j: (0, j)),             # b3 tile
            pl.BlockSpec((TH, HIDDEN), lambda j: (j, 0)),        # w4 K tile (int8)
            pl.BlockSpec((1, HIDDEN), lambda j: (0, 0)),         # w4 per-col scale
            pl.BlockSpec((1, HIDDEN), lambda j: (0, 0)),         # b4
            pl.BlockSpec((HIDDEN, OUT_F), lambda j: (0, 0)),     # w5 (tiny, f32)
            pl.BlockSpec((1, OUT_F), lambda j: (0, 0)),          # b5
        ],
        out_specs=pl.BlockSpec((n, OUT_F), lambda j: (0, 0)),
        scratch_shapes=[pltpu.VMEM((n, HIDDEN), jnp.float32)],   # h2 accumulator
        compiler_params=pltpu.CompilerParams(
            dimension_semantics=("arbitrary",),                  # reduction axis
            vmem_limit_bytes=24 * 1024 * 1024),
    )(x_bf, w3_i8, w3s, b3m, w4_i8, w4s, b4m, w5t, b5m)


# ---------------- glue: patch extraction (pure data rearrangement) -----------
def conv1_pool_patches(x2d):
    """x2d: (N, 28, 28) -> (4, N*13*13, 9); [phase=(rp,cp), n*169+u*13+v, di*3+dj]."""
    phases = []
    for rp in (0, 1):
        for cp in (0, 1):
            taps = []
            for di in range(3):
                for dj in range(3):
                    sl = x2d[:, rp + di:rp + di + 25:2, cp + dj:cp + dj + 25:2]
                    taps.append(sl)                      # (N, 13, 13)
            phases.append(jnp.stack(taps, axis=-1).reshape(-1, 9))
    return jnp.stack(phases, axis=0)


def conv2_patches(pooled4):
    """pooled4: (N, 13, 13, 64) -> (N*11*11, 9*64)."""
    taps = [pooled4[:, di:di + H2, dj:dj + H2, :]
            for di in range(3) for dj in range(3)]
    p = jnp.stack(taps, axis=3)                          # (N, 11, 11, 9, 64)
    return p.reshape(-1, 9 * C1)


# ---------------- parameters (deterministic, PyTorch-layout shapes) ----------
def init_params(key):
    ks = jax.random.split(key, 10)
    return dict(
        w1=jax.random.normal(ks[0], (C1, 1, 3, 3), jnp.float32) * 0.1,
        b1=jax.random.normal(ks[1], (C1,), jnp.float32) * 0.1,
        w2=jax.random.normal(ks[2], (C2, C1, 3, 3), jnp.float32) * 0.05,
        b2=jax.random.normal(ks[3], (C2,), jnp.float32) * 0.05,
        w3=jax.random.normal(ks[4], (HIDDEN, FLAT), jnp.float32) * 0.02,
        b3=jax.random.normal(ks[5], (HIDDEN,), jnp.float32) * 0.02,
        w4=jax.random.normal(ks[6], (HIDDEN, HIDDEN), jnp.float32) * 0.02,
        b4=jax.random.normal(ks[7], (HIDDEN,), jnp.float32) * 0.02,
        w5=jax.random.normal(ks[8], (OUT_F, HIDDEN), jnp.float32) * 0.02,
        b5=jax.random.normal(ks[9], (OUT_F,), jnp.float32) * 0.02,
    )


def _quantize_per_col(w):
    """Symmetric int8 quantization with a per-output-column f32 scale."""
    s = jnp.max(jnp.abs(w), axis=0) / 127.0
    s = jnp.maximum(s, 1e-12)
    q = jnp.clip(jnp.round(w / s), -127.0, 127.0).astype(jnp.int8)
    return q, s.astype(jnp.float32).reshape(1, -1)


def prepare_params(p):
    """One-time weight re-layout / quantization (hoisted out of forward()).

    - conv weights flattened into im2col matmul layout (f32, tiny).
    - w3 input axis permuted from PyTorch CHW flatten order to the HWC order
      produced by the channels-last conv path; w3/w4 quantized to int8 with
      per-output-column f32 scales so the HBM-bound weight stream is ~5 MB
      per forward.  Accumulation stays f32 in-kernel.
    """
    w3_hwc = (p["w3"].T                                  # (3872, 1024), rows CHW
              .reshape(C2, H2, H2, HIDDEN)
              .transpose(1, 2, 0, 3)                     # -> HWC row order
              .reshape(FLAT, HIDDEN))
    w3_i8, w3s = _quantize_per_col(w3_hwc)               # (3872, 1024) i8, (1,1024) f32
    w4_i8, w4s = _quantize_per_col(p["w4"].T)            # (1024, 1024) i8, (1,1024) f32
    return dict(
        w1mat=p["w1"].reshape(C1, 9).T,                              # (9, 64)
        b1m=p["b1"].reshape(1, C1),
        w2mat=jnp.transpose(p["w2"], (2, 3, 1, 0)).reshape(9 * C1, C2),
        b2m=p["b2"].reshape(1, C2),
        w3_i8=w3_i8, w3s=w3s,
        b3m=p["b3"].reshape(1, HIDDEN),
        w4_i8=w4_i8, w4s=w4s,
        b4m=p["b4"].reshape(1, HIDDEN),
        w5t=p["w5"].T,                                               # (1024, 1) f32
        b5m=p["b5"].reshape(1, OUT_F),
    )


def forward(x, kp):
    """x: (N, 1, 28, 28) NCHW, kp: prepare_params(...) output -> (N, 1)."""
    x2d = x[:, 0]                                        # (N, 28, 28)

    # conv1 + maxpool (Pallas kernel A)
    patches1 = conv1_pool_patches(x2d)                   # (4, N*169, 9)
    pooled = conv1_pool(patches1, kp["w1mat"], kp["b1m"])
    pooled4 = pooled.reshape(N, P1, P1, C1)              # NHWC

    # conv2 (Pallas kernel B)
    patches2 = conv2_patches(pooled4)                    # (N*121, 576)
    c2 = conv2(patches2, kp["w2mat"], kp["b2m"])         # (N*121, 32) NHWC rows

    # flatten (contiguous reshape, feature = i*352 + j*32 + c matches w3 rows);
    # cast to bf16 ONCE here so the MLP kernel has no per-step activation cast.
    flat = c2.reshape(N, FLAT).astype(jnp.bfloat16)

    # MLP: Linear -> Dropout(id) -> Linear -> Dropout(id) -> Linear (kernel C)
    return mlp(flat, kp["w3_i8"], kp["w3s"], kp["b3m"],
               kp["w4_i8"], kp["w4s"], kp["b4m"], kp["w5t"], kp["b5m"])


# ---------------- pure-JAX reference (NCHW, mirrors the PyTorch module) ------
def reference(x, p):
    dn = ("NCHW", "OIHW", "NCHW")
    o1 = lax.conv_general_dilated(x, p["w1"], (1, 1), "VALID",
                                  dimension_numbers=dn) + p["b1"].reshape(1, -1, 1, 1)
    pooled = lax.reduce_window(o1, jnp.array(-jnp.inf, jnp.float32), lax.max,
                               (1, 1, 2, 2), (1, 1, 2, 2), "VALID")
    o2 = lax.conv_general_dilated(pooled, p["w2"], (1, 1), "VALID",
                                  dimension_numbers=dn) + p["b2"].reshape(1, -1, 1, 1)
    flat = o2.reshape(x.shape[0], -1)                    # PyTorch Flatten: C,H,W order
    h = flat @ p["w3"].T + p["b3"]
    h = h @ p["w4"].T + p["b4"]
    return h @ p["w5"].T + p["b5"]


if __name__ == "__main__":
    key = jax.random.PRNGKey(0)
    kx, kparam = jax.random.split(key)
    x = jax.random.normal(kx, (N, 1, H_IN, H_IN), jnp.float32)
    raw_params = init_params(kparam)

    # one-time weight layout / int8 quantization (hoisted out of forward)
    kernel_params = jax.tree_util.tree_map(jax.block_until_ready,
                                           prepare_params(raw_params))

    fwd = jax.jit(forward)
    out = jax.block_until_ready(fwd(x, kernel_params))
    ref = jax.block_until_ready(reference(x, raw_params))

    assert out.shape == (N, OUT_F), out.shape
    assert jnp.all(jnp.isfinite(out))
    # bf16 activations + per-column int8 weights => ~1% relative error vs f32.
    assert jnp.allclose(out, ref, atol=5e-2, rtol=5e-2), (out, ref)
    print("KERNEL_OK")
</pallas_src>

<mosaic_0001>
module attributes {stable_mosaic.version = 11 : i64} {
  func.func @conv1_pool_kernel(%arg0: i32, %arg1: memref<4x338x9xf32, #tpu.memory_space<vmem>>, %arg2: memref<9x64xf32, #tpu.memory_space<vmem>>, %arg3: memref<1x64xf32, #tpu.memory_space<vmem>>, %arg4: memref<338x64xf32, #tpu.memory_space<vmem>>) attributes {dimension_semantics = [#tpu.dimension_semantics<arbitrary>], iteration_bounds = array<i64: 1>, scalar_prefetch = 0 : i64, scratch_operands = 0 : i64, tpu.core_type = #tpu.core_type<tc>, window_params = [{pipeline_mode = #tpu.pipeline_mode<synchronous>, transform_indices = @transform_0, window_bounds = array<i64: 4, 338, 9>}, {pipeline_mode = #tpu.pipeline_mode<synchronous>, transform_indices = @transform_1, window_bounds = array<i64: 9, 64>}, {pipeline_mode = #tpu.pipeline_mode<synchronous>, transform_indices = @transform_2, window_bounds = array<i64: 1, 64>}, {pipeline_mode = #tpu.pipeline_mode<synchronous>, transform_indices = @transform_3, window_bounds = array<i64: 338, 64>}]} {
    %c0 = arith.constant 0 : index
    %c0_0 = arith.constant 0 : index
    %c0_1 = arith.constant 0 : index
    %0 = vector.load %arg1[%c0, %c0_0, %c0_1] : memref<4x338x9xf32, #tpu.memory_space<vmem>>, vector<1x338x9xf32>
    %1 = vector.shape_cast %0 : vector<1x338x9xf32> to vector<338x9xf32>
    %c0_2 = arith.constant 0 : index
    %c0_3 = arith.constant 0 : index
    %2 = vector.load %arg2[%c0_2, %c0_3] : memref<9x64xf32, #tpu.memory_space<vmem>>, vector<9x64xf32>
    %cst = arith.constant dense<0.000000e+00> : vector<338x64xf32>
    %3 = tpu.matmul %1, %2, %cst {dimension_numbers = #tpu.dot_dimension_numbers<[1], [0], [0], [1], [0, 0, 1, 1], [], []>} : vector<338x9xf32>, vector<9x64xf32>, vector<338x64xf32> -> vector<338x64xf32>
    %c1 = arith.constant 1 : index
    %c0_4 = arith.constant 0 : index
    %c0_5 = arith.constant 0 : index
    %4 = vector.load %arg1[%c1, %c0_4, %c0_5] : memref<4x338x9xf32, #tpu.memory_space<vmem>>, vector<1x338x9xf32>
    %5 = vector.shape_cast %4 : vector<1x338x9xf32> to vector<338x9xf32>
    %c0_6 = arith.constant 0 : index
    %c0_7 = arith.constant 0 : index
    %6 = vector.load %arg2[%c0_6, %c0_7] : memref<9x64xf32, #tpu.memory_space<vmem>>, vector<9x64xf32>
    %cst_8 = arith.constant dense<0.000000e+00> : vector<338x64xf32>
    %7 = tpu.matmul %5, %6, %cst_8 {dimension_numbers = #tpu.dot_dimension_numbers<[1], [0], [0], [1], [0, 0, 1, 1], [], []>} : vector<338x9xf32>, vector<9x64xf32>, vector<338x64xf32> -> vector<338x64xf32>
    %8 = arith.maximumf %3, %7 : vector<338x64xf32>
    %c2 = arith.constant 2 : index
    %c0_9 = arith.constant 0 : index
    %c0_10 = arith.constant 0 : index
    %9 = vector.load %arg1[%c2, %c0_9, %c0_10] : memref<4x338x9xf32, #tpu.memory_space<vmem>>, vector<1x338x9xf32>
    %10 = vector.shape_cast %9 : vector<1x338x9xf32> to vector<338x9xf32>
    %c0_11 = arith.constant 0 : index
    %c0_12 = arith.constant 0 : index
    %11 = vector.load %arg2[%c0_11, %c0_12] : memref<9x64xf32, #tpu.memory_space<vmem>>, vector<9x64xf32>
    %cst_13 = arith.constant dense<0.000000e+00> : vector<338x64xf32>
    %12 = tpu.matmul %10, %11, %cst_13 {dimension_numbers = #tpu.dot_dimension_numbers<[1], [0], [0], [1], [0, 0, 1, 1], [], []>} : vector<338x9xf32>, vector<9x64xf32>, vector<338x64xf32> -> vector<338x64xf32>
    %13 = arith.maximumf %8, %12 : vector<338x64xf32>
    %c3 = arith.constant 3 : index
    %c0_14 = arith.constant 0 : index
    %c0_15 = arith.constant 0 : index
    %14 = vector.load %arg1[%c3, %c0_14, %c0_15] : memref<4x338x9xf32, #tpu.memory_space<vmem>>, vector<1x338x9xf32>
    %15 = vector.shape_cast %14 : vector<1x338x9xf32> to vector<338x9xf32>
    %c0_16 = arith.constant 0 : index
    %c0_17 = arith.constant 0 : index
    %16 = vector.load %arg2[%c0_16, %c0_17] : memref<9x64xf32, #tpu.memory_space<vmem>>, vector<9x64xf32>
    %cst_18 = arith.constant dense<0.000000e+00> : vector<338x64xf32>
    %17 = tpu.matmul %15, %16, %cst_18 {dimension_numbers = #tpu.dot_dimension_numbers<[1], [0], [0], [1], [0, 0, 1, 1], [], []>} : vector<338x9xf32>, vector<9x64xf32>, vector<338x64xf32> -> vector<338x64xf32>
    %18 = arith.maximumf %13, %17 : vector<338x64xf32>
    %c0_19 = arith.constant 0 : index
    %c0_20 = arith.constant 0 : index
    %19 = vector.load %arg3[%c0_19, %c0_20] : memref<1x64xf32, #tpu.memory_space<vmem>>, vector<1x64xf32>
    %20 = vector.broadcast %19 : vector<1x64xf32> to vector<338x64xf32>
    %21 = arith.addf %18, %20 : vector<338x64xf32>
    %c0_21 = arith.constant 0 : index
    %c0_22 = arith.constant 0 : index
    %22 = vector.load %arg4[%c0_21, %c0_22] : memref<338x64xf32, #tpu.memory_space<vmem>>, vector<338x64xf32>
    tpu.vector_store %arg4[%c0_21, %c0_22], %21 {strides = array<i32>} : memref<338x64xf32, #tpu.memory_space<vmem>>, vector<338x64xf32>,
    return
  }
  func.func @transform_0(%arg0: i32) -> (i32, i32, i32) {
    %c0_i32 = arith.constant 0 : i32
    %c0_i32_0 = arith.constant 0 : i32
    %c0_i32_1 = arith.constant 0 : i32
    %c0_i32_2 = arith.constant 0 : i32
    return %c0_i32, %c0_i32_0, %c0_i32_1 : i32, i32, i32
  }
  func.func @transform_1(%arg0: i32) -> (i32, i32) {
    %c0_i32 = arith.constant 0 : i32
    %c0_i32_0 = arith.constant 0 : i32
    %c0_i32_1 = arith.constant 0 : i32
    return %c0_i32, %c0_i32_0 : i32, i32
  }
  func.func @transform_2(%arg0: i32) -> (i32, i32) {
    %c0_i32 = arith.constant 0 : i32
    %c0_i32_0 = arith.constant 0 : i32
    %c0_i32_1 = arith.constant 0 : i32
    return %c0_i32, %c0_i32_0 : i32, i32
  }
  func.func @transform_3(%arg0: i32) -> (i32, i32) {
    %c0_i32 = arith.constant 0 : i32
    %c0_i32_0 = arith.constant 0 : i32
    %c0_i32_1 = arith.constant 0 : i32
    return %c0_i32, %c0_i32_0 : i32, i32
  }
}

module attributes {stable_mosaic.version = 11 : i64} {
  func.func @conv2_kernel(%arg0: i32, %arg1: memref<242x576xf32, #tpu.memory_space<vmem>>, %arg2: memref<576x32xf32, #tpu.memory_space<vmem>>, %arg3: memref<1x32xf32, #tpu.memory_space<vmem>>, %arg4: memref<242x32xf32, #tpu.memory_space<vmem>>) attributes {dimension_semantics = [#tpu.dimension_semantics<arbitrary>], iteration_bounds = array<i64: 1>, scalar_prefetch = 0 : i64, scratch_operands = 0 : i64, tpu.core_type = #tpu.core_type<tc>, window_params = [{pipeline_mode = #tpu.pipeline_mode<synchronous>, transform_indices = @transform_0, window_bounds = array<i64: 242, 576>}, {pipeline_mode = #tpu.pipeline_mode<synchronous>, transform_indices = @transform_1, window_bounds = array<i64: 576, 32>}, {pipeline_mode = #tpu.pipeline_mode<synchronous>, transform_indices = @transform_2, window_bounds = array<i64: 1, 32>}, {pipeline_mode = #tpu.pipeline_mode<synchronous>, transform_indices = @transform_3, window_bounds = array<i64: 242, 32>}]} {
    %c0 = arith.constant 0 : index
    %c0_0 = arith.constant 0 : index
    %0 = vector.load %arg1[%c0, %c0_0] : memref<242x576xf32, #tpu.memory_space<vmem>>, vector<242x576xf32>
    %c0_1 = arith.constant 0 : index
    %c0_2 = arith.constant 0 : index
    %1 = vector.load %arg2[%c0_1, %c0_2] : memref<576x32xf32, #tpu.memory_space<vmem>>, vector<576x32xf32>
    %cst = arith.constant dense<0.000000e+00> : vector<242x32xf32>
    %2 = tpu.matmul %0, %1, %cst {dimension_numbers = #tpu.dot_dimension_numbers<[1], [0], [0], [1], [0, 0, 1, 1], [], []>} : vector<242x576xf32>, vector<576x32xf32>, vector<242x32xf32> -> vector<242x32xf32>
    %c0_3 = arith.constant 0 : index
    %c0_4 = arith.constant 0 : index
    %3 = vector.load %arg3[%c0_3, %c0_4] : memref<1x32xf32, #tpu.memory_space<vmem>>, vector<1x32xf32>
    %4 = vector.broadcast %3 : vector<1x32xf32> to vector<242x32xf32>
    %5 = arith.addf %2, %4 : vector<242x32xf32>
    %c0_5 = arith.constant 0 : index
    %c0_6 = arith.constant 0 : index
    %6 = vector.load %arg4[%c0_5, %c0_6] : memref<242x32xf32, #tpu.memory_space<vmem>>, vector<242x32xf32>
    tpu.vector_store %arg4[%c0_5, %c0_6], %5 {strides = array<i32>} : memref<242x32xf32, #tpu.memory_space<vmem>>, vector<242x32xf32>,
    return
  }
  func.func @transform_0(%arg0: i32) -> (i32, i32) {
    %c0_i32 = arith.constant 0 : i32
    %c0_i32_0 = arith.constant 0 : i32
    %c0_i32_1 = arith.constant 0 : i32
    return %c0_i32, %c0_i32_0 : i32, i32
  }
  func.func @transform_1(%arg0: i32) -> (i32, i32) {
    %c0_i32 = arith.constant 0 : i32
    %c0_i32_0 = arith.constant 0 : i32
    %c0_i32_1 = arith.constant 0 : i32
    return %c0_i32, %c0_i32_0 : i32, i32
  }
  func.func @transform_2(%arg0: i32) -> (i32, i32) {
    %c0_i32 = arith.constant 0 : i32
    %c0_i32_0 = arith.constant 0 : i32
    %c0_i32_1 = arith.constant 0 : i32
    return %c0_i32, %c0_i32_0 : i32, i32
  }
  func.func @transform_3(%arg0: i32) -> (i32, i32) {
    %c0_i32 = arith.constant 0 : i32
    %c0_i32_0 = arith.constant 0 : i32
    %c0_i32_1 = arith.constant 0 : i32
    return %c0_i32, %c0_i32_0 : i32, i32
  }
}

module attributes {stable_mosaic.version = 11 : i64} {
  func.func @mlp_kernel(%arg0: i32, %arg1: memref<2x3872xbf16, #tpu.memory_space<vmem>>, %arg2: memref<3872x512xi8, #tpu.memory_space<vmem>>, %arg3: memref<1x512xf32, #tpu.memory_space<vmem>>, %arg4: memref<1x512xf32, #tpu.memory_space<vmem>>, %arg5: memref<512x1024xi8, #tpu.memory_space<vmem>>, %arg6: memref<1x1024xf32, #tpu.memory_space<vmem>>, %arg7: memref<1x1024xf32, #tpu.memory_space<vmem>>, %arg8: memref<1024x1xf32, #tpu.memory_space<vmem>>, %arg9: memref<1x1xf32, #tpu.memory_space<vmem>>, %arg10: memref<2x1xf32, #tpu.memory_space<vmem>>, %arg11: memref<2x1024xf32, #tpu.memory_space<vmem>>) attributes {dimension_semantics = [#tpu.dimension_semantics<arbitrary>], iteration_bounds = array<i64: 2>, scalar_prefetch = 0 : i64, scratch_operands = 1 : i64, tpu.core_type = #tpu.core_type<tc>, window_params = [{pipeline_mode = #tpu.pipeline_mode<synchronous>, transform_indices = @transform_0, window_bounds = array<i64: 2, 3872>}, {transform_indices = @transform_1, window_bounds = array<i64: 3872, 512>}, {transform_indices = @transform_2, window_bounds = array<i64: 1, 512>}, {transform_indices = @transform_3, window_bounds = array<i64: 1, 512>}, {transform_indices = @transform_4, window_bounds = array<i64: 512, 1024>}, {pipeline_mode = #tpu.pipeline_mode<synchronous>, transform_indices = @transform_5, window_bounds = array<i64: 1, 1024>}, {pipeline_mode = #tpu.pipeline_mode<synchronous>, transform_indices = @transform_6, window_bounds = array<i64: 1, 1024>}, {pipeline_mode = #tpu.pipeline_mode<synchronous>, transform_indices = @transform_7, window_bounds = array<i64: 1024, 1>}, {pipeline_mode = #tpu.pipeline_mode<synchronous>, transform_indices = @transform_8, window_bounds = array<i64: 1, 1>}, {pipeline_mode = #tpu.pipeline_mode<synchronous>, transform_indices = @transform_9, window_bounds = array<i64: 2, 1>}]} {
    %c0_i32 = arith.constant 0 : i32
    %0 = arith.cmpi eq, %arg0, %c0_i32 : i32
    %1 = arith.extui %0 : i1 to i32
    %c0_i32_0 = arith.constant 0 : i32
    %2 = arith.cmpi ne, %1, %c0_i32_0 : i32
    scf.if %2 {
      %cst_16 = arith.constant 0.000000e+00 : f32
      %23 = vector.broadcast %cst_16 : f32 to vector<2x1024xf32>
      %c0_17 = arith.constant 0 : index
      %c0_18 = arith.constant 0 : index
      %24 = vector.load %arg11[%c0_17, %c0_18] : memref<2x1024xf32, #tpu.memory_space<vmem>>, vector<2x1024xf32>
      tpu.vector_store %arg11[%c0_17, %c0_18], %23 {strides = array<i32>} : memref<2x1024xf32, #tpu.memory_space<vmem>>, vector<2x1024xf32>,
    } else {
    }
    %c0 = arith.constant 0 : index
    %c0_1 = arith.constant 0 : index
    %3 = vector.load %arg2[%c0, %c0_1] : memref<3872x512xi8, #tpu.memory_space<vmem>>, vector<3872x512xi8>
    %4 = arith.sitofp %3 : vector<3872x512xi8> to vector<3872x512xbf16>
    %c0_2 = arith.constant 0 : index
    %c0_3 = arith.constant 0 : index
    %5 = vector.load %arg1[%c0_2, %c0_3] : memref<2x3872xbf16, #tpu.memory_space<vmem>>, vector<2x3872xbf16>
    %cst = arith.constant dense<0.000000e+00> : vector<2x512xf32>
    %6 = tpu.matmul %5, %4, %cst {dimension_numbers = #tpu.dot_dimension_numbers<[1], [0], [0], [1], [0, 0, 1, 1], [], []>} : vector<2x3872xbf16>, vector<3872x512xbf16>, vector<2x512xf32> -> vector<2x512xf32>
    %c0_4 = arith.constant 0 : index
    %c0_5 = arith.constant 0 : index
    %7 = vector.load %arg3[%c0_4, %c0_5] : memref<1x512xf32, #tpu.memory_space<vmem>>, vector<1x512xf32>
    %8 = vector.broadcast %7 : vector<1x512xf32> to vector<2x512xf32>
    %9 = arith.mulf %6, %8 : vector<2x512xf32>
    %c0_6 = arith.constant 0 : index
    %c0_7 = arith.constant 0 : index
    %10 = vector.load %arg4[%c0_6, %c0_7] : memref<1x512xf32, #tpu.memory_space<vmem>>, vector<1x512xf32>
    %11 = vector.broadcast %10 : vector<1x512xf32> to vector<2x512xf32>
    %12 = arith.addf %9, %11 : vector<2x512xf32>
    %c0_8 = arith.constant 0 : index
    %c0_9 = arith.constant 0 : index
    %13 = vector.load %arg5[%c0_8, %c0_9] : memref<512x1024xi8, #tpu.memory_space<vmem>>, vector<512x1024xi8>
    %14 = arith.sitofp %13 : vector<512x1024xi8> to vector<512x1024xbf16>
    %c0_10 = arith.constant 0 : index
    %c0_11 = arith.constant 0 : index
    %15 = vector.load %arg11[%c0_10, %c0_11] : memref<2x1024xf32, #tpu.memory_space<vmem>>, vector<2x1024xf32>
    %16 = arith.truncf %12 : vector<2x512xf32> to vector<2x512xbf16>
    %cst_12 = arith.constant dense<0.000000e+00> : vector<2x1024xf32>
    %17 = tpu.matmul %16, %14, %cst_12 {dimension_numbers = #tpu.dot_dimension_numbers<[1], [0], [0], [1], [0, 0, 1, 1], [], []>} : vector<2x512xbf16>, vector<512x1024xbf16>, vector<2x1024xf32> -> vector<2x1024xf32>
    %18 = arith.addf %15, %17 : vector<2x1024xf32>
    %c0_13 = arith.constant 0 : index
    %c0_14 = arith.constant 0 : index
    %19 = vector.load %arg11[%c0_13, %c0_14] : memref<2x1024xf32, #tpu.memory_space<vmem>>, vector<2x1024xf32>
    tpu.vector_store %arg11[%c0_13, %c0_14], %18 {strides = array<i32>} : memref<2x1024xf32, #tpu.memory_space<vmem>>, vector<2x1024xf32>,
    %c1_i32 = arith.constant 1 : i32
    %20 = arith.cmpi eq, %arg0, %c1_i32 : i32
    %21 = arith.extui %20 : i1 to i32
    %c0_i32_15 = arith.constant 0 : i32
    %22 = arith.cmpi ne, %21, %c0_i32_15 : i32
    scf.if %22 {
      %c0_16 = arith.constant 0 : index
      %c0_17 = arith.constant 0 : index
      %23 = vector.load %arg11[%c0_16, %c0_17] : memref<2x1024xf32, #tpu.memory_space<vmem>>, vector<2x1024xf32>
      %c0_18 = arith.constant 0 : index
      %c0_19 = arith.constant 0 : index
      %24 = vector.load %arg6[%c0_18, %c0_19] : memref<1x1024xf32, #tpu.memory_space<vmem>>, vector<1x1024xf32>
      %25 = vector.broadcast %24 : vector<1x1024xf32> to vector<2x1024xf32>
      %26 = arith.mulf %23, %25 : vector<2x1024xf32>
      %c0_20 = arith.constant 0 : index
      %c0_21 = arith.constant 0 : index
      %27 = vector.load %arg7[%c0_20, %c0_21] : memref<1x1024xf32, #tpu.memory_space<vmem>>, vector<1x1024xf32>
      %28 = vector.broadcast %27 : vector<1x1024xf32> to vector<2x1024xf32>
      %29 = arith.addf %26, %28 : vector<2x1024xf32>
      %c0_22 = arith.constant 0 : index
      %c0_23 = arith.constant 0 : index
      %30 = vector.load %arg8[%c0_22, %c0_23] : memref<1024x1xf32, #tpu.memory_space<vmem>>, vector<1024x1xf32>
      %cst_24 = arith.constant dense<0.000000e+00> : vector<2x1xf32>
      %31 = tpu.matmul %29, %30, %cst_24 {dimension_numbers = #tpu.dot_dimension_numbers<[1], [0], [0], [1], [0, 0, 1, 1], [], []>} : vector<2x1024xf32>, vector<1024x1xf32>, vector<2x1xf32> -> vector<2x1xf32>
      %c0_25 = arith.constant 0 : index
      %c0_26 = arith.constant 0 : index
      %32 = vector.load %arg9[%c0_25, %c0_26] : memref<1x1xf32, #tpu.memory_space<vmem>>, vector<1x1xf32>
      %33 = vector.broadcast %32 : vector<1x1xf32> to vector<2x1xf32>
      %34 = arith.addf %31, %33 : vector<2x1xf32>
      %c0_27 = arith.constant 0 : index
      %c0_28 = arith.constant 0 : index
      %35 = vector.load %arg10[%c0_27, %c0_28] : memref<2x1xf32, #tpu.memory_space<vmem>>, vector<2x1xf32>
      tpu.vector_store %arg10[%c0_27, %c0_28], %34 {strides = array<i32>} : memref<2x1xf32, #tpu.memory_space<vmem>>, vector<2x1xf32>,
    } else {
    }
    return
  }
  func.func @transform_0(%arg0: i32) -> (i32, i32) {
    %c0_i32 = arith.constant 0 : i32
    %c0_i32_0 = arith.constant 0 : i32
    %c0_i32_1 = arith.constant 0 : i32
    return %c0_i32, %c0_i32_0 : i32, i32
  }
  func.func @transform_1(%arg0: i32) -> (i32, i32) {
    %c0_i32 = arith.constant 0 : i32
    %c0_i32_0 = arith.constant 0 : i32
    return %c0_i32, %arg0 : i32, i32
  }
  func.func @transform_2(%arg0: i32) -> (i32, i32) {
    %c0_i32 = arith.constant 0 : i32
    %c0_i32_0 = arith.constant 0 : i32
    return %c0_i32, %arg0 : i32, i32
  }
  func.func @transform_3(%arg0: i32) -> (i32, i32) {
    %c0_i32 = arith.constant 0 : i32
    %c0_i32_0 = arith.constant 0 : i32
    return %c0_i32, %arg0 : i32, i32
  }
  func.func @transform_4(%arg0: i32) -> (i32, i32) {
    %c0_i32 = arith.constant 0 : i32
    %c0_i32_0 = arith.constant 0 : i32
    return %arg0, %c0_i32 : i32, i32
  }
  func.func @transform_5(%arg0: i32) -> (i32, i32) {
    %c0_i32 = arith.constant 0 : i32
    %c0_i32_0 = arith.constant 0 : i32
    %c0_i32_1 = arith.constant 0 : i32
    return %c0_i32, %c0_i32_0 : i32, i32
  }
  func.func @transform_6(%arg0: i32) -> (i32, i32) {
    %c0_i32 = arith.constant 0 : i32
    %c0_i32_0 = arith.constant 0 : i32
    %c0_i32_1 = arith.constant 0 : i32
    return %c0_i32, %c0_i32_0 : i32, i32
  }
  func.func @transform_7(%arg0: i32) -> (i32, i32) {
    %c0_i32 = arith.constant 0 : i32
    %c0_i32_0 = arith.constant 0 : i32
    %c0_i32_1 = arith.constant 0 : i32
    return %c0_i32, %c0_i32_0 : i32, i32
  }
  func.func @transform_8(%arg0: i32) -> (i32, i32) {
    %c0_i32 = arith.constant 0 : i32
    %c0_i32_0 = arith.constant 0 : i32
    %c0_i32_1 = arith.constant 0 : i32
    return %c0_i32, %c0_i32_0 : i32, i32
  }
  func.func @transform_9(%arg0: i32) -> (i32, i32) {
    %c0_i32 = arith.constant 0 : i32
    %c0_i32_0 = arith.constant 0 : i32
    %c0_i32_1 = arith.constant 0 : i32
    return %c0_i32, %c0_i32_0 : i32, i32
  }
}

</mosaic_0001>

<llo_original>
// kernel: forward.3
$region0: #{forward.3}
  #allocation0 [shape = 'u32[]', space=smem, size = 0x4, offset = 0x4, fixed_abs, tag = 'smem constant byte address 0x4 - core index']
  #allocation1 [shape = 'u32[144,128]{1,0:T(1,128)}', space=vmem, size = 0x12000, scoped, tag = 'internal scratch']
  %s0 = inlined_call_operand.vmem [shape: f32[4,338,9], index: 0, kind: input, shape index: {}]
  %s1 = inlined_call_operand.vmem [shape: f32[9,64], index: 1, kind: input, shape index: {}]
  %s2 = inlined_call_operand.vmem [shape: f32[1,64], index: 2, kind: input, shape index: {}]
  %s3 = inlined_call_operand.vmem [shape: f32[338,64], index: 3, kind: output, shape index: {}]
  %s4 = sld [smem:[#allocation0]]
  $region22: #{forward.3} parent=0
    _
  %s6 = ssub.s32 1, %s4
  %s7 = scalar_select 0, %s6, %s4
  // Predicated region
  $region2: #{forward.3} parent=0 // pred_check
    _
  $region3: #{forward.3} parent=0 // pred_check_branch
    %9 = sbr.rel (0) target = $region5
  $region4: #{forward.3} parent=0 // pred_region
    _
  $region5: #{forward.3} parent=0 // pred_fallthru
    _
  // Predicated region
  $region6: #{forward.3} parent=0 // pred_check
    _
  $region7: #{forward.3} parent=0 // pred_check_branch
    %11 = sbr.rel (0) target = $region9
  $region8: #{forward.3} parent=0 // pred_region
    _
  $region9: #{forward.3} parent=0 // pred_fallthru
    _
  // Predicated region
  $region10: #{forward.3} parent=0 // pred_check
    _
  $region11: #{forward.3} parent=0 // pred_check_branch
    %13 = sbr.rel (0) target = $region13
  $region12: #{forward.3} parent=0 // pred_region
    _
  $region13: #{forward.3} parent=0 // pred_fallthru
    _
  %v14 = vld [vmem:[%s0] sm:$0xff]
  %v15 = vld [vmem:[%s0 + $0x8] sm:$0xff]
  %v16 = vld [vmem:[%s0 + $0x10] sm:$0xff]
  %v17 = vld [vmem:[%s0 + $0x18] sm:$0xff]
  %v18 = vld [vmem:[%s0 + $0x20] sm:$0xff]
  %v19 = vld [vmem:[%s0 + $0x28] sm:$0xff]
  %v20 = vld [vmem:[%s0 + $0x30] sm:$0xff]
  %v21 = vld [vmem:[%s0 + $0x38] sm:$0xff]
  %v22 = vld [vmem:[%s0 + $0x40] sm:$0xff]
  %v23 = vld [vmem:[%s0 + $0x48] sm:$0xff]
  %v24 = vld [vmem:[%s0 + $0x50] sm:$0xff]
  %v25 = vld [vmem:[%s0 + $0x58] sm:$0xff]
  %v26 = vld [vmem:[%s0 + $0x60] sm:$0xff]
  %v27 = vld [vmem:[%s0 + $0x68] sm:$0xff]
  %v28 = vld [vmem:[%s0 + $0x70] sm:$0xff]
  %v29 = vld [vmem:[%s0 + $0x78] sm:$0xff]
  %v30 = vld [vmem:[%s0 + $0x80] sm:$0xff]
  %v31 = vld [vmem:[%s0 + $0x88] sm:$0xff]
  %v32 = vld [vmem:[%s0 + $0x90] sm:$0xff]
  %v33 = vld [vmem:[%s0 + $0x98] sm:$0xff]
  %v34 = vld [vmem:[%s0 + $0xa0] sm:$0xff]
  %v35 = vld [vmem:[%s0 + $0xa8] sm:$0xff]
  %v36 = vld [vmem:[%s0 + $0xb0] sm:$0xff]
  %v37 = vld [vmem:[%s0 + $0xb8] sm:$0xff]
  %v38 = vld [vmem:[%s0 + $0xc0] sm:$0xff]
  %v39 = vld [vmem:[%s0 + $0xc8] sm:$0xff]
  %v40 = vld [vmem:[%s0 + $0xd0] sm:$0xff]
  %v41 = vld [vmem:[%s0 + $0xd8] sm:$0xff]
  %v42 = vld [vmem:[%s0 + $0xe0] sm:$0xff]
  %v43 = vld [vmem:[%s0 + $0xe8] sm:$0xff]
  %v44 = vld [vmem:[%s0 + $0xf0] sm:$0xff]
  %v45 = vld [vmem:[%s0 + $0xf8] sm:$0xff]
  %v46 = vld [vmem:[%s0 + $0x100] sm:$0xff]
  %v47 = vld [vmem:[%s0 + $0x108] sm:$0xff]
  %v48 = vld [vmem:[%s0 + $0x110] sm:$0xff]
  %v49 = vld [vmem:[%s0 + $0x118] sm:$0xff]
  %v50 = vld [vmem:[%s0 + $0x120] sm:$0xff]
  %v51 = vld [vmem:[%s0 + $0x128] sm:$0xff]
  %v52 = vld [vmem:[%s0 + $0x130] sm:$0xff]
  %v53 = vld [vmem:[%s0 + $0x138] sm:$0xff]
  %v54 = vld [vmem:[%s0 + $0x140] sm:$0xff]
  %v55 = vld [vmem:[%s0 + $0x148] sm:$0xff]
  %v56 = vld [vmem:[%s0 + $0x150] sm:$0x3]
  %v57 = vld [vmem:[%s1] sm:$0xff]
  %v58 = vld [vmem:[%s1 + $0x8] sm:$0x1]
  %vm59 = vcmask 72704
  %v61 = vsel %vm59, %v14, 0
  %v64 = vsel %vm59, %v15, 0
  %v67 = vsel %vm59, %v16, 0
  %v70 = vsel %vm59, %v17, 0
  %v73 = vsel %vm59, %v18, 0
  %v76 = vsel %vm59, %v19, 0
  %v79 = vsel %vm59, %v20, 0
  %v82 = vsel %vm59, %v21, 0
  %v85 = vsel %vm59, %v22, 0
  %v88 = vsel %vm59, %v23, 0
  %v91 = vsel %vm59, %v24, 0
  %v94 = vsel %vm59, %v25, 0
  %v97 = vsel %vm59, %v26, 0
  %v100 = vsel %vm59, %v27, 0
  %v103 = vsel %vm59, %v28, 0
  %v106 = vsel %vm59, %v29, 0
  %v109 = vsel %vm59, %v30, 0
  %v112 = vsel %vm59, %v31, 0
  %v115 = vsel %vm59, %v32, 0
  %v118 = vsel %vm59, %v33, 0
  %v121 = vsel %vm59, %v34, 0
  %v124 = vsel %vm59, %v35, 0
  %v127 = vsel %vm59, %v36, 0
  %v130 = vsel %vm59, %v37, 0
  %v133 = vsel %vm59, %v38, 0
  %v136 = vsel %vm59, %v39, 0
  %v139 = vsel %vm59, %v40, 0
  %v142 = vsel %vm59, %v41, 0
  %v145 = vsel %vm59, %v42, 0
  %v148 = vsel %vm59, %v43, 0
  %v151 = vsel %vm59, %v44, 0
  %v154 = vsel %vm59, %v45, 0
  %v157 = vsel %vm59, %v46, 0
  %v160 = vsel %vm59, %v47, 0
  %v163 = vsel %vm59, %v48, 0
  %v166 = vsel %vm59, %v49, 0
  %v169 = vsel %vm59, %v50, 0
  %v172 = vsel %vm59, %v51, 0
  %v175 = vsel %vm59, %v52, 0
  %v178 = vsel %vm59, %v53, 0
  %v181 = vsel %vm59, %v54, 0
  %v184 = vsel %vm59, %v55, 0
  %v187 = vsel %vm59, %v56, 0
  %vm189 = vcmask 1040384
  %v191 = vsel %vm189, %v58, 0
  %193 = vmatprep.subr.mxu0 0.0
  %194 = vmatpush1.msra.mxu0 0.0
  %195 = vmatprep.subr.mxu0 0.0
  %196 = vmatpush1.msra.mxu0 0.0
  %197 = vmatprep.subr.mxu0 0.0
  %198 = vmatpush1.msra.mxu0 0.0
  %199 = vmatprep.subr.mxu0 0.0
  %200 = vmatpush1.msra.mxu0 0.0
  %201 = vmatprep.subr.mxu0 0.0
  %202 = vmatpush1.msra.mxu0 0.0
  %203 = vmatprep.subr.mxu0 0.0
  %204 = vmatpush1.msra.mxu0 0.0
  %205 = vmatprep.subr.mxu0 0.0
  %206 = vmatpush1.msra.mxu0 0.0
  %207 = vmatprep.subr.mxu0 0.0
  %208 = vmatpush1.msra.mxu0 0.0
  %209 = vmatprep.subr.mxu0 0.0
  %210 = vmatpush1.msra.mxu0 0.0
  %211 = vmatprep.subr.mxu0 0.0
  %212 = vmatpush1.msra.mxu0 0.0
  %213 = vmatprep.subr.mxu0 0.0
  %214 = vmatpush1.msra.mxu0 0.0
  %215 = vmatprep.subr.mxu0 0.0
  %216 = vmatpush1.msra.mxu0 0.0
  %217 = vmatprep.subr.mxu0 0.0
  %218 = vmatpush1.msra.mxu0 0.0
  %219 = vmatprep.subr.mxu0 0.0
  %220 = vmatpush1.msra.mxu0 0.0
  %221 = vmatprep.subr.mxu0 0.0
  %222 = vmatpush1.msra.mxu0 %v191
  %223 = vmatprep.subr.mxu0 0.0
  %224 = vmatpush1.msra.mxu0 %v57
  %225 = vmatprep.subr.mxu0 0.0
  %226 = vmatpush2.msra.mxu0 0.0
  %227 = vmatprep.subr.mxu0 0.0
  %228 = vmatpush2.msra.mxu0 0.0
  %229 = vmatprep.subr.mxu0 0.0
  %230 = vmatpush2.msra.mxu0 0.0
  %231 = vmatprep.subr.mxu0 0.0
  %232 = vmatpush2.msra.mxu0 0.0
  %233 = vmatprep.subr.mxu0 0.0
  %234 = vmatpush2.msra.mxu0 0.0
  %235 = vmatprep.subr.mxu0 0.0
  %236 = vmatpush2.msra.mxu0 0.0
  %237 = vmatprep.subr.mxu0 0.0
  %238 = vmatpush2.msra.mxu0 0.0
  %239 = vmatprep.subr.mxu0 0.0
  %240 = vmatpush2.msra.mxu0 0.0
  %241 = vmatprep.subr.mxu0 0.0
  %242 = vmatpush2.msra.mxu0 0.0
  %243 = vmatprep.subr.mxu0 0.0
  %244 = vmatpush2.msra.mxu0 0.0
  %245 = vmatprep.subr.mxu0 0.0
  %246 = vmatpush2.msra.mxu0 0.0
  %247 = vmatprep.subr.mxu0 0.0
  %248 = vmatpush2.msra.mxu0 0.0
  %249 = vmatprep.subr.mxu0 0.0
  %250 = vmatpush2.msra.mxu0 0.0
  %251 = vmatprep.subr.mxu0 0.0
  %252 = vmatpush2.msra.mxu0 0.0
  %253 = vmatprep.subr.mxu0 0.0
  %254 = vmatpush2.msra.mxu0 0.0
  %255 = vmatprep.subr.mxu0 0.0
  %256 = vmatpush2.msra.mxu0 0.0
  %257 = vmatprep.mubr.f32.mxu0 0.0
  %258 = vmatmul.mubr.f32.gmra.mxu0 %v61
  %v259 = vpop.f32.mrf.mxu0
  %v260 = vadd.f32 0.0, %v259
  %v261 = vpop.f32.mrf.mxu0
  %262 = vmatprep.mubr.f32.mxu0 0.0
  %263 = vmatmul.mubr.f32.gmra.mxu0 %v64
  %v264 = vpop.f32.mrf.mxu0
  %v265 = vadd.f32 0.0, %v264
  %v266 = vpop.f32.mrf.mxu0
  %267 = vmatprep.mubr.f32.mxu0 0.0
  %268 = vmatmul.mubr.f32.gmra.mxu0 %v67
  %v269 = vpop.f32.mrf.mxu0
  %v270 = vadd.f32 0.0, %v269
  %v271 = vpop.f32.mrf.mxu0
  %272 = vmatprep.mubr.f32.mxu0 0.0
  %273 = vmatmul.mubr.f32.gmra.mxu0 %v70
  %v274 = vpop.f32.mrf.mxu0
  %v275 = vadd.f32 0.0, %v274
  %v276 = vpop.f32.mrf.mxu0
  %277 = vmatprep.mubr.f32.mxu0 0.0
  %278 = vmatmul.mubr.f32.gmra.mxu0 %v73
  %v279 = vpop.f32.mrf.mxu0
  %v280 = vadd.f32 0.0, %v279
  %v281 = vpop.f32.mrf.mxu0
  %282 = vmatprep.mubr.f32.mxu0 0.0
  %283 = vmatmul.mubr.f32.gmra.mxu0 %v76
  %v284 = vpop.f32.mrf.mxu0
  %v285 = vadd.f32 0.0, %v284
  %v286 = vpop.f32.mrf.mxu0
  %287 = vmatprep.mubr.f32.mxu0 0.0
  %288 = vmatmul.mubr.f32.gmra.mxu0 %v79
  %v289 = vpop.f32.mrf.mxu0
  %v290 = vadd.f32 0.0, %v289
  %v291 = vpop.f32.mrf.mxu0
  %292 = vmatprep.mubr.f32.mxu0 0.0
  %293 = vmatmul.mubr.f32.gmra.mxu0 %v82
  %v294 = vpop.f32.mrf.mxu0
  %v295 = vadd.f32 0.0, %v294
  %v296 = vpop.f32.mrf.mxu0
  %297 = vmatprep.mubr.f32.mxu0 0.0
  %298 = vmatmul.mubr.f32.gmra.mxu0 %v85
  %v299 = vpop.f32.mrf.mxu0
  %v300 = vadd.f32 0.0, %v299
  %v301 = vpop.f32.mrf.mxu0
  %302 = vmatprep.mubr.f32.mxu0 0.0
  %303 = vmatmul.mubr.f32.gmra.mxu0 %v88
  %v304 = vpop.f32.mrf.mxu0
  %v305 = vadd.f32 0.0, %v304
  %v306 = vpop.f32.mrf.mxu0
  %307 = vmatprep.mubr.f32.mxu0 0.0
  %308 = vmatmul.mubr.f32.gmra.mxu0 %v91
  %v309 = vpop.f32.mrf.mxu0
  %v310 = vadd.f32 0.0, %v309
  %v311 = vpop.f32.mrf.mxu0
  %312 = vmatprep.mubr.f32.mxu0 0.0
  %313 = vmatmul.mubr.f32.gmra.mxu0 %v94
  %v314 = vpop.f32.mrf.mxu0
  %v315 = vadd.f32 0.0, %v314
  %v316 = vpop.f32.mrf.mxu0
  %317 = vmatprep.mubr.f32.mxu0 0.0
  %318 = vmatmul.mubr.f32.gmra.mxu0 %v97
  %v319 = vpop.f32.mrf.mxu0
  %v320 = vadd.f32 0.0, %v319
  %v321 = vpop.f32.mrf.mxu0
  %322 = vmatprep.mubr.f32.mxu0 0.0
  %323 = vmatmul.mubr.f32.gmra.mxu0 %v100
  %v324 = vpop.f32.mrf.mxu0
  %v325 = vadd.f32 0.0, %v324
  %v326 = vpop.f32.mrf.mxu0
  %327 = vmatprep.mubr.f32.mxu0 0.0
  %328 = vmatmul.mubr.f32.gmra.mxu0 %v103
  %v329 = vpop.f32.mrf.mxu0
  %v330 = vadd.f32 0.0, %v329
  %v331 = vpop.f32.mrf.mxu0
  %332 = vmatprep.mubr.f32.mxu0 0.0
  %333 = vmatmul.mubr.f32.gmra.mxu0 %v106
  %v334 = vpop.f32.mrf.mxu0
  %v335 = vadd.f32 0.0, %v334
  %v336 = vpop.f32.mrf.mxu0
  %337 = vmatprep.mubr.f32.mxu0 0.0
  %338 = vmatmul.mubr.f32.gmra.mxu0 %v109
  %v339 = vpop.f32.mrf.mxu0
  %v340 = vadd.f32 0.0, %v339
  %v341 = vpop.f32.mrf.mxu0
  %342 = vmatprep.mubr.f32.mxu0 0.0
  %343 = vmatmul.mubr.f32.gmra.mxu0 %v112
  %v344 = vpop.f32.mrf.mxu0
  %v345 = vadd.f32 0.0, %v344
  %v346 = vpop.f32.mrf.mxu0
  %347 = vmatprep.mubr.f32.mxu0 0.0
  %348 = vmatmul.mubr.f32.gmra.mxu0 %v115
  %v349 = vpop.f32.mrf.mxu0
  %v350 = vadd.f32 0.0, %v349
  %v351 = vpop.f32.mrf.mxu0
  %352 = vmatprep.mubr.f32.mxu0 0.0
  %353 = vmatmul.mubr.f32.gmra.mxu0 %v118
  %v354 = vpop.f32.mrf.mxu0
  %v355 = vadd.f32 0.0, %v354
  %v356 = vpop.f32.mrf.mxu0
  %357 = vmatprep.mubr.f32.mxu0 0.0
  %358 = vmatmul.mubr.f32.gmra.mxu0 %v121
  %v359 = vpop.f32.mrf.mxu0
  %v360 = vadd.f32 0.0, %v359
  %v361 = vpop.f32.mrf.mxu0
  %362 = vmatprep.mubr.f32.mxu0 0.0
  %363 = vmatmul.mubr.f32.gmra.mxu0 %v124
  %v364 = vpop.f32.mrf.mxu0
  %v365 = vadd.f32 0.0, %v364
  %v366 = vpop.f32.mrf.mxu0
  %367 = vmatprep.mubr.f32.mxu0 0.0
  %368 = vmatmul.mubr.f32.gmra.mxu0 %v127
  %v369 = vpop.f32.mrf.mxu0
  %v370 = vadd.f32 0.0, %v369
  %v371 = vpop.f32.mrf.mxu0
  %372 = vmatprep.mubr.f32.mxu0 0.0
  %373 = vmatmul.mubr.f32.gmra.mxu0 %v130
  %v374 = vpop.f32.mrf.mxu0
  %v375 = vadd.f32 0.0, %v374
  %v376 = vpop.f32.mrf.mxu0
  %377 = vmatprep.mubr.f32.mxu0 0.0
  %378 = vmatmul.mubr.f32.gmra.mxu0 %v133
  %v379 = vpop.f32.mrf.mxu0
  %v380 = vadd.f32 0.0, %v379
  %v381 = vpop.f32.mrf.mxu0
  %382 = vmatprep.mubr.f32.mxu0 0.0
  %383 = vmatmul.mubr.f32.gmra.mxu0 %v136
  %v384 = vpop.f32.mrf.mxu0
  %v385 = vadd.f32 0.0, %v384
  %v386 = vpop.f32.mrf.mxu0
  %387 = vmatprep.mubr.f32.mxu0 0.0
  %388 = vmatmul.mubr.f32.gmra.mxu0 %v139
  %v389 = vpop.f32.mrf.mxu0
  %v390 = vadd.f32 0.0, %v389
  %v391 = vpop.f32.mrf.mxu0
  %392 = vmatprep.mubr.f32.mxu0 0.0
  %393 = vmatmul.mubr.f32.gmra.mxu0 %v142
  %v394 = vpop.f32.mrf.mxu0
  %v395 = vadd.f32 0.0, %v394
  %v396 = vpop.f32.mrf.mxu0
  %397 = vmatprep.mubr.f32.mxu0 0.0
  %398 = vmatmul.mubr.f32.gmra.mxu0 %v145
  %v399 = vpop.f32.mrf.mxu0
  %v400 = vadd.f32 0.0, %v399
  %v401 = vpop.f32.mrf.mxu0
  %402 = vmatprep.mubr.f32.mxu0 0.0
  %403 = vmatmul.mubr.f32.gmra.mxu0 %v148
  %v404 = vpop.f32.mrf.mxu0
  %v405 = vadd.f32 0.0, %v404
  %v406 = vpop.f32.mrf.mxu0
  %407 = vmatprep.mubr.f32.mxu0 0.0
  %408 = vmatmul.mubr.f32.gmra.mxu0 %v151
  %v409 = vpop.f32.mrf.mxu0
  %v410 = vadd.f32 0.0, %v409
  %v411 = vpop.f32.mrf.mxu0
  %412 = vmatprep.mubr.f32.mxu0 0.0
  %413 = vmatmul.mubr.f32.gmra.mxu0 %v154
  %v414 = vpop.f32.mrf.mxu0
  %v415 = vadd.f32 0.0, %v414
  %v416 = vpop.f32.mrf.mxu0
  %417 = vmatprep.mubr.f32.mxu0 0.0
  %418 = vmatmul.mubr.f32.gmra.mxu0 %v157
  %v419 = vpop.f32.mrf.mxu0
  %v420 = vadd.f32 0.0, %v419
  %v421 = vpop.f32.mrf.mxu0
  %422 = vmatprep.mubr.f32.mxu0 0.0
  %423 = vmatmul.mubr.f32.gmra.mxu0 %v160
  %v424 = vpop.f32.mrf.mxu0
  %v425 = vadd.f32 0.0, %v424
  %v426 = vpop.f32.mrf.mxu0
  %427 = vmatprep.mubr.f32.mxu0 0.0
  %428 = vmatmul.mubr.f32.gmra.mxu0 %v163
  %v429 = vpop.f32.mrf.mxu0
  %v430 = vadd.f32 0.0, %v429
  %v431 = vpop.f32.mrf.mxu0
  %432 = vmatprep.mubr.f32.mxu0 0.0
  %433 = vmatmul.mubr.f32.gmra.mxu0 %v166
  %v434 = vpop.f32.mrf.mxu0
  %v435 = vadd.f32 0.0, %v434
  %v436 = vpop.f32.mrf.mxu0
  %437 = vmatprep.mubr.f32.mxu0 0.0
  %438 = vmatmul.mubr.f32.gmra.mxu0 %v169
  %v439 = vpop.f32.mrf.mxu0
  %v440 = vadd.f32 0.0, %v439
  %v441 = vpop.f32.mrf.mxu0
  %442 = vmatprep.mubr.f32.mxu0 0.0
  %443 = vmatmul.mubr.f32.gmra.mxu0 %v172
  %v444 = vpop.f32.mrf.mxu0
  %v445 = vadd.f32 0.0, %v444
  %v446 = vpop.f32.mrf.mxu0
  %447 = vmatprep.mubr.f32.mxu0 0.0
  %448 = vmatmul.mubr.f32.gmra.mxu0 %v175
  %v449 = vpop.f32.mrf.mxu0
  %v450 = vadd.f32 0.0, %v449
  %v451 = vpop.f32.mrf.mxu0
  %452 = vmatprep.mubr.f32.mxu0 0.0
  %453 = vmatmul.mubr.f32.gmra.mxu0 %v178
  %v454 = vpop.f32.mrf.mxu0
  %v455 = vadd.f32 0.0, %v454
  %v456 = vpop.f32.mrf.mxu0
  %457 = vmatprep.mubr.f32.mxu0 0.0
  %458 = vmatmul.mubr.f32.gmra.mxu0 %v181
  %v459 = vpop.f32.mrf.mxu0
  %v460 = vadd.f32 0.0, %v459
  %v461 = vpop.f32.mrf.mxu0
  %462 = vmatprep.mubr.f32.mxu0 0.0
  %463 = vmatmul.mubr.f32.gmra.mxu0 %v184
  %v464 = vpop.f32.mrf.mxu0
  %v465 = vadd.f32 0.0, %v464
  %v466 = vpop.f32.mrf.mxu0
  %467 = vmatprep.mubr.f32.mxu0 0.0
  %468 = vmatmul.mubr.f32.gmra.mxu0 %v187
  %v469 = vpop.f32.mrf.mxu0
  %v470 = vadd.f32 0.0, %v469
  %v471 = vpop.f32.mrf.mxu0
  %472 = vdwg.mxu0
  %s473 = scalar_lea.vmem %s0, 344
  %v474 = vld [vmem:[%s473] sm:$0xff]
  %v475 = vld [vmem:[%s473 + $0x8] sm:$0xff]
  %v476 = vld [vmem:[%s473 + $0x10] sm:$0xff]
  %v477 = vld [vmem:[%s473 + $0x18] sm:$0xff]
  %v478 = vld [vmem:[%s473 + $0x20] sm:$0xff]
  %v479 = vld [vmem:[%s473 + $0x28] sm:$0xff]
  %v480 = vld [vmem:[%s473 + $0x30] sm:$0xff]
  %v481 = vld [vmem:[%s473 + $0x38] sm:$0xff]
  %v482 = vld [vmem:[%s473 + $0x40] sm:$0xff]
  %v483 = vld [vmem:[%s473 + $0x48] sm:$0xff]
  %v484 = vld [vmem:[%s473 + $0x50] sm:$0xff]
  %v485 = vld [vmem:[%s473 + $0x58] sm:$0xff]
  %v486 = vld [vmem:[%s473 + $0x60] sm:$0xff]
  %v487 = vld [vmem:[%s473 + $0x68] sm:$0xff]
  %v488 = vld [vmem:[%s473 + $0x70] sm:$0xff]
  %v489 = vld [vmem:[%s473 + $0x78] sm:$0xff]
  %v490 = vld [vmem:[%s473 + $0x80] sm:$0xff]
  %v491 = vld [vmem:[%s473 + $0x88] sm:$0xff]
  %v492 = vld [vmem:[%s473 + $0x90] sm:$0xff]
  %v493 = vld [vmem:[%s473 + $0x98] sm:$0xff]
  %v494 = vld [vmem:[%s473 + $0xa0] sm:$0xff]
  %v495 = vld [vmem:[%s473 + $0xa8] sm:$0xff]
  %v496 = vld [vmem:[%s473 + $0xb0] sm:$0xff]
  %v497 = vld [vmem:[%s473 + $0xb8] sm:$0xff]
  %v498 = vld [vmem:[%s473 + $0xc0] sm:$0xff]
  %v499 = vld [vmem:[%s473 + $0xc8] sm:$0xff]
  %v500 = vld [vmem:[%s473 + $0xd0] sm:$0xff]
  %v501 = vld [vmem:[%s473 + $0xd8] sm:$0xff]
  %v502 = vld [vmem:[%s473 + $0xe0] sm:$0xff]
  %v503 = vld [vmem:[%s473 + $0xe8] sm:$0xff]
  %v504 = vld [vmem:[%s473 + $0xf0] sm:$0xff]
  %v505 = vld [vmem:[%s473 + $0xf8] sm:$0xff]
  %v506 = vld [vmem:[%s473 + $0x100] sm:$0xff]
  %v507 = vld [vmem:[%s473 + $0x108] sm:$0xff]
  %v508 = vld [vmem:[%s473 + $0x110] sm:$0xff]
  %v509 = vld [vmem:[%s473 + $0x118] sm:$0xff]
  %v510 = vld [vmem:[%s473 + $0x120] sm:$0xff]
  %v511 = vld [vmem:[%s473 + $0x128] sm:$0xff]
  %v512 = vld [vmem:[%s473 + $0x130] sm:$0xff]
  %v513 = vld [vmem:[%s473 + $0x138] sm:$0xff]
  %v514 = vld [vmem:[%s473 + $0x140] sm:$0xff]
  %v515 = vld [vmem:[%s473 + $0x148] sm:$0xff]
  %v516 = vld [vmem:[%s473 + $0x150] sm:$0x3]
  %v518 = vsel %vm59, %v474, 0
  %v521 = vsel %vm59, %v475, 0
  %v524 = vsel %vm59, %v476, 0
  %v527 = vsel %vm59, %v477, 0
  %v530 = vsel %vm59, %v478, 0
  %v533 = vsel %vm59, %v479, 0
  %v536 = vsel %vm59, %v480, 0
  %v539 = vsel %vm59, %v481, 0
  %v542 = vsel %vm59, %v482, 0
  %v545 = vsel %vm59, %v483, 0
  %v548 = vsel %vm59, %v484, 0
  %v551 = vsel %vm59, %v485, 0
  %v554 = vsel %vm59, %v486, 0
  %v557 = vsel %vm59, %v487, 0
  %v560 = vsel %vm59, %v488, 0
  %v563 = vsel %vm59, %v489, 0
  %v566 = vsel %vm59, %v490, 0
  %v569 = vsel %vm59, %v491, 0
  %v572 = vsel %vm59, %v492, 0
  %v575 = vsel %vm59, %v493, 0
  %v578 = vsel %vm59, %v494, 0
  %v581 = vsel %vm59, %v495, 0
  %v584 = vsel %vm59, %v496, 0
  %v587 = vsel %vm59, %v497, 0
  %v590 = vsel %vm59, %v498, 0
  %v593 = vsel %vm59, %v499, 0
  %v596 = vsel %vm59, %v500, 0
  %v599 = vsel %vm59, %v501, 0
  %v602 = vsel %vm59, %v502, 0
  %v605 = vsel %vm59, %v503, 0
  %v608 = vsel %vm59, %v504, 0
  %v611 = vsel %vm59, %v505, 0
  %v614 = vsel %vm59, %v506, 0
  %v617 = vsel %vm59, %v507, 0
  %v620 = vsel %vm59, %v508, 0
  %v623 = vsel %vm59, %v509, 0
  %v626 = vsel %vm59, %v510, 0
  %v629 = vsel %vm59, %v511, 0
  %v632 = vsel %vm59, %v512, 0
  %v635 = vsel %vm59, %v513, 0
  %v638 = vsel %vm59, %v514, 0
  %v641 = vsel %vm59, %v515, 0
  %v644 = vsel %vm59, %v516, 0
  %646 = vmatprep.subr.mxu0 0.0
  %647 = vmatpush1.msra.mxu0 0.0
  %648 = vmatprep.subr.mxu0 0.0
  %649 = vmatpush1.msra.mxu0 0.0
  %650 = vmatprep.subr.mxu0 0.0
  %651 = vmatpush1.msra.mxu0 0.0
  %652 = vmatprep.subr.mxu0 0.0
  %653 = vmatpush1.msra.mxu0 0.0
  %654 = vmatprep.subr.mxu0 0.0
  %655 = vmatpush1.msra.mxu0 0.0
  %656 = vmatprep.subr.mxu0 0.0
  %657 = vmatpush1.msra.mxu0 0.0
  %658 = vmatprep.subr.mxu0 0.0
  %659 = vmatpush1.msra.mxu0 0.0
  %660 = vmatprep.subr.mxu0 0.0
  %661 = vmatpush1.msra.mxu0 0.0
  %662 = vmatprep.subr.mxu0 0.0
  %663 = vmatpush1.msra.mxu0 0.0
  %664 = vmatprep.subr.mxu0 0.0
  %665 = vmatpush1.msra.mxu0 0.0
  %666 = vmatprep.subr.mxu0 0.0
  %667 = vmatpush1.msra.mxu0 0.0
  %668 = vmatprep.subr.mxu0 0.0
  %669 = vmatpush1.msra.mxu0 0.0
  %670 = vmatprep.subr.mxu0 0.0
  %671 = vmatpush1.msra.mxu0 0.0
  %672 = vmatprep.subr.mxu0 0.0
  %673 = vmatpush1.msra.mxu0 0.0
  %674 = vmatprep.subr.mxu0 0.0
  %675 = vmatpush1.msra.mxu0 %v191
  %676 = vmatprep.subr.mxu0 0.0
  %677 = vmatpush1.msra.mxu0 %v57
  %678 = vmatprep.subr.mxu0 0.0
  %679 = vmatpush2.msra.mxu0 0.0
  %680 = vmatprep.subr.mxu0 0.0
  %681 = vmatpush2.msra.mxu0 0.0
  %682 = vmatprep.subr.mxu0 0.0
  %683 = vmatpush2.msra.mxu0 0.0
  %684 = vmatprep.subr.mxu0 0.0
  %685 = vmatpush2.msra.mxu0 0.0
  %686 = vmatprep.subr.mxu0 0.0
  %687 = vmatpush2.msra.mxu0 0.0
  %688 = vmatprep.subr.mxu0 0.0
  %689 = vmatpush2.msra.mxu0 0.0
  %690 = vmatprep.subr.mxu0 0.0
  %691 = vmatpush2.msra.mxu0 0.0
  %692 = vmatprep.subr.mxu0 0.0
  %693 = vmatpush2.msra.mxu0 0.0
  %694 = vmatprep.subr.mxu0 0.0
  %695 = vmatpush2.msra.mxu0 0.0
  %696 = vmatprep.subr.mxu0 0.0
  %697 = vmatpush2.msra.mxu0 0.0
  %698 = vmatprep.subr.mxu0 0.0
  %699 = vmatpush2.msra.mxu0 0.0
  %700 = vmatprep.subr.mxu0 0.0
  %701 = vmatpush2.msra.mxu0 0.0
  %702 = vmatprep.subr.mxu0 0.0
  %703 = vmatpush2.msra.mxu0 0.0
  %704 = vmatprep.subr.mxu0 0.0
  %705 = vmatpush2.msra.mxu0 0.0
  %706 = vmatprep.subr.mxu0 0.0
  %707 = vmatpush2.msra.mxu0 0.0
  %708 = vmatprep.subr.mxu0 0.0
  %709 = vmatpush2.msra.mxu0 0.0
  %710 = vmatprep.mubr.f32.mxu0 0.0
  %711 = vmatmul.mubr.f32.gmra.mxu0 %v518
  %v712 = vpop.f32.mrf.mxu0
  %v713 = vadd.f32 0.0, %v712
  %v714 = vpop.f32.mrf.mxu0
  %715 = vmatprep.mubr.f32.mxu0 0.0
  %716 = vmatmul.mubr.f32.gmra.mxu0 %v521
  %v717 = vpop.f32.mrf.mxu0
  %v718 = vadd.f32 0.0, %v717
  %v719 = vpop.f32.mrf.mxu0
  %720 = vmatprep.mubr.f32.mxu0 0.0
  %721 = vmatmul.mubr.f32.gmra.mxu0 %v524
  %v722 = vpop.f32.mrf.mxu0
  %v723 = vadd.f32 0.0, %v722
  %v724 = vpop.f32.mrf.mxu0
  %725 = vmatprep.mubr.f32.mxu0 0.0
  %726 = vmatmul.mubr.f32.gmra.mxu0 %v527
  %v727 = vpop.f32.mrf.mxu0
  %v728 = vadd.f32 0.0, %v727
  %v729 = vpop.f32.mrf.mxu0
  %730 = vmatprep.mubr.f32.mxu0 0.0
  %731 = vmatmul.mubr.f32.gmra.mxu0 %v530
  %v732 = vpop.f32.mrf.mxu0
  %v733 = vadd.f32 0.0, %v732
  %v734 = vpop.f32.mrf.mxu0
  %735 = vmatprep.mubr.f32.mxu0 0.0
  %736 = vmatmul.mubr.f32.gmra.mxu0 %v533
  %v737 = vpop.f32.mrf.mxu0
  %v738 = vadd.f32 0.0, %v737
  %v739 = vpop.f32.mrf.mxu0
  %740 = vmatprep.mubr.f32.mxu0 0.0
  %741 = vmatmul.mubr.f32.gmra.mxu0 %v536
  %v742 = vpop.f32.mrf.mxu0
  %v743 = vadd.f32 0.0, %v742
  %v744 = vpop.f32.mrf.mxu0
  %745 = vmatprep.mubr.f32.mxu0 0.0
  %746 = vmatmul.mubr.f32.gmra.mxu0 %v539
  %v747 = vpop.f32.mrf.mxu0
  %v748 = vadd.f32 0.0, %v747
  %v749 = vpop.f32.mrf.mxu0
  %750 = vmatprep.mubr.f32.mxu0 0.0
  %751 = vmatmul.mubr.f32.gmra.mxu0 %v542
  %v752 = vpop.f32.mrf.mxu0
  %v753 = vadd.f32 0.0, %v752
  %v754 = vpop.f32.mrf.mxu0
  %755 = vmatprep.mubr.f32.mxu0 0.0
  %756 = vmatmul.mubr.f32.gmra.mxu0 %v545
  %v757 = vpop.f32.mrf.mxu0
  %v758 = vadd.f32 0.0, %v757
  %v759 = vpop.f32.mrf.mxu0
  %760 = vmatprep.mubr.f32.mxu0 0.0
  %761 = vmatmul.mubr.f32.gmra.mxu0 %v548
  %v762 = vpop.f32.mrf.mxu0
  %v763 = vadd.f32 0.0, %v762
  %v764 = vpop.f32.mrf.mxu0
  %765 = vmatprep.mubr.f32.mxu0 0.0
  %766 = vmatmul.mubr.f32.gmra.mxu0 %v551
  %v767 = vpop.f32.mrf.mxu0
  %v768 = vadd.f32 0.0, %v767
  %v769 = vpop.f32.mrf.mxu0
  %770 = vmatprep.mubr.f32.mxu0 0.0
  %771 = vmatmul.mubr.f32.gmra.mxu0 %v554
  %v772 = vpop.f32.mrf.mxu0
  %v773 = vadd.f32 0.0, %v772
  %v774 = vpop.f32.mrf.mxu0
  %775 = vmatprep.mubr.f32.mxu0 0.0
  %776 = vmatmul.mubr.f32.gmra.mxu0 %v557
  %v777 = vpop.f32.mrf.mxu0
  %v778 = vadd.f32 0.0, %v777
  %v779 = vpop.f32.mrf.mxu0
  %780 = vmatprep.mubr.f32.mxu0 0.0
  %781 = vmatmul.mubr.f32.gmra.mxu0 %v560
  %v782 = vpop.f32.mrf.mxu0
  %v783 = vadd.f32 0.0, %v782
  %v784 = vpop.f32.mrf.mxu0
  %785 = vmatprep.mubr.f32.mxu0 0.0
  %786 = vmatmul.mubr.f32.gmra.mxu0 %v563
  %v787 = vpop.f32.mrf.mxu0
  %v788 = vadd.f32 0.0, %v787
  %v789 = vpop.f32.mrf.mxu0
  %790 = vmatprep.mubr.f32.mxu0 0.0
  %791 = vmatmul.mubr.f32.gmra.mxu0 %v566
  %v792 = vpop.f32.mrf.mxu0
  %v793 = vadd.f32 0.0, %v792
  %v794 = vpop.f32.mrf.mxu0
  %795 = vmatprep.mubr.f32.mxu0 0.0
  %796 = vmatmul.mubr.f32.gmra.mxu0 %v569
  %v797 = vpop.f32.mrf.mxu0
  %v798 = vadd.f32 0.0, %v797
  %v799 = vpop.f32.mrf.mxu0
  %800 = vmatprep.mubr.f32.mxu0 0.0
  %801 = vmatmul.mubr.f32.gmra.mxu0 %v572
  %v802 = vpop.f32.mrf.mxu0
  %v803 = vadd.f32 0.0, %v802
  %v804 = vpop.f32.mrf.mxu0
  %805 = vmatprep.mubr.f32.mxu0 0.0
  %806 = vmatmul.mubr.f32.gmra.mxu0 %v575
  %v807 = vpop.f32.mrf.mxu0
  %v808 = vadd.f32 0.0, %v807
  %v809 = vpop.f32.mrf.mxu0
  %810 = vmatprep.mubr.f32.mxu0 0.0
  %811 = vmatmul.mubr.f32.gmra.mxu0 %v578
  %v812 = vpop.f32.mrf.mxu0
  %v813 = vadd.f32 0.0, %v812
  %v814 = vpop.f32.mrf.mxu0
  %815 = vmatprep.mubr.f32.mxu0 0.0
  %816 = vmatmul.mubr.f32.gmra.mxu0 %v581
  %v817 = vpop.f32.mrf.mxu0
  %v818 = vadd.f32 0.0, %v817
  %v819 = vpop.f32.mrf.mxu0
  %820 = vmatprep.mubr.f32.mxu0 0.0
  %821 = vmatmul.mubr.f32.gmra.mxu0 %v584
  %v822 = vpop.f32.mrf.mxu0
  %v823 = vadd.f32 0.0, %v822
  %v824 = vpop.f32.mrf.mxu0
  %825 = vmatprep.mubr.f32.mxu0 0.0
  %826 = vmatmul.mubr.f32.gmra.mxu0 %v587
  %v827 = vpop.f32.mrf.mxu0
  %v828 = vadd.f32 0.0, %v827
  %v829 = vpop.f32.mrf.mxu0
  %830 = vmatprep.mubr.f32.mxu0 0.0
  %831 = vmatmul.mubr.f32.gmra.mxu0 %v590
  %v832 = vpop.f32.mrf.mxu0
  %v833 = vadd.f32 0.0, %v832
  %v834 = vpop.f32.mrf.mxu0
  %835 = vmatprep.mubr.f32.mxu0 0.0
  %836 = vmatmul.mubr.f32.gmra.mxu0 %v593
  %v837 = vpop.f32.mrf.mxu0
  %v838 = vadd.f32 0.0, %v837
  %v839 = vpop.f32.mrf.mxu0
  %840 = vmatprep.mubr.f32.mxu0 0.0
  %841 = vmatmul.mubr.f32.gmra.mxu0 %v596
  %v842 = vpop.f32.mrf.mxu0
  %v843 = vadd.f32 0.0, %v842
  %v844 = vpop.f32.mrf.mxu0
  %845 = vmatprep.mubr.f32.mxu0 0.0
  %846 = vmatmul.mubr.f32.gmra.mxu0 %v599
  %v847 = vpop.f32.mrf.mxu0
  %v848 = vadd.f32 0.0, %v847
  %v849 = vpop.f32.mrf.mxu0
  %850 = vmatprep.mubr.f32.mxu0 0.0
  %851 = vmatmul.mubr.f32.gmra.mxu0 %v602
  %v852 = vpop.f32.mrf.mxu0
  %v853 = vadd.f32 0.0, %v852
  %v854 = vpop.f32.mrf.mxu0
  %855 = vmatprep.mubr.f32.mxu0 0.0
  %856 = vmatmul.mubr.f32.gmra.mxu0 %v605
  %v857 = vpop.f32.mrf.mxu0
  %v858 = vadd.f32 0.0, %v857
  %v859 = vpop.f32.mrf.mxu0
  %860 = vmatprep.mubr.f32.mxu0 0.0
  %861 = vmatmul.mubr.f32.gmra.mxu0 %v608
  %v862 = vpop.f32.mrf.mxu0
  %v863 = vadd.f32 0.0, %v862
  %v864 = vpop.f32.mrf.mxu0
  %865 = vmatprep.mubr.f32.mxu0 0.0
  %866 = vmatmul.mubr.f32.gmra.mxu0 %v611
  %v867 = vpop.f32.mrf.mxu0
  %v868 = vadd.f32 0.0, %v867
  %v869 = vpop.f32.mrf.mxu0
  %870 = vmatprep.mubr.f32.mxu0 0.0
  %871 = vmatmul.mubr.f32.gmra.mxu0 %v614
  %v872 = vpop.f32.mrf.mxu0
  %v873 = vadd.f32 0.0, %v872
  %v874 = vpop.f32.mrf.mxu0
  %875 = vmatprep.mubr.f32.mxu0 0.0
  %876 = vmatmul.mubr.f32.gmra.mxu0 %v617
  %v877 = vpop.f32.mrf.mxu0
  %v878 = vadd.f32 0.0, %v877
  %v879 = vpop.f32.mrf.mxu0
  %880 = vmatprep.mubr.f32.mxu0 0.0
  %881 = vmatmul.mubr.f32.gmra.mxu0 %v620
  %v882 = vpop.f32.mrf.mxu0
  %v883 = vadd.f32 0.0, %v882
  %v884 = vpop.f32.mrf.mxu0
  %885 = vmatprep.mubr.f32.mxu0 0.0
  %886 = vmatmul.mubr.f32.gmra.mxu0 %v623
  %v887 = vpop.f32.mrf.mxu0
  %v888 = vadd.f32 0.0, %v887
  %v889 = vpop.f32.mrf.mxu0
  %890 = vmatprep.mubr.f32.mxu0 0.0
  %891 = vmatmul.mubr.f32.gmra.mxu0 %v626
  %v892 = vpop.f32.mrf.mxu0
  %v893 = vadd.f32 0.0, %v892
  %v894 = vpop.f32.mrf.mxu0
  %895 = vmatprep.mubr.f32.mxu0 0.0
  %896 = vmatmul.mubr.f32.gmra.mxu0 %v629
  %v897 = vpop.f32.mrf.mxu0
  %v898 = vadd.f32 0.0, %v897
  %v899 = vpop.f32.mrf.mxu0
  %900 = vmatprep.mubr.f32.mxu0 0.0
  %901 = vmatmul.mubr.f32.gmra.mxu0 %v632
  %v902 = vpop.f32.mrf.mxu0
  %v903 = vadd.f32 0.0, %v902
  %v904 = vpop.f32.mrf.mxu0
  %905 = vmatprep.mubr.f32.mxu0 0.0
  %906 = vmatmul.mubr.f32.gmra.mxu0 %v635
  %v907 = vpop.f32.mrf.mxu0
  %v908 = vadd.f32 0.0, %v907
  %v909 = vpop.f32.mrf.mxu0
  %910 = vmatprep.mubr.f32.mxu0 0.0
  %911 = vmatmul.mubr.f32.gmra.mxu0 %v638
  %v912 = vpop.f32.mrf.mxu0
  %v913 = vadd.f32 0.0, %v912
  %v914 = vpop.f32.mrf.mxu0
  %915 = vmatprep.mubr.f32.mxu0 0.0
  %916 = vmatmul.mubr.f32.gmra.mxu0 %v641
  %v917 = vpop.f32.mrf.mxu0
  %v918 = vadd.f32 0.0, %v917
  %v919 = vpop.f32.mrf.mxu0
  %920 = vmatprep.mubr.f32.mxu0 0.0
  %921 = vmatmul.mubr.f32.gmra.mxu0 %v644
  %v922 = vpop.f32.mrf.mxu0
  %v923 = vadd.f32 0.0, %v922
  %v924 = vpop.f32.mrf.mxu0
  %925 = vdwg.mxu0
  %v926 = vmax.f32 %v260, %v713
  %v927 = vmax.f32 %v265, %v718
  %v928 = vmax.f32 %v270, %v723
  %v929 = vmax.f32 %v275, %v728
  %v930 = vmax.f32 %v280, %v733
  %v931 = vmax.f32 %v285, %v738
  %v932 = vmax.f32 %v290, %v743
  %v933 = vmax.f32 %v295, %v748
  %v934 = vmax.f32 %v300, %v753
  %v935 = vmax.f32 %v305, %v758
  %v936 = vmax.f32 %v310, %v763
  %v937 = vmax.f32 %v315, %v768
  %v938 = vmax.f32 %v320, %v773
  %v939 = vmax.f32 %v325, %v778
  %v940 = vmax.f32 %v330, %v783
  %v941 = vmax.f32 %v335, %v788
  %v942 = vmax.f32 %v340, %v793
  %v943 = vmax.f32 %v345, %v798
  %v944 = vmax.f32 %v350, %v803
  %v945 = vmax.f32 %v355, %v808
  %v946 = vmax.f32 %v360, %v813
  %v947 = vmax.f32 %v365, %v818
  %v948 = vmax.f32 %v370, %v823
  %v949 = vmax.f32 %v375, %v828
  %v950 = vmax.f32 %v380, %v833
  %v951 = vmax.f32 %v385, %v838
  %v952 = vmax.f32 %v390, %v843
  %v953 = vmax.f32 %v395, %v848
  %v954 = vmax.f32 %v400, %v853
  %v955 = vmax.f32 %v405, %v858
  %v956 = vmax.f32 %v410, %v863
  %v957 = vmax.f32 %v415, %v868
  %v958 = vmax.f32 %v420, %v873
  %v959 = vmax.f32 %v425, %v878
  %v960 = vmax.f32 %v430, %v883
  %v961 = vmax.f32 %v435, %v888
  %v962 = vmax.f32 %v440, %v893
  %v963 = vmax.f32 %v445, %v898
  %v964 = vmax.f32 %v450, %v903
  %v965 = vmax.f32 %v455, %v908
  %v966 = vmax.f32 %v460, %v913
  %v967 = vmax.f32 %v465, %v918
  %v968 = vmax.f32 %v470, %v923
  %s969 = scalar_lea.vmem %s0, 688
  %v970 = vld [vmem:[%s969] sm:$0xff]
  %v971 = vld [vmem:[%s969 + $0x8] sm:$0xff]
  %v972 = vld [vmem:[%s969 + $0x10] sm:$0xff]
  %v973 = vld [vmem:[%s969 + $0x18] sm:$0xff]
  %v974 = vld [vmem:[%s969 + $0x20] sm:$0xff]
  %v975 = vld [vmem:[%s969 + $0x28] sm:$0xff]
  %v976 = vld [vmem:[%s969 + $0x30] sm:$0xff]
  %v977 = vld [vmem:[%s969 + $0x38] sm:$0xff]
  %v978 = vld [vmem:[%s969 + $0x40] sm:$0xff]
  %v979 = vld [vmem:[%s969 + $0x48] sm:$0xff]
  %v980 = vld [vmem:[%s969 + $0x50] sm:$0xff]
  %v981 = vld [vmem:[%s969 + $0x58] sm:$0xff]
  %v982 = vld [vmem:[%s969 + $0x60] sm:$0xff]
  %v983 = vld [vmem:[%s969 + $0x68] sm:$0xff]
  %v984 = vld [vmem:[%s969 + $0x70] sm:$0xff]
  %v985 = vld [vmem:[%s969 + $0x78] sm:$0xff]
  %v986 = vld [vmem:[%s969 + $0x80] sm:$0xff]
  %v987 = vld [vmem:[%s969 + $0x88] sm:$0xff]
  %v988 = vld [vmem:[%s969 + $0x90] sm:$0xff]
  %v989 = vld [vmem:[%s969 + $0x98] sm:$0xff]
  %v990 = vld [vmem:[%s969 + $0xa0] sm:$0xff]
  %v991 = vld [vmem:[%s969 + $0xa8] sm:$0xff]
  %v992 = vld [vmem:[%s969 + $0xb0] sm:$0xff]
  %v993 = vld [vmem:[%s969 + $0xb8] sm:$0xff]
  %v994 = vld [vmem:[%s969 + $0xc0] sm:$0xff]
  %v995 = vld [vmem:[%s969 + $0xc8] sm:$0xff]
  %v996 = vld [vmem:[%s969 + $0xd0] sm:$0xff]
  %v997 = vld [vmem:[%s969 + $0xd8] sm:$0xff]
  %v998 = vld [vmem:[%s969 + $0xe0] sm:$0xff]
  %v999 = vld [vmem:[%s969 + $0xe8] sm:$0xff]
  %v1000 = vld [vmem:[%s969 + $0xf0] sm:$0xff]
  %v1001 = vld [vmem:[%s969 + $0xf8] sm:$0xff]
  %v1002 = vld [vmem:[%s969 + $0x100] sm:$0xff]
  %v1003 = vld [vmem:[%s969 + $0x108] sm:$0xff]
  %v1004 = vld [vmem:[%s969 + $0x110] sm:$0xff]
  %v1005 = vld [vmem:[%s969 + $0x118] sm:$0xff]
  %v1006 = vld [vmem:[%s969 + $0x120] sm:$0xff]
  %v1007 = vld [vmem:[%s969 + $0x128] sm:$0xff]
  %v1008 = vld [vmem:[%s969 + $0x130] sm:$0xff]
  %v1009 = vld [vmem:[%s969 + $0x138] sm:$0xff]
  %v1010 = vld [vmem:[%s969 + $0x140] sm:$0xff]
  %v1011 = vld [vmem:[%s969 + $0x148] sm:$0xff]
  %v1012 = vld [vmem:[%s969 + $0x150] sm:$0x3]
  %v1014 = vsel %vm59, %v970, 0
  %v1017 = vsel %vm59, %v971, 0
  %v1020 = vsel %vm59, %v972, 0
  %v1023 = vsel %vm59, %v973, 0
  %v1026 = vsel %vm59, %v974, 0
  %v1029 = vsel %vm59, %v975, 0
  %v1032 = vsel %vm59, %v976, 0
  %v1035 = vsel %vm59, %v977, 0
  %v1038 = vsel %vm59, %v978, 0
  %v1041 = vsel %vm59, %v979, 0
  %v1044 = vsel %vm59, %v980, 0
  %v1047 = vsel %vm59, %v981, 0
  %v1050 = vsel %vm59, %v982, 0
  %v1053 = vsel %vm59, %v983, 0
  %v1056 = vsel %vm59, %v984, 0
  %v1059 = vsel %vm59, %v985, 0
  %v1062 = vsel %vm59, %v986, 0
  %v1065 = vsel %vm59, %v987, 0
  %v1068 = vsel %vm59, %v988, 0
  %v1071 = vsel %vm59, %v989, 0
  %v1074 = vsel %vm59, %v990, 0
  %v1077 = vsel %vm59, %v991, 0
  %v1080 = vsel %vm59, %v992, 0
  %v1083 = vsel %vm59, %v993, 0
  %v1086 = vsel %vm59, %v994, 0
  %v1089 = vsel %vm59, %v995, 0
  %v1092 = vsel %vm59, %v996, 0
  %v1095 = vsel %vm59, %v997, 0
  %v1098 = vsel %vm59, %v998, 0
  %v1101 = vsel %vm59, %v999, 0
  %v1104 = vsel %vm59, %v1000, 0
  %v1107 = vsel %vm59, %v1001, 0
  %v1110 = vsel %vm59, %v1002, 0
  %v1113 = vsel %vm59, %v1003, 0
  %v1116 = vsel %vm59, %v1004, 0
  %v1119 = vsel %vm59, %v1005, 0
  %v1122 = vsel %vm59, %v1006, 0
  %v1125 = vsel %vm59, %v1007, 0
  %v1128 = vsel %vm59, %v1008, 0
  %v1131 = vsel %vm59, %v1009, 0
  %v1134 = vsel %vm59, %v1010, 0
  %v1137 = vsel %vm59, %v1011, 0
  %v1140 = vsel %vm59, %v1012, 0
  %1142 = vmatprep.subr.mxu0 0.0
  %1143 = vmatpush1.msra.mxu0 0.0
  %1144 = vmatprep.subr.mxu0 0.0
  %1145 = vmatpush1.msra.mxu0 0.0
  %1146 = vmatprep.subr.mxu0 0.0
  %1147 = vmatpush1.msra.mxu0 0.0
  %1148 = vmatprep.subr.mxu0 0.0
  %1149 = vmatpush1.msra.mxu0 0.0
  %1150 = vmatprep.subr.mxu0 0.0
  %1151 = vmatpush1.msra.mxu0 0.0
  %1152 = vmatprep.subr.mxu0 0.0
  %1153 = vmatpush1.msra.mxu0 0.0
  %1154 = vmatprep.subr.mxu0 0.0
  %1155 = vmatpush1.msra.mxu0 0.0
  %1156 = vmatprep.subr.mxu0 0.0
  %1157 = vmatpush1.msra.mxu0 0.0
  %1158 = vmatprep.subr.mxu0 0.0
  %1159 = vmatpush1.msra.mxu0 0.0
  %1160 = vmatprep.subr.mxu0 0.0
  %1161 = vmatpush1.msra.mxu0 0.0
  %1162 = vmatprep.subr.mxu0 0.0
  %1163 = vmatpush1.msra.mxu0 0.0
  %1164 = vmatprep.subr.mxu0 0.0
  %1165 = vmatpush1.msra.mxu0 0.0
  %1166 = vmatprep.subr.mxu0 0.0
  %1167 = vmatpush1.msra.mxu0 0.0
  %1168 = vmatprep.subr.mxu0 0.0
  %1169 = vmatpush1.msra.mxu0 0.0
  %1170 = vmatprep.subr.mxu0 0.0
  %1171 = vmatpush1.msra.mxu0 %v191
  %1172 = vmatprep.subr.mxu0 0.0
  %1173 = vmatpush1.msra.mxu0 %v57
  %1174 = vmatprep.subr.mxu0 0.0
  %1175 = vmatpush2.msra.mxu0 0.0
  %1176 = vmatprep.subr.mxu0 0.0
  %1177 = vmatpush2.msra.mxu0 0.0
  %1178 = vmatprep.subr.mxu0 0.0
  %1179 = vmatpush2.msra.mxu0 0.0
  %1180 = vmatprep.subr.mxu0 0.0
  %1181 = vmatpush2.msra.mxu0 0.0
  %1182 = vmatprep.subr.mxu0 0.0
  %1183 = vmatpush2.msra.mxu0 0.0
  %1184 = vmatprep.subr.mxu0 0.0
  %1185 = vmatpush2.msra.mxu0 0.0
  %1186 = vmatprep.subr.mxu0 0.0
  %1187 = vmatpush2.msra.mxu0 0.0
  %1188 = vmatprep.subr.mxu0 0.0
  %1189 = vmatpush2.msra.mxu0 0.0
  %1190 = vmatprep.subr.mxu0 0.0
  %1191 = vmatpush2.msra.mxu0 0.0
  %1192 = vmatprep.subr.mxu0 0.0
  %1193 = vmatpush2.msra.mxu0 0.0
  %1194 = vmatprep.subr.mxu0 0.0
  %1195 = vmatpush2.msra.mxu0 0.0
  %1196 = vmatprep.subr.mxu0 0.0
  %1197 = vmatpush2.msra.mxu0 0.0
  %1198 = vmatprep.subr.mxu0 0.0
  %1199 = vmatpush2.msra.mxu0 0.0
  %1200 = vmatprep.subr.mxu0 0.0
  %1201 = vmatpush2.msra.mxu0 0.0
  %1202 = vmatprep.subr.mxu0 0.0
  %1203 = vmatpush2.msra.mxu0 0.0
  %1204 = vmatprep.subr.mxu0 0.0
  %1205 = vmatpush2.msra.mxu0 0.0
  %1206 = vmatprep.mubr.f32.mxu0 0.0
  %1207 = vmatmul.mubr.f32.gmra.mxu0 %v1014
  %v1208 = vpop.f32.mrf.mxu0
  %v1209 = vadd.f32 0.0, %v1208
  %v1210 = vpop.f32.mrf.mxu0
  %1211 = vmatprep.mubr.f32.mxu0 0.0
  %1212 = vmatmul.mubr.f32.gmra.mxu0 %v1017
  %v1213 = vpop.f32.mrf.mxu0
  %v1214 = vadd.f32 0.0, %v1213
  %v1215 = vpop.f32.mrf.mxu0
  %1216 = vmatprep.mubr.f32.mxu0 0.0
  %1217 = vmatmul.mubr.f32.gmra.mxu0 %v1020
  %v1218 = vpop.f32.mrf.mxu0
  %v1219 = vadd.f32 0.0, %v1218
  %v1220 = vpop.f32.mrf.mxu0
  %1221 = vmatprep.mubr.f32.mxu0 0.0
  %1222 = vmatmul.mubr.f32.gmra.mxu0 %v1023
  %v1223 = vpop.f32.mrf.mxu0
  %v1224 = vadd.f32 0.0, %v1223
  %v1225 = vpop.f32.mrf.mxu0
  %1226 = vmatprep.mubr.f32.mxu0 0.0
  %1227 = vmatmul.mubr.f32.gmra.mxu0 %v1026
  %v1228 = vpop.f32.mrf.mxu0
  %v1229 = vadd.f32 0.0, %v1228
  %v1230 = vpop.f32.mrf.mxu0
  %1231 = vmatprep.mubr.f32.mxu0 0.0
  %1232 = vmatmul.mubr.f32.gmra.mxu0 %v1029
  %v1233 = vpop.f32.mrf.mxu0
  %v1234 = vadd.f32 0.0, %v1233
  %v1235 = vpop.f32.mrf.mxu0
  %1236 = vmatprep.mubr.f32.mxu0 0.0
  %1237 = vmatmul.mubr.f32.gmra.mxu0 %v1032
  %v1238 = vpop.f32.mrf.mxu0
  %v1239 = vadd.f32 0.0, %v1238
  %v1240 = vpop.f32.mrf.mxu0
  %1241 = vmatprep.mubr.f32.mxu0 0.0
  %1242 = vmatmul.mubr.f32.gmra.mxu0 %v1035
  %v1243 = vpop.f32.mrf.mxu0
  %v1244 = vadd.f32 0.0, %v1243
  %v1245 = vpop.f32.mrf.mxu0
  %1246 = vmatprep.mubr.f32.mxu0 0.0
  %1247 = vmatmul.mubr.f32.gmra.mxu0 %v1038
  %v1248 = vpop.f32.mrf.mxu0
  %v1249 = vadd.f32 0.0, %v1248
  %v1250 = vpop.f32.mrf.mxu0
  %1251 = vmatprep.mubr.f32.mxu0 0.0
  %1252 = vmatmul.mubr.f32.gmra.mxu0 %v1041
  %v1253 = vpop.f32.mrf.mxu0
  %v1254 = vadd.f32 0.0, %v1253
  %v1255 = vpop.f32.mrf.mxu0
  %1256 = vmatprep.mubr.f32.mxu0 0.0
  %1257 = vmatmul.mubr.f32.gmra.mxu0 %v1044
  %v1258 = vpop.f32.mrf.mxu0
  %v1259 = vadd.f32 0.0, %v1258
  %v1260 = vpop.f32.mrf.mxu0
  %1261 = vmatprep.mubr.f32.mxu0 0.0
  %1262 = vmatmul.mubr.f32.gmra.mxu0 %v1047
  %v1263 = vpop.f32.mrf.mxu0
  %v1264 = vadd.f32 0.0, %v1263
  %v1265 = vpop.f32.mrf.mxu0
  %1266 = vmatprep.mubr.f32.mxu0 0.0
  %1267 = vmatmul.mubr.f32.gmra.mxu0 %v1050
  %v1268 = vpop.f32.mrf.mxu0
  %v1269 = vadd.f32 0.0, %v1268
  %v1270 = vpop.f32.mrf.mxu0
  %1271 = vmatprep.mubr.f32.mxu0 0.0
  %1272 = vmatmul.mubr.f32.gmra.mxu0 %v1053
  %v1273 = vpop.f32.mrf.mxu0
  %v1274 = vadd.f32 0.0, %v1273
  %v1275 = vpop.f32.mrf.mxu0
  %1276 = vmatprep.mubr.f32.mxu0 0.0
  %1277 = vmatmul.mubr.f32.gmra.mxu0 %v1056
  %v1278 = vpop.f32.mrf.mxu0
  %v1279 = vadd.f32 0.0, %v1278
  %v1280 = vpop.f32.mrf.mxu0
  %1281 = vmatprep.mubr.f32.mxu0 0.0
  %1282 = vmatmul.mubr.f32.gmra.mxu0 %v1059
  %v1283 = vpop.f32.mrf.mxu0
  %v1284 = vadd.f32 0.0, %v1283
  %v1285 = vpop.f32.mrf.mxu0
  %1286 = vmatprep.mubr.f32.mxu0 0.0
  %1287 = vmatmul.mubr.f32.gmra.mxu0 %v1062
  %v1288 = vpop.f32.mrf.mxu0
  %v1289 = vadd.f32 0.0, %v1288
  %v1290 = vpop.f32.mrf.mxu0
  %1291 = vmatprep.mubr.f32.mxu0 0.0
  %1292 = vmatmul.mubr.f32.gmra.mxu0 %v1065
  %v1293 = vpop.f32.mrf.mxu0
  %v1294 = vadd.f32 0.0, %v1293
  %v1295 = vpop.f32.mrf.mxu0
  %1296 = vmatprep.mubr.f32.mxu0 0.0
  %1297 = vmatmul.mubr.f32.gmra.mxu0 %v1068
  %v1298 = vpop.f32.mrf.mxu0
  %v1299 = vadd.f32 0.0, %v1298
  %v1300 = vpop.f32.mrf.mxu0
  %1301 = vmatprep.mubr.f32.mxu0 0.0
  %1302 = vmatmul.mubr.f32.gmra.mxu0 %v1071
  %v1303 = vpop.f32.mrf.mxu0
  %v1304 = vadd.f32 0.0, %v1303
  %v1305 = vpop.f32.mrf.mxu0
  %1306 = vmatprep.mubr.f32.mxu0 0.0
  %1307 = vmatmul.mubr.f32.gmra.mxu0 %v1074
  %v1308 = vpop.f32.mrf.mxu0
  %v1309 = vadd.f32 0.0, %v1308
  %v1310 = vpop.f32.mrf.mxu0
  %1311 = vmatprep.mubr.f32.mxu0 0.0
  %1312 = vmatmul.mubr.f32.gmra.mxu0 %v1077
  %v1313 = vpop.f32.mrf.mxu0
  %v1314 = vadd.f32 0.0, %v1313
  %v1315 = vpop.f32.mrf.mxu0
  %1316 = vmatprep.mubr.f32.mxu0 0.0
  %1317 = vmatmul.mubr.f32.gmra.mxu0 %v1080
  %v1318 = vpop.f32.mrf.mxu0
  %v1319 = vadd.f32 0.0, %v1318
  %v1320 = vpop.f32.mrf.mxu0
  %1321 = vmatprep.mubr.f32.mxu0 0.0
  %1322 = vmatmul.mubr.f32.gmra.mxu0 %v1083
  %v1323 = vpop.f32.mrf.mxu0
  %v1324 = vadd.f32 0.0, %v1323
  %v1325 = vpop.f32.mrf.mxu0
  %1326 = vmatprep.mubr.f32.mxu0 0.0
  %1327 = vmatmul.mubr.f32.gmra.mxu0 %v1086
  %v1328 = vpop.f32.mrf.mxu0
  %v1329 = vadd.f32 0.0, %v1328
  %v1330 = vpop.f32.mrf.mxu0
  %1331 = vmatprep.mubr.f32.mxu0 0.0
  %1332 = vmatmul.mubr.f32.gmra.mxu0 %v1089
  %v1333 = vpop.f32.mrf.mxu0
  %v1334 = vadd.f32 0.0, %v1333
  %v1335 = vpop.f32.mrf.mxu0
  %1336 = vmatprep.mubr.f32.mxu0 0.0
  %1337 = vmatmul.mubr.f32.gmra.mxu0 %v1092
  %v1338 = vpop.f32.mrf.mxu0
  %v1339 = vadd.f32 0.0, %v1338
  %v1340 = vpop.f32.mrf.mxu0
  %1341 = vmatprep.mubr.f32.mxu0 0.0
  %1342 = vmatmul.mubr.f32.gmra.mxu0 %v1095
  %v1343 = vpop.f32.mrf.mxu0
  %v1344 = vadd.f32 0.0, %v1343
  %v1345 = vpop.f32.mrf.mxu0
  %1346 = vmatprep.mubr.f32.mxu0 0.0
  %1347 = vmatmul.mubr.f32.gmra.mxu0 %v1098
  %v1348 = vpop.f32.mrf.mxu0
  %v1349 = vadd.f32 0.0, %v1348
  %v1350 = vpop.f32.mrf.mxu0
  %1351 = vmatprep.mubr.f32.mxu0 0.0
  %1352 = vmatmul.mubr.f32.gmra.mxu0 %v1101
  %v1353 = vpop.f32.mrf.mxu0
  %v1354 = vadd.f32 0.0, %v1353
  %v1355 = vpop.f32.mrf.mxu0
  %1356 = vmatprep.mubr.f32.mxu0 0.0
  %1357 = vmatmul.mubr.f32.gmra.mxu0 %v1104
  %v1358 = vpop.f32.mrf.mxu0
  %v1359 = vadd.f32 0.0, %v1358
  %v1360 = vpop.f32.mrf.mxu0
  %1361 = vmatprep.mubr.f32.mxu0 0.0
  %1362 = vmatmul.mubr.f32.gmra.mxu0 %v1107
  %v1363 = vpop.f32.mrf.mxu0
  %v1364 = vadd.f32 0.0, %v1363
  %v1365 = vpop.f32.mrf.mxu0
  %1366 = vmatprep.mubr.f32.mxu0 0.0
  %1367 = vmatmul.mubr.f32.gmra.mxu0 %v1110
  %v1368 = vpop.f32.mrf.mxu0
  %v1369 = vadd.f32 0.0, %v1368
  %v1370 = vpop.f32.mrf.mxu0
  %1371 = vmatprep.mubr.f32.mxu0 0.0
  %1372 = vmatmul.mubr.f32.gmra.mxu0 %v1113
  %v1373 = vpop.f32.mrf.mxu0
  %v1374 = vadd.f32 0.0, %v1373
  %v1375 = vpop.f32.mrf.mxu0
  %1376 = vmatprep.mubr.f32.mxu0 0.0
  %1377 = vmatmul.mubr.f32.gmra.mxu0 %v1116
  %v1378 = vpop.f32.mrf.mxu0
  %v1379 = vadd.f32 0.0, %v1378
  %v1380 = vpop.f32.mrf.mxu0
  %1381 = vmatprep.mubr.f32.mxu0 0.0
  %1382 = vmatmul.mubr.f32.gmra.mxu0 %v1119
  %v1383 = vpop.f32.mrf.mxu0
  %v1384 = vadd.f32 0.0, %v1383
  %v1385 = vpop.f32.mrf.mxu0
  %1386 = vmatprep.mubr.f32.mxu0 0.0
  %1387 = vmatmul.mubr.f32.gmra.mxu0 %v1122
  %v1388 = vpop.f32.mrf.mxu0
  %v1389 = vadd.f32 0.0, %v1388
  %v1390 = vpop.f32.mrf.mxu0
  %1391 = vmatprep.mubr.f32.mxu0 0.0
  %1392 = vmatmul.mubr.f32.gmra.mxu0 %v1125
  %v1393 = vpop.f32.mrf.mxu0
  %v1394 = vadd.f32 0.0, %v1393
  %v1395 = vpop.f32.mrf.mxu0
  %1396 = vmatprep.mubr.f32.mxu0 0.0
  %1397 = vmatmul.mubr.f32.gmra.mxu0 %v1128
  %v1398 = vpop.f32.mrf.mxu0
  %v1399 = vadd.f32 0.0, %v1398
  %v1400 = vpop.f32.mrf.mxu0
  %1401 = vmatprep.mubr.f32.mxu0 0.0
  %1402 = vmatmul.mubr.f32.gmra.mxu0 %v1131
  %v1403 = vpop.f32.mrf.mxu0
  %v1404 = vadd.f32 0.0, %v1403
  %v1405 = vpop.f32.mrf.mxu0
  %1406 = vmatprep.mubr.f32.mxu0 0.0
  %1407 = vmatmul.mubr.f32.gmra.mxu0 %v1134
  %v1408 = vpop.f32.mrf.mxu0
  %v1409 = vadd.f32 0.0, %v1408
  %v1410 = vpop.f32.mrf.mxu0
  %1411 = vmatprep.mubr.f32.mxu0 0.0
  %1412 = vmatmul.mubr.f32.gmra.mxu0 %v1137
  %v1413 = vpop.f32.mrf.mxu0
  %v1414 = vadd.f32 0.0, %v1413
  %v1415 = vpop.f32.mrf.mxu0
  %1416 = vmatprep.mubr.f32.mxu0 0.0
  %1417 = vmatmul.mubr.f32.gmra.mxu0 %v1140
  %v1418 = vpop.f32.mrf.mxu0
  %v1419 = vadd.f32 0.0, %v1418
  %v1420 = vpop.f32.mrf.mxu0
  %1421 = vdwg.mxu0
  %v1422 = vmax.f32 %v926, %v1209
  %v1423 = vmax.f32 %v927, %v1214
  %v1424 = vmax.f32 %v928, %v1219
  %v1425 = vmax.f32 %v929, %v1224
  %v1426 = vmax.f32 %v930, %v1229
  %v1427 = vmax.f32 %v931, %v1234
  %v1428 = vmax.f32 %v932, %v1239
  %v1429 = vmax.f32 %v933, %v1244
  %v1430 = vmax.f32 %v934, %v1249
  %v1431 = vmax.f32 %v935, %v1254
  %v1432 = vmax.f32 %v936, %v1259
  %v1433 = vmax.f32 %v937, %v1264
  %v1434 = vmax.f32 %v938, %v1269
  %v1435 = vmax.f32 %v939, %v1274
  %v1436 = vmax.f32 %v940, %v1279
  %v1437 = vmax.f32 %v941, %v1284
  %v1438 = vmax.f32 %v942, %v1289
  %v1439 = vmax.f32 %v943, %v1294
  %v1440 = vmax.f32 %v944, %v1299
  %v1441 = vmax.f32 %v945, %v1304
  %v1442 = vmax.f32 %v946, %v1309
  %v1443 = vmax.f32 %v947, %v1314
  %v1444 = vmax.f32 %v948, %v1319
  %v1445 = vmax.f32 %v949, %v1324
  %v1446 = vmax.f32 %v950, %v1329
  %v1447 = vmax.f32 %v951, %v1334
  %v1448 = vmax.f32 %v952, %v1339
  %v1449 = vmax.f32 %v953, %v1344
  %v1450 = vmax.f32 %v954, %v1349
  %v1451 = vmax.f32 %v955, %v1354
  %v1452 = vmax.f32 %v956, %v1359
  %v1453 = vmax.f32 %v957, %v1364
  %v1454 = vmax.f32 %v958, %v1369
  %v1455 = vmax.f32 %v959, %v1374
  %v1456 = vmax.f32 %v960, %v1379
  %v1457 = vmax.f32 %v961, %v1384
  %v1458 = vmax.f32 %v962, %v1389
  %v1459 = vmax.f32 %v963, %v1394
  %v1460 = vmax.f32 %v964, %v1399
  %v1461 = vmax.f32 %v965, %v1404
  %v1462 = vmax.f32 %v966, %v1409
  %v1463 = vmax.f32 %v967, %v1414
  %v1464 = vmax.f32 %v968, %v1419
  %s1465 = scalar_lea.vmem %s0, 1032
  %v1466 = vld [vmem:[%s1465] sm:$0xff]
  %v1467 = vld [vmem:[%s1465 + $0x8] sm:$0xff]
  %v1468 = vld [vmem:[%s1465 + $0x10] sm:$0xff]
  %v1469 = vld [vmem:[%s1465 + $0x18] sm:$0xff]
  %v1470 = vld [vmem:[%s1465 + $0x20] sm:$0xff]
  %v1471 = vld [vmem:[%s1465 + $0x28] sm:$0xff]
  %v1472 = vld [vmem:[%s1465 + $0x30] sm:$0xff]
  %v1473 = vld [vmem:[%s1465 + $0x38] sm:$0xff]
  %v1474 = vld [vmem:[%s1465 + $0x40] sm:$0xff]
  %v1475 = vld [vmem:[%s1465 + $0x48] sm:$0xff]
  %v1476 = vld [vmem:[%s1465 + $0x50] sm:$0xff]
  %v1477 = vld [vmem:[%s1465 + $0x58] sm:$0xff]
  %v1478 = vld [vmem:[%s1465 + $0x60] sm:$0xff]
  %v1479 = vld [vmem:[%s1465 + $0x68] sm:$0xff]
  %v1480 = vld [vmem:[%s1465 + $0x70] sm:$0xff]
  %v1481 = vld [vmem:[%s1465 + $0x78] sm:$0xff]
  %v1482 = vld [vmem:[%s1465 + $0x80] sm:$0xff]
  %v1483 = vld [vmem:[%s1465 + $0x88] sm:$0xff]
  %v1484 = vld [vmem:[%s1465 + $0x90] sm:$0xff]
  %v1485 = vld [vmem:[%s1465 + $0x98] sm:$0xff]
  %v1486 = vld [vmem:[%s1465 + $0xa0] sm:$0xff]
  %v1487 = vld [vmem:[%s1465 + $0xa8] sm:$0xff]
  %v1488 = vld [vmem:[%s1465 + $0xb0] sm:$0xff]
  %v1489 = vld [vmem:[%s1465 + $0xb8] sm:$0xff]
  %v1490 = vld [vmem:[%s1465 + $0xc0] sm:$0xff]
  %v1491 = vld [vmem:[%s1465 + $0xc8] sm:$0xff]
  %v1492 = vld [vmem:[%s1465 + $0xd0] sm:$0xff]
  %v1493 = vld [vmem:[%s1465 + $0xd8] sm:$0xff]
  %v1494 = vld [vmem:[%s1465 + $0xe0] sm:$0xff]
  %v1495 = vld [vmem:[%s1465 + $0xe8] sm:$0xff]
  %v1496 = vld [vmem:[%s1465 + $0xf0] sm:$0xff]
  %v1497 = vld [vmem:[%s1465 + $0xf8] sm:$0xff]
  %v1498 = vld [vmem:[%s1465 + $0x100] sm:$0xff]
  %v1499 = vld [vmem:[%s1465 + $0x108] sm:$0xff]
  %v1500 = vld [vmem:[%s1465 + $0x110] sm:$0xff]
  %v1501 = vld [vmem:[%s1465 + $0x118] sm:$0xff]
  %v1502 = vld [vmem:[%s1465 + $0x120] sm:$0xff]
  %v1503 = vld [vmem:[%s1465 + $0x128] sm:$0xff]
  %v1504 = vld [vmem:[%s1465 + $0x130] sm:$0xff]
  %v1505 = vld [vmem:[%s1465 + $0x138] sm:$0xff]
  %v1506 = vld [vmem:[%s1465 + $0x140] sm:$0xff]
  %v1507 = vld [vmem:[%s1465 + $0x148] sm:$0xff]
  %v1508 = vld [vmem:[%s1465 + $0x150] sm:$0x3]
  %v1510 = vsel %vm59, %v1466, 0
  %v1513 = vsel %vm59, %v1467, 0
  %v1516 = vsel %vm59, %v1468, 0
  %v1519 = vsel %vm59, %v1469, 0
  %v1522 = vsel %vm59, %v1470, 0
  %v1525 = vsel %vm59, %v1471, 0
  %v1528 = vsel %vm59, %v1472, 0
  %v1531 = vsel %vm59, %v1473, 0
  %v1534 = vsel %vm59, %v1474, 0
  %v1537 = vsel %vm59, %v1475, 0
  %v1540 = vsel %vm59, %v1476, 0
  %v1543 = vsel %vm59, %v1477, 0
  %v1546 = vsel %vm59, %v1478, 0
  %v1549 = vsel %vm59, %v1479, 0
  %v1552 = vsel %vm59, %v1480, 0
  %v1555 = vsel %vm59, %v1481, 0
  %v1558 = vsel %vm59, %v1482, 0
  %v1561 = vsel %vm59, %v1483, 0
  %v1564 = vsel %vm59, %v1484, 0
  %v1567 = vsel %vm59, %v1485, 0
  %v1570 = vsel %vm59, %v1486, 0
  %v1573 = vsel %vm59, %v1487, 0
  %v1576 = vsel %vm59, %v1488, 0
  %v1579 = vsel %vm59, %v1489, 0
  %v1582 = vsel %vm59, %v1490, 0
  %v1585 = vsel %vm59, %v1491, 0
  %v1588 = vsel %vm59, %v1492, 0
  %v1591 = vsel %vm59, %v1493, 0
  %v1594 = vsel %vm59, %v1494, 0
  %v1597 = vsel %vm59, %v1495, 0
  %v1600 = vsel %vm59, %v1496, 0
  %v1603 = vsel %vm59, %v1497, 0
  %v1606 = vsel %vm59, %v1498, 0
  %v1609 = vsel %vm59, %v1499, 0
  %v1612 = vsel %vm59, %v1500, 0
  %v1615 = vsel %vm59, %v1501, 0
  %v1618 = vsel %vm59, %v1502, 0
  %v1621 = vsel %vm59, %v1503, 0
  %v1624 = vsel %vm59, %v1504, 0
  %v1627 = vsel %vm59, %v1505, 0
  %v1630 = vsel %vm59, %v1506, 0
  %v1633 = vsel %vm59, %v1507, 0
  %v1636 = vsel %vm59, %v1508, 0
  %1638 = vmatprep.subr.mxu0 0.0
  %1639 = vmatpush1.msra.mxu0 0.0
  %1640 = vmatprep.subr.mxu0 0.0
  %1641 = vmatpush1.msra.mxu0 0.0
  %1642 = vmatprep.subr.mxu0 0.0
  %1643 = vmatpush1.msra.mxu0 0.0
  %1644 = vmatprep.subr.mxu0 0.0
  %1645 = vmatpush1.msra.mxu0 0.0
  %1646 = vmatprep.subr.mxu0 0.0
  %1647 = vmatpush1.msra.mxu0 0.0
  %1648 = vmatprep.subr.mxu0 0.0
  %1649 = vmatpush1.msra.mxu0 0.0
  %1650 = vmatprep.subr.mxu0 0.0
  %1651 = vmatpush1.msra.mxu0 0.0
  %1652 = vmatprep.subr.mxu0 0.0
  %1653 = vmatpush1.msra.mxu0 0.0
  %1654 = vmatprep.subr.mxu0 0.0
  %1655 = vmatpush1.msra.mxu0 0.0
  %1656 = vmatprep.subr.mxu0 0.0
  %1657 = vmatpush1.msra.mxu0 0.0
  %1658 = vmatprep.subr.mxu0 0.0
  %1659 = vmatpush1.msra.mxu0 0.0
  %1660 = vmatprep.subr.mxu0 0.0
  %1661 = vmatpush1.msra.mxu0 0.0
  %1662 = vmatprep.subr.mxu0 0.0
  %1663 = vmatpush1.msra.mxu0 0.0
  %1664 = vmatprep.subr.mxu0 0.0
  %1665 = vmatpush1.msra.mxu0 0.0
  %1666 = vmatprep.subr.mxu0 0.0
  %1667 = vmatpush1.msra.mxu0 %v191
  %1668 = vmatprep.subr.mxu0 0.0
  %1669 = vmatpush1.msra.mxu0 %v57
  %1670 = vmatprep.subr.mxu0 0.0
  %1671 = vmatpush2.msra.mxu0 0.0
  %1672 = vmatprep.subr.mxu0 0.0
  %1673 = vmatpush2.msra.mxu0 0.0
  %1674 = vmatprep.subr.mxu0 0.0
  %1675 = vmatpush2.msra.mxu0 0.0
  %1676 = vmatprep.subr.mxu0 0.0
  %1677 = vmatpush2.msra.mxu0 0.0
  %1678 = vmatprep.subr.mxu0 0.0
  %1679 = vmatpush2.msra.mxu0 0.0
  %1680 = vmatprep.subr.mxu0 0.0
  %1681 = vmatpush2.msra.mxu0 0.0
  %1682 = vmatprep.subr.mxu0 0.0
  %1683 = vmatpush2.msra.mxu0 0.0
  %1684 = vmatprep.subr.mxu0 0.0
  %1685 = vmatpush2.msra.mxu0 0.0
  %1686 = vmatprep.subr.mxu0 0.0
  %1687 = vmatpush2.msra.mxu0 0.0
  %1688 = vmatprep.subr.mxu0 0.0
  %1689 = vmatpush2.msra.mxu0 0.0
  %1690 = vmatprep.subr.mxu0 0.0
  %1691 = vmatpush2.msra.mxu0 0.0
  %1692 = vmatprep.subr.mxu0 0.0
  %1693 = vmatpush2.msra.mxu0 0.0
  %1694 = vmatprep.subr.mxu0 0.0
  %1695 = vmatpush2.msra.mxu0 0.0
  %1696 = vmatprep.subr.mxu0 0.0
  %1697 = vmatpush2.msra.mxu0 0.0
  %1698 = vmatprep.subr.mxu0 0.0
  %1699 = vmatpush2.msra.mxu0 0.0
  %1700 = vmatprep.subr.mxu0 0.0
  %1701 = vmatpush2.msra.mxu0 0.0
  %1702 = vmatprep.mubr.f32.mxu0 0.0
  %1703 = vmatmul.mubr.f32.gmra.mxu0 %v1510
  %v1704 = vpop.f32.mrf.mxu0
  %v1705 = vadd.f32 0.0, %v1704
  %v1706 = vpop.f32.mrf.mxu0
  %1707 = vmatprep.mubr.f32.mxu0 0.0
  %1708 = vmatmul.mubr.f32.gmra.mxu0 %v1513
  %v1709 = vpop.f32.mrf.mxu0
  %v1710 = vadd.f32 0.0, %v1709
  %v1711 = vpop.f32.mrf.mxu0
  %1712 = vmatprep.mubr.f32.mxu0 0.0
  %1713 = vmatmul.mubr.f32.gmra.mxu0 %v1516
  %v1714 = vpop.f32.mrf.mxu0
  %v1715 = vadd.f32 0.0, %v1714
  %v1716 = vpop.f32.mrf.mxu0
  %1717 = vmatprep.mubr.f32.mxu0 0.0
  %1718 = vmatmul.mubr.f32.gmra.mxu0 %v1519
  %v1719 = vpop.f32.mrf.mxu0
  %v1720 = vadd.f32 0.0, %v1719
  %v1721 = vpop.f32.mrf.mxu0
  %1722 = vmatprep.mubr.f32.mxu0 0.0
  %1723 = vmatmul.mubr.f32.gmra.mxu0 %v1522
  %v1724 = vpop.f32.mrf.mxu0
  %v1725 = vadd.f32 0.0, %v1724
  %v1726 = vpop.f32.mrf.mxu0
  %1727 = vmatprep.mubr.f32.mxu0 0.0
  %1728 = vmatmul.mubr.f32.gmra.mxu0 %v1525
  %v1729 = vpop.f32.mrf.mxu0
  %v1730 = vadd.f32 0.0, %v1729
  %v1731 = vpop.f32.mrf.mxu0
  %1732 = vmatprep.mubr.f32.mxu0 0.0
  %1733 = vmatmul.mubr.f32.gmra.mxu0 %v1528
  %v1734 = vpop.f32.mrf.mxu0
  %v1735 = vadd.f32 0.0, %v1734
  %v1736 = vpop.f32.mrf.mxu0
  %1737 = vmatprep.mubr.f32.mxu0 0.0
  %1738 = vmatmul.mubr.f32.gmra.mxu0 %v1531
  %v1739 = vpop.f32.mrf.mxu0
  %v1740 = vadd.f32 0.0, %v1739
  %v1741 = vpop.f32.mrf.mxu0
  %1742 = vmatprep.mubr.f32.mxu0 0.0
  %1743 = vmatmul.mubr.f32.gmra.mxu0 %v1534
  %v1744 = vpop.f32.mrf.mxu0
  %v1745 = vadd.f32 0.0, %v1744
  %v1746 = vpop.f32.mrf.mxu0
  %1747 = vmatprep.mubr.f32.mxu0 0.0
  %1748 = vmatmul.mubr.f32.gmra.mxu0 %v1537
  %v1749 = vpop.f32.mrf.mxu0
  %v1750 = vadd.f32 0.0, %v1749
  %v1751 = vpop.f32.mrf.mxu0
  %1752 = vmatprep.mubr.f32.mxu0 0.0
  %1753 = vmatmul.mubr.f32.gmra.mxu0 %v1540
  %v1754 = vpop.f32.mrf.mxu0
  %v1755 = vadd.f32 0.0, %v1754
  %v1756 = vpop.f32.mrf.mxu0
  %1757 = vmatprep.mubr.f32.mxu0 0.0
  %1758 = vmatmul.mubr.f32.gmra.mxu0 %v1543
  %v1759 = vpop.f32.mrf.mxu0
  %v1760 = vadd.f32 0.0, %v1759
  %v1761 = vpop.f32.mrf.mxu0
  %1762 = vmatprep.mubr.f32.mxu0 0.0
  %1763 = vmatmul.mubr.f32.gmra.mxu0 %v1546
  %v1764 = vpop.f32.mrf.mxu0
  %v1765 = vadd.f32 0.0, %v1764
  %v1766 = vpop.f32.mrf.mxu0
  %1767 = vmatprep.mubr.f32.mxu0 0.0
  %1768 = vmatmul.mubr.f32.gmra.mxu0 %v1549
  %v1769 = vpop.f32.mrf.mxu0
  %v1770 = vadd.f32 0.0, %v1769
  %v1771 = vpop.f32.mrf.mxu0
  %1772 = vmatprep.mubr.f32.mxu0 0.0
  %1773 = vmatmul.mubr.f32.gmra.mxu0 %v1552
  %v1774 = vpop.f32.mrf.mxu0
  %v1775 = vadd.f32 0.0, %v1774
  %v1776 = vpop.f32.mrf.mxu0
  %1777 = vmatprep.mubr.f32.mxu0 0.0
  %1778 = vmatmul.mubr.f32.gmra.mxu0 %v1555
  %v1779 = vpop.f32.mrf.mxu0
  %v1780 = vadd.f32 0.0, %v1779
  %v1781 = vpop.f32.mrf.mxu0
  %1782 = vmatprep.mubr.f32.mxu0 0.0
  %1783 = vmatmul.mubr.f32.gmra.mxu0 %v1558
  %v1784 = vpop.f32.mrf.mxu0
  %v1785 = vadd.f32 0.0, %v1784
  %v1786 = vpop.f32.mrf.mxu0
  %1787 = vmatprep.mubr.f32.mxu0 0.0
  %1788 = vmatmul.mubr.f32.gmra.mxu0 %v1561
  %v1789 = vpop.f32.mrf.mxu0
  %v1790 = vadd.f32 0.0, %v1789
  %v1791 = vpop.f32.mrf.mxu0
  %1792 = vmatprep.mubr.f32.mxu0 0.0
  %1793 = vmatmul.mubr.f32.gmra.mxu0 %v1564
  %v1794 = vpop.f32.mrf.mxu0
  %v1795 = vadd.f32 0.0, %v1794
  %v1796 = vpop.f32.mrf.mxu0
  %1797 = vmatprep.mubr.f32.mxu0 0.0
  %1798 = vmatmul.mubr.f32.gmra.mxu0 %v1567
  %v1799 = vpop.f32.mrf.mxu0
  %v1800 = vadd.f32 0.0, %v1799
  %v1801 = vpop.f32.mrf.mxu0
  %1802 = vmatprep.mubr.f32.mxu0 0.0
  %1803 = vmatmul.mubr.f32.gmra.mxu0 %v1570
  %v1804 = vpop.f32.mrf.mxu0
  %v1805 = vadd.f32 0.0, %v1804
  %v1806 = vpop.f32.mrf.mxu0
  %1807 = vmatprep.mubr.f32.mxu0 0.0
  %1808 = vmatmul.mubr.f32.gmra.mxu0 %v1573
  %v1809 = vpop.f32.mrf.mxu0
  %v1810 = vadd.f32 0.0, %v1809
  %v1811 = vpop.f32.mrf.mxu0
  %1812 = vmatprep.mubr.f32.mxu0 0.0
  %1813 = vmatmul.mubr.f32.gmra.mxu0 %v1576
  %v1814 = vpop.f32.mrf.mxu0
  %v1815 = vadd.f32 0.0, %v1814
  %v1816 = vpop.f32.mrf.mxu0
  %1817 = vmatprep.mubr.f32.mxu0 0.0
  %1818 = vmatmul.mubr.f32.gmra.mxu0 %v1579
  %v1819 = vpop.f32.mrf.mxu0
  %v1820 = vadd.f32 0.0, %v1819
  %v1821 = vpop.f32.mrf.mxu0
  %1822 = vmatprep.mubr.f32.mxu0 0.0
  %1823 = vmatmul.mubr.f32.gmra.mxu0 %v1582
  %v1824 = vpop.f32.mrf.mxu0
  %v1825 = vadd.f32 0.0, %v1824
  %v1826 = vpop.f32.mrf.mxu0
  %1827 = vmatprep.mubr.f32.mxu0 0.0
  %1828 = vmatmul.mubr.f32.gmra.mxu0 %v1585
  %v1829 = vpop.f32.mrf.mxu0
  %v1830 = vadd.f32 0.0, %v1829
  %v1831 = vpop.f32.mrf.mxu0
  %1832 = vmatprep.mubr.f32.mxu0 0.0
  %1833 = vmatmul.mubr.f32.gmra.mxu0 %v1588
  %v1834 = vpop.f32.mrf.mxu0
  %v1835 = vadd.f32 0.0, %v1834
  %v1836 = vpop.f32.mrf.mxu0
  %1837 = vmatprep.mubr.f32.mxu0 0.0
  %1838 = vmatmul.mubr.f32.gmra.mxu0 %v1591
  %v1839 = vpop.f32.mrf.mxu0
  %v1840 = vadd.f32 0.0, %v1839
  %v1841 = vpop.f32.mrf.mxu0
  %1842 = vmatprep.mubr.f32.mxu0 0.0
  %1843 = vmatmul.mubr.f32.gmra.mxu0 %v1594
  %v1844 = vpop.f32.mrf.mxu0
  %v1845 = vadd.f32 0.0, %v1844
  %v1846 = vpop.f32.mrf.mxu0
  %1847 = vmatprep.mubr.f32.mxu0 0.0
  %1848 = vmatmul.mubr.f32.gmra.mxu0 %v1597
  %v1849 = vpop.f32.mrf.mxu0
  %v1850 = vadd.f32 0.0, %v1849
  %v1851 = vpop.f32.mrf.mxu0
  %1852 = vmatprep.mubr.f32.mxu0 0.0
  %1853 = vmatmul.mubr.f32.gmra.mxu0 %v1600
  %v1854 = vpop.f32.mrf.mxu0
  %v1855 = vadd.f32 0.0, %v1854
  %v1856 = vpop.f32.mrf.mxu0
  %1857 = vmatprep.mubr.f32.mxu0 0.0
  %1858 = vmatmul.mubr.f32.gmra.mxu0 %v1603
  %v1859 = vpop.f32.mrf.mxu0
  %v1860 = vadd.f32 0.0, %v1859
  %v1861 = vpop.f32.mrf.mxu0
  %1862 = vmatprep.mubr.f32.mxu0 0.0
  %1863 = vmatmul.mubr.f32.gmra.mxu0 %v1606
  %v1864 = vpop.f32.mrf.mxu0
  %v1865 = vadd.f32 0.0, %v1864
  %v1866 = vpop.f32.mrf.mxu0
  %1867 = vmatprep.mubr.f32.mxu0 0.0
  %1868 = vmatmul.mubr.f32.gmra.mxu0 %v1609
  %v1869 = vpop.f32.mrf.mxu0
  %v1870 = vadd.f32 0.0, %v1869
  %v1871 = vpop.f32.mrf.mxu0
  %1872 = vmatprep.mubr.f32.mxu0 0.0
  %1873 = vmatmul.mubr.f32.gmra.mxu0 %v1612
  %v1874 = vpop.f32.mrf.mxu0
  %v1875 = vadd.f32 0.0, %v1874
  %v1876 = vpop.f32.mrf.mxu0
  %1877 = vmatprep.mubr.f32.mxu0 0.0
  %1878 = vmatmul.mubr.f32.gmra.mxu0 %v1615
  %v1879 = vpop.f32.mrf.mxu0
  %v1880 = vadd.f32 0.0, %v1879
  %v1881 = vpop.f32.mrf.mxu0
  %1882 = vmatprep.mubr.f32.mxu0 0.0
  %1883 = vmatmul.mubr.f32.gmra.mxu0 %v1618
  %v1884 = vpop.f32.mrf.mxu0
  %v1885 = vadd.f32 0.0, %v1884
  %v1886 = vpop.f32.mrf.mxu0
  %1887 = vmatprep.mubr.f32.mxu0 0.0
  %1888 = vmatmul.mubr.f32.gmra.mxu0 %v1621
  %v1889 = vpop.f32.mrf.mxu0
  %v1890 = vadd.f32 0.0, %v1889
  %v1891 = vpop.f32.mrf.mxu0
  %1892 = vmatprep.mubr.f32.mxu0 0.0
  %1893 = vmatmul.mubr.f32.gmra.mxu0 %v1624
  %v1894 = vpop.f32.mrf.mxu0
  %v1895 = vadd.f32 0.0, %v1894
  %v1896 = vpop.f32.mrf.mxu0
  %1897 = vmatprep.mubr.f32.mxu0 0.0
  %1898 = vmatmul.mubr.f32.gmra.mxu0 %v1627
  %v1899 = vpop.f32.mrf.mxu0
  %v1900 = vadd.f32 0.0, %v1899
  %v1901 = vpop.f32.mrf.mxu0
  %1902 = vmatprep.mubr.f32.mxu0 0.0
  %1903 = vmatmul.mubr.f32.gmra.mxu0 %v1630
  %v1904 = vpop.f32.mrf.mxu0
  %v1905 = vadd.f32 0.0, %v1904
  %v1906 = vpop.f32.mrf.mxu0
  %1907 = vmatprep.mubr.f32.mxu0 0.0
  %1908 = vmatmul.mubr.f32.gmra.mxu0 %v1633
  %v1909 = vpop.f32.mrf.mxu0
  %v1910 = vadd.f32 0.0, %v1909
  %v1911 = vpop.f32.mrf.mxu0
  %1912 = vmatprep.mubr.f32.mxu0 0.0
  %1913 = vmatmul.mubr.f32.gmra.mxu0 %v1636
  %v1914 = vpop.f32.mrf.mxu0
  %v1915 = vadd.f32 0.0, %v1914
  %v1916 = vpop.f32.mrf.mxu0
  %1917 = vdwg.mxu0
  %v1918 = vmax.f32 %v1422, %v1705
  %v1919 = vmax.f32 %v1423, %v1710
  %v1920 = vmax.f32 %v1424, %v1715
  %v1921 = vmax.f32 %v1425, %v1720
  %v1922 = vmax.f32 %v1426, %v1725
  %v1923 = vmax.f32 %v1427, %v1730
  %v1924 = vmax.f32 %v1428, %v1735
  %v1925 = vmax.f32 %v1429, %v1740
  %v1926 = vmax.f32 %v1430, %v1745
  %v1927 = vmax.f32 %v1431, %v1750
  %v1928 = vmax.f32 %v1432, %v1755
  %v1929 = vmax.f32 %v1433, %v1760
  %v1930 = vmax.f32 %v1434, %v1765
  %v1931 = vmax.f32 %v1435, %v1770
  %v1932 = vmax.f32 %v1436, %v1775
  %v1933 = vmax.f32 %v1437, %v1780
  %v1934 = vmax.f32 %v1438, %v1785
  %v1935 = vmax.f32 %v1439, %v1790
  %v1936 = vmax.f32 %v1440, %v1795
  %v1937 = vmax.f32 %v1441, %v1800
  %v1938 = vmax.f32 %v1442, %v1805
  %v1939 = vmax.f32 %v1443, %v1810
  %v1940 = vmax.f32 %v1444, %v1815
  %v1941 = vmax.f32 %v1445, %v1820
  %v1942 = vmax.f32 %v1446, %v1825
  %v1943 = vmax.f32 %v1447, %v1830
  %v1944 = vmax.f32 %v1448, %v1835
  %v1945 = vmax.f32 %v1449, %v1840
  %v1946 = vmax.f32 %v1450, %v1845
  %v1947 = vmax.f32 %v1451, %v1850
  %v1948 = vmax.f32 %v1452, %v1855
  %v1949 = vmax.f32 %v1453, %v1860
  %v1950 = vmax.f32 %v1454, %v1865
  %v1951 = vmax.f32 %v1455, %v1870
  %v1952 = vmax.f32 %v1456, %v1875
  %v1953 = vmax.f32 %v1457, %v1880
  %v1954 = vmax.f32 %v1458, %v1885
  %v1955 = vmax.f32 %v1459, %v1890
  %v1956 = vmax.f32 %v1460, %v1895
  %v1957 = vmax.f32 %v1461, %v1900
  %v1958 = vmax.f32 %v1462, %v1905
  %v1959 = vmax.f32 %v1463, %v1910
  %v1960 = vmax.f32 %v1464, %v1915
  %v1961 = vld [vmem:[%s2] sm:$0x1]
  %v1963 = vlaneseq
  %v1964 = vshrl.u32 %v1963, 7
  %v1965 = vsub.s32 0, %v1964
  %v1966 = vrot.slane %v1961, %v1965
  %v1968 = vadd.f32 %v1918, %v1966
  %v1969 = vadd.f32 %v1919, %v1966
  %v1970 = vadd.f32 %v1920, %v1966
  %v1971 = vadd.f32 %v1921, %v1966
  %v1972 = vadd.f32 %v1922, %v1966
  %v1973 = vadd.f32 %v1923, %v1966
  %v1974 = vadd.f32 %v1924, %v1966
  %v1975 = vadd.f32 %v1925, %v1966
  %v1976 = vadd.f32 %v1926, %v1966
  %v1977 = vadd.f32 %v1927, %v1966
  %v1978 = vadd.f32 %v1928, %v1966
  %v1979 = vadd.f32 %v1929, %v1966
  %v1980 = vadd.f32 %v1930, %v1966
  %v1981 = vadd.f32 %v1931, %v1966
  %v1982 = vadd.f32 %v1932, %v1966
  %v1983 = vadd.f32 %v1933, %v1966
  %v1984 = vadd.f32 %v1934, %v1966
  %v1985 = vadd.f32 %v1935, %v1966
  %v1986 = vadd.f32 %v1936, %v1966
  %v1987 = vadd.f32 %v1937, %v1966
  %v1988 = vadd.f32 %v1938, %v1966
  %v1989 = vadd.f32 %v1939, %v1966
  %v1990 = vadd.f32 %v1940, %v1966
  %v1991 = vadd.f32 %v1941, %v1966
  %v1992 = vadd.f32 %v1942, %v1966
  %v1993 = vadd.f32 %v1943, %v1966
  %v1994 = vadd.f32 %v1944, %v1966
  %v1995 = vadd.f32 %v1945, %v1966
  %v1996 = vadd.f32 %v1946, %v1966
  %v1997 = vadd.f32 %v1947, %v1966
  %v1998 = vadd.f32 %v1948, %v1966
  %v1999 = vadd.f32 %v1949, %v1966
  %v2000 = vadd.f32 %v1950, %v1966
  %v2001 = vadd.f32 %v1951, %v1966
  %v2002 = vadd.f32 %v1952, %v1966
  %v2003 = vadd.f32 %v1953, %v1966
  %v2004 = vadd.f32 %v1954, %v1966
  %v2005 = vadd.f32 %v1955, %v1966
  %v2006 = vadd.f32 %v1956, %v1966
  %v2007 = vadd.f32 %v1957, %v1966
  %v2008 = vadd.f32 %v1958, %v1966
  %v2009 = vadd.f32 %v1959, %v1966
  %v2010 = vadd.f32 %v1960, %v1966
  %vm2011 = vcmask 523264
  %2012 = vst.msk [vmem:[%s3] sm:$0xff] %vm2011, %v1968
  %2013 = vst.msk [vmem:[%s3 + $0x8] sm:$0xff] %vm2011, %v1969
  %2014 = vst.msk [vmem:[%s3 + $0x10] sm:$0xff] %vm2011, %v1970
  %2015 = vst.msk [vmem:[%s3 + $0x18] sm:$0xff] %vm2011, %v1971
  %2016 = vst.msk [vmem:[%s3 + $0x20] sm:$0xff] %vm2011, %v1972
  %2017 = vst.msk [vmem:[%s3 + $0x28] sm:$0xff] %vm2011, %v1973
  %2018 = vst.msk [vmem:[%s3 + $0x30] sm:$0xff] %vm2011, %v1974
  %2019 = vst.msk [vmem:[%s3 + $0x38] sm:$0xff] %vm2011, %v1975
  %2020 = vst.msk [vmem:[%s3 + $0x40] sm:$0xff] %vm2011, %v1976
  %2021 = vst.msk [vmem:[%s3 + $0x48] sm:$0xff] %vm2011, %v1977
  %2022 = vst.msk [vmem:[%s3 + $0x50] sm:$0xff] %vm2011, %v1978
  %2023 = vst.msk [vmem:[%s3 + $0x58] sm:$0xff] %vm2011, %v1979
  %2024 = vst.msk [vmem:[%s3 + $0x60] sm:$0xff] %vm2011, %v1980
  %2025 = vst.msk [vmem:[%s3 + $0x68] sm:$0xff] %vm2011, %v1981
  %2026 = vst.msk [vmem:[%s3 + $0x70] sm:$0xff] %vm2011, %v1982
  %2027 = vst.msk [vmem:[%s3 + $0x78] sm:$0xff] %vm2011, %v1983
  %2028 = vst.msk [vmem:[%s3 + $0x80] sm:$0xff] %vm2011, %v1984
  %2029 = vst.msk [vmem:[%s3 + $0x88] sm:$0xff] %vm2011, %v1985
  %2030 = vst.msk [vmem:[%s3 + $0x90] sm:$0xff] %vm2011, %v1986
  %2031 = vst.msk [vmem:[%s3 + $0x98] sm:$0xff] %vm2011, %v1987
  %2032 = vst.msk [vmem:[%s3 + $0xa0] sm:$0xff] %vm2011, %v1988
  %2033 = vst.msk [vmem:[%s3 + $0xa8] sm:$0xff] %vm2011, %v1989
  %2034 = vst.msk [vmem:[%s3 + $0xb0] sm:$0xff] %vm2011, %v1990
  %2035 = vst.msk [vmem:[%s3 + $0xb8] sm:$0xff] %vm2011, %v1991
  %2036 = vst.msk [vmem:[%s3 + $0xc0] sm:$0xff] %vm2011, %v1992
  %2037 = vst.msk [vmem:[%s3 + $0xc8] sm:$0xff] %vm2011, %v1993
  %2038 = vst.msk [vmem:[%s3 + $0xd0] sm:$0xff] %vm2011, %v1994
  %2039 = vst.msk [vmem:[%s3 + $0xd8] sm:$0xff] %vm2011, %v1995
  %2040 = vst.msk [vmem:[%s3 + $0xe0] sm:$0xff] %vm2011, %v1996
  %2041 = vst.msk [vmem:[%s3 + $0xe8] sm:$0xff] %vm2011, %v1997
  %2042 = vst.msk [vmem:[%s3 + $0xf0] sm:$0xff] %vm2011, %v1998
  %2043 = vst.msk [vmem:[%s3 + $0xf8] sm:$0xff] %vm2011, %v1999
  %2044 = vst.msk [vmem:[%s3 + $0x100] sm:$0xff] %vm2011, %v2000
  %2045 = vst.msk [vmem:[%s3 + $0x108] sm:$0xff] %vm2011, %v2001
  %2046 = vst.msk [vmem:[%s3 + $0x110] sm:$0xff] %vm2011, %v2002
  %2047 = vst.msk [vmem:[%s3 + $0x118] sm:$0xff] %vm2011, %v2003
  %2048 = vst.msk [vmem:[%s3 + $0x120] sm:$0xff] %vm2011, %v2004
  %2049 = vst.msk [vmem:[%s3 + $0x128] sm:$0xff] %vm2011, %v2005
  %2050 = vst.msk [vmem:[%s3 + $0x130] sm:$0xff] %vm2011, %v2006
  %2051 = vst.msk [vmem:[%s3 + $0x138] sm:$0xff] %vm2011, %v2007
  %2052 = vst.msk [vmem:[%s3 + $0x140] sm:$0xff] %vm2011, %v2008
  %2053 = vst.msk [vmem:[%s3 + $0x148] sm:$0xff] %vm2011, %v2009
  %vm2054 = vcmask 517120
  %2055 = vst.msk [vmem:[%s3 + $0x150] sm:$0x3] %vm2054, %v2010
  // Predicated region
  $region14: #{forward.3} parent=0 // pred_check
    _
  $region15: #{forward.3} parent=0 // pred_check_branch
    %2057 = sbr.rel (0) target = $region17
  $region16: #{forward.3} parent=0 // pred_region
    _
  $region17: #{forward.3} parent=0 // pred_fallthru
    _
  // Predicated region
  $region18: #{forward.3} parent=0 // pred_check
    _
  $region19: #{forward.3} parent=0 // pred_check_branch
    %2059 = sbr.rel (0) target = $region21
  $region20: #{forward.3} parent=0 // pred_region
    _
  $region21: #{forward.3} parent=0 // pred_fallthru
    _

// kernel: forward.4
$region0: #{forward.4}
  #allocation0 [shape = 'u32[]', space=smem, size = 0x4, offset = 0x4, fixed_abs, tag = 'smem constant byte address 0x4 - core index']
  #allocation1 [shape = 'u32[144,128]{1,0:T(1,128)}', space=vmem, size = 0x12000, scoped, tag = 'internal scratch']
  %s0 = inlined_call_operand.vmem [shape: f32[242,576], index: 0, kind: input, shape index: {}]
  %s1 = inlined_call_operand.vmem [shape: f32[576,32], index: 1, kind: input, shape index: {}]
  %s2 = inlined_call_operand.vmem [shape: f32[1,32], index: 2, kind: input, shape index: {}]
  %s3 = inlined_call_operand.vmem [shape: f32[242,32], index: 3, kind: output, shape index: {}]
  %s4 = sld [smem:[#allocation0]]
  $region22: #{forward.4} parent=0
    _
  %s6 = ssub.s32 1, %s4
  %s7 = scalar_select 0, %s6, %s4
  // Predicated region
  $region2: #{forward.4} parent=0 // pred_check
    _
  $region3: #{forward.4} parent=0 // pred_check_branch
    %9 = sbr.rel (0) target = $region5
  $region4: #{forward.4} parent=0 // pred_region
    _
  $region5: #{forward.4} parent=0 // pred_fallthru
    _
  // Predicated region
  $region6: #{forward.4} parent=0 // pred_check
    _
  $region7: #{forward.4} parent=0 // pred_check_branch
    %11 = sbr.rel (0) target = $region9
  $region8: #{forward.4} parent=0 // pred_region
    _
  $region9: #{forward.4} parent=0 // pred_fallthru
    _
  // Predicated region
  $region10: #{forward.4} parent=0 // pred_check
    _
  $region11: #{forward.4} parent=0 // pred_check_branch
    %13 = sbr.rel (0) target = $region13
  $region12: #{forward.4} parent=0 // pred_region
    _
  $region13: #{forward.4} parent=0 // pred_fallthru
    _
  %v14 = vld [vmem:[%s0] sm:$0xff]
  %v15 = vld [vmem:[%s0 + $0x8] sm:$0xff]
  %v16 = vld [vmem:[%s0 + $0x10] sm:$0xff]
  %v17 = vld [vmem:[%s0 + $0x18] sm:$0xff]
  %v18 = vld [vmem:[%s0 + $0x20] sm:$0xff]
  %v19 = vld [vmem:[%s0 + $0x28] sm:$0xff]
  %v20 = vld [vmem:[%s0 + $0x30] sm:$0xff]
  %v21 = vld [vmem:[%s0 + $0x38] sm:$0xff]
  %v22 = vld [vmem:[%s0 + $0x40] sm:$0xff]
  %v23 = vld [vmem:[%s0 + $0x48] sm:$0xff]
  %v24 = vld [vmem:[%s0 + $0x50] sm:$0xff]
  %v25 = vld [vmem:[%s0 + $0x58] sm:$0xff]
  %v26 = vld [vmem:[%s0 + $0x60] sm:$0xff]
  %v27 = vld [vmem:[%s0 + $0x68] sm:$0xff]
  %v28 = vld [vmem:[%s0 + $0x70] sm:$0xff]
  %v29 = vld [vmem:[%s0 + $0x78] sm:$0xff]
  %v30 = vld [vmem:[%s0 + $0x80] sm:$0xff]
  %v31 = vld [vmem:[%s0 + $0x88] sm:$0xff]
  %v32 = vld [vmem:[%s0 + $0x90] sm:$0xff]
  %v33 = vld [vmem:[%s0 + $0x98] sm:$0xff]
  %v34 = vld [vmem:[%s0 + $0xa0] sm:$0xff]
  %v35 = vld [vmem:[%s0 + $0xa8] sm:$0xff]
  %v36 = vld [vmem:[%s0 + $0xb0] sm:$0xff]
  %v37 = vld [vmem:[%s0 + $0xb8] sm:$0xff]
  %v38 = vld [vmem:[%s0 + $0xc0] sm:$0xff]
  %v39 = vld [vmem:[%s0 + $0xc8] sm:$0xff]
  %v40 = vld [vmem:[%s0 + $0xd0] sm:$0xff]
  %v41 = vld [vmem:[%s0 + $0xd8] sm:$0xff]
  %v42 = vld [vmem:[%s0 + $0xe0] sm:$0xff]
  %v43 = vld [vmem:[%s0 + $0xe8] sm:$0xff]
  %v44 = vld [vmem:[%s0 + $0xf0] sm:$0xff]
  %v45 = vld [vmem:[%s0 + $0xf8] sm:$0xff]
  %v46 = vld [vmem:[%s0 + $0x100] sm:$0xff]
  %v47 = vld [vmem:[%s0 + $0x108] sm:$0xff]
  %v48 = vld [vmem:[%s0 + $0x110] sm:$0xff]
  %v49 = vld [vmem:[%s0 + $0x118] sm:$0xff]
  %v50 = vld [vmem:[%s0 + $0x120] sm:$0xff]
  %v51 = vld [vmem:[%s0 + $0x128] sm:$0xff]
  %v52 = vld [vmem:[%s0 + $0x130] sm:$0xff]
  %v53 = vld [vmem:[%s0 + $0x138] sm:$0xff]
  %v54 = vld [vmem:[%s0 + $0x140] sm:$0xff]
  %v55 = vld [vmem:[%s0 + $0x148] sm:$0xff]
  %v56 = vld [vmem:[%s0 + $0x150] sm:$0xff]
  %v57 = vld [vmem:[%s0 + $0x158] sm:$0xff]
  %v58 = vld [vmem:[%s0 + $0x160] sm:$0xff]
  %v59 = vld [vmem:[%s0 + $0x168] sm:$0xff]
  %v60 = vld [vmem:[%s0 + $0x170] sm:$0xff]
  %v61 = vld [vmem:[%s0 + $0x178] sm:$0xff]
  %v62 = vld [vmem:[%s0 + $0x180] sm:$0xff]
  %v63 = vld [vmem:[%s0 + $0x188] sm:$0xff]
  %v64 = vld [vmem:[%s0 + $0x190] sm:$0xff]
  %v65 = vld [vmem:[%s0 + $0x198] sm:$0xff]
  %v66 = vld [vmem:[%s0 + $0x1a0] sm:$0xff]
  %v67 = vld [vmem:[%s0 + $0x1a8] sm:$0xff]
  %v68 = vld [vmem:[%s0 + $0x1b0] sm:$0xff]
  %v69 = vld [vmem:[%s0 + $0x1b8] sm:$0xff]
  %v70 = vld [vmem:[%s0 + $0x1c0] sm:$0xff]
  %v71 = vld [vmem:[%s0 + $0x1c8] sm:$0xff]
  %v72 = vld [vmem:[%s0 + $0x1d0] sm:$0xff]
  %v73 = vld [vmem:[%s0 + $0x1d8] sm:$0xff]
  %v74 = vld [vmem:[%s0 + $0x1e0] sm:$0xff]
  %v75 = vld [vmem:[%s0 + $0x1e8] sm:$0xff]
  %v76 = vld [vmem:[%s0 + $0x1f0] sm:$0xff]
  %v77 = vld [vmem:[%s0 + $0x1f8] sm:$0xff]
  %v78 = vld [vmem:[%s0 + $0x200] sm:$0xff]
  %v79 = vld [vmem:[%s0 + $0x208] sm:$0xff]
  %v80 = vld [vmem:[%s0 + $0x210] sm:$0xff]
  %v81 = vld [vmem:[%s0 + $0x218] sm:$0xff]
  %v82 = vld [vmem:[%s0 + $0x220] sm:$0xff]
  %v83 = vld [vmem:[%s0 + $0x228] sm:$0xff]
  %v84 = vld [vmem:[%s0 + $0x230] sm:$0xff]
  %v85 = vld [vmem:[%s0 + $0x238] sm:$0xff]
  %v86 = vld [vmem:[%s0 + $0x240] sm:$0xff]
  %v87 = vld [vmem:[%s0 + $0x248] sm:$0xff]
  %v88 = vld [vmem:[%s0 + $0x250] sm:$0xff]
  %v89 = vld [vmem:[%s0 + $0x258] sm:$0xff]
  %v90 = vld [vmem:[%s0 + $0x260] sm:$0xff]
  %v91 = vld [vmem:[%s0 + $0x268] sm:$0xff]
  %v92 = vld [vmem:[%s0 + $0x270] sm:$0xff]
  %v93 = vld [vmem:[%s0 + $0x278] sm:$0xff]
  %v94 = vld [vmem:[%s0 + $0x280] sm:$0xff]
  %v95 = vld [vmem:[%s0 + $0x288] sm:$0xff]
  %v96 = vld [vmem:[%s0 + $0x290] sm:$0xff]
  %v97 = vld [vmem:[%s0 + $0x298] sm:$0xff]
  %v98 = vld [vmem:[%s0 + $0x2a0] sm:$0xff]
  %v99 = vld [vmem:[%s0 + $0x2a8] sm:$0xff]
  %v100 = vld [vmem:[%s0 + $0x2b0] sm:$0xff]
  %v101 = vld [vmem:[%s0 + $0x2b8] sm:$0xff]
  %v102 = vld [vmem:[%s0 + $0x2c0] sm:$0xff]
  %v103 = vld [vmem:[%s0 + $0x2c8] sm:$0xff]
  %v104 = vld [vmem:[%s0 + $0x2d0] sm:$0xff]
  %v105 = vld [vmem:[%s0 + $0x2d8] sm:$0xff]
  %v106 = vld [vmem:[%s0 + $0x2e0] sm:$0xff]
  %v107 = vld [vmem:[%s0 + $0x2e8] sm:$0xff]
  %v108 = vld [vmem:[%s0 + $0x2f0] sm:$0xff]
  %v109 = vld [vmem:[%s0 + $0x2f8] sm:$0xff]
  %v110 = vld [vmem:[%s0 + $0x300] sm:$0xff]
  %v111 = vld [vmem:[%s0 + $0x308] sm:$0xff]
  %v112 = vld [vmem:[%s0 + $0x310] sm:$0xff]
  %v113 = vld [vmem:[%s0 + $0x318] sm:$0xff]
  %v114 = vld [vmem:[%s0 + $0x320] sm:$0xff]
  %v115 = vld [vmem:[%s0 + $0x328] sm:$0xff]
  %v116 = vld [vmem:[%s0 + $0x330] sm:$0xff]
  %v117 = vld [vmem:[%s0 + $0x338] sm:$0xff]
  %v118 = vld [vmem:[%s0 + $0x340] sm:$0xff]
  %v119 = vld [vmem:[%s0 + $0x348] sm:$0xff]
  %v120 = vld [vmem:[%s0 + $0x350] sm:$0xff]
  %v121 = vld [vmem:[%s0 + $0x358] sm:$0xff]
  %v122 = vld [vmem:[%s0 + $0x360] sm:$0xff]
  %v123 = vld [vmem:[%s0 + $0x368] sm:$0xff]
  %v124 = vld [vmem:[%s0 + $0x370] sm:$0xff]
  %v125 = vld [vmem:[%s0 + $0x378] sm:$0xff]
  %v126 = vld [vmem:[%s0 + $0x380] sm:$0xff]
  %v127 = vld [vmem:[%s0 + $0x388] sm:$0xff]
  %v128 = vld [vmem:[%s0 + $0x390] sm:$0xff]
  %v129 = vld [vmem:[%s0 + $0x398] sm:$0xff]
  %v130 = vld [vmem:[%s0 + $0x3a0] sm:$0xff]
  %v131 = vld [vmem:[%s0 + $0x3a8] sm:$0xff]
  %v132 = vld [vmem:[%s0 + $0x3b0] sm:$0xff]
  %v133 = vld [vmem:[%s0 + $0x3b8] sm:$0xff]
  %v134 = vld [vmem:[%s0 + $0x3c0] sm:$0xff]
  %v135 = vld [vmem:[%s0 + $0x3c8] sm:$0xff]
  %v136 = vld [vmem:[%s0 + $0x3d0] sm:$0xff]
  %v137 = vld [vmem:[%s0 + $0x3d8] sm:$0xff]
  %v138 = vld [vmem:[%s0 + $0x3e0] sm:$0xff]
  %v139 = vld [vmem:[%s0 + $0x3e8] sm:$0xff]
  %v140 = vld [vmem:[%s0 + $0x3f0] sm:$0xff]
  %v141 = vld [vmem:[%s0 + $0x3f8] sm:$0xff]
  %v142 = vld [vmem:[%s0 + $0x400] sm:$0xff]
  %v143 = vld [vmem:[%s0 + $0x408] sm:$0xff]
  %v144 = vld [vmem:[%s0 + $0x410] sm:$0xff]
  %v145 = vld [vmem:[%s0 + $0x418] sm:$0xff]
  %v146 = vld [vmem:[%s0 + $0x420] sm:$0xff]
  %v147 = vld [vmem:[%s0 + $0x428] sm:$0xff]
  %v148 = vld [vmem:[%s0 + $0x430] sm:$0xff]
  %v149 = vld [vmem:[%s0 + $0x438] sm:$0xff]
  %v150 = vld [vmem:[%s0 + $0x440] sm:$0xff]
  %v151 = vld [vmem:[%s0 + $0x448] sm:$0xff]
  %v152 = vld [vmem:[%s0 + $0x450] sm:$0xff]
  %v153 = vld [vmem:[%s0 + $0x458] sm:$0xff]
  %v154 = vld [vmem:[%s0 + $0x460] sm:$0xff]
  %v155 = vld [vmem:[%s0 + $0x468] sm:$0xff]
  %v156 = vld [vmem:[%s0 + $0x470] sm:$0xff]
  %v157 = vld [vmem:[%s0 + $0x478] sm:$0xff]
  %v158 = vld [vmem:[%s0 + $0x480] sm:$0xff]
  %v159 = vld [vmem:[%s0 + $0x488] sm:$0xff]
  %v160 = vld [vmem:[%s0 + $0x490] sm:$0xff]
  %v161 = vld [vmem:[%s0 + $0x498] sm:$0xff]
  %v162 = vld [vmem:[%s0 + $0x4a0] sm:$0xff]
  %v163 = vld [vmem:[%s0 + $0x4a8] sm:$0xff]
  %v164 = vld [vmem:[%s0 + $0x4b0] sm:$0x3]
  %v165 = vld [vmem:[%s0 + $0x4b8] sm:$0x3]
  %v166 = vld [vmem:[%s0 + $0x4c0] sm:$0x3]
  %v167 = vld [vmem:[%s0 + $0x4c8] sm:$0x3]
  %v168 = vld [vmem:[%s0 + $0x4d0] sm:$0x3]
  %v169 = vld [vmem:[%s1] sm:$0xff]
  %v170 = vld [vmem:[%s1 + $0x8] sm:$0xff]
  %v171 = vld [vmem:[%s1 + $0x10] sm:$0xff]
  %v172 = vld [vmem:[%s1 + $0x18] sm:$0xff]
  %v173 = vld [vmem:[%s1 + $0x20] sm:$0xff]
  %v174 = vld [vmem:[%s1 + $0x28] sm:$0xff]
  %v175 = vld [vmem:[%s1 + $0x30] sm:$0xff]
  %v176 = vld [vmem:[%s1 + $0x38] sm:$0xff]
  %v177 = vld [vmem:[%s1 + $0x40] sm:$0xff]
  %v178 = vld [vmem:[%s1 + $0x48] sm:$0xff]
  %v179 = vld [vmem:[%s1 + $0x50] sm:$0xff]
  %v180 = vld [vmem:[%s1 + $0x58] sm:$0xff]
  %v181 = vld [vmem:[%s1 + $0x60] sm:$0xff]
  %v182 = vld [vmem:[%s1 + $0x68] sm:$0xff]
  %v183 = vld [vmem:[%s1 + $0x70] sm:$0xff]
  %v184 = vld [vmem:[%s1 + $0x78] sm:$0xff]
  %v185 = vld [vmem:[%s1 + $0x80] sm:$0xff]
  %v186 = vld [vmem:[%s1 + $0x88] sm:$0xff]
  %v187 = vld [vmem:[%s1 + $0x90] sm:$0xff]
  %v188 = vld [vmem:[%s1 + $0x98] sm:$0xff]
  %v189 = vld [vmem:[%s1 + $0xa0] sm:$0xff]
  %v190 = vld [vmem:[%s1 + $0xa8] sm:$0xff]
  %v191 = vld [vmem:[%s1 + $0xb0] sm:$0xff]
  %v192 = vld [vmem:[%s1 + $0xb8] sm:$0xff]
  %v193 = vld [vmem:[%s1 + $0xc0] sm:$0xff]
  %v194 = vld [vmem:[%s1 + $0xc8] sm:$0xff]
  %v195 = vld [vmem:[%s1 + $0xd0] sm:$0xff]
  %v196 = vld [vmem:[%s1 + $0xd8] sm:$0xff]
  %v197 = vld [vmem:[%s1 + $0xe0] sm:$0xff]
  %v198 = vld [vmem:[%s1 + $0xe8] sm:$0xff]
  %v199 = vld [vmem:[%s1 + $0xf0] sm:$0xff]
  %v200 = vld [vmem:[%s1 + $0xf8] sm:$0xff]
  %v201 = vld [vmem:[%s1 + $0x100] sm:$0xff]
  %v202 = vld [vmem:[%s1 + $0x108] sm:$0xff]
  %v203 = vld [vmem:[%s1 + $0x110] sm:$0xff]
  %v204 = vld [vmem:[%s1 + $0x118] sm:$0xff]
  %v205 = vld [vmem:[%s1 + $0x120] sm:$0xff]
  %v206 = vld [vmem:[%s1 + $0x128] sm:$0xff]
  %v207 = vld [vmem:[%s1 + $0x130] sm:$0xff]
  %v208 = vld [vmem:[%s1 + $0x138] sm:$0xff]
  %v209 = vld [vmem:[%s1 + $0x140] sm:$0xff]
  %v210 = vld [vmem:[%s1 + $0x148] sm:$0xff]
  %v211 = vld [vmem:[%s1 + $0x150] sm:$0xff]
  %v212 = vld [vmem:[%s1 + $0x158] sm:$0xff]
  %v213 = vld [vmem:[%s1 + $0x160] sm:$0xff]
  %v214 = vld [vmem:[%s1 + $0x168] sm:$0xff]
  %v215 = vld [vmem:[%s1 + $0x170] sm:$0xff]
  %v216 = vld [vmem:[%s1 + $0x178] sm:$0xff]
  %v217 = vld [vmem:[%s1 + $0x180] sm:$0xff]
  %v218 = vld [vmem:[%s1 + $0x188] sm:$0xff]
  %v219 = vld [vmem:[%s1 + $0x190] sm:$0xff]
  %v220 = vld [vmem:[%s1 + $0x198] sm:$0xff]
  %v221 = vld [vmem:[%s1 + $0x1a0] sm:$0xff]
  %v222 = vld [vmem:[%s1 + $0x1a8] sm:$0xff]
  %v223 = vld [vmem:[%s1 + $0x1b0] sm:$0xff]
  %v224 = vld [vmem:[%s1 + $0x1b8] sm:$0xff]
  %v225 = vld [vmem:[%s1 + $0x1c0] sm:$0xff]
  %v226 = vld [vmem:[%s1 + $0x1c8] sm:$0xff]
  %v227 = vld [vmem:[%s1 + $0x1d0] sm:$0xff]
  %v228 = vld [vmem:[%s1 + $0x1d8] sm:$0xff]
  %v229 = vld [vmem:[%s1 + $0x1e0] sm:$0xff]
  %v230 = vld [vmem:[%s1 + $0x1e8] sm:$0xff]
  %v231 = vld [vmem:[%s1 + $0x1f0] sm:$0xff]
  %v232 = vld [vmem:[%s1 + $0x1f8] sm:$0xff]
  %v233 = vld [vmem:[%s1 + $0x200] sm:$0xff]
  %v234 = vld [vmem:[%s1 + $0x208] sm:$0xff]
  %v235 = vld [vmem:[%s1 + $0x210] sm:$0xff]
  %v236 = vld [vmem:[%s1 + $0x218] sm:$0xff]
  %v237 = vld [vmem:[%s1 + $0x220] sm:$0xff]
  %v238 = vld [vmem:[%s1 + $0x228] sm:$0xff]
  %v239 = vld [vmem:[%s1 + $0x230] sm:$0xff]
  %v240 = vld [vmem:[%s1 + $0x238] sm:$0xff]
  %v241 = vld [vmem:[%s2] sm:$0x1]
  %v243 = vlaneseq
  %v244 = vshrl.u32 %v243, 7
  %v245 = vsub.s32 0, %v244
  %v246 = vrot.slane %v241, %v245
  %vm248 = vcmask 523264
  %v250 = vsel %vm248, %v18, 0
  %v253 = vsel %vm248, %v23, 0
  %v256 = vsel %vm248, %v28, 0
  %v259 = vsel %vm248, %v33, 0
  %v262 = vsel %vm248, %v38, 0
  %v265 = vsel %vm248, %v43, 0
  %v268 = vsel %vm248, %v48, 0
  %v271 = vsel %vm248, %v53, 0
  %v274 = vsel %vm248, %v58, 0
  %v277 = vsel %vm248, %v63, 0
  %v280 = vsel %vm248, %v68, 0
  %v283 = vsel %vm248, %v73, 0
  %v286 = vsel %vm248, %v78, 0
  %v289 = vsel %vm248, %v83, 0
  %v292 = vsel %vm248, %v88, 0
  %v295 = vsel %vm248, %v93, 0
  %v298 = vsel %vm248, %v98, 0
  %v301 = vsel %vm248, %v103, 0
  %v304 = vsel %vm248, %v108, 0
  %v307 = vsel %vm248, %v113, 0
  %v310 = vsel %vm248, %v118, 0
  %v313 = vsel %vm248, %v123, 0
  %v316 = vsel %vm248, %v128, 0
  %v319 = vsel %vm248, %v133, 0
  %v322 = vsel %vm248, %v138, 0
  %v325 = vsel %vm248, %v143, 0
  %v328 = vsel %vm248, %v148, 0
  %v331 = vsel %vm248, %v153, 0
  %v334 = vsel %vm248, %v158, 0
  %v337 = vsel %vm248, %v163, 0
  %v340 = vsel %vm248, %v168, 0
  %342 = vmatprep.subr.mxu0 0.0
  %343 = vmatpush1.msra.mxu0 %v184
  %344 = vmatprep.subr.mxu0 0.0
  %345 = vmatpush1.msra.mxu0 %v183
  %346 = vmatprep.subr.mxu0 0.0
  %347 = vmatpush1.msra.mxu0 %v182
  %348 = vmatprep.subr.mxu0 0.0
  %349 = vmatpush1.msra.mxu0 %v181
  %350 = vmatprep.subr.mxu0 0.0
  %351 = vmatpush1.msra.mxu0 %v180
  %352 = vmatprep.subr.mxu0 0.0
  %353 = vmatpush1.msra.mxu0 %v179
  %354 = vmatprep.subr.mxu0 0.0
  %355 = vmatpush1.msra.mxu0 %v178
  %356 = vmatprep.subr.mxu0 0.0
  %357 = vmatpush1.msra.mxu0 %v177
  %358 = vmatprep.subr.mxu0 0.0
  %359 = vmatpush1.msra.mxu0 %v176
  %360 = vmatprep.subr.mxu0 0.0
  %361 = vmatpush1.msra.mxu0 %v175
  %362 = vmatprep.subr.mxu0 0.0
  %363 = vmatpush1.msra.mxu0 %v174
  %364 = vmatprep.subr.mxu0 0.0
  %365 = vmatpush1.msra.mxu0 %v173
  %366 = vmatprep.subr.mxu0 0.0
  %367 = vmatpush1.msra.mxu0 %v172
  %368 = vmatprep.subr.mxu0 0.0
  %369 = vmatpush1.msra.mxu0 %v171
  %370 = vmatprep.subr.mxu0 0.0
  %371 = vmatpush1.msra.mxu0 %v170
  %372 = vmatprep.subr.mxu0 0.0
  %373 = vmatpush1.msra.mxu0 %v169
  %374 = vmatprep.subr.mxu0 0.0
  %375 = vmatpush2.msra.mxu0 %v200
  %376 = vmatprep.subr.mxu0 0.0
  %377 = vmatpush2.msra.mxu0 %v199
  %378 = vmatprep.subr.mxu0 0.0
  %379 = vmatpush2.msra.mxu0 %v198
  %380 = vmatprep.subr.mxu0 0.0
  %381 = vmatpush2.msra.mxu0 %v197
  %382 = vmatprep.subr.mxu0 0.0
  %383 = vmatpush2.msra.mxu0 %v196
  %384 = vmatprep.subr.mxu0 0.0
  %385 = vmatpush2.msra.mxu0 %v195
  %386 = vmatprep.subr.mxu0 0.0
  %387 = vmatpush2.msra.mxu0 %v194
  %388 = vmatprep.subr.mxu0 0.0
  %389 = vmatpush2.msra.mxu0 %v193
  %390 = vmatprep.subr.mxu0 0.0
  %391 = vmatpush2.msra.mxu0 %v192
  %392 = vmatprep.subr.mxu0 0.0
  %393 = vmatpush2.msra.mxu0 %v191
  %394 = vmatprep.subr.mxu0 0.0
  %395 = vmatpush2.msra.mxu0 %v190
  %396 = vmatprep.subr.mxu0 0.0
  %397 = vmatpush2.msra.mxu0 %v189
  %398 = vmatprep.subr.mxu0 0.0
  %399 = vmatpush2.msra.mxu0 %v188
  %400 = vmatprep.subr.mxu0 0.0
  %401 = vmatpush2.msra.mxu0 %v187
  %402 = vmatprep.subr.mxu0 0.0
  %403 = vmatpush2.msra.mxu0 %v186
  %404 = vmatprep.subr.mxu0 0.0
  %405 = vmatpush2.msra.mxu0 %v185
  %406 = vmatprep.mubr.f32.mxu0 %v15
  %407 = vmatmul.mubr.f32.gmra.mxu0 %v14
  %v408 = vpop.f32.mrf.mxu0
  %v409 = vadd.f32 %v246, %v408
  %v410 = vpop.f32.mrf.mxu0
  %411 = vmatprep.mubr.f32.mxu0 %v20
  %412 = vmatmul.mubr.f32.gmra.mxu0 %v19
  %v413 = vpop.f32.mrf.mxu0
  %v414 = vadd.f32 %v246, %v413
  %v415 = vpop.f32.mrf.mxu0
  %416 = vmatprep.mubr.f32.mxu0 %v25
  %417 = vmatmul.mubr.f32.gmra.mxu0 %v24
  %v418 = vpop.f32.mrf.mxu0
  %v419 = vadd.f32 %v246, %v418
  %v420 = vpop.f32.mrf.mxu0
  %421 = vmatprep.mubr.f32.mxu0 %v30
  %422 = vmatmul.mubr.f32.gmra.mxu0 %v29
  %v423 = vpop.f32.mrf.mxu0
  %v424 = vadd.f32 %v246, %v423
  %v425 = vpop.f32.mrf.mxu0
  %426 = vmatprep.mubr.f32.mxu0 %v35
  %427 = vmatmul.mubr.f32.gmra.mxu0 %v34
  %v428 = vpop.f32.mrf.mxu0
  %v429 = vadd.f32 %v246, %v428
  %v430 = vpop.f32.mrf.mxu0
  %431 = vmatprep.mubr.f32.mxu0 %v40
  %432 = vmatmul.mubr.f32.gmra.mxu0 %v39
  %v433 = vpop.f32.mrf.mxu0
  %v434 = vadd.f32 %v246, %v433
  %v435 = vpop.f32.mrf.mxu0
  %436 = vmatprep.mubr.f32.mxu0 %v45
  %437 = vmatmul.mubr.f32.gmra.mxu0 %v44
  %v438 = vpop.f32.mrf.mxu0
  %v439 = vadd.f32 %v246, %v438
  %v440 = vpop.f32.mrf.mxu0
  %441 = vmatprep.mubr.f32.mxu0 %v50
  %442 = vmatmul.mubr.f32.gmra.mxu0 %v49
  %v443 = vpop.f32.mrf.mxu0
  %v444 = vadd.f32 %v246, %v443
  %v445 = vpop.f32.mrf.mxu0
  %446 = vmatprep.mubr.f32.mxu0 %v55
  %447 = vmatmul.mubr.f32.gmra.mxu0 %v54
  %v448 = vpop.f32.mrf.mxu0
  %v449 = vadd.f32 %v246, %v448
  %v450 = vpop.f32.mrf.mxu0
  %451 = vmatprep.mubr.f32.mxu0 %v60
  %452 = vmatmul.mubr.f32.gmra.mxu0 %v59
  %v453 = vpop.f32.mrf.mxu0
  %v454 = vadd.f32 %v246, %v453
  %v455 = vpop.f32.mrf.mxu0
  %456 = vmatprep.mubr.f32.mxu0 %v65
  %457 = vmatmul.mubr.f32.gmra.mxu0 %v64
  %v458 = vpop.f32.mrf.mxu0
  %v459 = vadd.f32 %v246, %v458
  %v460 = vpop.f32.mrf.mxu0
  %461 = vmatprep.mubr.f32.mxu0 %v70
  %462 = vmatmul.mubr.f32.gmra.mxu0 %v69
  %v463 = vpop.f32.mrf.mxu0
  %v464 = vadd.f32 %v246, %v463
  %v465 = vpop.f32.mrf.mxu0
  %466 = vmatprep.mubr.f32.mxu0 %v75
  %467 = vmatmul.mubr.f32.gmra.mxu0 %v74
  %v468 = vpop.f32.mrf.mxu0
  %v469 = vadd.f32 %v246, %v468
  %v470 = vpop.f32.mrf.mxu0
  %471 = vmatprep.mubr.f32.mxu0 %v80
  %472 = vmatmul.mubr.f32.gmra.mxu0 %v79
  %v473 = vpop.f32.mrf.mxu0
  %v474 = vadd.f32 %v246, %v473
  %v475 = vpop.f32.mrf.mxu0
  %476 = vmatprep.mubr.f32.mxu0 %v85
  %477 = vmatmul.mubr.f32.gmra.mxu0 %v84
  %v478 = vpop.f32.mrf.mxu0
  %v479 = vadd.f32 %v246, %v478
  %v480 = vpop.f32.mrf.mxu0
  %481 = vmatprep.mubr.f32.mxu0 %v90
  %482 = vmatmul.mubr.f32.gmra.mxu0 %v89
  %v483 = vpop.f32.mrf.mxu0
  %v484 = vadd.f32 %v246, %v483
  %v485 = vpop.f32.mrf.mxu0
  %486 = vmatprep.mubr.f32.mxu0 %v95
  %487 = vmatmul.mubr.f32.gmra.mxu0 %v94
  %v488 = vpop.f32.mrf.mxu0
  %v489 = vadd.f32 %v246, %v488
  %v490 = vpop.f32.mrf.mxu0
  %491 = vmatprep.mubr.f32.mxu0 %v100
  %492 = vmatmul.mubr.f32.gmra.mxu0 %v99
  %v493 = vpop.f32.mrf.mxu0
  %v494 = vadd.f32 %v246, %v493
  %v495 = vpop.f32.mrf.mxu0
  %496 = vmatprep.mubr.f32.mxu0 %v105
  %497 = vmatmul.mubr.f32.gmra.mxu0 %v104
  %v498 = vpop.f32.mrf.mxu0
  %v499 = vadd.f32 %v246, %v498
  %v500 = vpop.f32.mrf.mxu0
  %501 = vmatprep.mubr.f32.mxu0 %v110
  %502 = vmatmul.mubr.f32.gmra.mxu0 %v109
  %v503 = vpop.f32.mrf.mxu0
  %v504 = vadd.f32 %v246, %v503
  %v505 = vpop.f32.mrf.mxu0
  %506 = vmatprep.mubr.f32.mxu0 %v115
  %507 = vmatmul.mubr.f32.gmra.mxu0 %v114
  %v508 = vpop.f32.mrf.mxu0
  %v509 = vadd.f32 %v246, %v508
  %v510 = vpop.f32.mrf.mxu0
  %511 = vmatprep.mubr.f32.mxu0 %v120
  %512 = vmatmul.mubr.f32.gmra.mxu0 %v119
  %v513 = vpop.f32.mrf.mxu0
  %v514 = vadd.f32 %v246, %v513
  %v515 = vpop.f32.mrf.mxu0
  %516 = vmatprep.mubr.f32.mxu0 %v125
  %517 = vmatmul.mubr.f32.gmra.mxu0 %v124
  %v518 = vpop.f32.mrf.mxu0
  %v519 = vadd.f32 %v246, %v518
  %v520 = vpop.f32.mrf.mxu0
  %521 = vmatprep.mubr.f32.mxu0 %v130
  %522 = vmatmul.mubr.f32.gmra.mxu0 %v129
  %v523 = vpop.f32.mrf.mxu0
  %v524 = vadd.f32 %v246, %v523
  %v525 = vpop.f32.mrf.mxu0
  %526 = vmatprep.mubr.f32.mxu0 %v135
  %527 = vmatmul.mubr.f32.gmra.mxu0 %v134
  %v528 = vpop.f32.mrf.mxu0
  %v529 = vadd.f32 %v246, %v528
  %v530 = vpop.f32.mrf.mxu0
  %531 = vmatprep.mubr.f32.mxu0 %v140
  %532 = vmatmul.mubr.f32.gmra.mxu0 %v139
  %v533 = vpop.f32.mrf.mxu0
  %v534 = vadd.f32 %v246, %v533
  %v535 = vpop.f32.mrf.mxu0
  %536 = vmatprep.mubr.f32.mxu0 %v145
  %537 = vmatmul.mubr.f32.gmra.mxu0 %v144
  %v538 = vpop.f32.mrf.mxu0
  %v539 = vadd.f32 %v246, %v538
  %v540 = vpop.f32.mrf.mxu0
  %541 = vmatprep.mubr.f32.mxu0 %v150
  %542 = vmatmul.mubr.f32.gmra.mxu0 %v149
  %v543 = vpop.f32.mrf.mxu0
  %v544 = vadd.f32 %v246, %v543
  %v545 = vpop.f32.mrf.mxu0
  %546 = vmatprep.mubr.f32.mxu0 %v155
  %547 = vmatmul.mubr.f32.gmra.mxu0 %v154
  %v548 = vpop.f32.mrf.mxu0
  %v549 = vadd.f32 %v246, %v548
  %v550 = vpop.f32.mrf.mxu0
  %551 = vmatprep.mubr.f32.mxu0 %v160
  %552 = vmatmul.mubr.f32.gmra.mxu0 %v159
  %v553 = vpop.f32.mrf.mxu0
  %v554 = vadd.f32 %v246, %v553
  %v555 = vpop.f32.mrf.mxu0
  %556 = vmatprep.mubr.f32.mxu0 %v165
  %557 = vmatmul.mubr.f32.gmra.mxu0 %v164
  %v558 = vpop.f32.mrf.mxu0
  %v559 = vadd.f32 %v246, %v558
  %v560 = vpop.f32.mrf.mxu0
  %561 = vdwg.mxu0
  %562 = vmatprep.subr.mxu0 0.0
  %563 = vmatpush1.msra.mxu0 %v216
  %564 = vmatprep.subr.mxu0 0.0
  %565 = vmatpush1.msra.mxu0 %v215
  %566 = vmatprep.subr.mxu0 0.0
  %567 = vmatpush1.msra.mxu0 %v214
  %568 = vmatprep.subr.mxu0 0.0
  %569 = vmatpush1.msra.mxu0 %v213
  %570 = vmatprep.subr.mxu0 0.0
  %571 = vmatpush1.msra.mxu0 %v212
  %572 = vmatprep.subr.mxu0 0.0
  %573 = vmatpush1.msra.mxu0 %v211
  %574 = vmatprep.subr.mxu0 0.0
  %575 = vmatpush1.msra.mxu0 %v210
  %576 = vmatprep.subr.mxu0 0.0
  %577 = vmatpush1.msra.mxu0 %v209
  %578 = vmatprep.subr.mxu0 0.0
  %579 = vmatpush1.msra.mxu0 %v208
  %580 = vmatprep.subr.mxu0 0.0
  %581 = vmatpush1.msra.mxu0 %v207
  %582 = vmatprep.subr.mxu0 0.0
  %583 = vmatpush1.msra.mxu0 %v206
  %584 = vmatprep.subr.mxu0 0.0
  %585 = vmatpush1.msra.mxu0 %v205
  %586 = vmatprep.subr.mxu0 0.0
  %587 = vmatpush1.msra.mxu0 %v204
  %588 = vmatprep.subr.mxu0 0.0
  %589 = vmatpush1.msra.mxu0 %v203
  %590 = vmatprep.subr.mxu0 0.0
  %591 = vmatpush1.msra.mxu0 %v202
  %592 = vmatprep.subr.mxu0 0.0
  %593 = vmatpush1.msra.mxu0 %v201
  %594 = vmatprep.subr.mxu0 0.0
  %595 = vmatpush2.msra.mxu0 %v232
  %596 = vmatprep.subr.mxu0 0.0
  %597 = vmatpush2.msra.mxu0 %v231
  %598 = vmatprep.subr.mxu0 0.0
  %599 = vmatpush2.msra.mxu0 %v230
  %600 = vmatprep.subr.mxu0 0.0
  %601 = vmatpush2.msra.mxu0 %v229
  %602 = vmatprep.subr.mxu0 0.0
  %603 = vmatpush2.msra.mxu0 %v228
  %604 = vmatprep.subr.mxu0 0.0
  %605 = vmatpush2.msra.mxu0 %v227
  %606 = vmatprep.subr.mxu0 0.0
  %607 = vmatpush2.msra.mxu0 %v226
  %608 = vmatprep.subr.mxu0 0.0
  %609 = vmatpush2.msra.mxu0 %v225
  %610 = vmatprep.subr.mxu0 0.0
  %611 = vmatpush2.msra.mxu0 %v224
  %612 = vmatprep.subr.mxu0 0.0
  %613 = vmatpush2.msra.mxu0 %v223
  %614 = vmatprep.subr.mxu0 0.0
  %615 = vmatpush2.msra.mxu0 %v222
  %616 = vmatprep.subr.mxu0 0.0
  %617 = vmatpush2.msra.mxu0 %v221
  %618 = vmatprep.subr.mxu0 0.0
  %619 = vmatpush2.msra.mxu0 %v220
  %620 = vmatprep.subr.mxu0 0.0
  %621 = vmatpush2.msra.mxu0 %v219
  %622 = vmatprep.subr.mxu0 0.0
  %623 = vmatpush2.msra.mxu0 %v218
  %624 = vmatprep.subr.mxu0 0.0
  %625 = vmatpush2.msra.mxu0 %v217
  %626 = vmatprep.mubr.f32.mxu0 %v17
  %627 = vmatmul.mubr.f32.gmra.mxu0 %v16
  %v628 = vpop.f32.mrf.mxu0
  %v629 = vadd.f32 %v409, %v628
  %v630 = vpop.f32.mrf.mxu0
  %631 = vmatprep.mubr.f32.mxu0 %v22
  %632 = vmatmul.mubr.f32.gmra.mxu0 %v21
  %v633 = vpop.f32.mrf.mxu0
  %v634 = vadd.f32 %v414, %v633
  %v635 = vpop.f32.mrf.mxu0
  %636 = vmatprep.mubr.f32.mxu0 %v27
  %637 = vmatmul.mubr.f32.gmra.mxu0 %v26
  %v638 = vpop.f32.mrf.mxu0
  %v639 = vadd.f32 %v419, %v638
  %v640 = vpop.f32.mrf.mxu0
  %641 = vmatprep.mubr.f32.mxu0 %v32
  %642 = vmatmul.mubr.f32.gmra.mxu0 %v31
  %v643 = vpop.f32.mrf.mxu0
  %v644 = vadd.f32 %v424, %v643
  %v645 = vpop.f32.mrf.mxu0
  %646 = vmatprep.mubr.f32.mxu0 %v37
  %647 = vmatmul.mubr.f32.gmra.mxu0 %v36
  %v648 = vpop.f32.mrf.mxu0
  %v649 = vadd.f32 %v429, %v648
  %v650 = vpop.f32.mrf.mxu0
  %651 = vmatprep.mubr.f32.mxu0 %v42
  %652 = vmatmul.mubr.f32.gmra.mxu0 %v41
  %v653 = vpop.f32.mrf.mxu0
  %v654 = vadd.f32 %v434, %v653
  %v655 = vpop.f32.mrf.mxu0
  %656 = vmatprep.mubr.f32.mxu0 %v47
  %657 = vmatmul.mubr.f32.gmra.mxu0 %v46
  %v658 = vpop.f32.mrf.mxu0
  %v659 = vadd.f32 %v439, %v658
  %v660 = vpop.f32.mrf.mxu0
  %661 = vmatprep.mubr.f32.mxu0 %v52
  %662 = vmatmul.mubr.f32.gmra.mxu0 %v51
  %v663 = vpop.f32.mrf.mxu0
  %v664 = vadd.f32 %v444, %v663
  %v665 = vpop.f32.mrf.mxu0
  %666 = vmatprep.mubr.f32.mxu0 %v57
  %667 = vmatmul.mubr.f32.gmra.mxu0 %v56
  %v668 = vpop.f32.mrf.mxu0
  %v669 = vadd.f32 %v449, %v668
  %v670 = vpop.f32.mrf.mxu0
  %671 = vmatprep.mubr.f32.mxu0 %v62
  %672 = vmatmul.mubr.f32.gmra.mxu0 %v61
  %v673 = vpop.f32.mrf.mxu0
  %v674 = vadd.f32 %v454, %v673
  %v675 = vpop.f32.mrf.mxu0
  %676 = vmatprep.mubr.f32.mxu0 %v67
  %677 = vmatmul.mubr.f32.gmra.mxu0 %v66
  %v678 = vpop.f32.mrf.mxu0
  %v679 = vadd.f32 %v459, %v678
  %v680 = vpop.f32.mrf.mxu0
  %681 = vmatprep.mubr.f32.mxu0 %v72
  %682 = vmatmul.mubr.f32.gmra.mxu0 %v71
  %v683 = vpop.f32.mrf.mxu0
  %v684 = vadd.f32 %v464, %v683
  %v685 = vpop.f32.mrf.mxu0
  %686 = vmatprep.mubr.f32.mxu0 %v77
  %687 = vmatmul.mubr.f32.gmra.mxu0 %v76
  %v688 = vpop.f32.mrf.mxu0
  %v689 = vadd.f32 %v469, %v688
  %v690 = vpop.f32.mrf.mxu0
  %691 = vmatprep.mubr.f32.mxu0 %v82
  %692 = vmatmul.mubr.f32.gmra.mxu0 %v81
  %v693 = vpop.f32.mrf.mxu0
  %v694 = vadd.f32 %v474, %v693
  %v695 = vpop.f32.mrf.mxu0
  %696 = vmatprep.mubr.f32.mxu0 %v87
  %697 = vmatmul.mubr.f32.gmra.mxu0 %v86
  %v698 = vpop.f32.mrf.mxu0
  %v699 = vadd.f32 %v479, %v698
  %v700 = vpop.f32.mrf.mxu0
  %701 = vmatprep.mubr.f32.mxu0 %v92
  %702 = vmatmul.mubr.f32.gmra.mxu0 %v91
  %v703 = vpop.f32.mrf.mxu0
  %v704 = vadd.f32 %v484, %v703
  %v705 = vpop.f32.mrf.mxu0
  %706 = vmatprep.mubr.f32.mxu0 %v97
  %707 = vmatmul.mubr.f32.gmra.mxu0 %v96
  %v708 = vpop.f32.mrf.mxu0
  %v709 = vadd.f32 %v489, %v708
  %v710 = vpop.f32.mrf.mxu0
  %711 = vmatprep.mubr.f32.mxu0 %v102
  %712 = vmatmul.mubr.f32.gmra.mxu0 %v101
  %v713 = vpop.f32.mrf.mxu0
  %v714 = vadd.f32 %v494, %v713
  %v715 = vpop.f32.mrf.mxu0
  %716 = vmatprep.mubr.f32.mxu0 %v107
  %717 = vmatmul.mubr.f32.gmra.mxu0 %v106
  %v718 = vpop.f32.mrf.mxu0
  %v719 = vadd.f32 %v499, %v718
  %v720 = vpop.f32.mrf.mxu0
  %721 = vmatprep.mubr.f32.mxu0 %v112
  %722 = vmatmul.mubr.f32.gmra.mxu0 %v111
  %v723 = vpop.f32.mrf.mxu0
  %v724 = vadd.f32 %v504, %v723
  %v725 = vpop.f32.mrf.mxu0
  %726 = vmatprep.mubr.f32.mxu0 %v117
  %727 = vmatmul.mubr.f32.gmra.mxu0 %v116
  %v728 = vpop.f32.mrf.mxu0
  %v729 = vadd.f32 %v509, %v728
  %v730 = vpop.f32.mrf.mxu0
  %731 = vmatprep.mubr.f32.mxu0 %v122
  %732 = vmatmul.mubr.f32.gmra.mxu0 %v121
  %v733 = vpop.f32.mrf.mxu0
  %v734 = vadd.f32 %v514, %v733
  %v735 = vpop.f32.mrf.mxu0
  %736 = vmatprep.mubr.f32.mxu0 %v127
  %737 = vmatmul.mubr.f32.gmra.mxu0 %v126
  %v738 = vpop.f32.mrf.mxu0
  %v739 = vadd.f32 %v519, %v738
  %v740 = vpop.f32.mrf.mxu0
  %741 = vmatprep.mubr.f32.mxu0 %v132
  %742 = vmatmul.mubr.f32.gmra.mxu0 %v131
  %v743 = vpop.f32.mrf.mxu0
  %v744 = vadd.f32 %v524, %v743
  %v745 = vpop.f32.mrf.mxu0
  %746 = vmatprep.mubr.f32.mxu0 %v137
  %747 = vmatmul.mubr.f32.gmra.mxu0 %v136
  %v748 = vpop.f32.mrf.mxu0
  %v749 = vadd.f32 %v529, %v748
  %v750 = vpop.f32.mrf.mxu0
  %751 = vmatprep.mubr.f32.mxu0 %v142
  %752 = vmatmul.mubr.f32.gmra.mxu0 %v141
  %v753 = vpop.f32.mrf.mxu0
  %v754 = vadd.f32 %v534, %v753
  %v755 = vpop.f32.mrf.mxu0
  %756 = vmatprep.mubr.f32.mxu0 %v147
  %757 = vmatmul.mubr.f32.gmra.mxu0 %v146
  %v758 = vpop.f32.mrf.mxu0
  %v759 = vadd.f32 %v539, %v758
  %v760 = vpop.f32.mrf.mxu0
  %761 = vmatprep.mubr.f32.mxu0 %v152
  %762 = vmatmul.mubr.f32.gmra.mxu0 %v151
  %v763 = vpop.f32.mrf.mxu0
  %v764 = vadd.f32 %v544, %v763
  %v765 = vpop.f32.mrf.mxu0
  %766 = vmatprep.mubr.f32.mxu0 %v157
  %767 = vmatmul.mubr.f32.gmra.mxu0 %v156
  %v768 = vpop.f32.mrf.mxu0
  %v769 = vadd.f32 %v549, %v768
  %v770 = vpop.f32.mrf.mxu0
  %771 = vmatprep.mubr.f32.mxu0 %v162
  %772 = vmatmul.mubr.f32.gmra.mxu0 %v161
  %v773 = vpop.f32.mrf.mxu0
  %v774 = vadd.f32 %v554, %v773
  %v775 = vpop.f32.mrf.mxu0
  %776 = vmatprep.mubr.f32.mxu0 %v167
  %777 = vmatmul.mubr.f32.gmra.mxu0 %v166
  %v778 = vpop.f32.mrf.mxu0
  %v779 = vadd.f32 %v559, %v778
  %v780 = vpop.f32.mrf.mxu0
  %781 = vdwg.mxu0
  %782 = vmatprep.subr.mxu0 0.0
  %783 = vmatpush1.msra.mxu0 0.0
  %784 = vmatprep.subr.mxu0 0.0
  %785 = vmatpush1.msra.mxu0 0.0
  %786 = vmatprep.subr.mxu0 0.0
  %787 = vmatpush1.msra.mxu0 0.0
  %788 = vmatprep.subr.mxu0 0.0
  %789 = vmatpush1.msra.mxu0 0.0
  %790 = vmatprep.subr.mxu0 0.0
  %791 = vmatpush1.msra.mxu0 0.0
  %792 = vmatprep.subr.mxu0 0.0
  %793 = vmatpush1.msra.mxu0 0.0
  %794 = vmatprep.subr.mxu0 0.0
  %795 = vmatpush1.msra.mxu0 0.0
  %796 = vmatprep.subr.mxu0 0.0
  %797 = vmatpush1.msra.mxu0 0.0
  %798 = vmatprep.subr.mxu0 0.0
  %799 = vmatpush1.msra.mxu0 %v240
  %800 = vmatprep.subr.mxu0 0.0
  %801 = vmatpush1.msra.mxu0 %v239
  %802 = vmatprep.subr.mxu0 0.0
  %803 = vmatpush1.msra.mxu0 %v238
  %804 = vmatprep.subr.mxu0 0.0
  %805 = vmatpush1.msra.mxu0 %v237
  %806 = vmatprep.subr.mxu0 0.0
  %807 = vmatpush1.msra.mxu0 %v236
  %808 = vmatprep.subr.mxu0 0.0
  %809 = vmatpush1.msra.mxu0 %v235
  %810 = vmatprep.subr.mxu0 0.0
  %811 = vmatpush1.msra.mxu0 %v234
  %812 = vmatprep.subr.mxu0 0.0
  %813 = vmatpush1.msra.mxu0 %v233
  %814 = vmatprep.subr.mxu0 0.0
  %815 = vmatpush2.msra.mxu0 0.0
  %816 = vmatprep.subr.mxu0 0.0
  %817 = vmatpush2.msra.mxu0 0.0
  %818 = vmatprep.subr.mxu0 0.0
  %819 = vmatpush2.msra.mxu0 0.0
  %820 = vmatprep.subr.mxu0 0.0
  %821 = vmatpush2.msra.mxu0 0.0
  %822 = vmatprep.subr.mxu0 0.0
  %823 = vmatpush2.msra.mxu0 0.0
  %824 = vmatprep.subr.mxu0 0.0
  %825 = vmatpush2.msra.mxu0 0.0
  %826 = vmatprep.subr.mxu0 0.0
  %827 = vmatpush2.msra.mxu0 0.0
  %828 = vmatprep.subr.mxu0 0.0
  %829 = vmatpush2.msra.mxu0 0.0
  %830 = vmatprep.subr.mxu0 0.0
  %831 = vmatpush2.msra.mxu0 0.0
  %832 = vmatprep.subr.mxu0 0.0
  %833 = vmatpush2.msra.mxu0 0.0
  %834 = vmatprep.subr.mxu0 0.0
  %835 = vmatpush2.msra.mxu0 0.0
  %836 = vmatprep.subr.mxu0 0.0
  %837 = vmatpush2.msra.mxu0 0.0
  %838 = vmatprep.subr.mxu0 0.0
  %839 = vmatpush2.msra.mxu0 0.0
  %840 = vmatprep.subr.mxu0 0.0
  %841 = vmatpush2.msra.mxu0 0.0
  %842 = vmatprep.subr.mxu0 0.0
  %843 = vmatpush2.msra.mxu0 0.0
  %844 = vmatprep.subr.mxu0 0.0
  %845 = vmatpush2.msra.mxu0 0.0
  %846 = vmatprep.mubr.f32.mxu0 0.0
  %847 = vmatmul.mubr.f32.gmra.mxu0 %v250
  %v848 = vpop.f32.mrf.mxu0
  %v849 = vadd.f32 %v629, %v848
  %v850 = vpop.f32.mrf.mxu0
  %851 = vmatprep.mubr.f32.mxu0 0.0
  %852 = vmatmul.mubr.f32.gmra.mxu0 %v253
  %v853 = vpop.f32.mrf.mxu0
  %v854 = vadd.f32 %v634, %v853
  %v855 = vpop.f32.mrf.mxu0
  %856 = vmatprep.mubr.f32.mxu0 0.0
  %857 = vmatmul.mubr.f32.gmra.mxu0 %v256
  %v858 = vpop.f32.mrf.mxu0
  %v859 = vadd.f32 %v639, %v858
  %v860 = vpop.f32.mrf.mxu0
  %861 = vmatprep.mubr.f32.mxu0 0.0
  %862 = vmatmul.mubr.f32.gmra.mxu0 %v259
  %v863 = vpop.f32.mrf.mxu0
  %v864 = vadd.f32 %v644, %v863
  %v865 = vpop.f32.mrf.mxu0
  %866 = vmatprep.mubr.f32.mxu0 0.0
  %867 = vmatmul.mubr.f32.gmra.mxu0 %v262
  %v868 = vpop.f32.mrf.mxu0
  %v869 = vadd.f32 %v649, %v868
  %v870 = vpop.f32.mrf.mxu0
  %871 = vmatprep.mubr.f32.mxu0 0.0
  %872 = vmatmul.mubr.f32.gmra.mxu0 %v265
  %v873 = vpop.f32.mrf.mxu0
  %v874 = vadd.f32 %v654, %v873
  %v875 = vpop.f32.mrf.mxu0
  %876 = vmatprep.mubr.f32.mxu0 0.0
  %877 = vmatmul.mubr.f32.gmra.mxu0 %v268
  %v878 = vpop.f32.mrf.mxu0
  %v879 = vadd.f32 %v659, %v878
  %v880 = vpop.f32.mrf.mxu0
  %881 = vmatprep.mubr.f32.mxu0 0.0
  %882 = vmatmul.mubr.f32.gmra.mxu0 %v271
  %v883 = vpop.f32.mrf.mxu0
  %v884 = vadd.f32 %v664, %v883
  %v885 = vpop.f32.mrf.mxu0
  %886 = vmatprep.mubr.f32.mxu0 0.0
  %887 = vmatmul.mubr.f32.gmra.mxu0 %v274
  %v888 = vpop.f32.mrf.mxu0
  %v889 = vadd.f32 %v669, %v888
  %v890 = vpop.f32.mrf.mxu0
  %891 = vmatprep.mubr.f32.mxu0 0.0
  %892 = vmatmul.mubr.f32.gmra.mxu0 %v277
  %v893 = vpop.f32.mrf.mxu0
  %v894 = vadd.f32 %v674, %v893
  %v895 = vpop.f32.mrf.mxu0
  %896 = vmatprep.mubr.f32.mxu0 0.0
  %897 = vmatmul.mubr.f32.gmra.mxu0 %v280
  %v898 = vpop.f32.mrf.mxu0
  %v899 = vadd.f32 %v679, %v898
  %v900 = vpop.f32.mrf.mxu0
  %901 = vmatprep.mubr.f32.mxu0 0.0
  %902 = vmatmul.mubr.f32.gmra.mxu0 %v283
  %v903 = vpop.f32.mrf.mxu0
  %v904 = vadd.f32 %v684, %v903
  %v905 = vpop.f32.mrf.mxu0
  %906 = vmatprep.mubr.f32.mxu0 0.0
  %907 = vmatmul.mubr.f32.gmra.mxu0 %v286
  %v908 = vpop.f32.mrf.mxu0
  %v909 = vadd.f32 %v689, %v908
  %v910 = vpop.f32.mrf.mxu0
  %911 = vmatprep.mubr.f32.mxu0 0.0
  %912 = vmatmul.mubr.f32.gmra.mxu0 %v289
  %v913 = vpop.f32.mrf.mxu0
  %v914 = vadd.f32 %v694, %v913
  %v915 = vpop.f32.mrf.mxu0
  %916 = vmatprep.mubr.f32.mxu0 0.0
  %917 = vmatmul.mubr.f32.gmra.mxu0 %v292
  %v918 = vpop.f32.mrf.mxu0
  %v919 = vadd.f32 %v699, %v918
  %v920 = vpop.f32.mrf.mxu0
  %921 = vmatprep.mubr.f32.mxu0 0.0
  %922 = vmatmul.mubr.f32.gmra.mxu0 %v295
  %v923 = vpop.f32.mrf.mxu0
  %v924 = vadd.f32 %v704, %v923
  %v925 = vpop.f32.mrf.mxu0
  %926 = vmatprep.mubr.f32.mxu0 0.0
  %927 = vmatmul.mubr.f32.gmra.mxu0 %v298
  %v928 = vpop.f32.mrf.mxu0
  %v929 = vadd.f32 %v709, %v928
  %v930 = vpop.f32.mrf.mxu0
  %931 = vmatprep.mubr.f32.mxu0 0.0
  %932 = vmatmul.mubr.f32.gmra.mxu0 %v301
  %v933 = vpop.f32.mrf.mxu0
  %v934 = vadd.f32 %v714, %v933
  %v935 = vpop.f32.mrf.mxu0
  %936 = vmatprep.mubr.f32.mxu0 0.0
  %937 = vmatmul.mubr.f32.gmra.mxu0 %v304
  %v938 = vpop.f32.mrf.mxu0
  %v939 = vadd.f32 %v719, %v938
  %v940 = vpop.f32.mrf.mxu0
  %941 = vmatprep.mubr.f32.mxu0 0.0
  %942 = vmatmul.mubr.f32.gmra.mxu0 %v307
  %v943 = vpop.f32.mrf.mxu0
  %v944 = vadd.f32 %v724, %v943
  %v945 = vpop.f32.mrf.mxu0
  %946 = vmatprep.mubr.f32.mxu0 0.0
  %947 = vmatmul.mubr.f32.gmra.mxu0 %v310
  %v948 = vpop.f32.mrf.mxu0
  %v949 = vadd.f32 %v729, %v948
  %v950 = vpop.f32.mrf.mxu0
  %951 = vmatprep.mubr.f32.mxu0 0.0
  %952 = vmatmul.mubr.f32.gmra.mxu0 %v313
  %v953 = vpop.f32.mrf.mxu0
  %v954 = vadd.f32 %v734, %v953
  %v955 = vpop.f32.mrf.mxu0
  %956 = vmatprep.mubr.f32.mxu0 0.0
  %957 = vmatmul.mubr.f32.gmra.mxu0 %v316
  %v958 = vpop.f32.mrf.mxu0
  %v959 = vadd.f32 %v739, %v958
  %v960 = vpop.f32.mrf.mxu0
  %961 = vmatprep.mubr.f32.mxu0 0.0
  %962 = vmatmul.mubr.f32.gmra.mxu0 %v319
  %v963 = vpop.f32.mrf.mxu0
  %v964 = vadd.f32 %v744, %v963
  %v965 = vpop.f32.mrf.mxu0
  %966 = vmatprep.mubr.f32.mxu0 0.0
  %967 = vmatmul.mubr.f32.gmra.mxu0 %v322
  %v968 = vpop.f32.mrf.mxu0
  %v969 = vadd.f32 %v749, %v968
  %v970 = vpop.f32.mrf.mxu0
  %971 = vmatprep.mubr.f32.mxu0 0.0
  %972 = vmatmul.mubr.f32.gmra.mxu0 %v325
  %v973 = vpop.f32.mrf.mxu0
  %v974 = vadd.f32 %v754, %v973
  %v975 = vpop.f32.mrf.mxu0
  %976 = vmatprep.mubr.f32.mxu0 0.0
  %977 = vmatmul.mubr.f32.gmra.mxu0 %v328
  %v978 = vpop.f32.mrf.mxu0
  %v979 = vadd.f32 %v759, %v978
  %v980 = vpop.f32.mrf.mxu0
  %981 = vmatprep.mubr.f32.mxu0 0.0
  %982 = vmatmul.mubr.f32.gmra.mxu0 %v331
  %v983 = vpop.f32.mrf.mxu0
  %v984 = vadd.f32 %v764, %v983
  %v985 = vpop.f32.mrf.mxu0
  %986 = vmatprep.mubr.f32.mxu0 0.0
  %987 = vmatmul.mubr.f32.gmra.mxu0 %v334
  %v988 = vpop.f32.mrf.mxu0
  %v989 = vadd.f32 %v769, %v988
  %v990 = vpop.f32.mrf.mxu0
  %991 = vmatprep.mubr.f32.mxu0 0.0
  %992 = vmatmul.mubr.f32.gmra.mxu0 %v337
  %v993 = vpop.f32.mrf.mxu0
  %v994 = vadd.f32 %v774, %v993
  %v995 = vpop.f32.mrf.mxu0
  %996 = vmatprep.mubr.f32.mxu0 0.0
  %997 = vmatmul.mubr.f32.gmra.mxu0 %v340
  %v998 = vpop.f32.mrf.mxu0
  %v999 = vadd.f32 %v779, %v998
  %v1000 = vpop.f32.mrf.mxu0
  %1001 = vdwg.mxu0
  %vm1002 = vcmask 261120
  %1003 = vst.msk [vmem:[%s3] sm:$0xff] %vm1002, %v849
  %1004 = vst.msk [vmem:[%s3 + $0x8] sm:$0xff] %vm1002, %v854
  %1005 = vst.msk [vmem:[%s3 + $0x10] sm:$0xff] %vm1002, %v859
  %1006 = vst.msk [vmem:[%s3 + $0x18] sm:$0xff] %vm1002, %v864
  %1007 = vst.msk [vmem:[%s3 + $0x20] sm:$0xff] %vm1002, %v869
  %1008 = vst.msk [vmem:[%s3 + $0x28] sm:$0xff] %vm1002, %v874
  %1009 = vst.msk [vmem:[%s3 + $0x30] sm:$0xff] %vm1002, %v879
  %1010 = vst.msk [vmem:[%s3 + $0x38] sm:$0xff] %vm1002, %v884
  %1011 = vst.msk [vmem:[%s3 + $0x40] sm:$0xff] %vm1002, %v889
  %1012 = vst.msk [vmem:[%s3 + $0x48] sm:$0xff] %vm1002, %v894
  %1013 = vst.msk [vmem:[%s3 + $0x50] sm:$0xff] %vm1002, %v899
  %1014 = vst.msk [vmem:[%s3 + $0x58] sm:$0xff] %vm1002, %v904
  %1015 = vst.msk [vmem:[%s3 + $0x60] sm:$0xff] %vm1002, %v909
  %1016 = vst.msk [vmem:[%s3 + $0x68] sm:$0xff] %vm1002, %v914
  %1017 = vst.msk [vmem:[%s3 + $0x70] sm:$0xff] %vm1002, %v919
  %1018 = vst.msk [vmem:[%s3 + $0x78] sm:$0xff] %vm1002, %v924
  %1019 = vst.msk [vmem:[%s3 + $0x80] sm:$0xff] %vm1002, %v929
  %1020 = vst.msk [vmem:[%s3 + $0x88] sm:$0xff] %vm1002, %v934
  %1021 = vst.msk [vmem:[%s3 + $0x90] sm:$0xff] %vm1002, %v939
  %1022 = vst.msk [vmem:[%s3 + $0x98] sm:$0xff] %vm1002, %v944
  %1023 = vst.msk [vmem:[%s3 + $0xa0] sm:$0xff] %vm1002, %v949
  %1024 = vst.msk [vmem:[%s3 + $0xa8] sm:$0xff] %vm1002, %v954
  %1025 = vst.msk [vmem:[%s3 + $0xb0] sm:$0xff] %vm1002, %v959
  %1026 = vst.msk [vmem:[%s3 + $0xb8] sm:$0xff] %vm1002, %v964
  %1027 = vst.msk [vmem:[%s3 + $0xc0] sm:$0xff] %vm1002, %v969
  %1028 = vst.msk [vmem:[%s3 + $0xc8] sm:$0xff] %vm1002, %v974
  %1029 = vst.msk [vmem:[%s3 + $0xd0] sm:$0xff] %vm1002, %v979
  %1030 = vst.msk [vmem:[%s3 + $0xd8] sm:$0xff] %vm1002, %v984
  %1031 = vst.msk [vmem:[%s3 + $0xe0] sm:$0xff] %vm1002, %v989
  %1032 = vst.msk [vmem:[%s3 + $0xe8] sm:$0xff] %vm1002, %v994
  %vm1033 = vcmask 254976
  %1034 = vst.msk [vmem:[%s3 + $0xf0] sm:$0x3] %vm1033, %v999
  // Predicated region
  $region14: #{forward.4} parent=0 // pred_check
    _
  $region15: #{forward.4} parent=0 // pred_check_branch
    %1036 = sbr.rel (0) target = $region17
  $region16: #{forward.4} parent=0 // pred_region
    _
  $region17: #{forward.4} parent=0 // pred_fallthru
    _
  // Predicated region
  $region18: #{forward.4} parent=0 // pred_check
    _
  $region19: #{forward.4} parent=0 // pred_check_branch
    %1038 = sbr.rel (0) target = $region21
  $region20: #{forward.4} parent=0 // pred_region
    _
  $region21: #{forward.4} parent=0 // pred_fallthru
    _

// kernel: forward.5
$region0: #{forward.5}
  #allocation0 [shape = 'u32[]', space=smem, size = 0x4, offset = 0x4, fixed_abs, tag = 'smem constant byte address 0x4 - core index']
  #allocation1 [shape = 'u32[144,128]{1,0:T(1,128)}', space=vmem, size = 0x12000, scoped, tag = 'internal scratch']
  #allocation2 [shape = 'f32[2,1024]{1,0:T(2,128)}', space=vmem, size = 0x2000, scoped, tag = 'scratch operand']
  #allocation3 [shape = 'f32[1,1]{1,0:T(1,128)S(1)}', space=vmem, size = 0x200, scoped, tag = 'scoped memory for forward.5']
  %s0 = inlined_call_operand.vmem [shape: bf16[2,3872], index: 0, kind: input, shape index: {}]
  %s1 = inlined_call_operand.vmem [shape: s8[3872,1024], index: 1, kind: input, shape index: {}]
  %s2 = inlined_call_operand.vmem [shape: f32[1,1024], index: 2, kind: input, shape index: {}]
  %s3 = inlined_call_operand.vmem [shape: f32[1,1024], index: 3, kind: input, shape index: {}]
  %s4 = inlined_call_operand.vmem [shape: s8[1024,1024], index: 4, kind: input, shape index: {}]
  %s5 = inlined_call_operand.vmem [shape: f32[1,1024], index: 5, kind: input, shape index: {}]
  %s6 = inlined_call_operand.vmem [shape: f32[1,1024], index: 6, kind: input, shape index: {}]
  %s7 = inlined_call_operand.vmem [shape: f32[1024,1], index: 7, kind: input, shape index: {}]
  %s8 = inlined_call_operand.<no memory space> [shape: f32[1,1], index: 8, kind: input, shape index: {}]
  %s9 = inlined_call_operand.vmem [shape: f32[2,1], index: 9, kind: output, shape index: {}]
  %s10 = sld [smem:[#allocation0]]
  $region100: #{forward.5} parent=0
    _
  %s12 = ssub.s32 1, %s10
  %s13 = scalar_select 0, %s12, %s10
  %v14 = vstv %s8
  %15 = vst [vmem:[#allocation3] sm:$0x1] %v14
  $region1: #{forward.5} parent=0
    #allocation4 [shape = 'u8[3964928]{0}', space=vmem, size = 0x3c8000, scoped, tag = 'input window, operand 1']
    loop: start=0, step=1, limit=4
    $region2: #{forward.5} parent=1 // loop_pre_header
      _
    $region3: #{forward.5} parent=1 // loop_header
      %s17 = sphi 0, %s21
      %p18 = scmp.ge.s32.totalorder %s17, 4
      %s25 = sphi 0, %s25
      %s27 = sphi 0, %s25
      %s28 = sphi 0, %s27
      %s42 = sphi 0, %s28
      %s48 = sphi 0, %s50
      %s51 = sphi 0, %s48
      %s52 = sphi 0, %s51
      %s68 = sphi 0, %s52
      %s74 = sphi 0, %s76
      %s77 = sphi 0, %s74
      %s78 = sphi 0, %s77
      %s94 = sphi 0, %s78
      %s100 = sphi 0, %s102
      %s103 = sphi 0, %s100
      %s104 = sphi 0, %s103
      %s120 = sphi 0, %s104
      %s126 = sphi 0, %s128
      %s129 = sphi 0, %s126
      %s130 = sphi 0, %s129
      %s146 = sphi 0, %s130
      %s150 = sphi 0, %s150
      %s152 = sphi 0, %s150
      %s153 = sphi 0, %s152
      %s167 = sphi 0, %s153
      %s171 = sphi 0, %s171
      %s173 = sphi 0, %s171
      %s174 = sphi 0, %s173
      %s188 = sphi 0, %s174
      %s192 = sphi 0, %s192
      %s194 = sphi 0, %s192
      %s195 = sphi 0, %s194
      %s209 = sphi 0, %s195
      %s213 = sphi 0, %s213
      %s215 = sphi 0, %s213
      %s216 = sphi 0, %s215
      %s230 = sphi 0, %s216
      %s234 = sphi 0, %s234
      %s236 = sphi 0, %s234
      %s237 = sphi 0, %s236
      %s251 = sphi 0, %s237
    $region4: #{forward.5} parent=1 // loop_header_branch
      %20 = sbr.rel (%p18) target = $region8
    $region5: #{forward.5} parent=1 // loop_body
      %s22 = ssub.s32 %s17, 1
      %s23 = ssub.s32 %s17, 2
      %s24 = sadd.s32 %s17, 1
      %s26 = sadd.s32 %s25, 1
      %p29 = scmp.eq.s32.totalorder %s17, 1
      %p30 = scmp.ne.s32.totalorder %s25, %s27
      %p31 = scmp.eq.s32.totalorder %s17, 0
      %p32 = por %p30, %p31
      %p33 = scmp.ne.s32.totalorder %s25, %s27
      %p34 = scmp.eq.s32.totalorder %s22, 1
      %p35 = por %p33, %p34
      %p36 = scmp.ne.s32.totalorder %s27, %s28
      %p37 = scmp.eq.s32.totalorder %s22, 0
      %p38 = por %p36, %p37
      %p39 = scmp.ne.s32.totalorder %s27, %s28
      %p40 = scmp.eq.s32.totalorder %s23, 1
      %p41 = por %p39, %p40
      %p43 = scmp.ne.s32.totalorder %s28, %s42
      %p44 = scmp.eq.s32.totalorder %s23, 0
      %p45 = por %p43, %p44
      %s46 = ssub.s32 %s17, %s24
      %p47 = scmp.eq.s32.totalorder %s46, 0
      %s49 = sadd.s32 %s48, 1
      %s50 = scalar_select %p47, %s48, %s49
      %p53 = pneg %p47
      %p54 = scmp.eq.s32.totalorder %s17, 1
      %p55 = por %p53, %p54
      %p56 = scmp.ne.s32.totalorder %s48, %s51
      %p57 = scmp.eq.s32.totalorder %s17, 0
      %p58 = por %p56, %p57
      %p59 = scmp.ne.s32.totalorder %s48, %s51
      %p60 = scmp.eq.s32.totalorder %s22, 1
      %p61 = por %p59, %p60
      %p62 = scmp.ne.s32.totalorder %s51, %s52
      %p63 = scmp.eq.s32.totalorder %s22, 0
      %p64 = por %p62, %p63
      %p65 = scmp.ne.s32.totalorder %s51, %s52
      %p66 = scmp.eq.s32.totalorder %s23, 1
      %p67 = por %p65, %p66
      %p69 = scmp.ne.s32.totalorder %s52, %s68
      %p70 = scmp.eq.s32.totalorder %s23, 0
      %p71 = por %p69, %p70
      %s72 = ssub.s32 %s17, %s24
      %p73 = scmp.eq.s32.totalorder %s72, 0
      %s75 = sadd.s32 %s74, 1
      %s76 = scalar_select %p73, %s74, %s75
      %p79 = pneg %p73
      %p80 = scmp.eq.s32.totalorder %s17, 1
      %p81 = por %p79, %p80
      %p82 = scmp.ne.s32.totalorder %s74, %s77
      %p83 = scmp.eq.s32.totalorder %s17, 0
      %p84 = por %p82, %p83
      %p85 = scmp.ne.s32.totalorder %s74, %s77
      %p86 = scmp.eq.s32.totalorder %s22, 1
      %p87 = por %p85, %p86
      %p88 = scmp.ne.s32.totalorder %s77, %s78
      %p89 = scmp.eq.s32.totalorder %s22, 0
      %p90 = por %p88, %p89
      %p91 = scmp.ne.s32.totalorder %s77, %s78
      %p92 = scmp.eq.s32.totalorder %s23, 1
      %p93 = por %p91, %p92
      %p95 = scmp.ne.s32.totalorder %s78, %s94
      %p96 = scmp.eq.s32.totalorder %s23, 0
      %p97 = por %p95, %p96
      %s98 = ssub.s32 %s17, %s24
      %p99 = scmp.eq.s32.totalorder %s98, 0
      %s101 = sadd.s32 %s100, 1
      %s102 = scalar_select %p99, %s100, %s101
      %p105 = pneg %p99
      %p106 = scmp.eq.s32.totalorder %s17, 1
      %p107 = por %p105, %p106
      %p108 = scmp.ne.s32.totalorder %s100, %s103
      %p109 = scmp.eq.s32.totalorder %s17, 0
      %p110 = por %p108, %p109
      %p111 = scmp.ne.s32.totalorder %s100, %s103
      %p112 = scmp.eq.s32.totalorder %s22, 1
      %p113 = por %p111, %p112
      %p114 = scmp.ne.s32.totalorder %s103, %s104
      %p115 = scmp.eq.s32.totalorder %s22, 0
      %p116 = por %p114, %p115
      %p117 = scmp.ne.s32.totalorder %s103, %s104
      %p118 = scmp.eq.s32.totalorder %s23, 1
      %p119 = por %p117, %p118
      %p121 = scmp.ne.s32.totalorder %s104, %s120
      %p122 = scmp.eq.s32.totalorder %s23, 0
      %p123 = por %p121, %p122
      %s124 = ssub.s32 %s17, %s24
      %p125 = scmp.eq.s32.totalorder %s124, 0
      %s127 = sadd.s32 %s126, 1
      %s128 = scalar_select %p125, %s126, %s127
      %p131 = pneg %p125
      %p132 = scmp.eq.s32.totalorder %s17, 1
      %p133 = por %p131, %p132
      %p134 = scmp.ne.s32.totalorder %s126, %s129
      %p135 = scmp.eq.s32.totalorder %s17, 0
      %p136 = por %p134, %p135
      %p137 = scmp.ne.s32.totalorder %s126, %s129
      %p138 = scmp.eq.s32.totalorder %s22, 1
      %p139 = por %p137, %p138
      %p140 = scmp.ne.s32.totalorder %s129, %s130
      %p141 = scmp.eq.s32.totalorder %s22, 0
      %p142 = por %p140, %p141
      %p143 = scmp.ne.s32.totalorder %s129, %s130
      %p144 = scmp.eq.s32.totalorder %s23, 1
      %p145 = por %p143, %p144
      %p147 = scmp.ne.s32.totalorder %s130, %s146
      %p148 = scmp.eq.s32.totalorder %s23, 0
      %p149 = por %p147, %p148
      %s151 = sadd.s32 %s150, 1
      %p154 = scmp.eq.s32.totalorder %s17, 1
      %p155 = scmp.ne.s32.totalorder %s150, %s152
      %p156 = scmp.eq.s32.totalorder %s17, 0
      %p157 = por %p155, %p156
      %p158 = scmp.ne.s32.totalorder %s150, %s152
      %p159 = scmp.eq.s32.totalorder %s22, 1
      %p160 = por %p158, %p159
      %p161 = scmp.ne.s32.totalorder %s152, %s153
      %p162 = scmp.eq.s32.totalorder %s22, 0
      %p163 = por %p161, %p162
      %p164 = scmp.ne.s32.totalorder %s152, %s153
      %p165 = scmp.eq.s32.totalorder %s23, 1
      %p166 = por %p164, %p165
      %p168 = scmp.ne.s32.totalorder %s153, %s167
      %p169 = scmp.eq.s32.totalorder %s23, 0
      %p170 = por %p168, %p169
      %s172 = sadd.s32 %s171, 1
      %p175 = scmp.eq.s32.totalorder %s17, 1
      %p176 = scmp.ne.s32.totalorder %s171, %s173
      %p177 = scmp.eq.s32.totalorder %s17, 0
      %p178 = por %p176, %p177
      %p179 = scmp.ne.s32.totalorder %s171, %s173
      %p180 = scmp.eq.s32.totalorder %s22, 1
      %p181 = por %p179, %p180
      %p182 = scmp.ne.s32.totalorder %s173, %s174
      %p183 = scmp.eq.s32.totalorder %s22, 0
      %p184 = por %p182, %p183
      %p185 = scmp.ne.s32.totalorder %s173, %s174
      %p186 = scmp.eq.s32.totalorder %s23, 1
      %p187 = por %p185, %p186
      %p189 = scmp.ne.s32.totalorder %s174, %s188
      %p190 = scmp.eq.s32.totalorder %s23, 0
      %p191 = por %p189, %p190
      %s193 = sadd.s32 %s192, 1
      %p196 = scmp.eq.s32.totalorder %s17, 1
      %p197 = scmp.ne.s32.totalorder %s192, %s194
      %p198 = scmp.eq.s32.totalorder %s17, 0
      %p199 = por %p197, %p198
      %p200 = scmp.ne.s32.totalorder %s192, %s194
      %p201 = scmp.eq.s32.totalorder %s22, 1
      %p202 = por %p200, %p201
      %p203 = scmp.ne.s32.totalorder %s194, %s195
      %p204 = scmp.eq.s32.totalorder %s22, 0
      %p205 = por %p203, %p204
      %p206 = scmp.ne.s32.totalorder %s194, %s195
      %p207 = scmp.eq.s32.totalorder %s23, 1
      %p208 = por %p206, %p207
      %p210 = scmp.ne.s32.totalorder %s195, %s209
      %p211 = scmp.eq.s32.totalorder %s23, 0
      %p212 = por %p210, %p211
      %s214 = sadd.s32 %s213, 1
      %p217 = scmp.eq.s32.totalorder %s17, 1
      %p218 = scmp.ne.s32.totalorder %s213, %s215
      %p219 = scmp.eq.s32.totalorder %s17, 0
      %p220 = por %p218, %p219
      %p221 = scmp.ne.s32.totalorder %s213, %s215
      %p222 = scmp.eq.s32.totalorder %s22, 1
      %p223 = por %p221, %p222
      %p224 = scmp.ne.s32.totalorder %s215, %s216
      %p225 = scmp.eq.s32.totalorder %s22, 0
      %p226 = por %p224, %p225
      %p227 = scmp.ne.s32.totalorder %s215, %s216
      %p228 = scmp.eq.s32.totalorder %s23, 1
      %p229 = por %p227, %p228
      %p231 = scmp.ne.s32.totalorder %s216, %s230
      %p232 = scmp.eq.s32.totalorder %s23, 0
      %p233 = por %p231, %p232
      %s235 = sadd.s32 %s234, 1
      %p238 = scmp.eq.s32.totalorder %s17, 1
      %p239 = scmp.ne.s32.totalorder %s234, %s236
      %p240 = scmp.eq.s32.totalorder %s17, 0
      %p241 = por %p239, %p240
      %p242 = scmp.ne.s32.totalorder %s234, %s236
      %p243 = scmp.eq.s32.totalorder %s22, 1
      %p244 = por %p242, %p243
      %p245 = scmp.ne.s32.totalorder %s236, %s237
      %p246 = scmp.eq.s32.totalorder %s22, 0
      %p247 = por %p245, %p246
      %p248 = scmp.ne.s32.totalorder %s236, %s237
      %p249 = scmp.eq.s32.totalorder %s23, 1
      %p250 = por %p248, %p249
      %p252 = scmp.ne.s32.totalorder %s237, %s251
      %p253 = scmp.eq.s32.totalorder %s23, 0
      %p254 = por %p252, %p253
      %p255 = scmp.le.s32.totalorder 1, %s17
      %p256 = scmp.lt.s32.totalorder %s17, 3
      %p257 = pnand %p255, %p256
      %p258 = pneg %p257
      // Predicated region
      $region9: #{forward.5} parent=5 // pred_check
        _
      $region10: #{forward.5} parent=5 // pred_check_branch
        %260 = sbr.rel (%p257) target = $region12
      $region11: #{forward.5} parent=5 // pred_region
        %s261 = ssub.s32 %s17, 1
        // Predicated region
        $region13: #{forward.5} parent=11 // pred_check
          %p262 = pneg %p38
        $region14: #{forward.5} parent=11 // pred_check_branch
          %264 = sbr.rel (%p262) target = $region16
        $region15: #{forward.5} parent=11 // pred_region
          _
        $region16: #{forward.5} parent=11 // pred_fallthru
          _
        // Predicated region
        $region17: #{forward.5} parent=11 // pred_check
          %p265 = pneg %p163
        $region18: #{forward.5} parent=11 // pred_check_branch
          %267 = sbr.rel (%p265) target = $region20
        $region19: #{forward.5} parent=11 // pred_region
          _
        $region20: #{forward.5} parent=11 // pred_fallthru
          _
        // Predicated region
        $region21: #{forward.5} parent=11 // pred_check
          %p268 = pneg %p184
        $region22: #{forward.5} parent=11 // pred_check_branch
          %270 = sbr.rel (%p268) target = $region24
        $region23: #{forward.5} parent=11 // pred_region
          _
        $region24: #{forward.5} parent=11 // pred_fallthru
          _
        // Predicated region
        $region25: #{forward.5} parent=11 // pred_check
          %p271 = pneg %p205
        $region26: #{forward.5} parent=11 // pred_check_branch
          %273 = sbr.rel (%p271) target = $region28
        $region27: #{forward.5} parent=11 // pred_region
          _
        $region28: #{forward.5} parent=11 // pred_fallthru
          _
        // Predicated region
        $region29: #{forward.5} parent=11 // pred_check
          %p274 = pneg %p226
        $region30: #{forward.5} parent=11 // pred_check_branch
          %276 = sbr.rel (%p274) target = $region32
        $region31: #{forward.5} parent=11 // pred_region
          _
        $region32: #{forward.5} parent=11 // pred_fallthru
          _
      $region12: #{forward.5} parent=5 // pred_fallthru
        _
      %p277 = scmp.lt.s32.totalorder %s17, 2
      // Predicated region
      $region33: #{forward.5} parent=5 // pred_check
        %p278 = pneg %p277
      $region34: #{forward.5} parent=5 // pred_check_branch
        %280 = sbr.rel (%p278) target = $region36
      $region35: #{forward.5} parent=5 // pred_region
        // Predicated region
        $region37: #{forward.5} parent=35 // pred_check
          %p281 = pneg %p58
        $region38: #{forward.5} parent=35 // pred_check_branch
          %283 = sbr.rel (%p281) target = $region40
        $region39: #{forward.5} parent=35 // pred_region
          %s284 = sand.u32 %s48, 1
          %s285 = sand.u32 %s48, 1
          %s286 = smul.addr %s285, 3872
          %s287 = scalar_lea.vmem [#allocation4], %s286
          %s288 = smul.u32 4, %s17
          %s289 = smul.addr %s288, 8
          %s290 = scalar_lea.vmem %s1, %s289
          // Predicated region
          $region41: #{forward.5} parent=39 // pred_check
            _
          $region42: #{forward.5} parent=39 // pred_check_branch
            %292 = sbr.rel (0) target = $region44
          $region43: #{forward.5} parent=39 // pred_region
            // Predicated region
            $region45: #{forward.5} parent=43 // pred_check
              _
            $region46: #{forward.5} parent=43 // pred_check_branch
              %294 = sbr.rel (0) target = $region48
            $region47: #{forward.5} parent=43 // pred_region
              loop: start=0, step=1, limit=1
              $region49: #{forward.5} parent=47 // loop_pre_header
                _
              $region50: #{forward.5} parent=47 // loop_header
                %s296 = sphi 0, %s300
                %p297 = scmp.ge.s32.totalorder %s296, 1
                %s301 = sphi %s290, %s290
                %s302 = sphi %s287, %s287
              $region51: #{forward.5} parent=47 // loop_header_branch
                %299 = sbr.rel (%p297) target = $region55
              $region52: #{forward.5} parent=47 // loop_body
                %v303 = vld [vmem:[%s301] sm:$0xff]
                %304 = vst [vmem:[%s302] sm:$0xff] %v303
                %v305 = vld [vmem:[%s301 + $0x8] sm:$0xff]
                %306 = vst [vmem:[%s302 + $0x8] sm:$0xff] %v305
                %v307 = vld [vmem:[%s301 + $0x10] sm:$0xff]
                %308 = vst [vmem:[%s302 + $0x10] sm:$0xff] %v307
                %v309 = vld [vmem:[%s301 + $0x18] sm:$0xff]
                %310 = vst [vmem:[%s302 + $0x18] sm:$0xff] %v309
                %v311 = vld [vmem:[%s301 + $0x40] sm:$0xff]
                %312 = vst [vmem:[%s302 + $0x20] sm:$0xff] %v311
                %v313 = vld [vmem:[%s301 + $0x48] sm:$0xff]
                %314 = vst [vmem:[%s302 + $0x28] sm:$0xff] %v313
                %v315 = vld [vmem:[%s301 + $0x50] sm:$0xff]
                %316 = vst [vmem:[%s302 + $0x30] sm:$0xff] %v315
                %v317 = vld [vmem:[%s301 + $0x58] sm:$0xff]
                %318 = vst [vmem:[%s302 + $0x38] sm:$0xff] %v317
                %v319 = vld [vmem:[%s301 + $0x80] sm:$0xff]
                %320 = vst [vmem:[%s302 + $0x40] sm:$0xff] %v319
                %v321 = vld [vmem:[%s301 + $0x88] sm:$0xff]
                %322 = vst [vmem:[%s302 + $0x48] sm:$0xff] %v321
                %v323 = vld [vmem:[%s301 + $0x90] sm:$0xff]
                %324 = vst [vmem:[%s302 + $0x50] sm:$0xff] %v323
                %v325 = vld [vmem:[%s301 + $0x98] sm:$0xff]
                %326 = vst [vmem:[%s302 + $0x58] sm:$0xff] %v325
                %v327 = vld [vmem:[%s301 + $0xc0] sm:$0xff]
                %328 = vst [vmem:[%s302 + $0x60] sm:$0xff] %v327
                %v329 = vld [vmem:[%s301 + $0xc8] sm:$0xff]
                %330 = vst [vmem:[%s302 + $0x68] sm:$0xff] %v329
                %v331 = vld [vmem:[%s301 + $0xd0] sm:$0xff]
                %332 = vst [vmem:[%s302 + $0x70] sm:$0xff] %v331
                %v333 = vld [vmem:[%s301 + $0xd8] sm:$0xff]
                %334 = vst [vmem:[%s302 + $0x78] sm:$0xff] %v333
                %v335 = vld [vmem:[%s301 + $0x100] sm:$0xff]
                %336 = vst [vmem:[%s302 + $0x80] sm:$0xff] %v335
                %v337 = vld [vmem:[%s301 + $0x108] sm:$0xff]
                %338 = vst [vmem:[%s302 + $0x88] sm:$0xff] %v337
                %v339 = vld [vmem:[%s301 + $0x110] sm:$0xff]
                %340 = vst [vmem:[%s302 + $0x90] sm:$0xff] %v339
                %v341 = vld [vmem:[%s301 + $0x118] sm:$0xff]
                %342 = vst [vmem:[%s302 + $0x98] sm:$0xff] %v341
                %v343 = vld [vmem:[%s301 + $0x140] sm:$0xff]
                %344 = vst [vmem:[%s302 + $0xa0] sm:$0xff] %v343
                %v345 = vld [vmem:[%s301 + $0x148] sm:$0xff]
                %346 = vst [vmem:[%s302 + $0xa8] sm:$0xff] %v345
                %v347 = vld [vmem:[%s301 + $0x150] sm:$0xff]
                %348 = vst [vmem:[%s302 + $0xb0] sm:$0xff] %v347
                %v349 = vld [vmem:[%s301 + $0x158] sm:$0xff]
                %350 = vst [vmem:[%s302 + $0xb8] sm:$0xff] %v349
                %v351 = vld [vmem:[%s301 + $0x180] sm:$0xff]
                %352 = vst [vmem:[%s302 + $0xc0] sm:$0xff] %v351
                %v353 = vld [vmem:[%s301 + $0x188] sm:$0xff]
                %354 = vst [vmem:[%s302 + $0xc8] sm:$0xff] %v353
                %v355 = vld [vmem:[%s301 + $0x190] sm:$0xff]
                %356 = vst [vmem:[%s302 + $0xd0] sm:$0xff] %v355
                %v357 = vld [vmem:[%s301 + $0x198] sm:$0xff]
                %358 = vst [vmem:[%s302 + $0xd8] sm:$0xff] %v357
                %v359 = vld [vmem:[%s301 + $0x1c0] sm:$0xff]
                %360 = vst [vmem:[%s302 + $0xe0] sm:$0xff] %v359
                %v361 = vld [vmem:[%s301 + $0x1c8] sm:$0xff]
                %362 = vst [vmem:[%s302 + $0xe8] sm:$0xff] %v361
                %v363 = vld [vmem:[%s301 + $0x1d0] sm:$0xff]
                %364 = vst [vmem:[%s302 + $0xf0] sm:$0xff] %v363
                %v365 = vld [vmem:[%s301 + $0x1d8] sm:$0xff]
                %366 = vst [vmem:[%s302 + $0xf8] sm:$0xff] %v365
                %v367 = vld [vmem:[%s301 + $0x200] sm:$0xff]
                %368 = vst [vmem:[%s302 + $0x100] sm:$0xff] %v367
                %v369 = vld [vmem:[%s301 + $0x208] sm:$0xff]
                %370 = vst [vmem:[%s302 + $0x108] sm:$0xff] %v369
                %v371 = vld [vmem:[%s301 + $0x210] sm:$0xff]
                %372 = vst [vmem:[%s302 + $0x110] sm:$0xff] %v371
                %v373 = vld [vmem:[%s301 + $0x218] sm:$0xff]
                %374 = vst [vmem:[%s302 + $0x118] sm:$0xff] %v373
                %v375 = vld [vmem:[%s301 + $0x240] sm:$0xff]
                %376 = vst [vmem:[%s302 + $0x120] sm:$0xff] %v375
                %v377 = vld [vmem:[%s301 + $0x248] sm:$0xff]
                %378 = vst [vmem:[%s302 + $0x128] sm:$0xff] %v377
                %v379 = vld [vmem:[%s301 + $0x250] sm:$0xff]
                %380 = vst [vmem:[%s302 + $0x130] sm:$0xff] %v379
                %v381 = vld [vmem:[%s301 + $0x258] sm:$0xff]
                %382 = vst [vmem:[%s302 + $0x138] sm:$0xff] %v381
                %v383 = vld [vmem:[%s301 + $0x280] sm:$0xff]
                %384 = vst [vmem:[%s302 + $0x140] sm:$0xff] %v383
                %v385 = vld [vmem:[%s301 + $0x288] sm:$0xff]
                %386 = vst [vmem:[%s302 + $0x148] sm:$0xff] %v385
                %v387 = vld [vmem:[%s301 + $0x290] sm:$0xff]
                %388 = vst [vmem:[%s302 + $0x150] sm:$0xff] %v387
                %v389 = vld [vmem:[%s301 + $0x298] sm:$0xff]
                %390 = vst [vmem:[%s302 + $0x158] sm:$0xff] %v389
                %v391 = vld [vmem:[%s301 + $0x2c0] sm:$0xff]
                %392 = vst [vmem:[%s302 + $0x160] sm:$0xff] %v391
                %v393 = vld [vmem:[%s301 + $0x2c8] sm:$0xff]
                %394 = vst [vmem:[%s302 + $0x168] sm:$0xff] %v393
                %v395 = vld [vmem:[%s301 + $0x2d0] sm:$0xff]
                %396 = vst [vmem:[%s302 + $0x170] sm:$0xff] %v395
                %v397 = vld [vmem:[%s301 + $0x2d8] sm:$0xff]
                %398 = vst [vmem:[%s302 + $0x178] sm:$0xff] %v397
                %v399 = vld [vmem:[%s301 + $0x300] sm:$0xff]
                %400 = vst [vmem:[%s302 + $0x180] sm:$0xff] %v399
                %v401 = vld [vmem:[%s301 + $0x308] sm:$0xff]
                %402 = vst [vmem:[%s302 + $0x188] sm:$0xff] %v401
                %v403 = vld [vmem:[%s301 + $0x310] sm:$0xff]
                %404 = vst [vmem:[%s302 + $0x190] sm:$0xff] %v403
                %v405 = vld [vmem:[%s301 + $0x318] sm:$0xff]
                %406 = vst [vmem:[%s302 + $0x198] sm:$0xff] %v405
                %v407 = vld [vmem:[%s301 + $0x340] sm:$0xff]
                %408 = vst [vmem:[%s302 + $0x1a0] sm:$0xff] %v407
                %v409 = vld [vmem:[%s301 + $0x348] sm:$0xff]
                %410 = vst [vmem:[%s302 + $0x1a8] sm:$0xff] %v409
                %v411 = vld [vmem:[%s301 + $0x350] sm:$0xff]
                %412 = vst [vmem:[%s302 + $0x1b0] sm:$0xff] %v411
                %v413 = vld [vmem:[%s301 + $0x358] sm:$0xff]
                %414 = vst [vmem:[%s302 + $0x1b8] sm:$0xff] %v413
                %v415 = vld [vmem:[%s301 + $0x380] sm:$0xff]
                %416 = vst [vmem:[%s302 + $0x1c0] sm:$0xff] %v415
                %v417 = vld [vmem:[%s301 + $0x388] sm:$0xff]
                %418 = vst [vmem:[%s302 + $0x1c8] sm:$0xff] %v417
                %v419 = vld [vmem:[%s301 + $0x390] sm:$0xff]
                %420 = vst [vmem:[%s302 + $0x1d0] sm:$0xff] %v419
                %v421 = vld [vmem:[%s301 + $0x398] sm:$0xff]
                %422 = vst [vmem:[%s302 + $0x1d8] sm:$0xff] %v421
                %v423 = vld [vmem:[%s301 + $0x3c0] sm:$0xff]
                %424 = vst [vmem:[%s302 + $0x1e0] sm:$0xff] %v423
                %v425 = vld [vmem:[%s301 + $0x3c8] sm:$0xff]
                %426 = vst [vmem:[%s302 + $0x1e8] sm:$0xff] %v425
                %v427 = vld [vmem:[%s301 + $0x3d0] sm:$0xff]
                %428 = vst [vmem:[%s302 + $0x1f0] sm:$0xff] %v427
                %v429 = vld [vmem:[%s301 + $0x3d8] sm:$0xff]
                %430 = vst [vmem:[%s302 + $0x1f8] sm:$0xff] %v429
                %v431 = vld [vmem:[%s301 + $0x400] sm:$0xff]
                %432 = vst [vmem:[%s302 + $0x200] sm:$0xff] %v431
                %v433 = vld [vmem:[%s301 + $0x408] sm:$0xff]
                %434 = vst [vmem:[%s302 + $0x208] sm:$0xff] %v433
                %v435 = vld [vmem:[%s301 + $0x410] sm:$0xff]
                %436 = vst [vmem:[%s302 + $0x210] sm:$0xff] %v435
                %v437 = vld [vmem:[%s301 + $0x418] sm:$0xff]
                %438 = vst [vmem:[%s302 + $0x218] sm:$0xff] %v437
                %v439 = vld [vmem:[%s301 + $0x440] sm:$0xff]
                %440 = vst [vmem:[%s302 + $0x220] sm:$0xff] %v439
                %v441 = vld [vmem:[%s301 + $0x448] sm:$0xff]
                %442 = vst [vmem:[%s302 + $0x228] sm:$0xff] %v441
                %v443 = vld [vmem:[%s301 + $0x450] sm:$0xff]
                %444 = vst [vmem:[%s302 + $0x230] sm:$0xff] %v443
                %v445 = vld [vmem:[%s301 + $0x458] sm:$0xff]
                %446 = vst [vmem:[%s302 + $0x238] sm:$0xff] %v445
                %v447 = vld [vmem:[%s301 + $0x480] sm:$0xff]
                %448 = vst [vmem:[%s302 + $0x240] sm:$0xff] %v447
                %v449 = vld [vmem:[%s301 + $0x488] sm:$0xff]
                %450 = vst [vmem:[%s302 + $0x248] sm:$0xff] %v449
                %v451 = vld [vmem:[%s301 + $0x490] sm:$0xff]
                %452 = vst [vmem:[%s302 + $0x250] sm:$0xff] %v451
                %v453 = vld [vmem:[%s301 + $0x498] sm:$0xff]
                %454 = vst [vmem:[%s302 + $0x258] sm:$0xff] %v453
                %v455 = vld [vmem:[%s301 + $0x4c0] sm:$0xff]
                %456 = vst [vmem:[%s302 + $0x260] sm:$0xff] %v455
                %v457 = vld [vmem:[%s301 + $0x4c8] sm:$0xff]
                %458 = vst [vmem:[%s302 + $0x268] sm:$0xff] %v457
                %v459 = vld [vmem:[%s301 + $0x4d0] sm:$0xff]
                %460 = vst [vmem:[%s302 + $0x270] sm:$0xff] %v459
                %v461 = vld [vmem:[%s301 + $0x4d8] sm:$0xff]
                %462 = vst [vmem:[%s302 + $0x278] sm:$0xff] %v461
                %v463 = vld [vmem:[%s301 + $0x500] sm:$0xff]
                %464 = vst [vmem:[%s302 + $0x280] sm:$0xff] %v463
                %v465 = vld [vmem:[%s301 + $0x508] sm:$0xff]
                %466 = vst [vmem:[%s302 + $0x288] sm:$0xff] %v465
                %v467 = vld [vmem:[%s301 + $0x510] sm:$0xff]
                %468 = vst [vmem:[%s302 + $0x290] sm:$0xff] %v467
                %v469 = vld [vmem:[%s301 + $0x518] sm:$0xff]
                %470 = vst [vmem:[%s302 + $0x298] sm:$0xff] %v469
                %v471 = vld [vmem:[%s301 + $0x540] sm:$0xff]
                %472 = vst [vmem:[%s302 + $0x2a0] sm:$0xff] %v471
                %v473 = vld [vmem:[%s301 + $0x548] sm:$0xff]
                %474 = vst [vmem:[%s302 + $0x2a8] sm:$0xff] %v473
                %v475 = vld [vmem:[%s301 + $0x550] sm:$0xff]
                %476 = vst [vmem:[%s302 + $0x2b0] sm:$0xff] %v475
                %v477 = vld [vmem:[%s301 + $0x558] sm:$0xff]
                %478 = vst [vmem:[%s302 + $0x2b8] sm:$0xff] %v477
                %v479 = vld [vmem:[%s301 + $0x580] sm:$0xff]
                %480 = vst [vmem:[%s302 + $0x2c0] sm:$0xff] %v479
                %v481 = vld [vmem:[%s301 + $0x588] sm:$0xff]
                %482 = vst [vmem:[%s302 + $0x2c8] sm:$0xff] %v481
                %v483 = vld [vmem:[%s301 + $0x590] sm:$0xff]
                %484 = vst [vmem:[%s302 + $0x2d0] sm:$0xff] %v483
                %v485 = vld [vmem:[%s301 + $0x598] sm:$0xff]
                %486 = vst [vmem:[%s302 + $0x2d8] sm:$0xff] %v485
                %v487 = vld [vmem:[%s301 + $0x5c0] sm:$0xff]
                %488 = vst [vmem:[%s302 + $0x2e0] sm:$0xff] %v487
                %v489 = vld [vmem:[%s301 + $0x5c8] sm:$0xff]
                %490 = vst [vmem:[%s302 + $0x2e8] sm:$0xff] %v489
                %v491 = vld [vmem:[%s301 + $0x5d0] sm:$0xff]
                %492 = vst [vmem:[%s302 + $0x2f0] sm:$0xff] %v491
                %v493 = vld [vmem:[%s301 + $0x5d8] sm:$0xff]
                %494 = vst [vmem:[%s302 + $0x2f8] sm:$0xff] %v493
                %v495 = vld [vmem:[%s301 + $0x600] sm:$0xff]
                %496 = vst [vmem:[%s302 + $0x300] sm:$0xff] %v495
                %v497 = vld [vmem:[%s301 + $0x608] sm:$0xff]
                %498 = vst [vmem:[%s302 + $0x308] sm:$0xff] %v497
                %v499 = vld [vmem:[%s301 + $0x610] sm:$0xff]
                %500 = vst [vmem:[%s302 + $0x310] sm:$0xff] %v499
                %v501 = vld [vmem:[%s301 + $0x618] sm:$0xff]
                %502 = vst [vmem:[%s302 + $0x318] sm:$0xff] %v501
                %v503 = vld [vmem:[%s301 + $0x640] sm:$0xff]
                %504 = vst [vmem:[%s302 + $0x320] sm:$0xff] %v503
                %v505 = vld [vmem:[%s301 + $0x648] sm:$0xff]
                %506 = vst [vmem:[%s302 + $0x328] sm:$0xff] %v505
                %v507 = vld [vmem:[%s301 + $0x650] sm:$0xff]
                %508 = vst [vmem:[%s302 + $0x330] sm:$0xff] %v507
                %v509 = vld [vmem:[%s301 + $0x658] sm:$0xff]
                %510 = vst [vmem:[%s302 + $0x338] sm:$0xff] %v509
                %v511 = vld [vmem:[%s301 + $0x680] sm:$0xff]
                %512 = vst [vmem:[%s302 + $0x340] sm:$0xff] %v511
                %v513 = vld [vmem:[%s301 + $0x688] sm:$0xff]
                %514 = vst [vmem:[%s302 + $0x348] sm:$0xff] %v513
                %v515 = vld [vmem:[%s301 + $0x690] sm:$0xff]
                %516 = vst [vmem:[%s302 + $0x350] sm:$0xff] %v515
                %v517 = vld [vmem:[%s301 + $0x698] sm:$0xff]
                %518 = vst [vmem:[%s302 + $0x358] sm:$0xff] %v517
                %v519 = vld [vmem:[%s301 + $0x6c0] sm:$0xff]
                %520 = vst [vmem:[%s302 + $0x360] sm:$0xff] %v519
                %v521 = vld [vmem:[%s301 + $0x6c8] sm:$0xff]
                %522 = vst [vmem:[%s302 + $0x368] sm:$0xff] %v521
                %v523 = vld [vmem:[%s301 + $0x6d0] sm:$0xff]
                %524 = vst [vmem:[%s302 + $0x370] sm:$0xff] %v523
                %v525 = vld [vmem:[%s301 + $0x6d8] sm:$0xff]
                %526 = vst [vmem:[%s302 + $0x378] sm:$0xff] %v525
                %v527 = vld [vmem:[%s301 + $0x700] sm:$0xff]
                %528 = vst [vmem:[%s302 + $0x380] sm:$0xff] %v527
                %v529 = vld [vmem:[%s301 + $0x708] sm:$0xff]
                %530 = vst [vmem:[%s302 + $0x388] sm:$0xff] %v529
                %v531 = vld [vmem:[%s301 + $0x710] sm:$0xff]
                %532 = vst [vmem:[%s302 + $0x390] sm:$0xff] %v531
                %v533 = vld [vmem:[%s301 + $0x718] sm:$0xff]
                %534 = vst [vmem:[%s302 + $0x398] sm:$0xff] %v533
                %v535 = vld [vmem:[%s301 + $0x740] sm:$0xff]
                %536 = vst [vmem:[%s302 + $0x3a0] sm:$0xff] %v535
                %v537 = vld [vmem:[%s301 + $0x748] sm:$0xff]
                %538 = vst [vmem:[%s302 + $0x3a8] sm:$0xff] %v537
                %v539 = vld [vmem:[%s301 + $0x750] sm:$0xff]
                %540 = vst [vmem:[%s302 + $0x3b0] sm:$0xff] %v539
                %v541 = vld [vmem:[%s301 + $0x758] sm:$0xff]
                %542 = vst [vmem:[%s302 + $0x3b8] sm:$0xff] %v541
                %v543 = vld [vmem:[%s301 + $0x780] sm:$0xff]
                %544 = vst [vmem:[%s302 + $0x3c0] sm:$0xff] %v543
                %v545 = vld [vmem:[%s301 + $0x788] sm:$0xff]
                %546 = vst [vmem:[%s302 + $0x3c8] sm:$0xff] %v545
                %v547 = vld [vmem:[%s301 + $0x790] sm:$0xff]
                %548 = vst [vmem:[%s302 + $0x3d0] sm:$0xff] %v547
                %v549 = vld [vmem:[%s301 + $0x798] sm:$0xff]
                %550 = vst [vmem:[%s302 + $0x3d8] sm:$0xff] %v549
                %v551 = vld [vmem:[%s301 + $0x7c0] sm:$0xff]
                %552 = vst [vmem:[%s302 + $0x3e0] sm:$0xff] %v551
                %v553 = vld [vmem:[%s301 + $0x7c8] sm:$0xff]
                %554 = vst [vmem:[%s302 + $0x3e8] sm:$0xff] %v553
                %v555 = vld [vmem:[%s301 + $0x7d0] sm:$0xff]
                %556 = vst [vmem:[%s302 + $0x3f0] sm:$0xff] %v555
                %v557 = vld [vmem:[%s301 + $0x7d8] sm:$0xff]
                %558 = vst [vmem:[%s302 + $0x3f8] sm:$0xff] %v557
                %v559 = vld [vmem:[%s301 + $0x800] sm:$0xff]
                %560 = vst [vmem:[%s302 + $0x400] sm:$0xff] %v559
                %v561 = vld [vmem:[%s301 + $0x808] sm:$0xff]
                %562 = vst [vmem:[%s302 + $0x408] sm:$0xff] %v561
                %v563 = vld [vmem:[%s301 + $0x810] sm:$0xff]
                %564 = vst [vmem:[%s302 + $0x410] sm:$0xff] %v563
                %v565 = vld [vmem:[%s301 + $0x818] sm:$0xff]
                %566 = vst [vmem:[%s302 + $0x418] sm:$0xff] %v565
                %v567 = vld [vmem:[%s301 + $0x840] sm:$0xff]
                %568 = vst [vmem:[%s302 + $0x420] sm:$0xff] %v567
                %v569 = vld [vmem:[%s301 + $0x848] sm:$0xff]
                %570 = vst [vmem:[%s302 + $0x428] sm:$0xff] %v569
                %v571 = vld [vmem:[%s301 + $0x850] sm:$0xff]
                %572 = vst [vmem:[%s302 + $0x430] sm:$0xff] %v571
                %v573 = vld [vmem:[%s301 + $0x858] sm:$0xff]
                %574 = vst [vmem:[%s302 + $0x438] sm:$0xff] %v573
                %v575 = vld [vmem:[%s301 + $0x880] sm:$0xff]
                %576 = vst [vmem:[%s302 + $0x440] sm:$0xff] %v575
                %v577 = vld [vmem:[%s301 + $0x888] sm:$0xff]
                %578 = vst [vmem:[%s302 + $0x448] sm:$0xff] %v577
                %v579 = vld [vmem:[%s301 + $0x890] sm:$0xff]
                %580 = vst [vmem:[%s302 + $0x450] sm:$0xff] %v579
                %v581 = vld [vmem:[%s301 + $0x898] sm:$0xff]
                %582 = vst [vmem:[%s302 + $0x458] sm:$0xff] %v581
                %v583 = vld [vmem:[%s301 + $0x8c0] sm:$0xff]
                %584 = vst [vmem:[%s302 + $0x460] sm:$0xff] %v583
                %v585 = vld [vmem:[%s301 + $0x8c8] sm:$0xff]
                %586 = vst [vmem:[%s302 + $0x468] sm:$0xff] %v585
                %v587 = vld [vmem:[%s301 + $0x8d0] sm:$0xff]
                %588 = vst [vmem:[%s302 + $0x470] sm:$0xff] %v587
                %v589 = vld [vmem:[%s301 + $0x8d8] sm:$0xff]
                %590 = vst [vmem:[%s302 + $0x478] sm:$0xff] %v589
                %v591 = vld [vmem:[%s301 + $0x900] sm:$0xff]
                %592 = vst [vmem:[%s302 + $0x480] sm:$0xff] %v591
                %v593 = vld [vmem:[%s301 + $0x908] sm:$0xff]
                %594 = vst [vmem:[%s302 + $0x488] sm:$0xff] %v593
                %v595 = vld [vmem:[%s301 + $0x910] sm:$0xff]
                %596 = vst [vmem:[%s302 + $0x490] sm:$0xff] %v595
                %v597 = vld [vmem:[%s301 + $0x918] sm:$0xff]
                %598 = vst [vmem:[%s302 + $0x498] sm:$0xff] %v597
                %v599 = vld [vmem:[%s301 + $0x940] sm:$0xff]
                %600 = vst [vmem:[%s302 + $0x4a0] sm:$0xff] %v599
                %v601 = vld [vmem:[%s301 + $0x948] sm:$0xff]
                %602 = vst [vmem:[%s302 + $0x4a8] sm:$0xff] %v601
                %v603 = vld [vmem:[%s301 + $0x950] sm:$0xff]
                %604 = vst [vmem:[%s302 + $0x4b0] sm:$0xff] %v603
                %v605 = vld [vmem:[%s301 + $0x958] sm:$0xff]
                %606 = vst [vmem:[%s302 + $0x4b8] sm:$0xff] %v605
                %v607 = vld [vmem:[%s301 + $0x980] sm:$0xff]
                %608 = vst [vmem:[%s302 + $0x4c0] sm:$0xff] %v607
                %v609 = vld [vmem:[%s301 + $0x988] sm:$0xff]
                %610 = vst [vmem:[%s302 + $0x4c8] sm:$0xff] %v609
                %v611 = vld [vmem:[%s301 + $0x990] sm:$0xff]
                %612 = vst [vmem:[%s302 + $0x4d0] sm:$0xff] %v611
                %v613 = vld [vmem:[%s301 + $0x998] sm:$0xff]
                %614 = vst [vmem:[%s302 + $0x4d8] sm:$0xff] %v613
                %v615 = vld [vmem:[%s301 + $0x9c0] sm:$0xff]
                %616 = vst [vmem:[%s302 + $0x4e0] sm:$0xff] %v615
                %v617 = vld [vmem:[%s301 + $0x9c8] sm:$0xff]
                %618 = vst [vmem:[%s302 + $0x4e8] sm:$0xff] %v617
                %v619 = vld [vmem:[%s301 + $0x9d0] sm:$0xff]
                %620 = vst [vmem:[%s302 + $0x4f0] sm:$0xff] %v619
                %v621 = vld [vmem:[%s301 + $0x9d8] sm:$0xff]
                %622 = vst [vmem:[%s302 + $0x4f8] sm:$0xff] %v621
                %v623 = vld [vmem:[%s301 + $0xa00] sm:$0xff]
                %624 = vst [vmem:[%s302 + $0x500] sm:$0xff] %v623
                %v625 = vld [vmem:[%s301 + $0xa08] sm:$0xff]
                %626 = vst [vmem:[%s302 + $0x508] sm:$0xff] %v625
                %v627 = vld [vmem:[%s301 + $0xa10] sm:$0xff]
                %628 = vst [vmem:[%s302 + $0x510] sm:$0xff] %v627
                %v629 = vld [vmem:[%s301 + $0xa18] sm:$0xff]
                %630 = vst [vmem:[%s302 + $0x518] sm:$0xff] %v629
                %v631 = vld [vmem:[%s301 + $0xa40] sm:$0xff]
                %632 = vst [vmem:[%s302 + $0x520] sm:$0xff] %v631
                %v633 = vld [vmem:[%s301 + $0xa48] sm:$0xff]
                %634 = vst [vmem:[%s302 + $0x528] sm:$0xff] %v633
                %v635 = vld [vmem:[%s301 + $0xa50] sm:$0xff]
                %636 = vst [vmem:[%s302 + $0x530] sm:$0xff] %v635
                %v637 = vld [vmem:[%s301 + $0xa58] sm:$0xff]
                %638 = vst [vmem:[%s302 + $0x538] sm:$0xff] %v637
                %v639 = vld [vmem:[%s301 + $0xa80] sm:$0xff]
                %640 = vst [vmem:[%s302 + $0x540] sm:$0xff] %v639
                %v641 = vld [vmem:[%s301 + $0xa88] sm:$0xff]
                %642 = vst [vmem:[%s302 + $0x548] sm:$0xff] %v641
                %v643 = vld [vmem:[%s301 + $0xa90] sm:$0xff]
                %644 = vst [vmem:[%s302 + $0x550] sm:$0xff] %v643
                %v645 = vld [vmem:[%s301 + $0xa98] sm:$0xff]
                %646 = vst [vmem:[%s302 + $0x558] sm:$0xff] %v645
                %v647 = vld [vmem:[%s301 + $0xac0] sm:$0xff]
                %648 = vst [vmem:[%s302 + $0x560] sm:$0xff] %v647
                %v649 = vld [vmem:[%s301 + $0xac8] sm:$0xff]
                %650 = vst [vmem:[%s302 + $0x568] sm:$0xff] %v649
                %v651 = vld [vmem:[%s301 + $0xad0] sm:$0xff]
                %652 = vst [vmem:[%s302 + $0x570] sm:$0xff] %v651
                %v653 = vld [vmem:[%s301 + $0xad8] sm:$0xff]
                %654 = vst [vmem:[%s302 + $0x578] sm:$0xff] %v653
                %v655 = vld [vmem:[%s301 + $0xb00] sm:$0xff]
                %656 = vst [vmem:[%s302 + $0x580] sm:$0xff] %v655
                %v657 = vld [vmem:[%s301 + $0xb08] sm:$0xff]
                %658 = vst [vmem:[%s302 + $0x588] sm:$0xff] %v657
                %v659 = vld [vmem:[%s301 + $0xb10] sm:$0xff]
                %660 = vst [vmem:[%s302 + $0x590] sm:$0xff] %v659
                %v661 = vld [vmem:[%s301 + $0xb18] sm:$0xff]
                %662 = vst [vmem:[%s302 + $0x598] sm:$0xff] %v661
                %v663 = vld [vmem:[%s301 + $0xb40] sm:$0xff]
                %664 = vst [vmem:[%s302 + $0x5a0] sm:$0xff] %v663
                %v665 = vld [vmem:[%s301 + $0xb48] sm:$0xff]
                %666 = vst [vmem:[%s302 + $0x5a8] sm:$0xff] %v665
                %v667 = vld [vmem:[%s301 + $0xb50] sm:$0xff]
                %668 = vst [vmem:[%s302 + $0x5b0] sm:$0xff] %v667
                %v669 = vld [vmem:[%s301 + $0xb58] sm:$0xff]
                %670 = vst [vmem:[%s302 + $0x5b8] sm:$0xff] %v669
                %v671 = vld [vmem:[%s301 + $0xb80] sm:$0xff]
                %672 = vst [vmem:[%s302 + $0x5c0] sm:$0xff] %v671
                %v673 = vld [vmem:[%s301 + $0xb88] sm:$0xff]
                %674 = vst [vmem:[%s302 + $0x5c8] sm:$0xff] %v673
                %v675 = vld [vmem:[%s301 + $0xb90] sm:$0xff]
                %676 = vst [vmem:[%s302 + $0x5d0] sm:$0xff] %v675
                %v677 = vld [vmem:[%s301 + $0xb98] sm:$0xff]
                %678 = vst [vmem:[%s302 + $0x5d8] sm:$0xff] %v677
                %v679 = vld [vmem:[%s301 + $0xbc0] sm:$0xff]
                %680 = vst [vmem:[%s302 + $0x5e0] sm:$0xff] %v679
                %v681 = vld [vmem:[%s301 + $0xbc8] sm:$0xff]
                %682 = vst [vmem:[%s302 + $0x5e8] sm:$0xff] %v681
                %v683 = vld [vmem:[%s301 + $0xbd0] sm:$0xff]
                %684 = vst [vmem:[%s302 + $0x5f0] sm:$0xff] %v683
                %v685 = vld [vmem:[%s301 + $0xbd8] sm:$0xff]
                %686 = vst [vmem:[%s302 + $0x5f8] sm:$0xff] %v685
                %v687 = vld [vmem:[%s301 + $0xc00] sm:$0xff]
                %688 = vst [vmem:[%s302 + $0x600] sm:$0xff] %v687
                %v689 = vld [vmem:[%s301 + $0xc08] sm:$0xff]
                %690 = vst [vmem:[%s302 + $0x608] sm:$0xff] %v689
                %v691 = vld [vmem:[%s301 + $0xc10] sm:$0xff]
                %692 = vst [vmem:[%s302 + $0x610] sm:$0xff] %v691
                %v693 = vld [vmem:[%s301 + $0xc18] sm:$0xff]
                %694 = vst [vmem:[%s302 + $0x618] sm:$0xff] %v693
                %v695 = vld [vmem:[%s301 + $0xc40] sm:$0xff]
                %696 = vst [vmem:[%s302 + $0x620] sm:$0xff] %v695
                %v697 = vld [vmem:[%s301 + $0xc48] sm:$0xff]
                %698 = vst [vmem:[%s302 + $0x628] sm:$0xff] %v697
                %v699 = vld [vmem:[%s301 + $0xc50] sm:$0xff]
                %700 = vst [vmem:[%s302 + $0x630] sm:$0xff] %v699
                %v701 = vld [vmem:[%s301 + $0xc58] sm:$0xff]
                %702 = vst [vmem:[%s302 + $0x638] sm:$0xff] %v701
                %v703 = vld [vmem:[%s301 + $0xc80] sm:$0xff]
                %704 = vst [vmem:[%s302 + $0x640] sm:$0xff] %v703
                %v705 = vld [vmem:[%s301 + $0xc88] sm:$0xff]
                %706 = vst [vmem:[%s302 + $0x648] sm:$0xff] %v705
                %v707 = vld [vmem:[%s301 + $0xc90] sm:$0xff]
                %708 = vst [vmem:[%s302 + $0x650] sm:$0xff] %v707
                %v709 = vld [vmem:[%s301 + $0xc98] sm:$0xff]
                %710 = vst [vmem:[%s302 + $0x658] sm:$0xff] %v709
                %v711 = vld [vmem:[%s301 + $0xcc0] sm:$0xff]
                %712 = vst [vmem:[%s302 + $0x660] sm:$0xff] %v711
                %v713 = vld [vmem:[%s301 + $0xcc8] sm:$0xff]
                %714 = vst [vmem:[%s302 + $0x668] sm:$0xff] %v713
                %v715 = vld [vmem:[%s301 + $0xcd0] sm:$0xff]
                %716 = vst [vmem:[%s302 + $0x670] sm:$0xff] %v715
                %v717 = vld [vmem:[%s301 + $0xcd8] sm:$0xff]
                %718 = vst [vmem:[%s302 + $0x678] sm:$0xff] %v717
                %v719 = vld [vmem:[%s301 + $0xd00] sm:$0xff]
                %720 = vst [vmem:[%s302 + $0x680] sm:$0xff] %v719
                %v721 = vld [vmem:[%s301 + $0xd08] sm:$0xff]
                %722 = vst [vmem:[%s302 + $0x688] sm:$0xff] %v721
                %v723 = vld [vmem:[%s301 + $0xd10] sm:$0xff]
                %724 = vst [vmem:[%s302 + $0x690] sm:$0xff] %v723
                %v725 = vld [vmem:[%s301 + $0xd18] sm:$0xff]
                %726 = vst [vmem:[%s302 + $0x698] sm:$0xff] %v725
                %v727 = vld [vmem:[%s301 + $0xd40] sm:$0xff]
                %728 = vst [vmem:[%s302 + $0x6a0] sm:$0xff] %v727
                %v729 = vld [vmem:[%s301 + $0xd48] sm:$0xff]
                %730 = vst [vmem:[%s302 + $0x6a8] sm:$0xff] %v729
                %v731 = vld [vmem:[%s301 + $0xd50] sm:$0xff]
                %732 = vst [vmem:[%s302 + $0x6b0] sm:$0xff] %v731
                %v733 = vld [vmem:[%s301 + $0xd58] sm:$0xff]
                %734 = vst [vmem:[%s302 + $0x6b8] sm:$0xff] %v733
                %v735 = vld [vmem:[%s301 + $0xd80] sm:$0xff]
                %736 = vst [vmem:[%s302 + $0x6c0] sm:$0xff] %v735
                %v737 = vld [vmem:[%s301 + $0xd88] sm:$0xff]
                %738 = vst [vmem:[%s302 + $0x6c8] sm:$0xff] %v737
                %v739 = vld [vmem:[%s301 + $0xd90] sm:$0xff]
                %740 = vst [vmem:[%s302 + $0x6d0] sm:$0xff] %v739
                %v741 = vld [vmem:[%s301 + $0xd98] sm:$0xff]
                %742 = vst [vmem:[%s302 + $0x6d8] sm:$0xff] %v741
                %v743 = vld [vmem:[%s301 + $0xdc0] sm:$0xff]
                %744 = vst [vmem:[%s302 + $0x6e0] sm:$0xff] %v743
                %v745 = vld [vmem:[%s301 + $0xdc8] sm:$0xff]
                %746 = vst [vmem:[%s302 + $0x6e8] sm:$0xff] %v745
                %v747 = vld [vmem:[%s301 + $0xdd0] sm:$0xff]
                %748 = vst [vmem:[%s302 + $0x6f0] sm:$0xff] %v747
                %v749 = vld [vmem:[%s301 + $0xdd8] sm:$0xff]
                %750 = vst [vmem:[%s302 + $0x6f8] sm:$0xff] %v749
                %v751 = vld [vmem:[%s301 + $0xe00] sm:$0xff]
                %752 = vst [vmem:[%s302 + $0x700] sm:$0xff] %v751
                %v753 = vld [vmem:[%s301 + $0xe08] sm:$0xff]
                %754 = vst [vmem:[%s302 + $0x708] sm:$0xff] %v753
                %v755 = vld [vmem:[%s301 + $0xe10] sm:$0xff]
                %756 = vst [vmem:[%s302 + $0x710] sm:$0xff] %v755
                %v757 = vld [vmem:[%s301 + $0xe18] sm:$0xff]
                %758 = vst [vmem:[%s302 + $0x718] sm:$0xff] %v757
                %v759 = vld [vmem:[%s301 + $0xe40] sm:$0xff]
                %760 = vst [vmem:[%s302 + $0x720] sm:$0xff] %v759
                %v761 = vld [vmem:[%s301 + $0xe48] sm:$0xff]
                %762 = vst [vmem:[%s302 + $0x728] sm:$0xff] %v761
                %v763 = vld [vmem:[%s301 + $0xe50] sm:$0xff]
                %764 = vst [vmem:[%s302 + $0x730] sm:$0xff] %v763
                %v765 = vld [vmem:[%s301 + $0xe58] sm:$0xff]
                %766 = vst [vmem:[%s302 + $0x738] sm:$0xff] %v765
                %v767 = vld [vmem:[%s301 + $0xe80] sm:$0xff]
                %768 = vst [vmem:[%s302 + $0x740] sm:$0xff] %v767
                %v769 = vld [vmem:[%s301 + $0xe88] sm:$0xff]
                %770 = vst [vmem:[%s302 + $0x748] sm:$0xff] %v769
                %v771 = vld [vmem:[%s301 + $0xe90] sm:$0xff]
                %772 = vst [vmem:[%s302 + $0x750] sm:$0xff] %v771
                %v773 = vld [vmem:[%s301 + $0xe98] sm:$0xff]
                %774 = vst [vmem:[%s302 + $0x758] sm:$0xff] %v773
                %v775 = vld [vmem:[%s301 + $0xec0] sm:$0xff]
                %776 = vst [vmem:[%s302 + $0x760] sm:$0xff] %v775
                %v777 = vld [vmem:[%s301 + $0xec8] sm:$0xff]
                %778 = vst [vmem:[%s302 + $0x768] sm:$0xff] %v777
                %v779 = vld [vmem:[%s301 + $0xed0] sm:$0xff]
                %780 = vst [vmem:[%s302 + $0x770] sm:$0xff] %v779
                %v781 = vld [vmem:[%s301 + $0xed8] sm:$0xff]
                %782 = vst [vmem:[%s302 + $0x778] sm:$0xff] %v781
                %v783 = vld [vmem:[%s301 + $0xf00] sm:$0xff]
                %784 = vst [vmem:[%s302 + $0x780] sm:$0xff] %v783
                %v785 = vld [vmem:[%s301 + $0xf08] sm:$0xff]
                %786 = vst [vmem:[%s302 + $0x788] sm:$0xff] %v785
                %v787 = vld [vmem:[%s301 + $0xf10] sm:$0xff]
                %788 = vst [vmem:[%s302 + $0x790] sm:$0xff] %v787
                %v789 = vld [vmem:[%s301 + $0xf18] sm:$0xff]
                %790 = vst [vmem:[%s302 + $0x798] sm:$0xff] %v789
                %v791 = vld [vmem:[%s301 + $0xf40] sm:$0xff]
                %792 = vst [vmem:[%s302 + $0x7a0] sm:$0xff] %v791
                %v793 = vld [vmem:[%s301 + $0xf48] sm:$0xff]
                %794 = vst [vmem:[%s302 + $0x7a8] sm:$0xff] %v793
                %v795 = vld [vmem:[%s301 + $0xf50] sm:$0xff]
                %796 = vst [vmem:[%s302 + $0x7b0] sm:$0xff] %v795
                %v797 = vld [vmem:[%s301 + $0xf58] sm:$0xff]
                %798 = vst [vmem:[%s302 + $0x7b8] sm:$0xff] %v797
                %v799 = vld [vmem:[%s301 + $0xf80] sm:$0xff]
                %800 = vst [vmem:[%s302 + $0x7c0] sm:$0xff] %v799
                %v801 = vld [vmem:[%s301 + $0xf88] sm:$0xff]
                %802 = vst [vmem:[%s302 + $0x7c8] sm:$0xff] %v801
                %v803 = vld [vmem:[%s301 + $0xf90] sm:$0xff]
                %804 = vst [vmem:[%s302 + $0x7d0] sm:$0xff] %v803
                %v805 = vld [vmem:[%s301 + $0xf98] sm:$0xff]
                %806 = vst [vmem:[%s302 + $0x7d8] sm:$0xff] %v805
                %v807 = vld [vmem:[%s301 + $0xfc0] sm:$0xff]
                %808 = vst [vmem:[%s302 + $0x7e0] sm:$0xff] %v807
                %v809 = vld [vmem:[%s301 + $0xfc8] sm:$0xff]
                %810 = vst [vmem:[%s302 + $0x7e8] sm:$0xff] %v809
                %v811 = vld [vmem:[%s301 + $0xfd0] sm:$0xff]
                %812 = vst [vmem:[%s302 + $0x7f0] sm:$0xff] %v811
                %v813 = vld [vmem:[%s301 + $0xfd8] sm:$0xff]
                %814 = vst [vmem:[%s302 + $0x7f8] sm:$0xff] %v813
                %v815 = vld [vmem:[%s301 + $0x1000] sm:$0xff]
                %816 = vst [vmem:[%s302 + $0x800] sm:$0xff] %v815
                %v817 = vld [vmem:[%s301 + $0x1008] sm:$0xff]
                %818 = vst [vmem:[%s302 + $0x808] sm:$0xff] %v817
                %v819 = vld [vmem:[%s301 + $0x1010] sm:$0xff]
                %820 = vst [vmem:[%s302 + $0x810] sm:$0xff] %v819
                %v821 = vld [vmem:[%s301 + $0x1018] sm:$0xff]
                %822 = vst [vmem:[%s302 + $0x818] sm:$0xff] %v821
                %v823 = vld [vmem:[%s301 + $0x1040] sm:$0xff]
                %824 = vst [vmem:[%s302 + $0x820] sm:$0xff] %v823
                %v825 = vld [vmem:[%s301 + $0x1048] sm:$0xff]
                %826 = vst [vmem:[%s302 + $0x828] sm:$0xff] %v825
                %v827 = vld [vmem:[%s301 + $0x1050] sm:$0xff]
                %828 = vst [vmem:[%s302 + $0x830] sm:$0xff] %v827
                %v829 = vld [vmem:[%s301 + $0x1058] sm:$0xff]
                %830 = vst [vmem:[%s302 + $0x838] sm:$0xff] %v829
                %v831 = vld [vmem:[%s301 + $0x1080] sm:$0xff]
                %832 = vst [vmem:[%s302 + $0x840] sm:$0xff] %v831
                %v833 = vld [vmem:[%s301 + $0x1088] sm:$0xff]
                %834 = vst [vmem:[%s302 + $0x848] sm:$0xff] %v833
                %v835 = vld [vmem:[%s301 + $0x1090] sm:$0xff]
                %836 = vst [vmem:[%s302 + $0x850] sm:$0xff] %v835
                %v837 = vld [vmem:[%s301 + $0x1098] sm:$0xff]
                %838 = vst [vmem:[%s302 + $0x858] sm:$0xff] %v837
                %v839 = vld [vmem:[%s301 + $0x10c0] sm:$0xff]
                %840 = vst [vmem:[%s302 + $0x860] sm:$0xff] %v839
                %v841 = vld [vmem:[%s301 + $0x10c8] sm:$0xff]
                %842 = vst [vmem:[%s302 + $0x868] sm:$0xff] %v841
                %v843 = vld [vmem:[%s301 + $0x10d0] sm:$0xff]
                %844 = vst [vmem:[%s302 + $0x870] sm:$0xff] %v843
                %v845 = vld [vmem:[%s301 + $0x10d8] sm:$0xff]
                %846 = vst [vmem:[%s302 + $0x878] sm:$0xff] %v845
                %v847 = vld [vmem:[%s301 + $0x1100] sm:$0xff]
                %848 = vst [vmem:[%s302 + $0x880] sm:$0xff] %v847
                %v849 = vld [vmem:[%s301 + $0x1108] sm:$0xff]
                %850 = vst [vmem:[%s302 + $0x888] sm:$0xff] %v849
                %v851 = vld [vmem:[%s301 + $0x1110] sm:$0xff]
                %852 = vst [vmem:[%s302 + $0x890] sm:$0xff] %v851
                %v853 = vld [vmem:[%s301 + $0x1118] sm:$0xff]
                %854 = vst [vmem:[%s302 + $0x898] sm:$0xff] %v853
                %v855 = vld [vmem:[%s301 + $0x1140] sm:$0xff]
                %856 = vst [vmem:[%s302 + $0x8a0] sm:$0xff] %v855
                %v857 = vld [vmem:[%s301 + $0x1148] sm:$0xff]
                %858 = vst [vmem:[%s302 + $0x8a8] sm:$0xff] %v857
                %v859 = vld [vmem:[%s301 + $0x1150] sm:$0xff]
                %860 = vst [vmem:[%s302 + $0x8b0] sm:$0xff] %v859
                %v861 = vld [vmem:[%s301 + $0x1158] sm:$0xff]
                %862 = vst [vmem:[%s302 + $0x8b8] sm:$0xff] %v861
                %v863 = vld [vmem:[%s301 + $0x1180] sm:$0xff]
                %864 = vst [vmem:[%s302 + $0x8c0] sm:$0xff] %v863
                %v865 = vld [vmem:[%s301 + $0x1188] sm:$0xff]
                %866 = vst [vmem:[%s302 + $0x8c8] sm:$0xff] %v865
                %v867 = vld [vmem:[%s301 + $0x1190] sm:$0xff]
                %868 = vst [vmem:[%s302 + $0x8d0] sm:$0xff] %v867
                %v869 = vld [vmem:[%s301 + $0x1198] sm:$0xff]
                %870 = vst [vmem:[%s302 + $0x8d8] sm:$0xff] %v869
                %v871 = vld [vmem:[%s301 + $0x11c0] sm:$0xff]
                %872 = vst [vmem:[%s302 + $0x8e0] sm:$0xff] %v871
                %v873 = vld [vmem:[%s301 + $0x11c8] sm:$0xff]
                %874 = vst [vmem:[%s302 + $0x8e8] sm:$0xff] %v873
                %v875 = vld [vmem:[%s301 + $0x11d0] sm:$0xff]
                %876 = vst [vmem:[%s302 + $0x8f0] sm:$0xff] %v875
                %v877 = vld [vmem:[%s301 + $0x11d8] sm:$0xff]
                %878 = vst [vmem:[%s302 + $0x8f8] sm:$0xff] %v877
                %v879 = vld [vmem:[%s301 + $0x1200] sm:$0xff]
                %880 = vst [vmem:[%s302 + $0x900] sm:$0xff] %v879
                %v881 = vld [vmem:[%s301 + $0x1208] sm:$0xff]
                %882 = vst [vmem:[%s302 + $0x908] sm:$0xff] %v881
                %v883 = vld [vmem:[%s301 + $0x1210] sm:$0xff]
                %884 = vst [vmem:[%s302 + $0x910] sm:$0xff] %v883
                %v885 = vld [vmem:[%s301 + $0x1218] sm:$0xff]
                %886 = vst [vmem:[%s302 + $0x918] sm:$0xff] %v885
                %v887 = vld [vmem:[%s301 + $0x1240] sm:$0xff]
                %888 = vst [vmem:[%s302 + $0x920] sm:$0xff] %v887
                %v889 = vld [vmem:[%s301 + $0x1248] sm:$0xff]
                %890 = vst [vmem:[%s302 + $0x928] sm:$0xff] %v889
                %v891 = vld [vmem:[%s301 + $0x1250] sm:$0xff]
                %892 = vst [vmem:[%s302 + $0x930] sm:$0xff] %v891
                %v893 = vld [vmem:[%s301 + $0x1258] sm:$0xff]
                %894 = vst [vmem:[%s302 + $0x938] sm:$0xff] %v893
                %v895 = vld [vmem:[%s301 + $0x1280] sm:$0xff]
                %896 = vst [vmem:[%s302 + $0x940] sm:$0xff] %v895
                %v897 = vld [vmem:[%s301 + $0x1288] sm:$0xff]
                %898 = vst [vmem:[%s302 + $0x948] sm:$0xff] %v897
                %v899 = vld [vmem:[%s301 + $0x1290] sm:$0xff]
                %900 = vst [vmem:[%s302 + $0x950] sm:$0xff] %v899
                %v901 = vld [vmem:[%s301 + $0x1298] sm:$0xff]
                %902 = vst [vmem:[%s302 + $0x958] sm:$0xff] %v901
                %v903 = vld [vmem:[%s301 + $0x12c0] sm:$0xff]
                %904 = vst [vmem:[%s302 + $0x960] sm:$0xff] %v903
                %v905 = vld [vmem:[%s301 + $0x12c8] sm:$0xff]
                %906 = vst [vmem:[%s302 + $0x968] sm:$0xff] %v905
                %v907 = vld [vmem:[%s301 + $0x12d0] sm:$0xff]
                %908 = vst [vmem:[%s302 + $0x970] sm:$0xff] %v907
                %v909 = vld [vmem:[%s301 + $0x12d8] sm:$0xff]
                %910 = vst [vmem:[%s302 + $0x978] sm:$0xff] %v909
                %v911 = vld [vmem:[%s301 + $0x1300] sm:$0xff]
                %912 = vst [vmem:[%s302 + $0x980] sm:$0xff] %v911
                %v913 = vld [vmem:[%s301 + $0x1308] sm:$0xff]
                %914 = vst [vmem:[%s302 + $0x988] sm:$0xff] %v913
                %v915 = vld [vmem:[%s301 + $0x1310] sm:$0xff]
                %916 = vst [vmem:[%s302 + $0x990] sm:$0xff] %v915
                %v917 = vld [vmem:[%s301 + $0x1318] sm:$0xff]
                %918 = vst [vmem:[%s302 + $0x998] sm:$0xff] %v917
                %v919 = vld [vmem:[%s301 + $0x1340] sm:$0xff]
                %920 = vst [vmem:[%s302 + $0x9a0] sm:$0xff] %v919
                %v921 = vld [vmem:[%s301 + $0x1348] sm:$0xff]
                %922 = vst [vmem:[%s302 + $0x9a8] sm:$0xff] %v921
                %v923 = vld [vmem:[%s301 + $0x1350] sm:$0xff]
                %924 = vst [vmem:[%s302 + $0x9b0] sm:$0xff] %v923
                %v925 = vld [vmem:[%s301 + $0x1358] sm:$0xff]
                %926 = vst [vmem:[%s302 + $0x9b8] sm:$0xff] %v925
                %v927 = vld [vmem:[%s301 + $0x1380] sm:$0xff]
                %928 = vst [vmem:[%s302 + $0x9c0] sm:$0xff] %v927
                %v929 = vld [vmem:[%s301 + $0x1388] sm:$0xff]
                %930 = vst [vmem:[%s302 + $0x9c8] sm:$0xff] %v929
                %v931 = vld [vmem:[%s301 + $0x1390] sm:$0xff]
                %932 = vst [vmem:[%s302 + $0x9d0] sm:$0xff] %v931
                %v933 = vld [vmem:[%s301 + $0x1398] sm:$0xff]
                %934 = vst [vmem:[%s302 + $0x9d8] sm:$0xff] %v933
                %v935 = vld [vmem:[%s301 + $0x13c0] sm:$0xff]
                %936 = vst [vmem:[%s302 + $0x9e0] sm:$0xff] %v935
                %v937 = vld [vmem:[%s301 + $0x13c8] sm:$0xff]
                %938 = vst [vmem:[%s302 + $0x9e8] sm:$0xff] %v937
                %v939 = vld [vmem:[%s301 + $0x13d0] sm:$0xff]
                %940 = vst [vmem:[%s302 + $0x9f0] sm:$0xff] %v939
                %v941 = vld [vmem:[%s301 + $0x13d8] sm:$0xff]
                %942 = vst [vmem:[%s302 + $0x9f8] sm:$0xff] %v941
                %v943 = vld [vmem:[%s301 + $0x1400] sm:$0xff]
                %944 = vst [vmem:[%s302 + $0xa00] sm:$0xff] %v943
                %v945 = vld [vmem:[%s301 + $0x1408] sm:$0xff]
                %946 = vst [vmem:[%s302 + $0xa08] sm:$0xff] %v945
                %v947 = vld [vmem:[%s301 + $0x1410] sm:$0xff]
                %948 = vst [vmem:[%s302 + $0xa10] sm:$0xff] %v947
                %v949 = vld [vmem:[%s301 + $0x1418] sm:$0xff]
                %950 = vst [vmem:[%s302 + $0xa18] sm:$0xff] %v949
                %v951 = vld [vmem:[%s301 + $0x1440] sm:$0xff]
                %952 = vst [vmem:[%s302 + $0xa20] sm:$0xff] %v951
                %v953 = vld [vmem:[%s301 + $0x1448] sm:$0xff]
                %954 = vst [vmem:[%s302 + $0xa28] sm:$0xff] %v953
                %v955 = vld [vmem:[%s301 + $0x1450] sm:$0xff]
                %956 = vst [vmem:[%s302 + $0xa30] sm:$0xff] %v955
                %v957 = vld [vmem:[%s301 + $0x1458] sm:$0xff]
                %958 = vst [vmem:[%s302 + $0xa38] sm:$0xff] %v957
                %v959 = vld [vmem:[%s301 + $0x1480] sm:$0xff]
                %960 = vst [vmem:[%s302 + $0xa40] sm:$0xff] %v959
                %v961 = vld [vmem:[%s301 + $0x1488] sm:$0xff]
                %962 = vst [vmem:[%s302 + $0xa48] sm:$0xff] %v961
                %v963 = vld [vmem:[%s301 + $0x1490] sm:$0xff]
                %964 = vst [vmem:[%s302 + $0xa50] sm:$0xff] %v963
                %v965 = vld [vmem:[%s301 + $0x1498] sm:$0xff]
                %966 = vst [vmem:[%s302 + $0xa58] sm:$0xff] %v965
                %v967 = vld [vmem:[%s301 + $0x14c0] sm:$0xff]
                %968 = vst [vmem:[%s302 + $0xa60] sm:$0xff] %v967
                %v969 = vld [vmem:[%s301 + $0x14c8] sm:$0xff]
                %970 = vst [vmem:[%s302 + $0xa68] sm:$0xff] %v969
                %v971 = vld [vmem:[%s301 + $0x14d0] sm:$0xff]
                %972 = vst [vmem:[%s302 + $0xa70] sm:$0xff] %v971
                %v973 = vld [vmem:[%s301 + $0x14d8] sm:$0xff]
                %974 = vst [vmem:[%s302 + $0xa78] sm:$0xff] %v973
                %v975 = vld [vmem:[%s301 + $0x1500] sm:$0xff]
                %976 = vst [vmem:[%s302 + $0xa80] sm:$0xff] %v975
                %v977 = vld [vmem:[%s301 + $0x1508] sm:$0xff]
                %978 = vst [vmem:[%s302 + $0xa88] sm:$0xff] %v977
                %v979 = vld [vmem:[%s301 + $0x1510] sm:$0xff]
                %980 = vst [vmem:[%s302 + $0xa90] sm:$0xff] %v979
                %v981 = vld [vmem:[%s301 + $0x1518] sm:$0xff]
                %982 = vst [vmem:[%s302 + $0xa98] sm:$0xff] %v981
                %v983 = vld [vmem:[%s301 + $0x1540] sm:$0xff]
                %984 = vst [vmem:[%s302 + $0xaa0] sm:$0xff] %v983
                %v985 = vld [vmem:[%s301 + $0x1548] sm:$0xff]
                %986 = vst [vmem:[%s302 + $0xaa8] sm:$0xff] %v985
                %v987 = vld [vmem:[%s301 + $0x1550] sm:$0xff]
                %988 = vst [vmem:[%s302 + $0xab0] sm:$0xff] %v987
                %v989 = vld [vmem:[%s301 + $0x1558] sm:$0xff]
                %990 = vst [vmem:[%s302 + $0xab8] sm:$0xff] %v989
                %v991 = vld [vmem:[%s301 + $0x1580] sm:$0xff]
                %992 = vst [vmem:[%s302 + $0xac0] sm:$0xff] %v991
                %v993 = vld [vmem:[%s301 + $0x1588] sm:$0xff]
                %994 = vst [vmem:[%s302 + $0xac8] sm:$0xff] %v993
                %v995 = vld [vmem:[%s301 + $0x1590] sm:$0xff]
                %996 = vst [vmem:[%s302 + $0xad0] sm:$0xff] %v995
                %v997 = vld [vmem:[%s301 + $0x1598] sm:$0xff]
                %998 = vst [vmem:[%s302 + $0xad8] sm:$0xff] %v997
                %v999 = vld [vmem:[%s301 + $0x15c0] sm:$0xff]
                %1000 = vst [vmem:[%s302 + $0xae0] sm:$0xff] %v999
                %v1001 = vld [vmem:[%s301 + $0x15c8] sm:$0xff]
                %1002 = vst [vmem:[%s302 + $0xae8] sm:$0xff] %v1001
                %v1003 = vld [vmem:[%s301 + $0x15d0] sm:$0xff]
                %1004 = vst [vmem:[%s302 + $0xaf0] sm:$0xff] %v1003
                %v1005 = vld [vmem:[%s301 + $0x15d8] sm:$0xff]
                %1006 = vst [vmem:[%s302 + $0xaf8] sm:$0xff] %v1005
                %v1007 = vld [vmem:[%s301 + $0x1600] sm:$0xff]
                %1008 = vst [vmem:[%s302 + $0xb00] sm:$0xff] %v1007
                %v1009 = vld [vmem:[%s301 + $0x1608] sm:$0xff]
                %1010 = vst [vmem:[%s302 + $0xb08] sm:$0xff] %v1009
                %v1011 = vld [vmem:[%s301 + $0x1610] sm:$0xff]
                %1012 = vst [vmem:[%s302 + $0xb10] sm:$0xff] %v1011
                %v1013 = vld [vmem:[%s301 + $0x1618] sm:$0xff]
                %1014 = vst [vmem:[%s302 + $0xb18] sm:$0xff] %v1013
                %v1015 = vld [vmem:[%s301 + $0x1640] sm:$0xff]
                %1016 = vst [vmem:[%s302 + $0xb20] sm:$0xff] %v1015
                %v1017 = vld [vmem:[%s301 + $0x1648] sm:$0xff]
                %1018 = vst [vmem:[%s302 + $0xb28] sm:$0xff] %v1017
                %v1019 = vld [vmem:[%s301 + $0x1650] sm:$0xff]
                %1020 = vst [vmem:[%s302 + $0xb30] sm:$0xff] %v1019
                %v1021 = vld [vmem:[%s301 + $0x1658] sm:$0xff]
                %1022 = vst [vmem:[%s302 + $0xb38] sm:$0xff] %v1021
                %v1023 = vld [vmem:[%s301 + $0x1680] sm:$0xff]
                %1024 = vst [vmem:[%s302 + $0xb40] sm:$0xff] %v1023
                %v1025 = vld [vmem:[%s301 + $0x1688] sm:$0xff]
                %1026 = vst [vmem:[%s302 + $0xb48] sm:$0xff] %v1025
                %v1027 = vld [vmem:[%s301 + $0x1690] sm:$0xff]
                %1028 = vst [vmem:[%s302 + $0xb50] sm:$0xff] %v1027
                %v1029 = vld [vmem:[%s301 + $0x1698] sm:$0xff]
                %1030 = vst [vmem:[%s302 + $0xb58] sm:$0xff] %v1029
                %v1031 = vld [vmem:[%s301 + $0x16c0] sm:$0xff]
                %1032 = vst [vmem:[%s302 + $0xb60] sm:$0xff] %v1031
                %v1033 = vld [vmem:[%s301 + $0x16c8] sm:$0xff]
                %1034 = vst [vmem:[%s302 + $0xb68] sm:$0xff] %v1033
                %v1035 = vld [vmem:[%s301 + $0x16d0] sm:$0xff]
                %1036 = vst [vmem:[%s302 + $0xb70] sm:$0xff] %v1035
                %v1037 = vld [vmem:[%s301 + $0x16d8] sm:$0xff]
                %1038 = vst [vmem:[%s302 + $0xb78] sm:$0xff] %v1037
                %v1039 = vld [vmem:[%s301 + $0x1700] sm:$0xff]
                %1040 = vst [vmem:[%s302 + $0xb80] sm:$0xff] %v1039
                %v1041 = vld [vmem:[%s301 + $0x1708] sm:$0xff]
                %1042 = vst [vmem:[%s302 + $0xb88] sm:$0xff] %v1041
                %v1043 = vld [vmem:[%s301 + $0x1710] sm:$0xff]
                %1044 = vst [vmem:[%s302 + $0xb90] sm:$0xff] %v1043
                %v1045 = vld [vmem:[%s301 + $0x1718] sm:$0xff]
                %1046 = vst [vmem:[%s302 + $0xb98] sm:$0xff] %v1045
                %v1047 = vld [vmem:[%s301 + $0x1740] sm:$0xff]
                %1048 = vst [vmem:[%s302 + $0xba0] sm:$0xff] %v1047
                %v1049 = vld [vmem:[%s301 + $0x1748] sm:$0xff]
                %1050 = vst [vmem:[%s302 + $0xba8] sm:$0xff] %v1049
                %v1051 = vld [vmem:[%s301 + $0x1750] sm:$0xff]
                %1052 = vst [vmem:[%s302 + $0xbb0] sm:$0xff] %v1051
                %v1053 = vld [vmem:[%s301 + $0x1758] sm:$0xff]
                %1054 = vst [vmem:[%s302 + $0xbb8] sm:$0xff] %v1053
                %v1055 = vld [vmem:[%s301 + $0x1780] sm:$0xff]
                %1056 = vst [vmem:[%s302 + $0xbc0] sm:$0xff] %v1055
                %v1057 = vld [vmem:[%s301 + $0x1788] sm:$0xff]
                %1058 = vst [vmem:[%s302 + $0xbc8] sm:$0xff] %v1057
                %v1059 = vld [vmem:[%s301 + $0x1790] sm:$0xff]
                %1060 = vst [vmem:[%s302 + $0xbd0] sm:$0xff] %v1059
                %v1061 = vld [vmem:[%s301 + $0x1798] sm:$0xff]
                %1062 = vst [vmem:[%s302 + $0xbd8] sm:$0xff] %v1061
                %v1063 = vld [vmem:[%s301 + $0x17c0] sm:$0xff]
                %1064 = vst [vmem:[%s302 + $0xbe0] sm:$0xff] %v1063
                %v1065 = vld [vmem:[%s301 + $0x17c8] sm:$0xff]
                %1066 = vst [vmem:[%s302 + $0xbe8] sm:$0xff] %v1065
                %v1067 = vld [vmem:[%s301 + $0x17d0] sm:$0xff]
                %1068 = vst [vmem:[%s302 + $0xbf0] sm:$0xff] %v1067
                %v1069 = vld [vmem:[%s301 + $0x17d8] sm:$0xff]
                %1070 = vst [vmem:[%s302 + $0xbf8] sm:$0xff] %v1069
                %v1071 = vld [vmem:[%s301 + $0x1800] sm:$0xff]
                %1072 = vst [vmem:[%s302 + $0xc00] sm:$0xff] %v1071
                %v1073 = vld [vmem:[%s301 + $0x1808] sm:$0xff]
                %1074 = vst [vmem:[%s302 + $0xc08] sm:$0xff] %v1073
                %v1075 = vld [vmem:[%s301 + $0x1810] sm:$0xff]
                %1076 = vst [vmem:[%s302 + $0xc10] sm:$0xff] %v1075
                %v1077 = vld [vmem:[%s301 + $0x1818] sm:$0xff]
                %1078 = vst [vmem:[%s302 + $0xc18] sm:$0xff] %v1077
                %v1079 = vld [vmem:[%s301 + $0x1840] sm:$0xff]
                %1080 = vst [vmem:[%s302 + $0xc20] sm:$0xff] %v1079
                %v1081 = vld [vmem:[%s301 + $0x1848] sm:$0xff]
                %1082 = vst [vmem:[%s302 + $0xc28] sm:$0xff] %v1081
                %v1083 = vld [vmem:[%s301 + $0x1850] sm:$0xff]
                %1084 = vst [vmem:[%s302 + $0xc30] sm:$0xff] %v1083
                %v1085 = vld [vmem:[%s301 + $0x1858] sm:$0xff]
                %1086 = vst [vmem:[%s302 + $0xc38] sm:$0xff] %v1085
                %v1087 = vld [vmem:[%s301 + $0x1880] sm:$0xff]
                %1088 = vst [vmem:[%s302 + $0xc40] sm:$0xff] %v1087
                %v1089 = vld [vmem:[%s301 + $0x1888] sm:$0xff]
                %1090 = vst [vmem:[%s302 + $0xc48] sm:$0xff] %v1089
                %v1091 = vld [vmem:[%s301 + $0x1890] sm:$0xff]
                %1092 = vst [vmem:[%s302 + $0xc50] sm:$0xff] %v1091
                %v1093 = vld [vmem:[%s301 + $0x1898] sm:$0xff]
                %1094 = vst [vmem:[%s302 + $0xc58] sm:$0xff] %v1093
                %v1095 = vld [vmem:[%s301 + $0x18c0] sm:$0xff]
                %1096 = vst [vmem:[%s302 + $0xc60] sm:$0xff] %v1095
                %v1097 = vld [vmem:[%s301 + $0x18c8] sm:$0xff]
                %1098 = vst [vmem:[%s302 + $0xc68] sm:$0xff] %v1097
                %v1099 = vld [vmem:[%s301 + $0x18d0] sm:$0xff]
                %1100 = vst [vmem:[%s302 + $0xc70] sm:$0xff] %v1099
                %v1101 = vld [vmem:[%s301 + $0x18d8] sm:$0xff]
                %1102 = vst [vmem:[%s302 + $0xc78] sm:$0xff] %v1101
                %v1103 = vld [vmem:[%s301 + $0x1900] sm:$0xff]
                %1104 = vst [vmem:[%s302 + $0xc80] sm:$0xff] %v1103
                %v1105 = vld [vmem:[%s301 + $0x1908] sm:$0xff]
                %1106 = vst [vmem:[%s302 + $0xc88] sm:$0xff] %v1105
                %v1107 = vld [vmem:[%s301 + $0x1910] sm:$0xff]
                %1108 = vst [vmem:[%s302 + $0xc90] sm:$0xff] %v1107
                %v1109 = vld [vmem:[%s301 + $0x1918] sm:$0xff]
                %1110 = vst [vmem:[%s302 + $0xc98] sm:$0xff] %v1109
                %v1111 = vld [vmem:[%s301 + $0x1940] sm:$0xff]
                %1112 = vst [vmem:[%s302 + $0xca0] sm:$0xff] %v1111
                %v1113 = vld [vmem:[%s301 + $0x1948] sm:$0xff]
                %1114 = vst [vmem:[%s302 + $0xca8] sm:$0xff] %v1113
                %v1115 = vld [vmem:[%s301 + $0x1950] sm:$0xff]
                %1116 = vst [vmem:[%s302 + $0xcb0] sm:$0xff] %v1115
                %v1117 = vld [vmem:[%s301 + $0x1958] sm:$0xff]
                %1118 = vst [vmem:[%s302 + $0xcb8] sm:$0xff] %v1117
                %v1119 = vld [vmem:[%s301 + $0x1980] sm:$0xff]
                %1120 = vst [vmem:[%s302 + $0xcc0] sm:$0xff] %v1119
                %v1121 = vld [vmem:[%s301 + $0x1988] sm:$0xff]
                %1122 = vst [vmem:[%s302 + $0xcc8] sm:$0xff] %v1121
                %v1123 = vld [vmem:[%s301 + $0x1990] sm:$0xff]
                %1124 = vst [vmem:[%s302 + $0xcd0] sm:$0xff] %v1123
                %v1125 = vld [vmem:[%s301 + $0x1998] sm:$0xff]
                %1126 = vst [vmem:[%s302 + $0xcd8] sm:$0xff] %v1125
                %v1127 = vld [vmem:[%s301 + $0x19c0] sm:$0xff]
                %1128 = vst [vmem:[%s302 + $0xce0] sm:$0xff] %v1127
                %v1129 = vld [vmem:[%s301 + $0x19c8] sm:$0xff]
                %1130 = vst [vmem:[%s302 + $0xce8] sm:$0xff] %v1129
                %v1131 = vld [vmem:[%s301 + $0x19d0] sm:$0xff]
                %1132 = vst [vmem:[%s302 + $0xcf0] sm:$0xff] %v1131
                %v1133 = vld [vmem:[%s301 + $0x19d8] sm:$0xff]
                %1134 = vst [vmem:[%s302 + $0xcf8] sm:$0xff] %v1133
                %v1135 = vld [vmem:[%s301 + $0x1a00] sm:$0xff]
                %1136 = vst [vmem:[%s302 + $0xd00] sm:$0xff] %v1135
                %v1137 = vld [vmem:[%s301 + $0x1a08] sm:$0xff]
                %1138 = vst [vmem:[%s302 + $0xd08] sm:$0xff] %v1137
                %v1139 = vld [vmem:[%s301 + $0x1a10] sm:$0xff]
                %1140 = vst [vmem:[%s302 + $0xd10] sm:$0xff] %v1139
                %v1141 = vld [vmem:[%s301 + $0x1a18] sm:$0xff]
                %1142 = vst [vmem:[%s302 + $0xd18] sm:$0xff] %v1141
                %v1143 = vld [vmem:[%s301 + $0x1a40] sm:$0xff]
                %1144 = vst [vmem:[%s302 + $0xd20] sm:$0xff] %v1143
                %v1145 = vld [vmem:[%s301 + $0x1a48] sm:$0xff]
                %1146 = vst [vmem:[%s302 + $0xd28] sm:$0xff] %v1145
                %v1147 = vld [vmem:[%s301 + $0x1a50] sm:$0xff]
                %1148 = vst [vmem:[%s302 + $0xd30] sm:$0xff] %v1147
                %v1149 = vld [vmem:[%s301 + $0x1a58] sm:$0xff]
                %1150 = vst [vmem:[%s302 + $0xd38] sm:$0xff] %v1149
                %v1151 = vld [vmem:[%s301 + $0x1a80] sm:$0xff]
                %1152 = vst [vmem:[%s302 + $0xd40] sm:$0xff] %v1151
                %v1153 = vld [vmem:[%s301 + $0x1a88] sm:$0xff]
                %1154 = vst [vmem:[%s302 + $0xd48] sm:$0xff] %v1153
                %v1155 = vld [vmem:[%s301 + $0x1a90] sm:$0xff]
                %1156 = vst [vmem:[%s302 + $0xd50] sm:$0xff] %v1155
                %v1157 = vld [vmem:[%s301 + $0x1a98] sm:$0xff]
                %1158 = vst [vmem:[%s302 + $0xd58] sm:$0xff] %v1157
                %v1159 = vld [vmem:[%s301 + $0x1ac0] sm:$0xff]
                %1160 = vst [vmem:[%s302 + $0xd60] sm:$0xff] %v1159
                %v1161 = vld [vmem:[%s301 + $0x1ac8] sm:$0xff]
                %1162 = vst [vmem:[%s302 + $0xd68] sm:$0xff] %v1161
                %v1163 = vld [vmem:[%s301 + $0x1ad0] sm:$0xff]
                %1164 = vst [vmem:[%s302 + $0xd70] sm:$0xff] %v1163
                %v1165 = vld [vmem:[%s301 + $0x1ad8] sm:$0xff]
                %1166 = vst [vmem:[%s302 + $0xd78] sm:$0xff] %v1165
                %v1167 = vld [vmem:[%s301 + $0x1b00] sm:$0xff]
                %1168 = vst [vmem:[%s302 + $0xd80] sm:$0xff] %v1167
                %v1169 = vld [vmem:[%s301 + $0x1b08] sm:$0xff]
                %1170 = vst [vmem:[%s302 + $0xd88] sm:$0xff] %v1169
                %v1171 = vld [vmem:[%s301 + $0x1b10] sm:$0xff]
                %1172 = vst [vmem:[%s302 + $0xd90] sm:$0xff] %v1171
                %v1173 = vld [vmem:[%s301 + $0x1b18] sm:$0xff]
                %1174 = vst [vmem:[%s302 + $0xd98] sm:$0xff] %v1173
                %v1175 = vld [vmem:[%s301 + $0x1b40] sm:$0xff]
                %1176 = vst [vmem:[%s302 + $0xda0] sm:$0xff] %v1175
                %v1177 = vld [vmem:[%s301 + $0x1b48] sm:$0xff]
                %1178 = vst [vmem:[%s302 + $0xda8] sm:$0xff] %v1177
                %v1179 = vld [vmem:[%s301 + $0x1b50] sm:$0xff]
                %1180 = vst [vmem:[%s302 + $0xdb0] sm:$0xff] %v1179
                %v1181 = vld [vmem:[%s301 + $0x1b58] sm:$0xff]
                %1182 = vst [vmem:[%s302 + $0xdb8] sm:$0xff] %v1181
                %v1183 = vld [vmem:[%s301 + $0x1b80] sm:$0xff]
                %1184 = vst [vmem:[%s302 + $0xdc0] sm:$0xff] %v1183
                %v1185 = vld [vmem:[%s301 + $0x1b88] sm:$0xff]
                %1186 = vst [vmem:[%s302 + $0xdc8] sm:$0xff] %v1185
                %v1187 = vld [vmem:[%s301 + $0x1b90] sm:$0xff]
                %1188 = vst [vmem:[%s302 + $0xdd0] sm:$0xff] %v1187
                %v1189 = vld [vmem:[%s301 + $0x1b98] sm:$0xff]
                %1190 = vst [vmem:[%s302 + $0xdd8] sm:$0xff] %v1189
                %v1191 = vld [vmem:[%s301 + $0x1bc0] sm:$0xff]
                %1192 = vst [vmem:[%s302 + $0xde0] sm:$0xff] %v1191
                %v1193 = vld [vmem:[%s301 + $0x1bc8] sm:$0xff]
                %1194 = vst [vmem:[%s302 + $0xde8] sm:$0xff] %v1193
                %v1195 = vld [vmem:[%s301 + $0x1bd0] sm:$0xff]
                %1196 = vst [vmem:[%s302 + $0xdf0] sm:$0xff] %v1195
                %v1197 = vld [vmem:[%s301 + $0x1bd8] sm:$0xff]
                %1198 = vst [vmem:[%s302 + $0xdf8] sm:$0xff] %v1197
                %v1199 = vld [vmem:[%s301 + $0x1c00] sm:$0xff]
                %1200 = vst [vmem:[%s302 + $0xe00] sm:$0xff] %v1199
                %v1201 = vld [vmem:[%s301 + $0x1c08] sm:$0xff]
                %1202 = vst [vmem:[%s302 + $0xe08] sm:$0xff] %v1201
                %v1203 = vld [vmem:[%s301 + $0x1c10] sm:$0xff]
                %1204 = vst [vmem:[%s302 + $0xe10] sm:$0xff] %v1203
                %v1205 = vld [vmem:[%s301 + $0x1c18] sm:$0xff]
                %1206 = vst [vmem:[%s302 + $0xe18] sm:$0xff] %v1205
                %v1207 = vld [vmem:[%s301 + $0x1c40] sm:$0xff]
                %1208 = vst [vmem:[%s302 + $0xe20] sm:$0xff] %v1207
                %v1209 = vld [vmem:[%s301 + $0x1c48] sm:$0xff]
                %1210 = vst [vmem:[%s302 + $0xe28] sm:$0xff] %v1209
                %v1211 = vld [vmem:[%s301 + $0x1c50] sm:$0xff]
                %1212 = vst [vmem:[%s302 + $0xe30] sm:$0xff] %v1211
                %v1213 = vld [vmem:[%s301 + $0x1c58] sm:$0xff]
                %1214 = vst [vmem:[%s302 + $0xe38] sm:$0xff] %v1213
                %v1215 = vld [vmem:[%s301 + $0x1c80] sm:$0xff]
                %1216 = vst [vmem:[%s302 + $0xe40] sm:$0xff] %v1215
                %v1217 = vld [vmem:[%s301 + $0x1c88] sm:$0xff]
                %1218 = vst [vmem:[%s302 + $0xe48] sm:$0xff] %v1217
                %v1219 = vld [vmem:[%s301 + $0x1c90] sm:$0xff]
                %1220 = vst [vmem:[%s302 + $0xe50] sm:$0xff] %v1219
                %v1221 = vld [vmem:[%s301 + $0x1c98] sm:$0xff]
                %1222 = vst [vmem:[%s302 + $0xe58] sm:$0xff] %v1221
                %v1223 = vld [vmem:[%s301 + $0x1cc0] sm:$0xff]
                %1224 = vst [vmem:[%s302 + $0xe60] sm:$0xff] %v1223
                %v1225 = vld [vmem:[%s301 + $0x1cc8] sm:$0xff]
                %1226 = vst [vmem:[%s302 + $0xe68] sm:$0xff] %v1225
                %v1227 = vld [vmem:[%s301 + $0x1cd0] sm:$0xff]
                %1228 = vst [vmem:[%s302 + $0xe70] sm:$0xff] %v1227
                %v1229 = vld [vmem:[%s301 + $0x1cd8] sm:$0xff]
                %1230 = vst [vmem:[%s302 + $0xe78] sm:$0xff] %v1229
                %v1231 = vld [vmem:[%s301 + $0x1d00] sm:$0xff]
                %1232 = vst [vmem:[%s302 + $0xe80] sm:$0xff] %v1231
                %v1233 = vld [vmem:[%s301 + $0x1d08] sm:$0xff]
                %1234 = vst [vmem:[%s302 + $0xe88] sm:$0xff] %v1233
                %v1235 = vld [vmem:[%s301 + $0x1d10] sm:$0xff]
                %1236 = vst [vmem:[%s302 + $0xe90] sm:$0xff] %v1235
                %v1237 = vld [vmem:[%s301 + $0x1d18] sm:$0xff]
                %1238 = vst [vmem:[%s302 + $0xe98] sm:$0xff] %v1237
                %v1239 = vld [vmem:[%s301 + $0x1d40] sm:$0xff]
                %1240 = vst [vmem:[%s302 + $0xea0] sm:$0xff] %v1239
                %v1241 = vld [vmem:[%s301 + $0x1d48] sm:$0xff]
                %1242 = vst [vmem:[%s302 + $0xea8] sm:$0xff] %v1241
                %v1243 = vld [vmem:[%s301 + $0x1d50] sm:$0xff]
                %1244 = vst [vmem:[%s302 + $0xeb0] sm:$0xff] %v1243
                %v1245 = vld [vmem:[%s301 + $0x1d58] sm:$0xff]
                %1246 = vst [vmem:[%s302 + $0xeb8] sm:$0xff] %v1245
                %v1247 = vld [vmem:[%s301 + $0x1d80] sm:$0xff]
                %1248 = vst [vmem:[%s302 + $0xec0] sm:$0xff] %v1247
                %v1249 = vld [vmem:[%s301 + $0x1d88] sm:$0xff]
                %1250 = vst [vmem:[%s302 + $0xec8] sm:$0xff] %v1249
                %v1251 = vld [vmem:[%s301 + $0x1d90] sm:$0xff]
                %1252 = vst [vmem:[%s302 + $0xed0] sm:$0xff] %v1251
                %v1253 = vld [vmem:[%s301 + $0x1d98] sm:$0xff]
                %1254 = vst [vmem:[%s302 + $0xed8] sm:$0xff] %v1253
                %v1255 = vld [vmem:[%s301 + $0x1dc0] sm:$0xff]
                %1256 = vst [vmem:[%s302 + $0xee0] sm:$0xff] %v1255
                %v1257 = vld [vmem:[%s301 + $0x1dc8] sm:$0xff]
                %1258 = vst [vmem:[%s302 + $0xee8] sm:$0xff] %v1257
                %v1259 = vld [vmem:[%s301 + $0x1dd0] sm:$0xff]
                %1260 = vst [vmem:[%s302 + $0xef0] sm:$0xff] %v1259
                %v1261 = vld [vmem:[%s301 + $0x1dd8] sm:$0xff]
                %1262 = vst [vmem:[%s302 + $0xef8] sm:$0xff] %v1261
                %v1263 = vld [vmem:[%s301 + $0x1e00] sm:$0xff]
                %1264 = vst [vmem:[%s302 + $0xf00] sm:$0xff] %v1263
                %v1265 = vld [vmem:[%s301 + $0x1e08] sm:$0xff]
                %1266 = vst [vmem:[%s302 + $0xf08] sm:$0xff] %v1265
                %v1267 = vld [vmem:[%s301 + $0x1e10] sm:$0xff]
                %1268 = vst [vmem:[%s302 + $0xf10] sm:$0xff] %v1267
                %v1269 = vld [vmem:[%s301 + $0x1e18] sm:$0xff]
                %1270 = vst [vmem:[%s302 + $0xf18] sm:$0xff] %v1269
              $region53: #{forward.5} parent=47 // loop_footer
                %s300 = sadd.s32 1, %s296
              $region54: #{forward.5} parent=47 // loop_footer_branch
                %295 = sbr.rel target = $region50
              $region55: #{forward.5} parent=47 // loop_exit
                _
            $region48: #{forward.5} parent=43 // pred_fallthru
              _
            // Predicated region
            $region56: #{forward.5} parent=43 // pred_check
              _
            $region57: #{forward.5} parent=43 // pred_check_branch
              %1272 = sbr.rel target = $region59
            $region58: #{forward.5} parent=43 // pred_region
              _
            $region59: #{forward.5} parent=43 // pred_fallthru
              _
          $region44: #{forward.5} parent=39 // pred_fallthru
            _
          %1273 = vnop
        $region40: #{forward.5} parent=35 // pred_fallthru
          _
        // Predicated region
        $region60: #{forward.5} parent=35 // pred_check
          %p1274 = pneg %p84
        $region61: #{forward.5} parent=35 // pred_check_branch
          %1276 = sbr.rel (%p1274) target = $region63
        $region62: #{forward.5} parent=35 // pred_region
          %s1277 = smul.u32 4, %s17
          %p1278 = scmp.lt.s32.totalorder %s1277, 7
          %s1279 = scalar_select %p1278, %s1277, 7
          %s1280 = scalar_lea.vmem %s2, %s1279
          %s1281 = smul.u32 4, %s17
        $region63: #{forward.5} parent=35 // pred_fallthru
          _
        // Predicated region
        $region64: #{forward.5} parent=35 // pred_check
          %p1282 = pneg %p110
        $region65: #{forward.5} parent=35 // pred_check_branch
          %1284 = sbr.rel (%p1282) target = $region67
        $region66: #{forward.5} parent=35 // pred_region
          %s1285 = smul.u32 4, %s17
          %p1286 = scmp.lt.s32.totalorder %s1285, 7
          %s1287 = scalar_select %p1286, %s1285, 7
          %s1288 = scalar_lea.vmem %s3, %s1287
          %s1289 = smul.u32 4, %s17
        $region67: #{forward.5} parent=35 // pred_fallthru
          _
        // Predicated region
        $region68: #{forward.5} parent=35 // pred_check
          %p1290 = pneg %p136
        $region69: #{forward.5} parent=35 // pred_check_branch
          %1292 = sbr.rel (%p1290) target = $region71
        $region70: #{forward.5} parent=35 // pred_region
          %s1293 = smul.u32 16, %s17
          %p1294 = scmp.lt.s32.totalorder %s1293, 31
          %s1295 = scalar_select %p1294, %s1293, 31
          %s1296 = smul.addr %s1295, 8
          %s1297 = smul.addr %s1296, 8
          %s1298 = scalar_lea.vmem %s4, %s1297
          %s1299 = smul.u32 16, %s17
        $region71: #{forward.5} parent=35 // pred_fallthru
          _
      $region36: #{forward.5} parent=5 // pred_fallthru
        _
      %p1300 = scmp.le.s32.totalorder 1, %s17
      %p1301 = scmp.lt.s32.totalorder %s17, 3
      %p1302 = pnand %p1300, %p1301
      %p1303 = pneg %p1302
      // Predicated region
      $region72: #{forward.5} parent=5 // pred_check
        _
      $region73: #{forward.5} parent=5 // pred_check_branch
        %1305 = sbr.rel (%p1302) target = $region75
      $region74: #{forward.5} parent=5 // pred_region
        %s1306 = ssub.s32 %s17, 1
        %s1307 = sand.u32 %s51, 1
        %s1308 = sand.u32 %s51, 1
        %s1309 = smul.addr %s1308, 3872
        %s1310 = scalar_lea.vmem [#allocation4], %s1309
        // Predicated region
        $region76: #{forward.5} parent=74 // pred_check
          %p1311 = pneg %p64
        $region77: #{forward.5} parent=74 // pred_check_branch
          %1313 = sbr.rel (%p1311) target = $region79
        $region78: #{forward.5} parent=74 // pred_region
          _
        $region79: #{forward.5} parent=74 // pred_fallthru
          _
        %p1314 = pneg %p38
        %p1315 = pneg %p35
        %s1316 = sand.u32 %s51, 1
        %s1317 = sand.u32 %s51, 1
        %s1318 = smul.addr %s1317, 3872
        %s1319 = scalar_lea.vmem [#allocation4], %s1318
        %p1320 = pneg %p64
        %p1321 = pneg %p61
        %s1322 = smul.u32 4, %s22
        %p1323 = scmp.lt.s32.totalorder %s1322, 7
        %s1324 = scalar_select %p1323, %s1322, 7
        %s1325 = scalar_lea.vmem %s2, %s1324
        %p1326 = pneg %p90
        %p1327 = pneg %p87
        %s1328 = smul.u32 4, %s22
        %p1329 = scmp.lt.s32.totalorder %s1328, 7
        %s1330 = scalar_select %p1329, %s1328, 7
        %s1331 = scalar_lea.vmem %s3, %s1330
        %p1332 = pneg %p116
        %p1333 = pneg %p113
        %s1334 = smul.u32 16, %s22
        %p1335 = scmp.lt.s32.totalorder %s1334, 31
        %s1336 = scalar_select %p1335, %s1334, 31
        %s1337 = smul.addr %s1336, 8
        %s1338 = smul.addr %s1337, 8
        %s1339 = scalar_lea.vmem %s4, %s1338
        %p1340 = pneg %p142
        %p1341 = pneg %p139
        %p1342 = pneg %p163
        %p1343 = pneg %p160
        %p1344 = pneg %p184
        %p1345 = pneg %p181
        %p1346 = pneg %p205
        %p1347 = pneg %p202
        %p1348 = pneg %p226
        %p1349 = pneg %p223
        %p1350 = pneg %p247
        %p1351 = pneg %p244
        %s1352 = smul.u32 4, %s22
        %s1353 = smul.u32 4, %s22
        %p1354 = scmp.lt.s32.totalorder %s1353, 7
        %s1355 = scalar_select %p1354, %s1353, 7
        %s1356 = scalar_lea.vmem %s2, %s1355
        %s1357 = smul.u32 4, %s22
        %s1358 = smul.u32 4, %s22
        %p1359 = scmp.lt.s32.totalorder %s1358, 7
        %s1360 = scalar_select %p1359, %s1358, 7
        %s1361 = scalar_lea.vmem %s3, %s1360
        %s1362 = smul.u32 4, %s22
        %s1363 = smul.u32 16, %s22
        %p1364 = scmp.lt.s32.totalorder %s1363, 31
        %s1365 = scalar_select %p1364, %s1363, 31
        %s1366 = smul.addr %s1365, 8
        %s1367 = smul.addr %s1366, 8
        %s1368 = scalar_lea.vmem %s4, %s1367
        %s1369 = smul.u32 16, %s22
        %p1371 = scmp.eq.s32.totalorder %s22, 0
        // Predicated region
        $region80: #{forward.5} parent=74 // pred_check
          %p1372 = pneg %p1371
        $region81: #{forward.5} parent=74 // pred_check_branch
          %1374 = sbr.rel (%p1372) target = $region83
        $region82: #{forward.5} parent=74 // pred_region
          %1375 = vst [vmem:[#allocation2] sm:$0xff] 0.0
          %1376 = vst [vmem:[#allocation2 + $0x8] sm:$0xff] 0.0
        $region83: #{forward.5} parent=74 // pred_fallthru
          _
        %v1377 = vld [vmem:[%s1310] sm:$0xff]
        %v1378 = vld [vmem:[%s1310 + $0x8] sm:$0xff]
        %v1379 = vld [vmem:[%s1310 + $0x10] sm:$0xff]
        %v1380 = vld [vmem:[%s1310 + $0x18] sm:$0xff]
        %v1381 = vld [vmem:[%s1310 + $0x20] sm:$0xff]
        %v1382 = vld [vmem:[%s1310 + $0x28] sm:$0xff]
        %v1383 = vld [vmem:[%s1310 + $0x30] sm:$0xff]
        %v1384 = vld [vmem:[%s1310 + $0x38] sm:$0xff]
        %v1385 = vld [vmem:[%s1310 + $0x40] sm:$0xff]
        %v1386 = vld [vmem:[%s1310 + $0x48] sm:$0xff]
        %v1387 = vld [vmem:[%s1310 + $0x50] sm:$0xff]
        %v1388 = vld [vmem:[%s1310 + $0x58] sm:$0xff]
        %v1389 = vld [vmem:[%s1310 + $0x60] sm:$0xff]
        %v1390 = vld [vmem:[%s1310 + $0x68] sm:$0xff]
        %v1391 = vld [vmem:[%s1310 + $0x70] sm:$0xff]
        %v1392 = vld [vmem:[%s1310 + $0x78] sm:$0xff]
        %v1393 = vld [vmem:[%s1310 + $0x80] sm:$0xff]
        %v1394 = vld [vmem:[%s1310 + $0x88] sm:$0xff]
        %v1395 = vld [vmem:[%s1310 + $0x90] sm:$0xff]
        %v1396 = vld [vmem:[%s1310 + $0x98] sm:$0xff]
        %v1397 = vld [vmem:[%s1310 + $0xa0] sm:$0xff]
        %v1398 = vld [vmem:[%s1310 + $0xa8] sm:$0xff]
        %v1399 = vld [vmem:[%s1310 + $0xb0] sm:$0xff]
        %v1400 = vld [vmem:[%s1310 + $0xb8] sm:$0xff]
        %v1401 = vld [vmem:[%s1310 + $0xc0] sm:$0xff]
        %v1402 = vld [vmem:[%s1310 + $0xc8] sm:$0xff]
        %v1403 = vld [vmem:[%s1310 + $0xd0] sm:$0xff]
        %v1404 = vld [vmem:[%s1310 + $0xd8] sm:$0xff]
        %v1405 = vld [vmem:[%s1310 + $0xe0] sm:$0xff]
        %v1406 = vld [vmem:[%s1310 + $0xe8] sm:$0xff]
        %v1407 = vld [vmem:[%s1310 + $0xf0] sm:$0xff]
        %v1408 = vld [vmem:[%s1310 + $0xf8] sm:$0xff]
        %v1409 = vld [vmem:[%s1310 + $0x100] sm:$0xff]
        %v1410 = vld [vmem:[%s1310 + $0x108] sm:$0xff]
        %v1411 = vld [vmem:[%s1310 + $0x110] sm:$0xff]
        %v1412 = vld [vmem:[%s1310 + $0x118] sm:$0xff]
        %v1413 = vld [vmem:[%s1310 + $0x120] sm:$0xff]
        %v1414 = vld [vmem:[%s1310 + $0x128] sm:$0xff]
        %v1415 = vld [vmem:[%s1310 + $0x130] sm:$0xff]
        %v1416 = vld [vmem:[%s1310 + $0x138] sm:$0xff]
        %v1417 = vld [vmem:[%s1310 + $0x140] sm:$0xff]
        %v1418 = vld [vmem:[%s1310 + $0x148] sm:$0xff]
        %v1419 = vld [vmem:[%s1310 + $0x150] sm:$0xff]
        %v1420 = vld [vmem:[%s1310 + $0x158] sm:$0xff]
        %v1421 = vld [vmem:[%s1310 + $0x160] sm:$0xff]
        %v1422 = vld [vmem:[%s1310 + $0x168] sm:$0xff]
        %v1423 = vld [vmem:[%s1310 + $0x170] sm:$0xff]
        %v1424 = vld [vmem:[%s1310 + $0x178] sm:$0xff]
        %v1425 = vld [vmem:[%s1310 + $0x180] sm:$0xff]
        %v1426 = vld [vmem:[%s1310 + $0x188] sm:$0xff]
        %v1427 = vld [vmem:[%s1310 + $0x190] sm:$0xff]
        %v1428 = vld [vmem:[%s1310 + $0x198] sm:$0xff]
        %v1429 = vld [vmem:[%s1310 + $0x1a0] sm:$0xff]
        %v1430 = vld [vmem:[%s1310 + $0x1a8] sm:$0xff]
        %v1431 = vld [vmem:[%s1310 + $0x1b0] sm:$0xff]
        %v1432 = vld [vmem:[%s1310 + $0x1b8] sm:$0xff]
        %v1433 = vld [vmem:[%s1310 + $0x1c0] sm:$0xff]
        %v1434 = vld [vmem:[%s1310 + $0x1c8] sm:$0xff]
        %v1435 = vld [vmem:[%s1310 + $0x1d0] sm:$0xff]
        %v1436 = vld [vmem:[%s1310 + $0x1d8] sm:$0xff]
        %v1437 = vld [vmem:[%s1310 + $0x1e0] sm:$0xff]
        %v1438 = vld [vmem:[%s1310 + $0x1e8] sm:$0xff]
        %v1439 = vld [vmem:[%s1310 + $0x1f0] sm:$0xff]
        %v1440 = vld [vmem:[%s1310 + $0x1f8] sm:$0xff]
        %v1441 = vld [vmem:[%s1310 + $0x200] sm:$0xff]
        %v1442 = vld [vmem:[%s1310 + $0x208] sm:$0xff]
        %v1443 = vld [vmem:[%s1310 + $0x210] sm:$0xff]
        %v1444 = vld [vmem:[%s1310 + $0x218] sm:$0xff]
        %v1445 = vld [vmem:[%s1310 + $0x220] sm:$0xff]
        %v1446 = vld [vmem:[%s1310 + $0x228] sm:$0xff]
        %v1447 = vld [vmem:[%s1310 + $0x230] sm:$0xff]
        %v1448 = vld [vmem:[%s1310 + $0x238] sm:$0xff]
        %v1449 = vld [vmem:[%s1310 + $0x240] sm:$0xff]
        %v1450 = vld [vmem:[%s1310 + $0x248] sm:$0xff]
        %v1451 = vld [vmem:[%s1310 + $0x250] sm:$0xff]
        %v1452 = vld [vmem:[%s1310 + $0x258] sm:$0xff]
        %v1453 = vld [vmem:[%s1310 + $0x260] sm:$0xff]
        %v1454 = vld [vmem:[%s1310 + $0x268] sm:$0xff]
        %v1455 = vld [vmem:[%s1310 + $0x270] sm:$0xff]
        %v1456 = vld [vmem:[%s1310 + $0x278] sm:$0xff]
        %v1457 = vld [vmem:[%s1310 + $0x280] sm:$0xff]
        %v1458 = vld [vmem:[%s1310 + $0x288] sm:$0xff]
        %v1459 = vld [vmem:[%s1310 + $0x290] sm:$0xff]
        %v1460 = vld [vmem:[%s1310 + $0x298] sm:$0xff]
        %v1461 = vld [vmem:[%s1310 + $0x2a0] sm:$0xff]
        %v1462 = vld [vmem:[%s1310 + $0x2a8] sm:$0xff]
        %v1463 = vld [vmem:[%s1310 + $0x2b0] sm:$0xff]
        %v1464 = vld [vmem:[%s1310 + $0x2b8] sm:$0xff]
        %v1465 = vld [vmem:[%s1310 + $0x2c0] sm:$0xff]
        %v1466 = vld [vmem:[%s1310 + $0x2c8] sm:$0xff]
        %v1467 = vld [vmem:[%s1310 + $0x2d0] sm:$0xff]
        %v1468 = vld [vmem:[%s1310 + $0x2d8] sm:$0xff]
        %v1469 = vld [vmem:[%s1310 + $0x2e0] sm:$0xff]
        %v1470 = vld [vmem:[%s1310 + $0x2e8] sm:$0xff]
        %v1471 = vld [vmem:[%s1310 + $0x2f0] sm:$0xff]
        %v1472 = vld [vmem:[%s1310 + $0x2f8] sm:$0xff]
        %v1473 = vld [vmem:[%s1310 + $0x300] sm:$0xff]
        %v1474 = vld [vmem:[%s1310 + $0x308] sm:$0xff]
        %v1475 = vld [vmem:[%s1310 + $0x310] sm:$0xff]
        %v1476 = vld [vmem:[%s1310 + $0x318] sm:$0xff]
        %v1477 = vld [vmem:[%s1310 + $0x320] sm:$0xff]
        %v1478 = vld [vmem:[%s1310 + $0x328] sm:$0xff]
        %v1479 = vld [vmem:[%s1310 + $0x330] sm:$0xff]
        %v1480 = vld [vmem:[%s1310 + $0x338] sm:$0xff]
        %v1481 = vld [vmem:[%s1310 + $0x340] sm:$0xff]
        %v1482 = vld [vmem:[%s1310 + $0x348] sm:$0xff]
        %v1483 = vld [vmem:[%s1310 + $0x350] sm:$0xff]
        %v1484 = vld [vmem:[%s1310 + $0x358] sm:$0xff]
        %v1485 = vld [vmem:[%s1310 + $0x360] sm:$0xff]
        %v1486 = vld [vmem:[%s1310 + $0x368] sm:$0xff]
        %v1487 = vld [vmem:[%s1310 + $0x370] sm:$0xff]
        %v1488 = vld [vmem:[%s1310 + $0x378] sm:$0xff]
        %v1489 = vld [vmem:[%s1310 + $0x380] sm:$0xff]
        %v1490 = vld [vmem:[%s1310 + $0x388] sm:$0xff]
        %v1491 = vld [vmem:[%s1310 + $0x390] sm:$0xff]
        %v1492 = vld [vmem:[%s1310 + $0x398] sm:$0xff]
        %v1493 = vld [vmem:[%s1310 + $0x3a0] sm:$0xff]
        %v1494 = vld [vmem:[%s1310 + $0x3a8] sm:$0xff]
        %v1495 = vld [vmem:[%s1310 + $0x3b0] sm:$0xff]
        %v1496 = vld [vmem:[%s1310 + $0x3b8] sm:$0xff]
        %v1497 = vld [vmem:[%s1310 + $0x3c0] sm:$0xff]
        %v1498 = vld [vmem:[%s1310 + $0x3c8] sm:$0xff]
        %v1499 = vld [vmem:[%s1310 + $0x3d0] sm:$0xff]
        %v1500 = vld [vmem:[%s1310 + $0x3d8] sm:$0xff]
        %v1501 = vld [vmem:[%s1310 + $0x3e0] sm:$0xff]
        %v1502 = vld [vmem:[%s1310 + $0x3e8] sm:$0xff]
        %v1503 = vld [vmem:[%s1310 + $0x3f0] sm:$0xff]
        %v1504 = vld [vmem:[%s1310 + $0x3f8] sm:$0xff]
        %v1505 = vld [vmem:[%s1310 + $0x400] sm:$0xff]
        %v1506 = vld [vmem:[%s1310 + $0x408] sm:$0xff]
        %v1507 = vld [vmem:[%s1310 + $0x410] sm:$0xff]
        %v1508 = vld [vmem:[%s1310 + $0x418] sm:$0xff]
        %v1509 = vld [vmem:[%s1310 + $0x420] sm:$0xff]
        %v1510 = vld [vmem:[%s1310 + $0x428] sm:$0xff]
        %v1511 = vld [vmem:[%s1310 + $0x430] sm:$0xff]
        %v1512 = vld [vmem:[%s1310 + $0x438] sm:$0xff]
        %v1513 = vld [vmem:[%s1310 + $0x440] sm:$0xff]
        %v1514 = vld [vmem:[%s1310 + $0x448] sm:$0xff]
        %v1515 = vld [vmem:[%s1310 + $0x450] sm:$0xff]
        %v1516 = vld [vmem:[%s1310 + $0x458] sm:$0xff]
        %v1517 = vld [vmem:[%s1310 + $0x460] sm:$0xff]
        %v1518 = vld [vmem:[%s1310 + $0x468] sm:$0xff]
        %v1519 = vld [vmem:[%s1310 + $0x470] sm:$0xff]
        %v1520 = vld [vmem:[%s1310 + $0x478] sm:$0xff]
        %v1521 = vld [vmem:[%s1310 + $0x480] sm:$0xff]
        %v1522 = vld [vmem:[%s1310 + $0x488] sm:$0xff]
        %v1523 = vld [vmem:[%s1310 + $0x490] sm:$0xff]
        %v1524 = vld [vmem:[%s1310 + $0x498] sm:$0xff]
        %v1525 = vld [vmem:[%s1310 + $0x4a0] sm:$0xff]
        %v1526 = vld [vmem:[%s1310 + $0x4a8] sm:$0xff]
        %v1527 = vld [vmem:[%s1310 + $0x4b0] sm:$0xff]
        %v1528 = vld [vmem:[%s1310 + $0x4b8] sm:$0xff]
        %v1529 = vld [vmem:[%s1310 + $0x4c0] sm:$0xff]
        %v1530 = vld [vmem:[%s1310 + $0x4c8] sm:$0xff]
        %v1531 = vld [vmem:[%s1310 + $0x4d0] sm:$0xff]
        %v1532 = vld [vmem:[%s1310 + $0x4d8] sm:$0xff]
        %v1533 = vld [vmem:[%s1310 + $0x4e0] sm:$0xff]
        %v1534 = vld [vmem:[%s1310 + $0x4e8] sm:$0xff]
        %v1535 = vld [vmem:[%s1310 + $0x4f0] sm:$0xff]
        %v1536 = vld [vmem:[%s1310 + $0x4f8] sm:$0xff]
        %v1537 = vld [vmem:[%s1310 + $0x500] sm:$0xff]
        %v1538 = vld [vmem:[%s1310 + $0x508] sm:$0xff]
        %v1539 = vld [vmem:[%s1310 + $0x510] sm:$0xff]
        %v1540 = vld [vmem:[%s1310 + $0x518] sm:$0xff]
        %v1541 = vld [vmem:[%s1310 + $0x520] sm:$0xff]
        %v1542 = vld [vmem:[%s1310 + $0x528] sm:$0xff]
        %v1543 = vld [vmem:[%s1310 + $0x530] sm:$0xff]
        %v1544 = vld [vmem:[%s1310 + $0x538] sm:$0xff]
        %v1545 = vld [vmem:[%s1310 + $0x540] sm:$0xff]
        %v1546 = vld [vmem:[%s1310 + $0x548] sm:$0xff]
        %v1547 = vld [vmem:[%s1310 + $0x550] sm:$0xff]
        %v1548 = vld [vmem:[%s1310 + $0x558] sm:$0xff]
        %v1549 = vld [vmem:[%s1310 + $0x560] sm:$0xff]
        %v1550 = vld [vmem:[%s1310 + $0x568] sm:$0xff]
        %v1551 = vld [vmem:[%s1310 + $0x570] sm:$0xff]
        %v1552 = vld [vmem:[%s1310 + $0x578] sm:$0xff]
        %v1553 = vld [vmem:[%s1310 + $0x580] sm:$0xff]
        %v1554 = vld [vmem:[%s1310 + $0x588] sm:$0xff]
        %v1555 = vld [vmem:[%s1310 + $0x590] sm:$0xff]
        %v1556 = vld [vmem:[%s1310 + $0x598] sm:$0xff]
        %v1557 = vld [vmem:[%s1310 + $0x5a0] sm:$0xff]
        %v1558 = vld [vmem:[%s1310 + $0x5a8] sm:$0xff]
        %v1559 = vld [vmem:[%s1310 + $0x5b0] sm:$0xff]
        %v1560 = vld [vmem:[%s1310 + $0x5b8] sm:$0xff]
        %v1561 = vld [vmem:[%s1310 + $0x5c0] sm:$0xff]
        %v1562 = vld [vmem:[%s1310 + $0x5c8] sm:$0xff]
        %v1563 = vld [vmem:[%s1310 + $0x5d0] sm:$0xff]
        %v1564 = vld [vmem:[%s1310 + $0x5d8] sm:$0xff]
        %v1565 = vld [vmem:[%s1310 + $0x5e0] sm:$0xff]
        %v1566 = vld [vmem:[%s1310 + $0x5e8] sm:$0xff]
        %v1567 = vld [vmem:[%s1310 + $0x5f0] sm:$0xff]
        %v1568 = vld [vmem:[%s1310 + $0x5f8] sm:$0xff]
        %v1569 = vld [vmem:[%s1310 + $0x600] sm:$0xff]
        %v1570 = vld [vmem:[%s1310 + $0x608] sm:$0xff]
        %v1571 = vld [vmem:[%s1310 + $0x610] sm:$0xff]
        %v1572 = vld [vmem:[%s1310 + $0x618] sm:$0xff]
        %v1573 = vld [vmem:[%s1310 + $0x620] sm:$0xff]
        %v1574 = vld [vmem:[%s1310 + $0x628] sm:$0xff]
        %v1575 = vld [vmem:[%s1310 + $0x630] sm:$0xff]
        %v1576 = vld [vmem:[%s1310 + $0x638] sm:$0xff]
        %v1577 = vld [vmem:[%s1310 + $0x640] sm:$0xff]
        %v1578 = vld [vmem:[%s1310 + $0x648] sm:$0xff]
        %v1579 = vld [vmem:[%s1310 + $0x650] sm:$0xff]
        %v1580 = vld [vmem:[%s1310 + $0x658] sm:$0xff]
        %v1581 = vld [vmem:[%s1310 + $0x660] sm:$0xff]
        %v1582 = vld [vmem:[%s1310 + $0x668] sm:$0xff]
        %v1583 = vld [vmem:[%s1310 + $0x670] sm:$0xff]
        %v1584 = vld [vmem:[%s1310 + $0x678] sm:$0xff]
        %v1585 = vld [vmem:[%s1310 + $0x680] sm:$0xff]
        %v1586 = vld [vmem:[%s1310 + $0x688] sm:$0xff]
        %v1587 = vld [vmem:[%s1310 + $0x690] sm:$0xff]
        %v1588 = vld [vmem:[%s1310 + $0x698] sm:$0xff]
        %v1589 = vld [vmem:[%s1310 + $0x6a0] sm:$0xff]
        %v1590 = vld [vmem:[%s1310 + $0x6a8] sm:$0xff]
        %v1591 = vld [vmem:[%s1310 + $0x6b0] sm:$0xff]
        %v1592 = vld [vmem:[%s1310 + $0x6b8] sm:$0xff]
        %v1593 = vld [vmem:[%s1310 + $0x6c0] sm:$0xff]
        %v1594 = vld [vmem:[%s1310 + $0x6c8] sm:$0xff]
        %v1595 = vld [vmem:[%s1310 + $0x6d0] sm:$0xff]
        %v1596 = vld [vmem:[%s1310 + $0x6d8] sm:$0xff]
        %v1597 = vld [vmem:[%s1310 + $0x6e0] sm:$0xff]
        %v1598 = vld [vmem:[%s1310 + $0x6e8] sm:$0xff]
        %v1599 = vld [vmem:[%s1310 + $0x6f0] sm:$0xff]
        %v1600 = vld [vmem:[%s1310 + $0x6f8] sm:$0xff]
        %v1601 = vld [vmem:[%s1310 + $0x700] sm:$0xff]
        %v1602 = vld [vmem:[%s1310 + $0x708] sm:$0xff]
        %v1603 = vld [vmem:[%s1310 + $0x710] sm:$0xff]
        %v1604 = vld [vmem:[%s1310 + $0x718] sm:$0xff]
        %v1605 = vld [vmem:[%s1310 + $0x720] sm:$0xff]
        %v1606 = vld [vmem:[%s1310 + $0x728] sm:$0xff]
        %v1607 = vld [vmem:[%s1310 + $0x730] sm:$0xff]
        %v1608 = vld [vmem:[%s1310 + $0x738] sm:$0xff]
        %v1609 = vld [vmem:[%s1310 + $0x740] sm:$0xff]
        %v1610 = vld [vmem:[%s1310 + $0x748] sm:$0xff]
        %v1611 = vld [vmem:[%s1310 + $0x750] sm:$0xff]
        %v1612 = vld [vmem:[%s1310 + $0x758] sm:$0xff]
        %v1613 = vld [vmem:[%s1310 + $0x760] sm:$0xff]
        %v1614 = vld [vmem:[%s1310 + $0x768] sm:$0xff]
        %v1615 = vld [vmem:[%s1310 + $0x770] sm:$0xff]
        %v1616 = vld [vmem:[%s1310 + $0x778] sm:$0xff]
        %v1617 = vld [vmem:[%s1310 + $0x780] sm:$0xff]
        %v1618 = vld [vmem:[%s1310 + $0x788] sm:$0xff]
        %v1619 = vld [vmem:[%s1310 + $0x790] sm:$0xff]
        %v1620 = vld [vmem:[%s1310 + $0x798] sm:$0xff]
        %v1621 = vld [vmem:[%s1310 + $0x7a0] sm:$0xff]
        %v1622 = vld [vmem:[%s1310 + $0x7a8] sm:$0xff]
        %v1623 = vld [vmem:[%s1310 + $0x7b0] sm:$0xff]
        %v1624 = vld [vmem:[%s1310 + $0x7b8] sm:$0xff]
        %v1625 = vld [vmem:[%s1310 + $0x7c0] sm:$0xff]
        %v1626 = vld [vmem:[%s1310 + $0x7c8] sm:$0xff]
        %v1627 = vld [vmem:[%s1310 + $0x7d0] sm:$0xff]
        %v1628 = vld [vmem:[%s1310 + $0x7d8] sm:$0xff]
        %v1629 = vld [vmem:[%s1310 + $0x7e0] sm:$0xff]
        %v1630 = vld [vmem:[%s1310 + $0x7e8] sm:$0xff]
        %v1631 = vld [vmem:[%s1310 + $0x7f0] sm:$0xff]
        %v1632 = vld [vmem:[%s1310 + $0x7f8] sm:$0xff]
        %v1633 = vld [vmem:[%s1310 + $0x800] sm:$0xff]
        %v1634 = vld [vmem:[%s1310 + $0x808] sm:$0xff]
        %v1635 = vld [vmem:[%s1310 + $0x810] sm:$0xff]
        %v1636 = vld [vmem:[%s1310 + $0x818] sm:$0xff]
        %v1637 = vld [vmem:[%s1310 + $0x820] sm:$0xff]
        %v1638 = vld [vmem:[%s1310 + $0x828] sm:$0xff]
        %v1639 = vld [vmem:[%s1310 + $0x830] sm:$0xff]
        %v1640 = vld [vmem:[%s1310 + $0x838] sm:$0xff]
        %v1641 = vld [vmem:[%s1310 + $0x840] sm:$0xff]
        %v1642 = vld [vmem:[%s1310 + $0x848] sm:$0xff]
        %v1643 = vld [vmem:[%s1310 + $0x850] sm:$0xff]
        %v1644 = vld [vmem:[%s1310 + $0x858] sm:$0xff]
        %v1645 = vld [vmem:[%s1310 + $0x860] sm:$0xff]
        %v1646 = vld [vmem:[%s1310 + $0x868] sm:$0xff]
        %v1647 = vld [vmem:[%s1310 + $0x870] sm:$0xff]
        %v1648 = vld [vmem:[%s1310 + $0x878] sm:$0xff]
        %v1649 = vld [vmem:[%s1310 + $0x880] sm:$0xff]
        %v1650 = vld [vmem:[%s1310 + $0x888] sm:$0xff]
        %v1651 = vld [vmem:[%s1310 + $0x890] sm:$0xff]
        %v1652 = vld [vmem:[%s1310 + $0x898] sm:$0xff]
        %v1653 = vld [vmem:[%s1310 + $0x8a0] sm:$0xff]
        %v1654 = vld [vmem:[%s1310 + $0x8a8] sm:$0xff]
        %v1655 = vld [vmem:[%s1310 + $0x8b0] sm:$0xff]
        %v1656 = vld [vmem:[%s1310 + $0x8b8] sm:$0xff]
        %v1657 = vld [vmem:[%s1310 + $0x8c0] sm:$0xff]
        %v1658 = vld [vmem:[%s1310 + $0x8c8] sm:$0xff]
        %v1659 = vld [vmem:[%s1310 + $0x8d0] sm:$0xff]
        %v1660 = vld [vmem:[%s1310 + $0x8d8] sm:$0xff]
        %v1661 = vld [vmem:[%s1310 + $0x8e0] sm:$0xff]
        %v1662 = vld [vmem:[%s1310 + $0x8e8] sm:$0xff]
        %v1663 = vld [vmem:[%s1310 + $0x8f0] sm:$0xff]
        %v1664 = vld [vmem:[%s1310 + $0x8f8] sm:$0xff]
        %v1665 = vld [vmem:[%s1310 + $0x900] sm:$0xff]
        %v1666 = vld [vmem:[%s1310 + $0x908] sm:$0xff]
        %v1667 = vld [vmem:[%s1310 + $0x910] sm:$0xff]
        %v1668 = vld [vmem:[%s1310 + $0x918] sm:$0xff]
        %v1669 = vld [vmem:[%s1310 + $0x920] sm:$0xff]
        %v1670 = vld [vmem:[%s1310 + $0x928] sm:$0xff]
        %v1671 = vld [vmem:[%s1310 + $0x930] sm:$0xff]
        %v1672 = vld [vmem:[%s1310 + $0x938] sm:$0xff]
        %v1673 = vld [vmem:[%s1310 + $0x940] sm:$0xff]
        %v1674 = vld [vmem:[%s1310 + $0x948] sm:$0xff]
        %v1675 = vld [vmem:[%s1310 + $0x950] sm:$0xff]
        %v1676 = vld [vmem:[%s1310 + $0x958] sm:$0xff]
        %v1677 = vld [vmem:[%s1310 + $0x960] sm:$0xff]
        %v1678 = vld [vmem:[%s1310 + $0x968] sm:$0xff]
        %v1679 = vld [vmem:[%s1310 + $0x970] sm:$0xff]
        %v1680 = vld [vmem:[%s1310 + $0x978] sm:$0xff]
        %v1681 = vld [vmem:[%s1310 + $0x980] sm:$0xff]
        %v1682 = vld [vmem:[%s1310 + $0x988] sm:$0xff]
        %v1683 = vld [vmem:[%s1310 + $0x990] sm:$0xff]
        %v1684 = vld [vmem:[%s1310 + $0x998] sm:$0xff]
        %v1685 = vld [vmem:[%s1310 + $0x9a0] sm:$0xff]
        %v1686 = vld [vmem:[%s1310 + $0x9a8] sm:$0xff]
        %v1687 = vld [vmem:[%s1310 + $0x9b0] sm:$0xff]
        %v1688 = vld [vmem:[%s1310 + $0x9b8] sm:$0xff]
        %v1689 = vld [vmem:[%s1310 + $0x9c0] sm:$0xff]
        %v1690 = vld [vmem:[%s1310 + $0x9c8] sm:$0xff]
        %v1691 = vld [vmem:[%s1310 + $0x9d0] sm:$0xff]
        %v1692 = vld [vmem:[%s1310 + $0x9d8] sm:$0xff]
        %v1693 = vld [vmem:[%s1310 + $0x9e0] sm:$0xff]
        %v1694 = vld [vmem:[%s1310 + $0x9e8] sm:$0xff]
        %v1695 = vld [vmem:[%s1310 + $0x9f0] sm:$0xff]
        %v1696 = vld [vmem:[%s1310 + $0x9f8] sm:$0xff]
        %v1697 = vld [vmem:[%s1310 + $0xa00] sm:$0xff]
        %v1698 = vld [vmem:[%s1310 + $0xa08] sm:$0xff]
        %v1699 = vld [vmem:[%s1310 + $0xa10] sm:$0xff]
        %v1700 = vld [vmem:[%s1310 + $0xa18] sm:$0xff]
        %v1701 = vld [vmem:[%s1310 + $0xa20] sm:$0xff]
        %v1702 = vld [vmem:[%s1310 + $0xa28] sm:$0xff]
        %v1703 = vld [vmem:[%s1310 + $0xa30] sm:$0xff]
        %v1704 = vld [vmem:[%s1310 + $0xa38] sm:$0xff]
        %v1705 = vld [vmem:[%s1310 + $0xa40] sm:$0xff]
        %v1706 = vld [vmem:[%s1310 + $0xa48] sm:$0xff]
        %v1707 = vld [vmem:[%s1310 + $0xa50] sm:$0xff]
        %v1708 = vld [vmem:[%s1310 + $0xa58] sm:$0xff]
        %v1709 = vld [vmem:[%s1310 + $0xa60] sm:$0xff]
        %v1710 = vld [vmem:[%s1310 + $0xa68] sm:$0xff]
        %v1711 = vld [vmem:[%s1310 + $0xa70] sm:$0xff]
        %v1712 = vld [vmem:[%s1310 + $0xa78] sm:$0xff]
        %v1713 = vld [vmem:[%s1310 + $0xa80] sm:$0xff]
        %v1714 = vld [vmem:[%s1310 + $0xa88] sm:$0xff]
        %v1715 = vld [vmem:[%s1310 + $0xa90] sm:$0xff]
        %v1716 = vld [vmem:[%s1310 + $0xa98] sm:$0xff]
        %v1717 = vld [vmem:[%s1310 + $0xaa0] sm:$0xff]
        %v1718 = vld [vmem:[%s1310 + $0xaa8] sm:$0xff]
        %v1719 = vld [vmem:[%s1310 + $0xab0] sm:$0xff]
        %v1720 = vld [vmem:[%s1310 + $0xab8] sm:$0xff]
        %v1721 = vld [vmem:[%s1310 + $0xac0] sm:$0xff]
        %v1722 = vld [vmem:[%s1310 + $0xac8] sm:$0xff]
        %v1723 = vld [vmem:[%s1310 + $0xad0] sm:$0xff]
        %v1724 = vld [vmem:[%s1310 + $0xad8] sm:$0xff]
        %v1725 = vld [vmem:[%s1310 + $0xae0] sm:$0xff]
        %v1726 = vld [vmem:[%s1310 + $0xae8] sm:$0xff]
        %v1727 = vld [vmem:[%s1310 + $0xaf0] sm:$0xff]
        %v1728 = vld [vmem:[%s1310 + $0xaf8] sm:$0xff]
        %v1729 = vld [vmem:[%s1310 + $0xb00] sm:$0xff]
        %v1730 = vld [vmem:[%s1310 + $0xb08] sm:$0xff]
        %v1731 = vld [vmem:[%s1310 + $0xb10] sm:$0xff]
        %v1732 = vld [vmem:[%s1310 + $0xb18] sm:$0xff]
        %v1733 = vld [vmem:[%s1310 + $0xb20] sm:$0xff]
        %v1734 = vld [vmem:[%s1310 + $0xb28] sm:$0xff]
        %v1735 = vld [vmem:[%s1310 + $0xb30] sm:$0xff]
        %v1736 = vld [vmem:[%s1310 + $0xb38] sm:$0xff]
        %v1737 = vld [vmem:[%s1310 + $0xb40] sm:$0xff]
        %v1738 = vld [vmem:[%s1310 + $0xb48] sm:$0xff]
        %v1739 = vld [vmem:[%s1310 + $0xb50] sm:$0xff]
        %v1740 = vld [vmem:[%s1310 + $0xb58] sm:$0xff]
        %v1741 = vld [vmem:[%s1310 + $0xb60] sm:$0xff]
        %v1742 = vld [vmem:[%s1310 + $0xb68] sm:$0xff]
        %v1743 = vld [vmem:[%s1310 + $0xb70] sm:$0xff]
        %v1744 = vld [vmem:[%s1310 + $0xb78] sm:$0xff]
        %v1745 = vld [vmem:[%s1310 + $0xb80] sm:$0xff]
        %v1746 = vld [vmem:[%s1310 + $0xb88] sm:$0xff]
        %v1747 = vld [vmem:[%s1310 + $0xb90] sm:$0xff]
        %v1748 = vld [vmem:[%s1310 + $0xb98] sm:$0xff]
        %v1749 = vld [vmem:[%s1310 + $0xba0] sm:$0xff]
        %v1750 = vld [vmem:[%s1310 + $0xba8] sm:$0xff]
        %v1751 = vld [vmem:[%s1310 + $0xbb0] sm:$0xff]
        %v1752 = vld [vmem:[%s1310 + $0xbb8] sm:$0xff]
        %v1753 = vld [vmem:[%s1310 + $0xbc0] sm:$0xff]
        %v1754 = vld [vmem:[%s1310 + $0xbc8] sm:$0xff]
        %v1755 = vld [vmem:[%s1310 + $0xbd0] sm:$0xff]
        %v1756 = vld [vmem:[%s1310 + $0xbd8] sm:$0xff]
        %v1757 = vld [vmem:[%s1310 + $0xbe0] sm:$0xff]
        %v1758 = vld [vmem:[%s1310 + $0xbe8] sm:$0xff]
        %v1759 = vld [vmem:[%s1310 + $0xbf0] sm:$0xff]
        %v1760 = vld [vmem:[%s1310 + $0xbf8] sm:$0xff]
        %v1761 = vld [vmem:[%s1310 + $0xc00] sm:$0xff]
        %v1762 = vld [vmem:[%s1310 + $0xc08] sm:$0xff]
        %v1763 = vld [vmem:[%s1310 + $0xc10] sm:$0xff]
        %v1764 = vld [vmem:[%s1310 + $0xc18] sm:$0xff]
        %v1765 = vld [vmem:[%s1310 + $0xc20] sm:$0xff]
        %v1766 = vld [vmem:[%s1310 + $0xc28] sm:$0xff]
        %v1767 = vld [vmem:[%s1310 + $0xc30] sm:$0xff]
        %v1768 = vld [vmem:[%s1310 + $0xc38] sm:$0xff]
        %v1769 = vld [vmem:[%s1310 + $0xc40] sm:$0xff]
        %v1770 = vld [vmem:[%s1310 + $0xc48] sm:$0xff]
        %v1771 = vld [vmem:[%s1310 + $0xc50] sm:$0xff]
        %v1772 = vld [vmem:[%s1310 + $0xc58] sm:$0xff]
        %v1773 = vld [vmem:[%s1310 + $0xc60] sm:$0xff]
        %v1774 = vld [vmem:[%s1310 + $0xc68] sm:$0xff]
        %v1775 = vld [vmem:[%s1310 + $0xc70] sm:$0xff]
        %v1776 = vld [vmem:[%s1310 + $0xc78] sm:$0xff]
        %v1777 = vld [vmem:[%s1310 + $0xc80] sm:$0xff]
        %v1778 = vld [vmem:[%s1310 + $0xc88] sm:$0xff]
        %v1779 = vld [vmem:[%s1310 + $0xc90] sm:$0xff]
        %v1780 = vld [vmem:[%s1310 + $0xc98] sm:$0xff]
        %v1781 = vld [vmem:[%s1310 + $0xca0] sm:$0xff]
        %v1782 = vld [vmem:[%s1310 + $0xca8] sm:$0xff]
        %v1783 = vld [vmem:[%s1310 + $0xcb0] sm:$0xff]
        %v1784 = vld [vmem:[%s1310 + $0xcb8] sm:$0xff]
        %v1785 = vld [vmem:[%s1310 + $0xcc0] sm:$0xff]
        %v1786 = vld [vmem:[%s1310 + $0xcc8] sm:$0xff]
        %v1787 = vld [vmem:[%s1310 + $0xcd0] sm:$0xff]
        %v1788 = vld [vmem:[%s1310 + $0xcd8] sm:$0xff]
        %v1789 = vld [vmem:[%s1310 + $0xce0] sm:$0xff]
        %v1790 = vld [vmem:[%s1310 + $0xce8] sm:$0xff]
        %v1791 = vld [vmem:[%s1310 + $0xcf0] sm:$0xff]
        %v1792 = vld [vmem:[%s1310 + $0xcf8] sm:$0xff]
        %v1793 = vld [vmem:[%s1310 + $0xd00] sm:$0xff]
        %v1794 = vld [vmem:[%s1310 + $0xd08] sm:$0xff]
        %v1795 = vld [vmem:[%s1310 + $0xd10] sm:$0xff]
        %v1796 = vld [vmem:[%s1310 + $0xd18] sm:$0xff]
        %v1797 = vld [vmem:[%s1310 + $0xd20] sm:$0xff]
        %v1798 = vld [vmem:[%s1310 + $0xd28] sm:$0xff]
        %v1799 = vld [vmem:[%s1310 + $0xd30] sm:$0xff]
        %v1800 = vld [vmem:[%s1310 + $0xd38] sm:$0xff]
        %v1801 = vld [vmem:[%s1310 + $0xd40] sm:$0xff]
        %v1802 = vld [vmem:[%s1310 + $0xd48] sm:$0xff]
        %v1803 = vld [vmem:[%s1310 + $0xd50] sm:$0xff]
        %v1804 = vld [vmem:[%s1310 + $0xd58] sm:$0xff]
        %v1805 = vld [vmem:[%s1310 + $0xd60] sm:$0xff]
        %v1806 = vld [vmem:[%s1310 + $0xd68] sm:$0xff]
        %v1807 = vld [vmem:[%s1310 + $0xd70] sm:$0xff]
        %v1808 = vld [vmem:[%s1310 + $0xd78] sm:$0xff]
        %v1809 = vld [vmem:[%s1310 + $0xd80] sm:$0xff]
        %v1810 = vld [vmem:[%s1310 + $0xd88] sm:$0xff]
        %v1811 = vld [vmem:[%s1310 + $0xd90] sm:$0xff]
        %v1812 = vld [vmem:[%s1310 + $0xd98] sm:$0xff]
        %v1813 = vld [vmem:[%s1310 + $0xda0] sm:$0xff]
        %v1814 = vld [vmem:[%s1310 + $0xda8] sm:$0xff]
        %v1815 = vld [vmem:[%s1310 + $0xdb0] sm:$0xff]
        %v1816 = vld [vmem:[%s1310 + $0xdb8] sm:$0xff]
        %v1817 = vld [vmem:[%s1310 + $0xdc0] sm:$0xff]
        %v1818 = vld [vmem:[%s1310 + $0xdc8] sm:$0xff]
        %v1819 = vld [vmem:[%s1310 + $0xdd0] sm:$0xff]
        %v1820 = vld [vmem:[%s1310 + $0xdd8] sm:$0xff]
        %v1821 = vld [vmem:[%s1310 + $0xde0] sm:$0xff]
        %v1822 = vld [vmem:[%s1310 + $0xde8] sm:$0xff]
        %v1823 = vld [vmem:[%s1310 + $0xdf0] sm:$0xff]
        %v1824 = vld [vmem:[%s1310 + $0xdf8] sm:$0xff]
        %v1825 = vld [vmem:[%s1310 + $0xe00] sm:$0xff]
        %v1826 = vld [vmem:[%s1310 + $0xe08] sm:$0xff]
        %v1827 = vld [vmem:[%s1310 + $0xe10] sm:$0xff]
        %v1828 = vld [vmem:[%s1310 + $0xe18] sm:$0xff]
        %v1829 = vld [vmem:[%s1310 + $0xe20] sm:$0xff]
        %v1830 = vld [vmem:[%s1310 + $0xe28] sm:$0xff]
        %v1831 = vld [vmem:[%s1310 + $0xe30] sm:$0xff]
        %v1832 = vld [vmem:[%s1310 + $0xe38] sm:$0xff]
        %v1833 = vld [vmem:[%s1310 + $0xe40] sm:$0xff]
        %v1834 = vld [vmem:[%s1310 + $0xe48] sm:$0xff]
        %v1835 = vld [vmem:[%s1310 + $0xe50] sm:$0xff]
        %v1836 = vld [vmem:[%s1310 + $0xe58] sm:$0xff]
        %v1837 = vld [vmem:[%s1310 + $0xe60] sm:$0xff]
        %v1838 = vld [vmem:[%s1310 + $0xe68] sm:$0xff]
        %v1839 = vld [vmem:[%s1310 + $0xe70] sm:$0xff]
        %v1840 = vld [vmem:[%s1310 + $0xe78] sm:$0xff]
        %v1841 = vld [vmem:[%s1310 + $0xe80] sm:$0xff]
        %v1842 = vld [vmem:[%s1310 + $0xe88] sm:$0xff]
        %v1843 = vld [vmem:[%s1310 + $0xe90] sm:$0xff]
        %v1844 = vld [vmem:[%s1310 + $0xe98] sm:$0xff]
        %v1845 = vld [vmem:[%s1310 + $0xea0] sm:$0xff]
        %v1846 = vld [vmem:[%s1310 + $0xea8] sm:$0xff]
        %v1847 = vld [vmem:[%s1310 + $0xeb0] sm:$0xff]
        %v1848 = vld [vmem:[%s1310 + $0xeb8] sm:$0xff]
        %v1849 = vld [vmem:[%s1310 + $0xec0] sm:$0xff]
        %v1850 = vld [vmem:[%s1310 + $0xec8] sm:$0xff]
        %v1851 = vld [vmem:[%s1310 + $0xed0] sm:$0xff]
        %v1852 = vld [vmem:[%s1310 + $0xed8] sm:$0xff]
        %v1853 = vld [vmem:[%s1310 + $0xee0] sm:$0xff]
        %v1854 = vld [vmem:[%s1310 + $0xee8] sm:$0xff]
        %v1855 = vld [vmem:[%s1310 + $0xef0] sm:$0xff]
        %v1856 = vld [vmem:[%s1310 + $0xef8] sm:$0xff]
        %v1857 = vld [vmem:[%s1310 + $0xf00] sm:$0xff]
        %v1858 = vld [vmem:[%s1310 + $0xf08] sm:$0xff]
        %v1859 = vld [vmem:[%s1310 + $0xf10] sm:$0xff]
        %v1860 = vld [vmem:[%s1310 + $0xf18] sm:$0xff]
        %v1861 = vunpack.c.l.s8.bf16 %v1377
        %v1862 = vunpack.c.l.s8.bf16 %v1378
        %v1863 = vunpack.c.l.s8.bf16 %v1379
        %v1864 = vunpack.c.l.s8.bf16 %v1380
        %v1865 = vunpack.c.h.s8.bf16 %v1377
        %v1866 = vunpack.c.h.s8.bf16 %v1378
        %v1867 = vunpack.c.h.s8.bf16 %v1379
        %v1868 = vunpack.c.h.s8.bf16 %v1380
        %v1869 = vunpack.c.l.s8.bf16 %v1381
        %v1870 = vunpack.c.l.s8.bf16 %v1382
        %v1871 = vunpack.c.l.s8.bf16 %v1383
        %v1872 = vunpack.c.l.s8.bf16 %v1384
        %v1873 = vunpack.c.h.s8.bf16 %v1381
        %v1874 = vunpack.c.h.s8.bf16 %v1382
        %v1875 = vunpack.c.h.s8.bf16 %v1383
        %v1876 = vunpack.c.h.s8.bf16 %v1384
        %v1877 = vunpack.c.l.s8.bf16 %v1385
        %v1878 = vunpack.c.l.s8.bf16 %v1386
        %v1879 = vunpack.c.l.s8.bf16 %v1387
        %v1880 = vunpack.c.l.s8.bf16 %v1388
        %v1881 = vunpack.c.h.s8.bf16 %v1385
        %v1882 = vunpack.c.h.s8.bf16 %v1386
        %v1883 = vunpack.c.h.s8.bf16 %v1387
        %v1884 = vunpack.c.h.s8.bf16 %v1388
        %v1885 = vunpack.c.l.s8.bf16 %v1389
        %v1886 = vunpack.c.l.s8.bf16 %v1390
        %v1887 = vunpack.c.l.s8.bf16 %v1391
        %v1888 = vunpack.c.l.s8.bf16 %v1392
        %v1889 = vunpack.c.h.s8.bf16 %v1389
        %v1890 = vunpack.c.h.s8.bf16 %v1390
        %v1891 = vunpack.c.h.s8.bf16 %v1391
        %v1892 = vunpack.c.h.s8.bf16 %v1392
        %v1893 = vunpack.c.l.s8.bf16 %v1393
        %v1894 = vunpack.c.l.s8.bf16 %v1394
        %v1895 = vunpack.c.l.s8.bf16 %v1395
        %v1896 = vunpack.c.l.s8.bf16 %v1396
        %v1897 = vunpack.c.h.s8.bf16 %v1393
        %v1898 = vunpack.c.h.s8.bf16 %v1394
        %v1899 = vunpack.c.h.s8.bf16 %v1395
        %v1900 = vunpack.c.h.s8.bf16 %v1396
        %v1901 = vunpack.c.l.s8.bf16 %v1397
        %v1902 = vunpack.c.l.s8.bf16 %v1398
        %v1903 = vunpack.c.l.s8.bf16 %v1399
        %v1904 = vunpack.c.l.s8.bf16 %v1400
        %v1905 = vunpack.c.h.s8.bf16 %v1397
        %v1906 = vunpack.c.h.s8.bf16 %v1398
        %v1907 = vunpack.c.h.s8.bf16 %v1399
        %v1908 = vunpack.c.h.s8.bf16 %v1400
        %v1909 = vunpack.c.l.s8.bf16 %v1401
        %v1910 = vunpack.c.l.s8.bf16 %v1402
        %v1911 = vunpack.c.l.s8.bf16 %v1403
        %v1912 = vunpack.c.l.s8.bf16 %v1404
        %v1913 = vunpack.c.h.s8.bf16 %v1401
        %v1914 = vunpack.c.h.s8.bf16 %v1402
        %v1915 = vunpack.c.h.s8.bf16 %v1403
        %v1916 = vunpack.c.h.s8.bf16 %v1404
        %v1917 = vunpack.c.l.s8.bf16 %v1405
        %v1918 = vunpack.c.l.s8.bf16 %v1406
        %v1919 = vunpack.c.l.s8.bf16 %v1407
        %v1920 = vunpack.c.l.s8.bf16 %v1408
        %v1921 = vunpack.c.h.s8.bf16 %v1405
        %v1922 = vunpack.c.h.s8.bf16 %v1406
        %v1923 = vunpack.c.h.s8.bf16 %v1407
        %v1924 = vunpack.c.h.s8.bf16 %v1408
        %v1925 = vunpack.c.l.s8.bf16 %v1409
        %v1926 = vunpack.c.l.s8.bf16 %v1410
        %v1927 = vunpack.c.l.s8.bf16 %v1411
        %v1928 = vunpack.c.l.s8.bf16 %v1412
        %v1929 = vunpack.c.h.s8.bf16 %v1409
        %v1930 = vunpack.c.h.s8.bf16 %v1410
        %v1931 = vunpack.c.h.s8.bf16 %v1411
        %v1932 = vunpack.c.h.s8.bf16 %v1412
        %v1933 = vunpack.c.l.s8.bf16 %v1413
        %v1934 = vunpack.c.l.s8.bf16 %v1414
        %v1935 = vunpack.c.l.s8.bf16 %v1415
        %v1936 = vunpack.c.l.s8.bf16 %v1416
        %v1937 = vunpack.c.h.s8.bf16 %v1413
        %v1938 = vunpack.c.h.s8.bf16 %v1414
        %v1939 = vunpack.c.h.s8.bf16 %v1415
        %v1940 = vunpack.c.h.s8.bf16 %v1416
        %v1941 = vunpack.c.l.s8.bf16 %v1417
        %v1942 = vunpack.c.l.s8.bf16 %v1418
        %v1943 = vunpack.c.l.s8.bf16 %v1419
        %v1944 = vunpack.c.l.s8.bf16 %v1420
        %v1945 = vunpack.c.h.s8.bf16 %v1417
        %v1946 = vunpack.c.h.s8.bf16 %v1418
        %v1947 = vunpack.c.h.s8.bf16 %v1419
        %v1948 = vunpack.c.h.s8.bf16 %v1420
        %v1949 = vunpack.c.l.s8.bf16 %v1421
        %v1950 = vunpack.c.l.s8.bf16 %v1422
        %v1951 = vunpack.c.l.s8.bf16 %v1423
        %v1952 = vunpack.c.l.s8.bf16 %v1424
        %v1953 = vunpack.c.h.s8.bf16 %v1421
        %v1954 = vunpack.c.h.s8.bf16 %v1422
        %v1955 = vunpack.c.h.s8.bf16 %v1423
        %v1956 = vunpack.c.h.s8.bf16 %v1424
        %v1957 = vunpack.c.l.s8.bf16 %v1425
        %v1958 = vunpack.c.l.s8.bf16 %v1426
        %v1959 = vunpack.c.l.s8.bf16 %v1427
        %v1960 = vunpack.c.l.s8.bf16 %v1428
        %v1961 = vunpack.c.h.s8.bf16 %v1425
        %v1962 = vunpack.c.h.s8.bf16 %v1426
        %v1963 = vunpack.c.h.s8.bf16 %v1427
        %v1964 = vunpack.c.h.s8.bf16 %v1428
        %v1965 = vunpack.c.l.s8.bf16 %v1429
        %v1966 = vunpack.c.l.s8.bf16 %v1430
        %v1967 = vunpack.c.l.s8.bf16 %v1431
        %v1968 = vunpack.c.l.s8.bf16 %v1432
        %v1969 = vunpack.c.h.s8.bf16 %v1429
        %v1970 = vunpack.c.h.s8.bf16 %v1430
        %v1971 = vunpack.c.h.s8.bf16 %v1431
        %v1972 = vunpack.c.h.s8.bf16 %v1432
        %v1973 = vunpack.c.l.s8.bf16 %v1433
        %v1974 = vunpack.c.l.s8.bf16 %v1434
        %v1975 = vunpack.c.l.s8.bf16 %v1435
        %v1976 = vunpack.c.l.s8.bf16 %v1436
        %v1977 = vunpack.c.h.s8.bf16 %v1433
        %v1978 = vunpack.c.h.s8.bf16 %v1434
        %v1979 = vunpack.c.h.s8.bf16 %v1435
        %v1980 = vunpack.c.h.s8.bf16 %v1436
        %v1981 = vunpack.c.l.s8.bf16 %v1437
        %v1982 = vunpack.c.l.s8.bf16 %v1438
        %v1983 = vunpack.c.l.s8.bf16 %v1439
        %v1984 = vunpack.c.l.s8.bf16 %v1440
        %v1985 = vunpack.c.h.s8.bf16 %v1437
        %v1986 = vunpack.c.h.s8.bf16 %v1438
        %v1987 = vunpack.c.h.s8.bf16 %v1439
        %v1988 = vunpack.c.h.s8.bf16 %v1440
        %v1989 = vunpack.c.l.s8.bf16 %v1441
        %v1990 = vunpack.c.l.s8.bf16 %v1442
        %v1991 = vunpack.c.l.s8.bf16 %v1443
        %v1992 = vunpack.c.l.s8.bf16 %v1444
        %v1993 = vunpack.c.h.s8.bf16 %v1441
        %v1994 = vunpack.c.h.s8.bf16 %v1442
        %v1995 = vunpack.c.h.s8.bf16 %v1443
        %v1996 = vunpack.c.h.s8.bf16 %v1444
        %v1997 = vunpack.c.l.s8.bf16 %v1445
        %v1998 = vunpack.c.l.s8.bf16 %v1446
        %v1999 = vunpack.c.l.s8.bf16 %v1447
        %v2000 = vunpack.c.l.s8.bf16 %v1448
        %v2001 = vunpack.c.h.s8.bf16 %v1445
        %v2002 = vunpack.c.h.s8.bf16 %v1446
        %v2003 = vunpack.c.h.s8.bf16 %v1447
        %v2004 = vunpack.c.h.s8.bf16 %v1448
        %v2005 = vunpack.c.l.s8.bf16 %v1449
        %v2006 = vunpack.c.l.s8.bf16 %v1450
        %v2007 = vunpack.c.l.s8.bf16 %v1451
        %v2008 = vunpack.c.l.s8.bf16 %v1452
        %v2009 = vunpack.c.h.s8.bf16 %v1449
        %v2010 = vunpack.c.h.s8.bf16 %v1450
        %v2011 = vunpack.c.h.s8.bf16 %v1451
        %v2012 = vunpack.c.h.s8.bf16 %v1452
        %v2013 = vunpack.c.l.s8.bf16 %v1453
        %v2014 = vunpack.c.l.s8.bf16 %v1454
        %v2015 = vunpack.c.l.s8.bf16 %v1455
        %v2016 = vunpack.c.l.s8.bf16 %v1456
        %v2017 = vunpack.c.h.s8.bf16 %v1453
        %v2018 = vunpack.c.h.s8.bf16 %v1454
        %v2019 = vunpack.c.h.s8.bf16 %v1455
        %v2020 = vunpack.c.h.s8.bf16 %v1456
        %v2021 = vunpack.c.l.s8.bf16 %v1457
        %v2022 = vunpack.c.l.s8.bf16 %v1458
        %v2023 = vunpack.c.l.s8.bf16 %v1459
        %v2024 = vunpack.c.l.s8.bf16 %v1460
        %v2025 = vunpack.c.h.s8.bf16 %v1457
        %v2026 = vunpack.c.h.s8.bf16 %v1458
        %v2027 = vunpack.c.h.s8.bf16 %v1459
        %v2028 = vunpack.c.h.s8.bf16 %v1460
        %v2029 = vunpack.c.l.s8.bf16 %v1461
        %v2030 = vunpack.c.l.s8.bf16 %v1462
        %v2031 = vunpack.c.l.s8.bf16 %v1463
        %v2032 = vunpack.c.l.s8.bf16 %v1464
        %v2033 = vunpack.c.h.s8.bf16 %v1461
        %v2034 = vunpack.c.h.s8.bf16 %v1462
        %v2035 = vunpack.c.h.s8.bf16 %v1463
        %v2036 = vunpack.c.h.s8.bf16 %v1464
        %v2037 = vunpack.c.l.s8.bf16 %v1465
        %v2038 = vunpack.c.l.s8.bf16 %v1466
        %v2039 = vunpack.c.l.s8.bf16 %v1467
        %v2040 = vunpack.c.l.s8.bf16 %v1468
        %v2041 = vunpack.c.h.s8.bf16 %v1465
        %v2042 = vunpack.c.h.s8.bf16 %v1466
        %v2043 = vunpack.c.h.s8.bf16 %v1467
        %v2044 = vunpack.c.h.s8.bf16 %v1468
        %v2045 = vunpack.c.l.s8.bf16 %v1469
        %v2046 = vunpack.c.l.s8.bf16 %v1470
        %v2047 = vunpack.c.l.s8.bf16 %v1471
        %v2048 = vunpack.c.l.s8.bf16 %v1472
        %v2049 = vunpack.c.h.s8.bf16 %v1469
        %v2050 = vunpack.c.h.s8.bf16 %v1470
        %v2051 = vunpack.c.h.s8.bf16 %v1471
        %v2052 = vunpack.c.h.s8.bf16 %v1472
        %v2053 = vunpack.c.l.s8.bf16 %v1473
        %v2054 = vunpack.c.l.s8.bf16 %v1474
        %v2055 = vunpack.c.l.s8.bf16 %v1475
        %v2056 = vunpack.c.l.s8.bf16 %v1476
        %v2057 = vunpack.c.h.s8.bf16 %v1473
        %v2058 = vunpack.c.h.s8.bf16 %v1474
        %v2059 = vunpack.c.h.s8.bf16 %v1475
        %v2060 = vunpack.c.h.s8.bf16 %v1476
        %v2061 = vunpack.c.l.s8.bf16 %v1477
        %v2062 = vunpack.c.l.s8.bf16 %v1478
        %v2063 = vunpack.c.l.s8.bf16 %v1479
        %v2064 = vunpack.c.l.s8.bf16 %v1480
        %v2065 = vunpack.c.h.s8.bf16 %v1477
        %v2066 = vunpack.c.h.s8.bf16 %v1478
        %v2067 = vunpack.c.h.s8.bf16 %v1479
        %v2068 = vunpack.c.h.s8.bf16 %v1480
        %v2069 = vunpack.c.l.s8.bf16 %v1481
        %v2070 = vunpack.c.l.s8.bf16 %v1482
        %v2071 = vunpack.c.l.s8.bf16 %v1483
        %v2072 = vunpack.c.l.s8.bf16 %v1484
        %v2073 = vunpack.c.h.s8.bf16 %v1481
        %v2074 = vunpack.c.h.s8.bf16 %v1482
        %v2075 = vunpack.c.h.s8.bf16 %v1483
        %v2076 = vunpack.c.h.s8.bf16 %v1484
        %v2077 = vunpack.c.l.s8.bf16 %v1485
        %v2078 = vunpack.c.l.s8.bf16 %v1486
        %v2079 = vunpack.c.l.s8.bf16 %v1487
        %v2080 = vunpack.c.l.s8.bf16 %v1488
        %v2081 = vunpack.c.h.s8.bf16 %v1485
        %v2082 = vunpack.c.h.s8.bf16 %v1486
        %v2083 = vunpack.c.h.s8.bf16 %v1487
        %v2084 = vunpack.c.h.s8.bf16 %v1488
        %v2085 = vunpack.c.l.s8.bf16 %v1489
        %v2086 = vunpack.c.l.s8.bf16 %v1490
        %v2087 = vunpack.c.l.s8.bf16 %v1491
        %v2088 = vunpack.c.l.s8.bf16 %v1492
        %v2089 = vunpack.c.h.s8.bf16 %v1489
        %v2090 = vunpack.c.h.s8.bf16 %v1490
        %v2091 = vunpack.c.h.s8.bf16 %v1491
        %v2092 = vunpack.c.h.s8.bf16 %v1492
        %v2093 = vunpack.c.l.s8.bf16 %v1493
        %v2094 = vunpack.c.l.s8.bf16 %v1494
        %v2095 = vunpack.c.l.s8.bf16 %v1495
        %v2096 = vunpack.c.l.s8.bf16 %v1496
        %v2097 = vunpack.c.h.s8.bf16 %v1493
        %v2098 = vunpack.c.h.s8.bf16 %v1494
        %v2099 = vunpack.c.h.s8.bf16 %v1495
        %v2100 = vunpack.c.h.s8.bf16 %v1496
        %v2101 = vunpack.c.l.s8.bf16 %v1497
        %v2102 = vunpack.c.l.s8.bf16 %v1498
        %v2103 = vunpack.c.l.s8.bf16 %v1499
        %v2104 = vunpack.c.l.s8.bf16 %v1500
        %v2105 = vunpack.c.h.s8.bf16 %v1497
        %v2106 = vunpack.c.h.s8.bf16 %v1498
        %v2107 = vunpack.c.h.s8.bf16 %v1499
        %v2108 = vunpack.c.h.s8.bf16 %v1500
        %v2109 = vunpack.c.l.s8.bf16 %v1501
        %v2110 = vunpack.c.l.s8.bf16 %v1502
        %v2111 = vunpack.c.l.s8.bf16 %v1503
        %v2112 = vunpack.c.l.s8.bf16 %v1504
        %v2113 = vunpack.c.h.s8.bf16 %v1501
        %v2114 = vunpack.c.h.s8.bf16 %v1502
        %v2115 = vunpack.c.h.s8.bf16 %v1503
        %v2116 = vunpack.c.h.s8.bf16 %v1504
        %v2117 = vunpack.c.l.s8.bf16 %v1505
        %v2118 = vunpack.c.l.s8.bf16 %v1506
        %v2119 = vunpack.c.l.s8.bf16 %v1507
        %v2120 = vunpack.c.l.s8.bf16 %v1508
        %v2121 = vunpack.c.h.s8.bf16 %v1505
        %v2122 = vunpack.c.h.s8.bf16 %v1506
        %v2123 = vunpack.c.h.s8.bf16 %v1507
        %v2124 = vunpack.c.h.s8.bf16 %v1508
        %v2125 = vunpack.c.l.s8.bf16 %v1509
        %v2126 = vunpack.c.l.s8.bf16 %v1510
        %v2127 = vunpack.c.l.s8.bf16 %v1511
        %v2128 = vunpack.c.l.s8.bf16 %v1512
        %v2129 = vunpack.c.h.s8.bf16 %v1509
        %v2130 = vunpack.c.h.s8.bf16 %v1510
        %v2131 = vunpack.c.h.s8.bf16 %v1511
        %v2132 = vunpack.c.h.s8.bf16 %v1512
        %v2133 = vunpack.c.l.s8.bf16 %v1513
        %v2134 = vunpack.c.l.s8.bf16 %v1514
        %v2135 = vunpack.c.l.s8.bf16 %v1515
        %v2136 = vunpack.c.l.s8.bf16 %v1516
        %v2137 = vunpack.c.h.s8.bf16 %v1513
        %v2138 = vunpack.c.h.s8.bf16 %v1514
        %v2139 = vunpack.c.h.s8.bf16 %v1515
        %v2140 = vunpack.c.h.s8.bf16 %v1516
        %v2141 = vunpack.c.l.s8.bf16 %v1517
        %v2142 = vunpack.c.l.s8.bf16 %v1518
        %v2143 = vunpack.c.l.s8.bf16 %v1519
        %v2144 = vunpack.c.l.s8.bf16 %v1520
        %v2145 = vunpack.c.h.s8.bf16 %v1517
        %v2146 = vunpack.c.h.s8.bf16 %v1518
        %v2147 = vunpack.c.h.s8.bf16 %v1519
        %v2148 = vunpack.c.h.s8.bf16 %v1520
        %v2149 = vunpack.c.l.s8.bf16 %v1521
        %v2150 = vunpack.c.l.s8.bf16 %v1522
        %v2151 = vunpack.c.l.s8.bf16 %v1523
        %v2152 = vunpack.c.l.s8.bf16 %v1524
        %v2153 = vunpack.c.h.s8.bf16 %v1521
        %v2154 = vunpack.c.h.s8.bf16 %v1522
        %v2155 = vunpack.c.h.s8.bf16 %v1523
        %v2156 = vunpack.c.h.s8.bf16 %v1524
        %v2157 = vunpack.c.l.s8.bf16 %v1525
        %v2158 = vunpack.c.l.s8.bf16 %v1526
        %v2159 = vunpack.c.l.s8.bf16 %v1527
        %v2160 = vunpack.c.l.s8.bf16 %v1528
        %v2161 = vunpack.c.h.s8.bf16 %v1525
        %v2162 = vunpack.c.h.s8.bf16 %v1526
        %v2163 = vunpack.c.h.s8.bf16 %v1527
        %v2164 = vunpack.c.h.s8.bf16 %v1528
        %v2165 = vunpack.c.l.s8.bf16 %v1529
        %v2166 = vunpack.c.l.s8.bf16 %v1530
        %v2167 = vunpack.c.l.s8.bf16 %v1531
        %v2168 = vunpack.c.l.s8.bf16 %v1532
        %v2169 = vunpack.c.h.s8.bf16 %v1529
        %v2170 = vunpack.c.h.s8.bf16 %v1530
        %v2171 = vunpack.c.h.s8.bf16 %v1531
        %v2172 = vunpack.c.h.s8.bf16 %v1532
        %v2173 = vunpack.c.l.s8.bf16 %v1533
        %v2174 = vunpack.c.l.s8.bf16 %v1534
        %v2175 = vunpack.c.l.s8.bf16 %v1535
        %v2176 = vunpack.c.l.s8.bf16 %v1536
        %v2177 = vunpack.c.h.s8.bf16 %v1533
        %v2178 = vunpack.c.h.s8.bf16 %v1534
        %v2179 = vunpack.c.h.s8.bf16 %v1535
        %v2180 = vunpack.c.h.s8.bf16 %v1536
        %v2181 = vunpack.c.l.s8.bf16 %v1537
        %v2182 = vunpack.c.l.s8.bf16 %v1538
        %v2183 = vunpack.c.l.s8.bf16 %v1539
        %v2184 = vunpack.c.l.s8.bf16 %v1540
        %v2185 = vunpack.c.h.s8.bf16 %v1537
        %v2186 = vunpack.c.h.s8.bf16 %v1538
        %v2187 = vunpack.c.h.s8.bf16 %v1539
        %v2188 = vunpack.c.h.s8.bf16 %v1540
        %v2189 = vunpack.c.l.s8.bf16 %v1541
        %v2190 = vunpack.c.l.s8.bf16 %v1542
        %v2191 = vunpack.c.l.s8.bf16 %v1543
        %v2192 = vunpack.c.l.s8.bf16 %v1544
        %v2193 = vunpack.c.h.s8.bf16 %v1541
        %v2194 = vunpack.c.h.s8.bf16 %v1542
        %v2195 = vunpack.c.h.s8.bf16 %v1543
        %v2196 = vunpack.c.h.s8.bf16 %v1544
        %v2197 = vunpack.c.l.s8.bf16 %v1545
        %v2198 = vunpack.c.l.s8.bf16 %v1546
        %v2199 = vunpack.c.l.s8.bf16 %v1547
        %v2200 = vunpack.c.l.s8.bf16 %v1548
        %v2201 = vunpack.c.h.s8.bf16 %v1545
        %v2202 = vunpack.c.h.s8.bf16 %v1546
        %v2203 = vunpack.c.h.s8.bf16 %v1547
        %v2204 = vunpack.c.h.s8.bf16 %v1548
        %v2205 = vunpack.c.l.s8.bf16 %v1549
        %v2206 = vunpack.c.l.s8.bf16 %v1550
        %v2207 = vunpack.c.l.s8.bf16 %v1551
        %v2208 = vunpack.c.l.s8.bf16 %v1552
        %v2209 = vunpack.c.h.s8.bf16 %v1549
        %v2210 = vunpack.c.h.s8.bf16 %v1550
        %v2211 = vunpack.c.h.s8.bf16 %v1551
        %v2212 = vunpack.c.h.s8.bf16 %v1552
        %v2213 = vunpack.c.l.s8.bf16 %v1553
        %v2214 = vunpack.c.l.s8.bf16 %v1554
        %v2215 = vunpack.c.l.s8.bf16 %v1555
        %v2216 = vunpack.c.l.s8.bf16 %v1556
        %v2217 = vunpack.c.h.s8.bf16 %v1553
        %v2218 = vunpack.c.h.s8.bf16 %v1554
        %v2219 = vunpack.c.h.s8.bf16 %v1555
        %v2220 = vunpack.c.h.s8.bf16 %v1556
        %v2221 = vunpack.c.l.s8.bf16 %v1557
        %v2222 = vunpack.c.l.s8.bf16 %v1558
        %v2223 = vunpack.c.l.s8.bf16 %v1559
        %v2224 = vunpack.c.l.s8.bf16 %v1560
        %v2225 = vunpack.c.h.s8.bf16 %v1557
        %v2226 = vunpack.c.h.s8.bf16 %v1558
        %v2227 = vunpack.c.h.s8.bf16 %v1559
        %v2228 = vunpack.c.h.s8.bf16 %v1560
        %v2229 = vunpack.c.l.s8.bf16 %v1561
        %v2230 = vunpack.c.l.s8.bf16 %v1562
        %v2231 = vunpack.c.l.s8.bf16 %v1563
        %v2232 = vunpack.c.l.s8.bf16 %v1564
        %v2233 = vunpack.c.h.s8.bf16 %v1561
        %v2234 = vunpack.c.h.s8.bf16 %v1562
        %v2235 = vunpack.c.h.s8.bf16 %v1563
        %v2236 = vunpack.c.h.s8.bf16 %v1564
        %v2237 = vunpack.c.l.s8.bf16 %v1565
        %v2238 = vunpack.c.l.s8.bf16 %v1566
        %v2239 = vunpack.c.l.s8.bf16 %v1567
        %v2240 = vunpack.c.l.s8.bf16 %v1568
        %v2241 = vunpack.c.h.s8.bf16 %v1565
        %v2242 = vunpack.c.h.s8.bf16 %v1566
        %v2243 = vunpack.c.h.s8.bf16 %v1567
        %v2244 = vunpack.c.h.s8.bf16 %v1568
        %v2245 = vunpack.c.l.s8.bf16 %v1569
        %v2246 = vunpack.c.l.s8.bf16 %v1570
        %v2247 = vunpack.c.l.s8.bf16 %v1571
        %v2248 = vunpack.c.l.s8.bf16 %v1572
        %v2249 = vunpack.c.h.s8.bf16 %v1569
        %v2250 = vunpack.c.h.s8.bf16 %v1570
        %v2251 = vunpack.c.h.s8.bf16 %v1571
        %v2252 = vunpack.c.h.s8.bf16 %v1572
        %v2253 = vunpack.c.l.s8.bf16 %v1573
        %v2254 = vunpack.c.l.s8.bf16 %v1574
        %v2255 = vunpack.c.l.s8.bf16 %v1575
        %v2256 = vunpack.c.l.s8.bf16 %v1576
        %v2257 = vunpack.c.h.s8.bf16 %v1573
        %v2258 = vunpack.c.h.s8.bf16 %v1574
        %v2259 = vunpack.c.h.s8.bf16 %v1575
        %v2260 = vunpack.c.h.s8.bf16 %v1576
        %v2261 = vunpack.c.l.s8.bf16 %v1577
        %v2262 = vunpack.c.l.s8.bf16 %v1578
        %v2263 = vunpack.c.l.s8.bf16 %v1579
        %v2264 = vunpack.c.l.s8.bf16 %v1580
        %v2265 = vunpack.c.h.s8.bf16 %v1577
        %v2266 = vunpack.c.h.s8.bf16 %v1578
        %v2267 = vunpack.c.h.s8.bf16 %v1579
        %v2268 = vunpack.c.h.s8.bf16 %v1580
        %v2269 = vunpack.c.l.s8.bf16 %v1581
        %v2270 = vunpack.c.l.s8.bf16 %v1582
        %v2271 = vunpack.c.l.s8.bf16 %v1583
        %v2272 = vunpack.c.l.s8.bf16 %v1584
        %v2273 = vunpack.c.h.s8.bf16 %v1581
        %v2274 = vunpack.c.h.s8.bf16 %v1582
        %v2275 = vunpack.c.h.s8.bf16 %v1583
        %v2276 = vunpack.c.h.s8.bf16 %v1584
        %v2277 = vunpack.c.l.s8.bf16 %v1585
        %v2278 = vunpack.c.l.s8.bf16 %v1586
        %v2279 = vunpack.c.l.s8.bf16 %v1587
        %v2280 = vunpack.c.l.s8.bf16 %v1588
        %v2281 = vunpack.c.h.s8.bf16 %v1585
        %v2282 = vunpack.c.h.s8.bf16 %v1586
        %v2283 = vunpack.c.h.s8.bf16 %v1587
        %v2284 = vunpack.c.h.s8.bf16 %v1588
        %v2285 = vunpack.c.l.s8.bf16 %v1589
        %v2286 = vunpack.c.l.s8.bf16 %v1590
        %v2287 = vunpack.c.l.s8.bf16 %v1591
        %v2288 = vunpack.c.l.s8.bf16 %v1592
        %v2289 = vunpack.c.h.s8.bf16 %v1589
        %v2290 = vunpack.c.h.s8.bf16 %v1590
        %v2291 = vunpack.c.h.s8.bf16 %v1591
        %v2292 = vunpack.c.h.s8.bf16 %v1592
        %v2293 = vunpack.c.l.s8.bf16 %v1593
        %v2294 = vunpack.c.l.s8.bf16 %v1594
        %v2295 = vunpack.c.l.s8.bf16 %v1595
        %v2296 = vunpack.c.l.s8.bf16 %v1596
        %v2297 = vunpack.c.h.s8.bf16 %v1593
        %v2298 = vunpack.c.h.s8.bf16 %v1594
        %v2299 = vunpack.c.h.s8.bf16 %v1595
        %v2300 = vunpack.c.h.s8.bf16 %v1596
        %v2301 = vunpack.c.l.s8.bf16 %v1597
        %v2302 = vunpack.c.l.s8.bf16 %v1598
        %v2303 = vunpack.c.l.s8.bf16 %v1599
        %v2304 = vunpack.c.l.s8.bf16 %v1600
        %v2305 = vunpack.c.h.s8.bf16 %v1597
        %v2306 = vunpack.c.h.s8.bf16 %v1598
        %v2307 = vunpack.c.h.s8.bf16 %v1599
        %v2308 = vunpack.c.h.s8.bf16 %v1600
        %v2309 = vunpack.c.l.s8.bf16 %v1601
        %v2310 = vunpack.c.l.s8.bf16 %v1602
        %v2311 = vunpack.c.l.s8.bf16 %v1603
        %v2312 = vunpack.c.l.s8.bf16 %v1604
        %v2313 = vunpack.c.h.s8.bf16 %v1601
        %v2314 = vunpack.c.h.s8.bf16 %v1602
        %v2315 = vunpack.c.h.s8.bf16 %v1603
        %v2316 = vunpack.c.h.s8.bf16 %v1604
        %v2317 = vunpack.c.l.s8.bf16 %v1605
        %v2318 = vunpack.c.l.s8.bf16 %v1606
        %v2319 = vunpack.c.l.s8.bf16 %v1607
        %v2320 = vunpack.c.l.s8.bf16 %v1608
        %v2321 = vunpack.c.h.s8.bf16 %v1605
        %v2322 = vunpack.c.h.s8.bf16 %v1606
        %v2323 = vunpack.c.h.s8.bf16 %v1607
        %v2324 = vunpack.c.h.s8.bf16 %v1608
        %v2325 = vunpack.c.l.s8.bf16 %v1609
        %v2326 = vunpack.c.l.s8.bf16 %v1610
        %v2327 = vunpack.c.l.s8.bf16 %v1611
        %v2328 = vunpack.c.l.s8.bf16 %v1612
        %v2329 = vunpack.c.h.s8.bf16 %v1609
        %v2330 = vunpack.c.h.s8.bf16 %v1610
        %v2331 = vunpack.c.h.s8.bf16 %v1611
        %v2332 = vunpack.c.h.s8.bf16 %v1612
        %v2333 = vunpack.c.l.s8.bf16 %v1613
        %v2334 = vunpack.c.l.s8.bf16 %v1614
        %v2335 = vunpack.c.l.s8.bf16 %v1615
        %v2336 = vunpack.c.l.s8.bf16 %v1616
        %v2337 = vunpack.c.h.s8.bf16 %v1613
        %v2338 = vunpack.c.h.s8.bf16 %v1614
        %v2339 = vunpack.c.h.s8.bf16 %v1615
        %v2340 = vunpack.c.h.s8.bf16 %v1616
        %v2341 = vunpack.c.l.s8.bf16 %v1617
        %v2342 = vunpack.c.l.s8.bf16 %v1618
        %v2343 = vunpack.c.l.s8.bf16 %v1619
        %v2344 = vunpack.c.l.s8.bf16 %v1620
        %v2345 = vunpack.c.h.s8.bf16 %v1617
        %v2346 = vunpack.c.h.s8.bf16 %v1618
        %v2347 = vunpack.c.h.s8.bf16 %v1619
        %v2348 = vunpack.c.h.s8.bf16 %v1620
        %v2349 = vunpack.c.l.s8.bf16 %v1621
        %v2350 = vunpack.c.l.s8.bf16 %v1622
        %v2351 = vunpack.c.l.s8.bf16 %v1623
        %v2352 = vunpack.c.l.s8.bf16 %v1624
        %v2353 = vunpack.c.h.s8.bf16 %v1621
        %v2354 = vunpack.c.h.s8.bf16 %v1622
        %v2355 = vunpack.c.h.s8.bf16 %v1623
        %v2356 = vunpack.c.h.s8.bf16 %v1624
        %v2357 = vunpack.c.l.s8.bf16 %v1625
        %v2358 = vunpack.c.l.s8.bf16 %v1626
        %v2359 = vunpack.c.l.s8.bf16 %v1627
        %v2360 = vunpack.c.l.s8.bf16 %v1628
        %v2361 = vunpack.c.h.s8.bf16 %v1625
        %v2362 = vunpack.c.h.s8.bf16 %v1626
        %v2363 = vunpack.c.h.s8.bf16 %v1627
        %v2364 = vunpack.c.h.s8.bf16 %v1628
        %v2365 = vunpack.c.l.s8.bf16 %v1629
        %v2366 = vunpack.c.l.s8.bf16 %v1630
        %v2367 = vunpack.c.l.s8.bf16 %v1631
        %v2368 = vunpack.c.l.s8.bf16 %v1632
        %v2369 = vunpack.c.h.s8.bf16 %v1629
        %v2370 = vunpack.c.h.s8.bf16 %v1630
        %v2371 = vunpack.c.h.s8.bf16 %v1631
        %v2372 = vunpack.c.h.s8.bf16 %v1632
        %v2373 = vunpack.c.l.s8.bf16 %v1633
        %v2374 = vunpack.c.l.s8.bf16 %v1634
        %v2375 = vunpack.c.l.s8.bf16 %v1635
        %v2376 = vunpack.c.l.s8.bf16 %v1636
        %v2377 = vunpack.c.h.s8.bf16 %v1633
        %v2378 = vunpack.c.h.s8.bf16 %v1634
        %v2379 = vunpack.c.h.s8.bf16 %v1635
        %v2380 = vunpack.c.h.s8.bf16 %v1636
        %v2381 = vunpack.c.l.s8.bf16 %v1637
        %v2382 = vunpack.c.l.s8.bf16 %v1638
        %v2383 = vunpack.c.l.s8.bf16 %v1639
        %v2384 = vunpack.c.l.s8.bf16 %v1640
        %v2385 = vunpack.c.h.s8.bf16 %v1637
        %v2386 = vunpack.c.h.s8.bf16 %v1638
        %v2387 = vunpack.c.h.s8.bf16 %v1639
        %v2388 = vunpack.c.h.s8.bf16 %v1640
        %v2389 = vunpack.c.l.s8.bf16 %v1641
        %v2390 = vunpack.c.l.s8.bf16 %v1642
        %v2391 = vunpack.c.l.s8.bf16 %v1643
        %v2392 = vunpack.c.l.s8.bf16 %v1644
        %v2393 = vunpack.c.h.s8.bf16 %v1641
        %v2394 = vunpack.c.h.s8.bf16 %v1642
        %v2395 = vunpack.c.h.s8.bf16 %v1643
        %v2396 = vunpack.c.h.s8.bf16 %v1644
        %v2397 = vunpack.c.l.s8.bf16 %v1645
        %v2398 = vunpack.c.l.s8.bf16 %v1646
        %v2399 = vunpack.c.l.s8.bf16 %v1647
        %v2400 = vunpack.c.l.s8.bf16 %v1648
        %v2401 = vunpack.c.h.s8.bf16 %v1645
        %v2402 = vunpack.c.h.s8.bf16 %v1646
        %v2403 = vunpack.c.h.s8.bf16 %v1647
        %v2404 = vunpack.c.h.s8.bf16 %v1648
        %v2405 = vunpack.c.l.s8.bf16 %v1649
        %v2406 = vunpack.c.l.s8.bf16 %v1650
        %v2407 = vunpack.c.l.s8.bf16 %v1651
        %v2408 = vunpack.c.l.s8.bf16 %v1652
        %v2409 = vunpack.c.h.s8.bf16 %v1649
        %v2410 = vunpack.c.h.s8.bf16 %v1650
        %v2411 = vunpack.c.h.s8.bf16 %v1651
        %v2412 = vunpack.c.h.s8.bf16 %v1652
        %v2413 = vunpack.c.l.s8.bf16 %v1653
        %v2414 = vunpack.c.l.s8.bf16 %v1654
        %v2415 = vunpack.c.l.s8.bf16 %v1655
        %v2416 = vunpack.c.l.s8.bf16 %v1656
        %v2417 = vunpack.c.h.s8.bf16 %v1653
        %v2418 = vunpack.c.h.s8.bf16 %v1654
        %v2419 = vunpack.c.h.s8.bf16 %v1655
        %v2420 = vunpack.c.h.s8.bf16 %v1656
        %v2421 = vunpack.c.l.s8.bf16 %v1657
        %v2422 = vunpack.c.l.s8.bf16 %v1658
        %v2423 = vunpack.c.l.s8.bf16 %v1659
        %v2424 = vunpack.c.l.s8.bf16 %v1660
        %v2425 = vunpack.c.h.s8.bf16 %v1657
        %v2426 = vunpack.c.h.s8.bf16 %v1658
        %v2427 = vunpack.c.h.s8.bf16 %v1659
        %v2428 = vunpack.c.h.s8.bf16 %v1660
        %v2429 = vunpack.c.l.s8.bf16 %v1661
        %v2430 = vunpack.c.l.s8.bf16 %v1662
        %v2431 = vunpack.c.l.s8.bf16 %v1663
        %v2432 = vunpack.c.l.s8.bf16 %v1664
        %v2433 = vunpack.c.h.s8.bf16 %v1661
        %v2434 = vunpack.c.h.s8.bf16 %v1662
        %v2435 = vunpack.c.h.s8.bf16 %v1663
        %v2436 = vunpack.c.h.s8.bf16 %v1664
        %v2437 = vunpack.c.l.s8.bf16 %v1665
        %v2438 = vunpack.c.l.s8.bf16 %v1666
        %v2439 = vunpack.c.l.s8.bf16 %v1667
        %v2440 = vunpack.c.l.s8.bf16 %v1668
        %v2441 = vunpack.c.h.s8.bf16 %v1665
        %v2442 = vunpack.c.h.s8.bf16 %v1666
        %v2443 = vunpack.c.h.s8.bf16 %v1667
        %v2444 = vunpack.c.h.s8.bf16 %v1668
        %v2445 = vunpack.c.l.s8.bf16 %v1669
        %v2446 = vunpack.c.l.s8.bf16 %v1670
        %v2447 = vunpack.c.l.s8.bf16 %v1671
        %v2448 = vunpack.c.l.s8.bf16 %v1672
        %v2449 = vunpack.c.h.s8.bf16 %v1669
        %v2450 = vunpack.c.h.s8.bf16 %v1670
        %v2451 = vunpack.c.h.s8.bf16 %v1671
        %v2452 = vunpack.c.h.s8.bf16 %v1672
        %v2453 = vunpack.c.l.s8.bf16 %v1673
        %v2454 = vunpack.c.l.s8.bf16 %v1674
        %v2455 = vunpack.c.l.s8.bf16 %v1675
        %v2456 = vunpack.c.l.s8.bf16 %v1676
        %v2457 = vunpack.c.h.s8.bf16 %v1673
        %v2458 = vunpack.c.h.s8.bf16 %v1674
        %v2459 = vunpack.c.h.s8.bf16 %v1675
        %v2460 = vunpack.c.h.s8.bf16 %v1676
        %v2461 = vunpack.c.l.s8.bf16 %v1677
        %v2462 = vunpack.c.l.s8.bf16 %v1678
        %v2463 = vunpack.c.l.s8.bf16 %v1679
        %v2464 = vunpack.c.l.s8.bf16 %v1680
        %v2465 = vunpack.c.h.s8.bf16 %v1677
        %v2466 = vunpack.c.h.s8.bf16 %v1678
        %v2467 = vunpack.c.h.s8.bf16 %v1679
        %v2468 = vunpack.c.h.s8.bf16 %v1680
        %v2469 = vunpack.c.l.s8.bf16 %v1681
        %v2470 = vunpack.c.l.s8.bf16 %v1682
        %v2471 = vunpack.c.l.s8.bf16 %v1683
        %v2472 = vunpack.c.l.s8.bf16 %v1684
        %v2473 = vunpack.c.h.s8.bf16 %v1681
        %v2474 = vunpack.c.h.s8.bf16 %v1682
        %v2475 = vunpack.c.h.s8.bf16 %v1683
        %v2476 = vunpack.c.h.s8.bf16 %v1684
        %v2477 = vunpack.c.l.s8.bf16 %v1685
        %v2478 = vunpack.c.l.s8.bf16 %v1686
        %v2479 = vunpack.c.l.s8.bf16 %v1687
        %v2480 = vunpack.c.l.s8.bf16 %v1688
        %v2481 = vunpack.c.h.s8.bf16 %v1685
        %v2482 = vunpack.c.h.s8.bf16 %v1686
        %v2483 = vunpack.c.h.s8.bf16 %v1687
        %v2484 = vunpack.c.h.s8.bf16 %v1688
        %v2485 = vunpack.c.l.s8.bf16 %v1689
        %v2486 = vunpack.c.l.s8.bf16 %v1690
        %v2487 = vunpack.c.l.s8.bf16 %v1691
        %v2488 = vunpack.c.l.s8.bf16 %v1692
        %v2489 = vunpack.c.h.s8.bf16 %v1689
        %v2490 = vunpack.c.h.s8.bf16 %v1690
        %v2491 = vunpack.c.h.s8.bf16 %v1691
        %v2492 = vunpack.c.h.s8.bf16 %v1692
        %v2493 = vunpack.c.l.s8.bf16 %v1693
        %v2494 = vunpack.c.l.s8.bf16 %v1694
        %v2495 = vunpack.c.l.s8.bf16 %v1695
        %v2496 = vunpack.c.l.s8.bf16 %v1696
        %v2497 = vunpack.c.h.s8.bf16 %v1693
        %v2498 = vunpack.c.h.s8.bf16 %v1694
        %v2499 = vunpack.c.h.s8.bf16 %v1695
        %v2500 = vunpack.c.h.s8.bf16 %v1696
        %v2501 = vunpack.c.l.s8.bf16 %v1697
        %v2502 = vunpack.c.l.s8.bf16 %v1698
        %v2503 = vunpack.c.l.s8.bf16 %v1699
        %v2504 = vunpack.c.l.s8.bf16 %v1700
        %v2505 = vunpack.c.h.s8.bf16 %v1697
        %v2506 = vunpack.c.h.s8.bf16 %v1698
        %v2507 = vunpack.c.h.s8.bf16 %v1699
        %v2508 = vunpack.c.h.s8.bf16 %v1700
        %v2509 = vunpack.c.l.s8.bf16 %v1701
        %v2510 = vunpack.c.l.s8.bf16 %v1702
        %v2511 = vunpack.c.l.s8.bf16 %v1703
        %v2512 = vunpack.c.l.s8.bf16 %v1704
        %v2513 = vunpack.c.h.s8.bf16 %v1701
        %v2514 = vunpack.c.h.s8.bf16 %v1702
        %v2515 = vunpack.c.h.s8.bf16 %v1703
        %v2516 = vunpack.c.h.s8.bf16 %v1704
        %v2517 = vunpack.c.l.s8.bf16 %v1705
        %v2518 = vunpack.c.l.s8.bf16 %v1706
        %v2519 = vunpack.c.l.s8.bf16 %v1707
        %v2520 = vunpack.c.l.s8.bf16 %v1708
        %v2521 = vunpack.c.h.s8.bf16 %v1705
        %v2522 = vunpack.c.h.s8.bf16 %v1706
        %v2523 = vunpack.c.h.s8.bf16 %v1707
        %v2524 = vunpack.c.h.s8.bf16 %v1708
        %v2525 = vunpack.c.l.s8.bf16 %v1709
        %v2526 = vunpack.c.l.s8.bf16 %v1710
        %v2527 = vunpack.c.l.s8.bf16 %v1711
        %v2528 = vunpack.c.l.s8.bf16 %v1712
        %v2529 = vunpack.c.h.s8.bf16 %v1709
        %v2530 = vunpack.c.h.s8.bf16 %v1710
        %v2531 = vunpack.c.h.s8.bf16 %v1711
        %v2532 = vunpack.c.h.s8.bf16 %v1712
        %v2533 = vunpack.c.l.s8.bf16 %v1713
        %v2534 = vunpack.c.l.s8.bf16 %v1714
        %v2535 = vunpack.c.l.s8.bf16 %v1715
        %v2536 = vunpack.c.l.s8.bf16 %v1716
        %v2537 = vunpack.c.h.s8.bf16 %v1713
        %v2538 = vunpack.c.h.s8.bf16 %v1714
        %v2539 = vunpack.c.h.s8.bf16 %v1715
        %v2540 = vunpack.c.h.s8.bf16 %v1716
        %v2541 = vunpack.c.l.s8.bf16 %v1717
        %v2542 = vunpack.c.l.s8.bf16 %v1718
        %v2543 = vunpack.c.l.s8.bf16 %v1719
        %v2544 = vunpack.c.l.s8.bf16 %v1720
        %v2545 = vunpack.c.h.s8.bf16 %v1717
        %v2546 = vunpack.c.h.s8.bf16 %v1718
        %v2547 = vunpack.c.h.s8.bf16 %v1719
        %v2548 = vunpack.c.h.s8.bf16 %v1720
        %v2549 = vunpack.c.l.s8.bf16 %v1721
        %v2550 = vunpack.c.l.s8.bf16 %v1722
        %v2551 = vunpack.c.l.s8.bf16 %v1723
        %v2552 = vunpack.c.l.s8.bf16 %v1724
        %v2553 = vunpack.c.h.s8.bf16 %v1721
        %v2554 = vunpack.c.h.s8.bf16 %v1722
        %v2555 = vunpack.c.h.s8.bf16 %v1723
        %v2556 = vunpack.c.h.s8.bf16 %v1724
        %v2557 = vunpack.c.l.s8.bf16 %v1725
        %v2558 = vunpack.c.l.s8.bf16 %v1726
        %v2559 = vunpack.c.l.s8.bf16 %v1727
        %v2560 = vunpack.c.l.s8.bf16 %v1728
        %v2561 = vunpack.c.h.s8.bf16 %v1725
        %v2562 = vunpack.c.h.s8.bf16 %v1726
        %v2563 = vunpack.c.h.s8.bf16 %v1727
        %v2564 = vunpack.c.h.s8.bf16 %v1728
        %v2565 = vunpack.c.l.s8.bf16 %v1729
        %v2566 = vunpack.c.l.s8.bf16 %v1730
        %v2567 = vunpack.c.l.s8.bf16 %v1731
        %v2568 = vunpack.c.l.s8.bf16 %v1732
        %v2569 = vunpack.c.h.s8.bf16 %v1729
        %v2570 = vunpack.c.h.s8.bf16 %v1730
        %v2571 = vunpack.c.h.s8.bf16 %v1731
        %v2572 = vunpack.c.h.s8.bf16 %v1732
        %v2573 = vunpack.c.l.s8.bf16 %v1733
        %v2574 = vunpack.c.l.s8.bf16 %v1734
        %v2575 = vunpack.c.l.s8.bf16 %v1735
        %v2576 = vunpack.c.l.s8.bf16 %v1736
        %v2577 = vunpack.c.h.s8.bf16 %v1733
        %v2578 = vunpack.c.h.s8.bf16 %v1734
        %v2579 = vunpack.c.h.s8.bf16 %v1735
        %v2580 = vunpack.c.h.s8.bf16 %v1736
        %v2581 = vunpack.c.l.s8.bf16 %v1737
        %v2582 = vunpack.c.l.s8.bf16 %v1738
        %v2583 = vunpack.c.l.s8.bf16 %v1739
        %v2584 = vunpack.c.l.s8.bf16 %v1740
        %v2585 = vunpack.c.h.s8.bf16 %v1737
        %v2586 = vunpack.c.h.s8.bf16 %v1738
        %v2587 = vunpack.c.h.s8.bf16 %v1739
        %v2588 = vunpack.c.h.s8.bf16 %v1740
        %v2589 = vunpack.c.l.s8.bf16 %v1741
        %v2590 = vunpack.c.l.s8.bf16 %v1742
        %v2591 = vunpack.c.l.s8.bf16 %v1743
        %v2592 = vunpack.c.l.s8.bf16 %v1744
        %v2593 = vunpack.c.h.s8.bf16 %v1741
        %v2594 = vunpack.c.h.s8.bf16 %v1742
        %v2595 = vunpack.c.h.s8.bf16 %v1743
        %v2596 = vunpack.c.h.s8.bf16 %v1744
        %v2597 = vunpack.c.l.s8.bf16 %v1745
        %v2598 = vunpack.c.l.s8.bf16 %v1746
        %v2599 = vunpack.c.l.s8.bf16 %v1747
        %v2600 = vunpack.c.l.s8.bf16 %v1748
        %v2601 = vunpack.c.h.s8.bf16 %v1745
        %v2602 = vunpack.c.h.s8.bf16 %v1746
        %v2603 = vunpack.c.h.s8.bf16 %v1747
        %v2604 = vunpack.c.h.s8.bf16 %v1748
        %v2605 = vunpack.c.l.s8.bf16 %v1749
        %v2606 = vunpack.c.l.s8.bf16 %v1750
        %v2607 = vunpack.c.l.s8.bf16 %v1751
        %v2608 = vunpack.c.l.s8.bf16 %v1752
        %v2609 = vunpack.c.h.s8.bf16 %v1749
        %v2610 = vunpack.c.h.s8.bf16 %v1750
        %v2611 = vunpack.c.h.s8.bf16 %v1751
        %v2612 = vunpack.c.h.s8.bf16 %v1752
        %v2613 = vunpack.c.l.s8.bf16 %v1753
        %v2614 = vunpack.c.l.s8.bf16 %v1754
        %v2615 = vunpack.c.l.s8.bf16 %v1755
        %v2616 = vunpack.c.l.s8.bf16 %v1756
        %v2617 = vunpack.c.h.s8.bf16 %v1753
        %v2618 = vunpack.c.h.s8.bf16 %v1754
        %v2619 = vunpack.c.h.s8.bf16 %v1755
        %v2620 = vunpack.c.h.s8.bf16 %v1756
        %v2621 = vunpack.c.l.s8.bf16 %v1757
        %v2622 = vunpack.c.l.s8.bf16 %v1758
        %v2623 = vunpack.c.l.s8.bf16 %v1759
        %v2624 = vunpack.c.l.s8.bf16 %v1760
        %v2625 = vunpack.c.h.s8.bf16 %v1757
        %v2626 = vunpack.c.h.s8.bf16 %v1758
        %v2627 = vunpack.c.h.s8.bf16 %v1759
        %v2628 = vunpack.c.h.s8.bf16 %v1760
        %v2629 = vunpack.c.l.s8.bf16 %v1761
        %v2630 = vunpack.c.l.s8.bf16 %v1762
        %v2631 = vunpack.c.l.s8.bf16 %v1763
        %v2632 = vunpack.c.l.s8.bf16 %v1764
        %v2633 = vunpack.c.h.s8.bf16 %v1761
        %v2634 = vunpack.c.h.s8.bf16 %v1762
        %v2635 = vunpack.c.h.s8.bf16 %v1763
        %v2636 = vunpack.c.h.s8.bf16 %v1764
        %v2637 = vunpack.c.l.s8.bf16 %v1765
        %v2638 = vunpack.c.l.s8.bf16 %v1766
        %v2639 = vunpack.c.l.s8.bf16 %v1767
        %v2640 = vunpack.c.l.s8.bf16 %v1768
        %v2641 = vunpack.c.h.s8.bf16 %v1765
        %v2642 = vunpack.c.h.s8.bf16 %v1766
        %v2643 = vunpack.c.h.s8.bf16 %v1767
        %v2644 = vunpack.c.h.s8.bf16 %v1768
        %v2645 = vunpack.c.l.s8.bf16 %v1769
        %v2646 = vunpack.c.l.s8.bf16 %v1770
        %v2647 = vunpack.c.l.s8.bf16 %v1771
        %v2648 = vunpack.c.l.s8.bf16 %v1772
        %v2649 = vunpack.c.h.s8.bf16 %v1769
        %v2650 = vunpack.c.h.s8.bf16 %v1770
        %v2651 = vunpack.c.h.s8.bf16 %v1771
        %v2652 = vunpack.c.h.s8.bf16 %v1772
        %v2653 = vunpack.c.l.s8.bf16 %v1773
        %v2654 = vunpack.c.l.s8.bf16 %v1774
        %v2655 = vunpack.c.l.s8.bf16 %v1775
        %v2656 = vunpack.c.l.s8.bf16 %v1776
        %v2657 = vunpack.c.h.s8.bf16 %v1773
        %v2658 = vunpack.c.h.s8.bf16 %v1774
        %v2659 = vunpack.c.h.s8.bf16 %v1775
        %v2660 = vunpack.c.h.s8.bf16 %v1776
        %v2661 = vunpack.c.l.s8.bf16 %v1777
        %v2662 = vunpack.c.l.s8.bf16 %v1778
        %v2663 = vunpack.c.l.s8.bf16 %v1779
        %v2664 = vunpack.c.l.s8.bf16 %v1780
        %v2665 = vunpack.c.h.s8.bf16 %v1777
        %v2666 = vunpack.c.h.s8.bf16 %v1778
        %v2667 = vunpack.c.h.s8.bf16 %v1779
        %v2668 = vunpack.c.h.s8.bf16 %v1780
        %v2669 = vunpack.c.l.s8.bf16 %v1781
        %v2670 = vunpack.c.l.s8.bf16 %v1782
        %v2671 = vunpack.c.l.s8.bf16 %v1783
        %v2672 = vunpack.c.l.s8.bf16 %v1784
        %v2673 = vunpack.c.h.s8.bf16 %v1781
        %v2674 = vunpack.c.h.s8.bf16 %v1782
        %v2675 = vunpack.c.h.s8.bf16 %v1783
        %v2676 = vunpack.c.h.s8.bf16 %v1784
        %v2677 = vunpack.c.l.s8.bf16 %v1785
        %v2678 = vunpack.c.l.s8.bf16 %v1786
        %v2679 = vunpack.c.l.s8.bf16 %v1787
        %v2680 = vunpack.c.l.s8.bf16 %v1788
        %v2681 = vunpack.c.h.s8.bf16 %v1785
        %v2682 = vunpack.c.h.s8.bf16 %v1786
        %v2683 = vunpack.c.h.s8.bf16 %v1787
        %v2684 = vunpack.c.h.s8.bf16 %v1788
        %v2685 = vunpack.c.l.s8.bf16 %v1789
        %v2686 = vunpack.c.l.s8.bf16 %v1790
        %v2687 = vunpack.c.l.s8.bf16 %v1791
        %v2688 = vunpack.c.l.s8.bf16 %v1792
        %v2689 = vunpack.c.h.s8.bf16 %v1789
        %v2690 = vunpack.c.h.s8.bf16 %v1790
        %v2691 = vunpack.c.h.s8.bf16 %v1791
        %v2692 = vunpack.c.h.s8.bf16 %v1792
        %v2693 = vunpack.c.l.s8.bf16 %v1793
        %v2694 = vunpack.c.l.s8.bf16 %v1794
        %v2695 = vunpack.c.l.s8.bf16 %v1795
        %v2696 = vunpack.c.l.s8.bf16 %v1796
        %v2697 = vunpack.c.h.s8.bf16 %v1793
        %v2698 = vunpack.c.h.s8.bf16 %v1794
        %v2699 = vunpack.c.h.s8.bf16 %v1795
        %v2700 = vunpack.c.h.s8.bf16 %v1796
        %v2701 = vunpack.c.l.s8.bf16 %v1797
        %v2702 = vunpack.c.l.s8.bf16 %v1798
        %v2703 = vunpack.c.l.s8.bf16 %v1799
        %v2704 = vunpack.c.l.s8.bf16 %v1800
        %v2705 = vunpack.c.h.s8.bf16 %v1797
        %v2706 = vunpack.c.h.s8.bf16 %v1798
        %v2707 = vunpack.c.h.s8.bf16 %v1799
        %v2708 = vunpack.c.h.s8.bf16 %v1800
        %v2709 = vunpack.c.l.s8.bf16 %v1801
        %v2710 = vunpack.c.l.s8.bf16 %v1802
        %v2711 = vunpack.c.l.s8.bf16 %v1803
        %v2712 = vunpack.c.l.s8.bf16 %v1804
        %v2713 = vunpack.c.h.s8.bf16 %v1801
        %v2714 = vunpack.c.h.s8.bf16 %v1802
        %v2715 = vunpack.c.h.s8.bf16 %v1803
        %v2716 = vunpack.c.h.s8.bf16 %v1804
        %v2717 = vunpack.c.l.s8.bf16 %v1805
        %v2718 = vunpack.c.l.s8.bf16 %v1806
        %v2719 = vunpack.c.l.s8.bf16 %v1807
        %v2720 = vunpack.c.l.s8.bf16 %v1808
        %v2721 = vunpack.c.h.s8.bf16 %v1805
        %v2722 = vunpack.c.h.s8.bf16 %v1806
        %v2723 = vunpack.c.h.s8.bf16 %v1807
        %v2724 = vunpack.c.h.s8.bf16 %v1808
        %v2725 = vunpack.c.l.s8.bf16 %v1809
        %v2726 = vunpack.c.l.s8.bf16 %v1810
        %v2727 = vunpack.c.l.s8.bf16 %v1811
        %v2728 = vunpack.c.l.s8.bf16 %v1812
        %v2729 = vunpack.c.h.s8.bf16 %v1809
        %v2730 = vunpack.c.h.s8.bf16 %v1810
        %v2731 = vunpack.c.h.s8.bf16 %v1811
        %v2732 = vunpack.c.h.s8.bf16 %v1812
        %v2733 = vunpack.c.l.s8.bf16 %v1813
        %v2734 = vunpack.c.l.s8.bf16 %v1814
        %v2735 = vunpack.c.l.s8.bf16 %v1815
        %v2736 = vunpack.c.l.s8.bf16 %v1816
        %v2737 = vunpack.c.h.s8.bf16 %v1813
        %v2738 = vunpack.c.h.s8.bf16 %v1814
        %v2739 = vunpack.c.h.s8.bf16 %v1815
        %v2740 = vunpack.c.h.s8.bf16 %v1816
        %v2741 = vunpack.c.l.s8.bf16 %v1817
        %v2742 = vunpack.c.l.s8.bf16 %v1818
        %v2743 = vunpack.c.l.s8.bf16 %v1819
        %v2744 = vunpack.c.l.s8.bf16 %v1820
        %v2745 = vunpack.c.h.s8.bf16 %v1817
        %v2746 = vunpack.c.h.s8.bf16 %v1818
        %v2747 = vunpack.c.h.s8.bf16 %v1819
        %v2748 = vunpack.c.h.s8.bf16 %v1820
        %v2749 = vunpack.c.l.s8.bf16 %v1821
        %v2750 = vunpack.c.l.s8.bf16 %v1822
        %v2751 = vunpack.c.l.s8.bf16 %v1823
        %v2752 = vunpack.c.l.s8.bf16 %v1824
        %v2753 = vunpack.c.h.s8.bf16 %v1821
        %v2754 = vunpack.c.h.s8.bf16 %v1822
        %v2755 = vunpack.c.h.s8.bf16 %v1823
        %v2756 = vunpack.c.h.s8.bf16 %v1824
        %v2757 = vunpack.c.l.s8.bf16 %v1825
        %v2758 = vunpack.c.l.s8.bf16 %v1826
        %v2759 = vunpack.c.l.s8.bf16 %v1827
        %v2760 = vunpack.c.l.s8.bf16 %v1828
        %v2761 = vunpack.c.h.s8.bf16 %v1825
        %v2762 = vunpack.c.h.s8.bf16 %v1826
        %v2763 = vunpack.c.h.s8.bf16 %v1827
        %v2764 = vunpack.c.h.s8.bf16 %v1828
        %v2765 = vunpack.c.l.s8.bf16 %v1829
        %v2766 = vunpack.c.l.s8.bf16 %v1830
        %v2767 = vunpack.c.l.s8.bf16 %v1831
        %v2768 = vunpack.c.l.s8.bf16 %v1832
        %v2769 = vunpack.c.h.s8.bf16 %v1829
        %v2770 = vunpack.c.h.s8.bf16 %v1830
        %v2771 = vunpack.c.h.s8.bf16 %v1831
        %v2772 = vunpack.c.h.s8.bf16 %v1832
        %v2773 = vunpack.c.l.s8.bf16 %v1833
        %v2774 = vunpack.c.l.s8.bf16 %v1834
        %v2775 = vunpack.c.l.s8.bf16 %v1835
        %v2776 = vunpack.c.l.s8.bf16 %v1836
        %v2777 = vunpack.c.h.s8.bf16 %v1833
        %v2778 = vunpack.c.h.s8.bf16 %v1834
        %v2779 = vunpack.c.h.s8.bf16 %v1835
        %v2780 = vunpack.c.h.s8.bf16 %v1836
        %v2781 = vunpack.c.l.s8.bf16 %v1837
        %v2782 = vunpack.c.l.s8.bf16 %v1838
        %v2783 = vunpack.c.l.s8.bf16 %v1839
        %v2784 = vunpack.c.l.s8.bf16 %v1840
        %v2785 = vunpack.c.h.s8.bf16 %v1837
        %v2786 = vunpack.c.h.s8.bf16 %v1838
        %v2787 = vunpack.c.h.s8.bf16 %v1839
        %v2788 = vunpack.c.h.s8.bf16 %v1840
        %v2789 = vunpack.c.l.s8.bf16 %v1841
        %v2790 = vunpack.c.l.s8.bf16 %v1842
        %v2791 = vunpack.c.l.s8.bf16 %v1843
        %v2792 = vunpack.c.l.s8.bf16 %v1844
        %v2793 = vunpack.c.h.s8.bf16 %v1841
        %v2794 = vunpack.c.h.s8.bf16 %v1842
        %v2795 = vunpack.c.h.s8.bf16 %v1843
        %v2796 = vunpack.c.h.s8.bf16 %v1844
        %v2797 = vunpack.c.l.s8.bf16 %v1845
        %v2798 = vunpack.c.l.s8.bf16 %v1846
        %v2799 = vunpack.c.l.s8.bf16 %v1847
        %v2800 = vunpack.c.l.s8.bf16 %v1848
        %v2801 = vunpack.c.h.s8.bf16 %v1845
        %v2802 = vunpack.c.h.s8.bf16 %v1846
        %v2803 = vunpack.c.h.s8.bf16 %v1847
        %v2804 = vunpack.c.h.s8.bf16 %v1848
        %v2805 = vunpack.c.l.s8.bf16 %v1849
        %v2806 = vunpack.c.l.s8.bf16 %v1850
        %v2807 = vunpack.c.l.s8.bf16 %v1851
        %v2808 = vunpack.c.l.s8.bf16 %v1852
        %v2809 = vunpack.c.h.s8.bf16 %v1849
        %v2810 = vunpack.c.h.s8.bf16 %v1850
        %v2811 = vunpack.c.h.s8.bf16 %v1851
        %v2812 = vunpack.c.h.s8.bf16 %v1852
        %v2813 = vunpack.c.l.s8.bf16 %v1853
        %v2814 = vunpack.c.l.s8.bf16 %v1854
        %v2815 = vunpack.c.l.s8.bf16 %v1855
        %v2816 = vunpack.c.l.s8.bf16 %v1856
        %v2817 = vunpack.c.h.s8.bf16 %v1853
        %v2818 = vunpack.c.h.s8.bf16 %v1854
        %v2819 = vunpack.c.h.s8.bf16 %v1855
        %v2820 = vunpack.c.h.s8.bf16 %v1856
        %v2821 = vunpack.c.l.s8.bf16 %v1857
        %v2822 = vunpack.c.l.s8.bf16 %v1858
        %v2823 = vunpack.c.l.s8.bf16 %v1859
        %v2824 = vunpack.c.l.s8.bf16 %v1860
        %v2825 = vunpack.c.h.s8.bf16 %v1857
        %v2826 = vunpack.c.h.s8.bf16 %v1858
        %v2827 = vunpack.c.h.s8.bf16 %v1859
        %v2828 = vunpack.c.h.s8.bf16 %v1860
        %v2829 = vld [vmem:[%s0] sm:$0xff]
        %v2830 = vld [vmem:[%s0 + $0x8] sm:$0xff]
        %v2831 = vld [vmem:[%s0 + $0x10] sm:$0xff]
        %v2832 = vld [vmem:[%s0 + $0x18] sm:$0x7f]
        %v2837 = vcombine.high %v2829, %v2829
        %v2839 = vunpack.c.l.s4 1966171168
        %v2840 = vunpack.c.0.s8 %v2839
        %v2841 = vlaneseq
        %v2842 = vshrl.u32 %v2841, 7
        %v2843 = vsub.s32 %v2840, %v2842
        %v2844 = vrot.slane %v2829, %v2843
        %v2846 = vunpack.c.l.s4 1966171168
        %v2847 = vunpack.c.0.s8 %v2846
        %v2848 = vlaneseq
        %v2849 = vshrl.u32 %v2848, 7
        %v2850 = vsub.s32 %v2847, %v2849
        %v2851 = vrot.slane %v2837, %v2850
        %v2852 = vcombine.high %v2844, %v2844
        %v2853 = vcombine.high %v2851, %v2851
        %v2855 = vunpack.c.l.s4 1966171168
        %v2856 = vunpack.c.0.s8 %v2855
        %v2857 = vlaneseq
        %v2858 = vshrl.u32 %v2857, 7
        %v2859 = vsub.s32 %v2856, %v2858
        %v2860 = vrot.slane %v2844, %v2859
        %v2862 = vunpack.c.l.s4 1966171168
        %v2863 = vunpack.c.0.s8 %v2862
        %v2864 = vlaneseq
        %v2865 = vshrl.u32 %v2864, 7
        %v2866 = vsub.s32 %v2863, %v2865
        %v2867 = vrot.slane %v2851, %v2866
        %v2869 = vunpack.c.l.s4 1966171168
        %v2870 = vunpack.c.0.s8 %v2869
        %v2871 = vlaneseq
        %v2872 = vshrl.u32 %v2871, 7
        %v2873 = vsub.s32 %v2870, %v2872
        %v2874 = vrot.slane %v2852, %v2873
        %v2876 = vunpack.c.l.s4 1966171168
        %v2877 = vunpack.c.0.s8 %v2876
        %v2878 = vlaneseq
        %v2879 = vshrl.u32 %v2878, 7
        %v2880 = vsub.s32 %v2877, %v2879
        %v2881 = vrot.slane %v2853, %v2880
        %v2882 = vcombine.high %v2860, %v2860
        %v2883 = vcombine.high %v2867, %v2867
        %v2884 = vcombine.high %v2874, %v2874
        %v2885 = vcombine.high %v2881, %v2881
        %v2886 = vcombine.high %v2830, %v2830
        %v2888 = vunpack.c.l.s4 1966171168
        %v2889 = vunpack.c.0.s8 %v2888
        %v2890 = vlaneseq
        %v2891 = vshrl.u32 %v2890, 7
        %v2892 = vsub.s32 %v2889, %v2891
        %v2893 = vrot.slane %v2830, %v2892
        %v2895 = vunpack.c.l.s4 1966171168
        %v2896 = vunpack.c.0.s8 %v2895
        %v2897 = vlaneseq
        %v2898 = vshrl.u32 %v2897, 7
        %v2899 = vsub.s32 %v2896, %v2898
        %v2900 = vrot.slane %v2886, %v2899
        %v2901 = vcombine.high %v2893, %v2893
        %v2902 = vcombine.high %v2900, %v2900
        %v2904 = vunpack.c.l.s4 1966171168
        %v2905 = vunpack.c.0.s8 %v2904
        %v2906 = vlaneseq
        %v2907 = vshrl.u32 %v2906, 7
        %v2908 = vsub.s32 %v2905, %v2907
        %v2909 = vrot.slane %v2893, %v2908
        %v2911 = vunpack.c.l.s4 1966171168
        %v2912 = vunpack.c.0.s8 %v2911
        %v2913 = vlaneseq
        %v2914 = vshrl.u32 %v2913, 7
        %v2915 = vsub.s32 %v2912, %v2914
        %v2916 = vrot.slane %v2900, %v2915
        %v2918 = vunpack.c.l.s4 1966171168
        %v2919 = vunpack.c.0.s8 %v2918
        %v2920 = vlaneseq
        %v2921 = vshrl.u32 %v2920, 7
        %v2922 = vsub.s32 %v2919, %v2921
        %v2923 = vrot.slane %v2901, %v2922
        %v2925 = vunpack.c.l.s4 1966171168
        %v2926 = vunpack.c.0.s8 %v2925
        %v2927 = vlaneseq
        %v2928 = vshrl.u32 %v2927, 7
        %v2929 = vsub.s32 %v2926, %v2928
        %v2930 = vrot.slane %v2902, %v2929
        %v2931 = vcombine.high %v2909, %v2909
        %v2932 = vcombine.high %v2916, %v2916
        %v2933 = vcombine.high %v2923, %v2923
        %v2934 = vcombine.high %v2930, %v2930
        %v2935 = vcombine.high %v2831, %v2831
        %v2937 = vunpack.c.l.s4 1966171168
        %v2938 = vunpack.c.0.s8 %v2937
        %v2939 = vlaneseq
        %v2940 = vshrl.u32 %v2939, 7
        %v2941 = vsub.s32 %v2938, %v2940
        %v2942 = vrot.slane %v2831, %v2941
        %v2944 = vunpack.c.l.s4 1966171168
        %v2945 = vunpack.c.0.s8 %v2944
        %v2946 = vlaneseq
        %v2947 = vshrl.u32 %v2946, 7
        %v2948 = vsub.s32 %v2945, %v2947
        %v2949 = vrot.slane %v2935, %v2948
        %v2950 = vcombine.high %v2942, %v2942
        %v2951 = vcombine.high %v2949, %v2949
        %v2953 = vunpack.c.l.s4 1966171168
        %v2954 = vunpack.c.0.s8 %v2953
        %v2955 = vlaneseq
        %v2956 = vshrl.u32 %v2955, 7
        %v2957 = vsub.s32 %v2954, %v2956
        %v2958 = vrot.slane %v2942, %v2957
        %v2960 = vunpack.c.l.s4 1966171168
        %v2961 = vunpack.c.0.s8 %v2960
        %v2962 = vlaneseq
        %v2963 = vshrl.u32 %v2962, 7
        %v2964 = vsub.s32 %v2961, %v2963
        %v2965 = vrot.slane %v2949, %v2964
        %v2967 = vunpack.c.l.s4 1966171168
        %v2968 = vunpack.c.0.s8 %v2967
        %v2969 = vlaneseq
        %v2970 = vshrl.u32 %v2969, 7
        %v2971 = vsub.s32 %v2968, %v2970
        %v2972 = vrot.slane %v2950, %v2971
        %v2974 = vunpack.c.l.s4 1966171168
        %v2975 = vunpack.c.0.s8 %v2974
        %v2976 = vlaneseq
        %v2977 = vshrl.u32 %v2976, 7
        %v2978 = vsub.s32 %v2975, %v2977
        %v2979 = vrot.slane %v2951, %v2978
        %v2980 = vcombine.high %v2958, %v2958
        %v2981 = vcombine.high %v2965, %v2965
        %v2982 = vcombine.high %v2972, %v2972
        %v2983 = vcombine.high %v2979, %v2979
        %v2984 = vcombine.high %v2832, %v2832
        %v2986 = vunpack.c.l.s4 1966171168
        %v2987 = vunpack.c.0.s8 %v2986
        %v2988 = vlaneseq
        %v2989 = vshrl.u32 %v2988, 7
        %v2990 = vsub.s32 %v2987, %v2989
        %v2991 = vrot.slane %v2832, %v2990
        %v2993 = vunpack.c.l.s4 1966171168
        %v2994 = vunpack.c.0.s8 %v2993
        %v2995 = vlaneseq
        %v2996 = vshrl.u32 %v2995, 7
        %v2997 = vsub.s32 %v2994, %v2996
        %v2998 = vrot.slane %v2984, %v2997
        %v2999 = vcombine.high %v2991, %v2991
        %v3000 = vcombine.high %v2998, %v2998
        %v3002 = vunpack.c.l.s4 1966171168
        %v3003 = vunpack.c.0.s8 %v3002
        %v3004 = vlaneseq
        %v3005 = vshrl.u32 %v3004, 7
        %v3006 = vsub.s32 %v3003, %v3005
        %v3007 = vrot.slane %v2991, %v3006
        %v3009 = vunpack.c.l.s4 1966171168
        %v3010 = vunpack.c.0.s8 %v3009
        %v3011 = vlaneseq
        %v3012 = vshrl.u32 %v3011, 7
        %v3013 = vsub.s32 %v3010, %v3012
        %v3014 = vrot.slane %v2998, %v3013
        %v3016 = vunpack.c.l.s4 1966171168
        %v3017 = vunpack.c.0.s8 %v3016
        %v3018 = vlaneseq
        %v3019 = vshrl.u32 %v3018, 7
        %v3020 = vsub.s32 %v3017, %v3019
        %v3021 = vrot.slane %v2999, %v3020
        %v3023 = vunpack.c.l.s4 1966171168
        %v3024 = vunpack.c.0.s8 %v3023
        %v3025 = vlaneseq
        %v3026 = vshrl.u32 %v3025, 7
        %v3027 = vsub.s32 %v3024, %v3026
        %v3028 = vrot.slane %v3000, %v3027
        %v3029 = vcombine.high %v3007, %v3007
        %v3030 = vcombine.high %v3014, %v3014
        %v3031 = vcombine.high %v3021, %v3021
        %vm3062 = vcmask 261120
        %v3064 = vsel %vm3062, %v3030, 0
        %3066 = vmatprep.subr.bf16.mxu0 %v1890
        %3067 = vmatpush1.bf16.msra.mxu0 %v1889
        %3068 = vmatprep.subr.bf16.mxu0 %v1886
        %3069 = vmatpush1.bf16.msra.mxu0 %v1885
        %3070 = vmatprep.subr.bf16.mxu0 %v1882
        %3071 = vmatpush1.bf16.msra.mxu0 %v1881
        %3072 = vmatprep.subr.bf16.mxu0 %v1878
        %3073 = vmatpush1.bf16.msra.mxu0 %v1877
        %3074 = vmatprep.subr.bf16.mxu0 %v1874
        %3075 = vmatpush1.bf16.msra.mxu0 %v1873
        %3076 = vmatprep.subr.bf16.mxu0 %v1870
        %3077 = vmatpush1.bf16.msra.mxu0 %v1869
        %3078 = vmatprep.subr.bf16.mxu0 %v1866
        %3079 = vmatpush1.bf16.msra.mxu0 %v1865
        %3080 = vmatprep.subr.bf16.mxu0 %v1862
        %3081 = vmatpush1.bf16.msra.mxu0 %v1861
        %3082 = vmatprep.subr.bf16.mxu0 %v1922
        %3083 = vmatpush2.bf16.msra.mxu0 %v1921
        %3084 = vmatprep.subr.bf16.mxu0 %v1918
        %3085 = vmatpush2.bf16.msra.mxu0 %v1917
        %3086 = vmatprep.subr.bf16.mxu0 %v1914
        %3087 = vmatpush2.bf16.msra.mxu0 %v1913
        %3088 = vmatprep.subr.bf16.mxu0 %v1910
        %3089 = vmatpush2.bf16.msra.mxu0 %v1909
        %3090 = vmatprep.subr.bf16.mxu0 %v1906
        %3091 = vmatpush2.bf16.msra.mxu0 %v1905
        %3092 = vmatprep.subr.bf16.mxu0 %v1902
        %3093 = vmatpush2.bf16.msra.mxu0 %v1901
        %3094 = vmatprep.subr.bf16.mxu0 %v1898
        %3095 = vmatpush2.bf16.msra.mxu0 %v1897
        %3096 = vmatprep.subr.bf16.mxu0 %v1894
        %3097 = vmatpush2.bf16.msra.mxu0 %v1893
        %3098 = vmatprep.mubr.bf16.mxu0 %v2874
        %3099 = vmatmul.mubr.bf16.gmra.mxu0 %v2860
        %v3100 = vpop.f32.mrf.mxu0
        %v3101 = vadd.f32 0.0, %v3100
        %v3102 = vpop.f32.mrf.mxu0
        %v3103 = vadd.f32 0.0, %v3102
        %v3104 = vpop.f32.mrf.mxu0
        %v3105 = vpop.f32.mrf.mxu0
        %3106 = vdwg.mxu0
        %3107 = vmatprep.subr.bf16.mxu0 %v1954
        %3108 = vmatpush1.bf16.msra.mxu0 %v1953
        %3109 = vmatprep.subr.bf16.mxu0 %v1950
        %3110 = vmatpush1.bf16.msra.mxu0 %v1949
        %3111 = vmatprep.subr.bf16.mxu0 %v1946
        %3112 = vmatpush1.bf16.msra.mxu0 %v1945
        %3113 = vmatprep.subr.bf16.mxu0 %v1942
        %3114 = vmatpush1.bf16.msra.mxu0 %v1941
        %3115 = vmatprep.subr.bf16.mxu0 %v1938
        %3116 = vmatpush1.bf16.msra.mxu0 %v1937
        %3117 = vmatprep.subr.bf16.mxu0 %v1934
        %3118 = vmatpush1.bf16.msra.mxu0 %v1933
        %3119 = vmatprep.subr.bf16.mxu0 %v1930
        %3120 = vmatpush1.bf16.msra.mxu0 %v1929
        %3121 = vmatprep.subr.bf16.mxu0 %v1926
        %3122 = vmatpush1.bf16.msra.mxu0 %v1925
        %3123 = vmatprep.subr.bf16.mxu0 %v1986
        %3124 = vmatpush2.bf16.msra.mxu0 %v1985
        %3125 = vmatprep.subr.bf16.mxu0 %v1982
        %3126 = vmatpush2.bf16.msra.mxu0 %v1981
        %3127 = vmatprep.subr.bf16.mxu0 %v1978
        %3128 = vmatpush2.bf16.msra.mxu0 %v1977
        %3129 = vmatprep.subr.bf16.mxu0 %v1974
        %3130 = vmatpush2.bf16.msra.mxu0 %v1973
        %3131 = vmatprep.subr.bf16.mxu0 %v1970
        %3132 = vmatpush2.bf16.msra.mxu0 %v1969
        %3133 = vmatprep.subr.bf16.mxu0 %v1966
        %3134 = vmatpush2.bf16.msra.mxu0 %v1965
        %3135 = vmatprep.subr.bf16.mxu0 %v1962
        %3136 = vmatpush2.bf16.msra.mxu0 %v1961
        %3137 = vmatprep.subr.bf16.mxu0 %v1958
        %3138 = vmatpush2.bf16.msra.mxu0 %v1957
        %3139 = vmatprep.mubr.bf16.mxu0 %v2884
        %3140 = vmatmul.mubr.bf16.gmra.mxu0 %v2882
        %v3141 = vpop.f32.mrf.mxu0
        %v3142 = vadd.f32 %v3101, %v3141
        %v3143 = vpop.f32.mrf.mxu0
        %v3144 = vadd.f32 %v3103, %v3143
        %v3145 = vpop.f32.mrf.mxu0
        %v3146 = vpop.f32.mrf.mxu0
        %3147 = vdwg.mxu0
        %3148 = vmatprep.subr.bf16.mxu0 %v2018
        %3149 = vmatpush1.bf16.msra.mxu0 %v2017
        %3150 = vmatprep.subr.bf16.mxu0 %v2014
        %3151 = vmatpush1.bf16.msra.mxu0 %v2013
        %3152 = vmatprep.subr.bf16.mxu0 %v2010
        %3153 = vmatpush1.bf16.msra.mxu0 %v2009
        %3154 = vmatprep.subr.bf16.mxu0 %v2006
        %3155 = vmatpush1.bf16.msra.mxu0 %v2005
        %3156 = vmatprep.subr.bf16.mxu0 %v2002
        %3157 = vmatpush1.bf16.msra.mxu0 %v2001
        %3158 = vmatprep.subr.bf16.mxu0 %v1998
        %3159 = vmatpush1.bf16.msra.mxu0 %v1997
        %3160 = vmatprep.subr.bf16.mxu0 %v1994
        %3161 = vmatpush1.bf16.msra.mxu0 %v1993
        %3162 = vmatprep.subr.bf16.mxu0 %v1990
        %3163 = vmatpush1.bf16.msra.mxu0 %v1989
        %3164 = vmatprep.subr.bf16.mxu0 %v2050
        %3165 = vmatpush2.bf16.msra.mxu0 %v2049
        %3166 = vmatprep.subr.bf16.mxu0 %v2046
        %3167 = vmatpush2.bf16.msra.mxu0 %v2045
        %3168 = vmatprep.subr.bf16.mxu0 %v2042
        %3169 = vmatpush2.bf16.msra.mxu0 %v2041
        %3170 = vmatprep.subr.bf16.mxu0 %v2038
        %3171 = vmatpush2.bf16.msra.mxu0 %v2037
        %3172 = vmatprep.subr.bf16.mxu0 %v2034
        %3173 = vmatpush2.bf16.msra.mxu0 %v2033
        %3174 = vmatprep.subr.bf16.mxu0 %v2030
        %3175 = vmatpush2.bf16.msra.mxu0 %v2029
        %3176 = vmatprep.subr.bf16.mxu0 %v2026
        %3177 = vmatpush2.bf16.msra.mxu0 %v2025
        %3178 = vmatprep.subr.bf16.mxu0 %v2022
        %3179 = vmatpush2.bf16.msra.mxu0 %v2021
        %3180 = vmatprep.mubr.bf16.mxu0 %v2881
        %3181 = vmatmul.mubr.bf16.gmra.mxu0 %v2867
        %v3182 = vpop.f32.mrf.mxu0
        %v3183 = vadd.f32 %v3142, %v3182
        %v3184 = vpop.f32.mrf.mxu0
        %v3185 = vadd.f32 %v3144, %v3184
        %v3186 = vpop.f32.mrf.mxu0
        %v3187 = vpop.f32.mrf.mxu0
        %3188 = vdwg.mxu0
        %3189 = vmatprep.subr.bf16.mxu0 %v2082
        %3190 = vmatpush1.bf16.msra.mxu0 %v2081
        %3191 = vmatprep.subr.bf16.mxu0 %v2078
        %3192 = vmatpush1.bf16.msra.mxu0 %v2077
        %3193 = vmatprep.subr.bf16.mxu0 %v2074
        %3194 = vmatpush1.bf16.msra.mxu0 %v2073
        %3195 = vmatprep.subr.bf16.mxu0 %v2070
        %3196 = vmatpush1.bf16.msra.mxu0 %v2069
        %3197 = vmatprep.subr.bf16.mxu0 %v2066
        %3198 = vmatpush1.bf16.msra.mxu0 %v2065
        %3199 = vmatprep.subr.bf16.mxu0 %v2062
        %3200 = vmatpush1.bf16.msra.mxu0 %v2061
        %3201 = vmatprep.subr.bf16.mxu0 %v2058
        %3202 = vmatpush1.bf16.msra.mxu0 %v2057
        %3203 = vmatprep.subr.bf16.mxu0 %v2054
        %3204 = vmatpush1.bf16.msra.mxu0 %v2053
        %3205 = vmatprep.subr.bf16.mxu0 %v2114
        %3206 = vmatpush2.bf16.msra.mxu0 %v2113
        %3207 = vmatprep.subr.bf16.mxu0 %v2110
        %3208 = vmatpush2.bf16.msra.mxu0 %v2109
        %3209 = vmatprep.subr.bf16.mxu0 %v2106
        %3210 = vmatpush2.bf16.msra.mxu0 %v2105
        %3211 = vmatprep.subr.bf16.mxu0 %v2102
        %3212 = vmatpush2.bf16.msra.mxu0 %v2101
        %3213 = vmatprep.subr.bf16.mxu0 %v2098
        %3214 = vmatpush2.bf16.msra.mxu0 %v2097
        %3215 = vmatprep.subr.bf16.mxu0 %v2094
        %3216 = vmatpush2.bf16.msra.mxu0 %v2093
        %3217 = vmatprep.subr.bf16.mxu0 %v2090
        %3218 = vmatpush2.bf16.msra.mxu0 %v2089
        %3219 = vmatprep.subr.bf16.mxu0 %v2086
        %3220 = vmatpush2.bf16.msra.mxu0 %v2085
        %3221 = vmatprep.mubr.bf16.mxu0 %v2885
        %3222 = vmatmul.mubr.bf16.gmra.mxu0 %v2883
        %v3223 = vpop.f32.mrf.mxu0
        %v3224 = vadd.f32 %v3183, %v3223
        %v3225 = vpop.f32.mrf.mxu0
        %v3226 = vadd.f32 %v3185, %v3225
        %v3227 = vpop.f32.mrf.mxu0
        %v3228 = vpop.f32.mrf.mxu0
        %3229 = vdwg.mxu0
        %3230 = vmatprep.subr.bf16.mxu0 %v2146
        %3231 = vmatpush1.bf16.msra.mxu0 %v2145
        %3232 = vmatprep.subr.bf16.mxu0 %v2142
        %3233 = vmatpush1.bf16.msra.mxu0 %v2141
        %3234 = vmatprep.subr.bf16.mxu0 %v2138
        %3235 = vmatpush1.bf16.msra.mxu0 %v2137
        %3236 = vmatprep.subr.bf16.mxu0 %v2134
        %3237 = vmatpush1.bf16.msra.mxu0 %v2133
        %3238 = vmatprep.subr.bf16.mxu0 %v2130
        %3239 = vmatpush1.bf16.msra.mxu0 %v2129
        %3240 = vmatprep.subr.bf16.mxu0 %v2126
        %3241 = vmatpush1.bf16.msra.mxu0 %v2125
        %3242 = vmatprep.subr.bf16.mxu0 %v2122
        %3243 = vmatpush1.bf16.msra.mxu0 %v2121
        %3244 = vmatprep.subr.bf16.mxu0 %v2118
        %3245 = vmatpush1.bf16.msra.mxu0 %v2117
        %3246 = vmatprep.subr.bf16.mxu0 %v2178
        %3247 = vmatpush2.bf16.msra.mxu0 %v2177
        %3248 = vmatprep.subr.bf16.mxu0 %v2174
        %3249 = vmatpush2.bf16.msra.mxu0 %v2173
        %3250 = vmatprep.subr.bf16.mxu0 %v2170
        %3251 = vmatpush2.bf16.msra.mxu0 %v2169
        %3252 = vmatprep.subr.bf16.mxu0 %v2166
        %3253 = vmatpush2.bf16.msra.mxu0 %v2165
        %3254 = vmatprep.subr.bf16.mxu0 %v2162
        %3255 = vmatpush2.bf16.msra.mxu0 %v2161
        %3256 = vmatprep.subr.bf16.mxu0 %v2158
        %3257 = vmatpush2.bf16.msra.mxu0 %v2157
        %3258 = vmatprep.subr.bf16.mxu0 %v2154
        %3259 = vmatpush2.bf16.msra.mxu0 %v2153
        %3260 = vmatprep.subr.bf16.mxu0 %v2150
        %3261 = vmatpush2.bf16.msra.mxu0 %v2149
        %3262 = vmatprep.mubr.bf16.mxu0 %v2923
        %3263 = vmatmul.mubr.bf16.gmra.mxu0 %v2909
        %v3264 = vpop.f32.mrf.mxu0
        %v3265 = vadd.f32 %v3224, %v3264
        %v3266 = vpop.f32.mrf.mxu0
        %v3267 = vadd.f32 %v3226, %v3266
        %v3268 = vpop.f32.mrf.mxu0
        %v3269 = vpop.f32.mrf.mxu0
        %3270 = vdwg.mxu0
        %3271 = vmatprep.subr.bf16.mxu0 %v2210
        %3272 = vmatpush1.bf16.msra.mxu0 %v2209
        %3273 = vmatprep.subr.bf16.mxu0 %v2206
        %3274 = vmatpush1.bf16.msra.mxu0 %v2205
        %3275 = vmatprep.subr.bf16.mxu0 %v2202
        %3276 = vmatpush1.bf16.msra.mxu0 %v2201
        %3277 = vmatprep.subr.bf16.mxu0 %v2198
        %3278 = vmatpush1.bf16.msra.mxu0 %v2197
        %3279 = vmatprep.subr.bf16.mxu0 %v2194
        %3280 = vmatpush1.bf16.msra.mxu0 %v2193
        %3281 = vmatprep.subr.bf16.mxu0 %v2190
        %3282 = vmatpush1.bf16.msra.mxu0 %v2189
        %3283 = vmatprep.subr.bf16.mxu0 %v2186
        %3284 = vmatpush1.bf16.msra.mxu0 %v2185
        %3285 = vmatprep.subr.bf16.mxu0 %v2182
        %3286 = vmatpush1.bf16.msra.mxu0 %v2181
        %3287 = vmatprep.subr.bf16.mxu0 %v2242
        %3288 = vmatpush2.bf16.msra.mxu0 %v2241
        %3289 = vmatprep.subr.bf16.mxu0 %v2238
        %3290 = vmatpush2.bf16.msra.mxu0 %v2237
        %3291 = vmatprep.subr.bf16.mxu0 %v2234
        %3292 = vmatpush2.bf16.msra.mxu0 %v2233
        %3293 = vmatprep.subr.bf16.mxu0 %v2230
        %3294 = vmatpush2.bf16.msra.mxu0 %v2229
        %3295 = vmatprep.subr.bf16.mxu0 %v2226
        %3296 = vmatpush2.bf16.msra.mxu0 %v2225
        %3297 = vmatprep.subr.bf16.mxu0 %v2222
        %3298 = vmatpush2.bf16.msra.mxu0 %v2221
        %3299 = vmatprep.subr.bf16.mxu0 %v2218
        %3300 = vmatpush2.bf16.msra.mxu0 %v2217
        %3301 = vmatprep.subr.bf16.mxu0 %v2214
        %3302 = vmatpush2.bf16.msra.mxu0 %v2213
        %3303 = vmatprep.mubr.bf16.mxu0 %v2933
        %3304 = vmatmul.mubr.bf16.gmra.mxu0 %v2931
        %v3305 = vpop.f32.mrf.mxu0
        %v3306 = vadd.f32 %v3265, %v3305
        %v3307 = vpop.f32.mrf.mxu0
        %v3308 = vadd.f32 %v3267, %v3307
        %v3309 = vpop.f32.mrf.mxu0
        %v3310 = vpop.f32.mrf.mxu0
        %3311 = vdwg.mxu0
        %3312 = vmatprep.subr.bf16.mxu0 %v2274
        %3313 = vmatpush1.bf16.msra.mxu0 %v2273
        %3314 = vmatprep.subr.bf16.mxu0 %v2270
        %3315 = vmatpush1.bf16.msra.mxu0 %v2269
        %3316 = vmatprep.subr.bf16.mxu0 %v2266
        %3317 = vmatpush1.bf16.msra.mxu0 %v2265
        %3318 = vmatprep.subr.bf16.mxu0 %v2262
        %3319 = vmatpush1.bf16.msra.mxu0 %v2261
        %3320 = vmatprep.subr.bf16.mxu0 %v2258
        %3321 = vmatpush1.bf16.msra.mxu0 %v2257
        %3322 = vmatprep.subr.bf16.mxu0 %v2254
        %3323 = vmatpush1.bf16.msra.mxu0 %v2253
        %3324 = vmatprep.subr.bf16.mxu0 %v2250
        %3325 = vmatpush1.bf16.msra.mxu0 %v2249
        %3326 = vmatprep.subr.bf16.mxu0 %v2246
        %3327 = vmatpush1.bf16.msra.mxu0 %v2245
        %3328 = vmatprep.subr.bf16.mxu0 %v2306
        %3329 = vmatpush2.bf16.msra.mxu0 %v2305
        %3330 = vmatprep.subr.bf16.mxu0 %v2302
        %3331 = vmatpush2.bf16.msra.mxu0 %v2301
        %3332 = vmatprep.subr.bf16.mxu0 %v2298
        %3333 = vmatpush2.bf16.msra.mxu0 %v2297
        %3334 = vmatprep.subr.bf16.mxu0 %v2294
        %3335 = vmatpush2.bf16.msra.mxu0 %v2293
        %3336 = vmatprep.subr.bf16.mxu0 %v2290
        %3337 = vmatpush2.bf16.msra.mxu0 %v2289
        %3338 = vmatprep.subr.bf16.mxu0 %v2286
        %3339 = vmatpush2.bf16.msra.mxu0 %v2285
        %3340 = vmatprep.subr.bf16.mxu0 %v2282
        %3341 = vmatpush2.bf16.msra.mxu0 %v2281
        %3342 = vmatprep.subr.bf16.mxu0 %v2278
        %3343 = vmatpush2.bf16.msra.mxu0 %v2277
        %3344 = vmatprep.mubr.bf16.mxu0 %v2930
        %3345 = vmatmul.mubr.bf16.gmra.mxu0 %v2916
        %v3346 = vpop.f32.mrf.mxu0
        %v3347 = vadd.f32 %v3306, %v3346
        %v3348 = vpop.f32.mrf.mxu0
        %v3349 = vadd.f32 %v3308, %v3348
        %v3350 = vpop.f32.mrf.mxu0
        %v3351 = vpop.f32.mrf.mxu0
        %3352 = vdwg.mxu0
        %3353 = vmatprep.subr.bf16.mxu0 %v2338
        %3354 = vmatpush1.bf16.msra.mxu0 %v2337
        %3355 = vmatprep.subr.bf16.mxu0 %v2334
        %3356 = vmatpush1.bf16.msra.mxu0 %v2333
        %3357 = vmatprep.subr.bf16.mxu0 %v2330
        %3358 = vmatpush1.bf16.msra.mxu0 %v2329
        %3359 = vmatprep.subr.bf16.mxu0 %v2326
        %3360 = vmatpush1.bf16.msra.mxu0 %v2325
        %3361 = vmatprep.subr.bf16.mxu0 %v2322
        %3362 = vmatpush1.bf16.msra.mxu0 %v2321
        %3363 = vmatprep.subr.bf16.mxu0 %v2318
        %3364 = vmatpush1.bf16.msra.mxu0 %v2317
        %3365 = vmatprep.subr.bf16.mxu0 %v2314
        %3366 = vmatpush1.bf16.msra.mxu0 %v2313
        %3367 = vmatprep.subr.bf16.mxu0 %v2310
        %3368 = vmatpush1.bf16.msra.mxu0 %v2309
        %3369 = vmatprep.subr.bf16.mxu0 %v2370
        %3370 = vmatpush2.bf16.msra.mxu0 %v2369
        %3371 = vmatprep.subr.bf16.mxu0 %v2366
        %3372 = vmatpush2.bf16.msra.mxu0 %v2365
        %3373 = vmatprep.subr.bf16.mxu0 %v2362
        %3374 = vmatpush2.bf16.msra.mxu0 %v2361
        %3375 = vmatprep.subr.bf16.mxu0 %v2358
        %3376 = vmatpush2.bf16.msra.mxu0 %v2357
        %3377 = vmatprep.subr.bf16.mxu0 %v2354
        %3378 = vmatpush2.bf16.msra.mxu0 %v2353
        %3379 = vmatprep.subr.bf16.mxu0 %v2350
        %3380 = vmatpush2.bf16.msra.mxu0 %v2349
        %3381 = vmatprep.subr.bf16.mxu0 %v2346
        %3382 = vmatpush2.bf16.msra.mxu0 %v2345
        %3383 = vmatprep.subr.bf16.mxu0 %v2342
        %3384 = vmatpush2.bf16.msra.mxu0 %v2341
        %3385 = vmatprep.mubr.bf16.mxu0 %v2934
        %3386 = vmatmul.mubr.bf16.gmra.mxu0 %v2932
        %v3387 = vpop.f32.mrf.mxu0
        %v3388 = vadd.f32 %v3347, %v3387
        %v3389 = vpop.f32.mrf.mxu0
        %v3390 = vadd.f32 %v3349, %v3389
        %v3391 = vpop.f32.mrf.mxu0
        %v3392 = vpop.f32.mrf.mxu0
        %3393 = vdwg.mxu0
        %3394 = vmatprep.subr.bf16.mxu0 %v2402
        %3395 = vmatpush1.bf16.msra.mxu0 %v2401
        %3396 = vmatprep.subr.bf16.mxu0 %v2398
        %3397 = vmatpush1.bf16.msra.mxu0 %v2397
        %3398 = vmatprep.subr.bf16.mxu0 %v2394
        %3399 = vmatpush1.bf16.msra.mxu0 %v2393
        %3400 = vmatprep.subr.bf16.mxu0 %v2390
        %3401 = vmatpush1.bf16.msra.mxu0 %v2389
        %3402 = vmatprep.subr.bf16.mxu0 %v2386
        %3403 = vmatpush1.bf16.msra.mxu0 %v2385
        %3404 = vmatprep.subr.bf16.mxu0 %v2382
        %3405 = vmatpush1.bf16.msra.mxu0 %v2381
        %3406 = vmatprep.subr.bf16.mxu0 %v2378
        %3407 = vmatpush1.bf16.msra.mxu0 %v2377
        %3408 = vmatprep.subr.bf16.mxu0 %v2374
        %3409 = vmatpush1.bf16.msra.mxu0 %v2373
        %3410 = vmatprep.subr.bf16.mxu0 %v2434
        %3411 = vmatpush2.bf16.msra.mxu0 %v2433
        %3412 = vmatprep.subr.bf16.mxu0 %v2430
        %3413 = vmatpush2.bf16.msra.mxu0 %v2429
        %3414 = vmatprep.subr.bf16.mxu0 %v2426
        %3415 = vmatpush2.bf16.msra.mxu0 %v2425
        %3416 = vmatprep.subr.bf16.mxu0 %v2422
        %3417 = vmatpush2.bf16.msra.mxu0 %v2421
        %3418 = vmatprep.subr.bf16.mxu0 %v2418
        %3419 = vmatpush2.bf16.msra.mxu0 %v2417
        %3420 = vmatprep.subr.bf16.mxu0 %v2414
        %3421 = vmatpush2.bf16.msra.mxu0 %v2413
        %3422 = vmatprep.subr.bf16.mxu0 %v2410
        %3423 = vmatpush2.bf16.msra.mxu0 %v2409
        %3424 = vmatprep.subr.bf16.mxu0 %v2406
        %3425 = vmatpush2.bf16.msra.mxu0 %v2405
        %3426 = vmatprep.mubr.bf16.mxu0 %v2972
        %3427 = vmatmul.mubr.bf16.gmra.mxu0 %v2958
        %v3428 = vpop.f32.mrf.mxu0
        %v3429 = vadd.f32 %v3388, %v3428
        %v3430 = vpop.f32.mrf.mxu0
        %v3431 = vadd.f32 %v3390, %v3430
        %v3432 = vpop.f32.mrf.mxu0
        %v3433 = vpop.f32.mrf.mxu0
        %3434 = vdwg.mxu0
        %3435 = vmatprep.subr.bf16.mxu0 %v2466
        %3436 = vmatpush1.bf16.msra.mxu0 %v2465
        %3437 = vmatprep.subr.bf16.mxu0 %v2462
        %3438 = vmatpush1.bf16.msra.mxu0 %v2461
        %3439 = vmatprep.subr.bf16.mxu0 %v2458
        %3440 = vmatpush1.bf16.msra.mxu0 %v2457
        %3441 = vmatprep.subr.bf16.mxu0 %v2454
        %3442 = vmatpush1.bf16.msra.mxu0 %v2453
        %3443 = vmatprep.subr.bf16.mxu0 %v2450
        %3444 = vmatpush1.bf16.msra.mxu0 %v2449
        %3445 = vmatprep.subr.bf16.mxu0 %v2446
        %3446 = vmatpush1.bf16.msra.mxu0 %v2445
        %3447 = vmatprep.subr.bf16.mxu0 %v2442
        %3448 = vmatpush1.bf16.msra.mxu0 %v2441
        %3449 = vmatprep.subr.bf16.mxu0 %v2438
        %3450 = vmatpush1.bf16.msra.mxu0 %v2437
        %3451 = vmatprep.subr.bf16.mxu0 %v2498
        %3452 = vmatpush2.bf16.msra.mxu0 %v2497
        %3453 = vmatprep.subr.bf16.mxu0 %v2494
        %3454 = vmatpush2.bf16.msra.mxu0 %v2493
        %3455 = vmatprep.subr.bf16.mxu0 %v2490
        %3456 = vmatpush2.bf16.msra.mxu0 %v2489
        %3457 = vmatprep.subr.bf16.mxu0 %v2486
        %3458 = vmatpush2.bf16.msra.mxu0 %v2485
        %3459 = vmatprep.subr.bf16.mxu0 %v2482
        %3460 = vmatpush2.bf16.msra.mxu0 %v2481
        %3461 = vmatprep.subr.bf16.mxu0 %v2478
        %3462 = vmatpush2.bf16.msra.mxu0 %v2477
        %3463 = vmatprep.subr.bf16.mxu0 %v2474
        %3464 = vmatpush2.bf16.msra.mxu0 %v2473
        %3465 = vmatprep.subr.bf16.mxu0 %v2470
        %3466 = vmatpush2.bf16.msra.mxu0 %v2469
        %3467 = vmatprep.mubr.bf16.mxu0 %v2982
        %3468 = vmatmul.mubr.bf16.gmra.mxu0 %v2980
        %v3469 = vpop.f32.mrf.mxu0
        %v3470 = vadd.f32 %v3429, %v3469
        %v3471 = vpop.f32.mrf.mxu0
        %v3472 = vadd.f32 %v3431, %v3471
        %v3473 = vpop.f32.mrf.mxu0
        %v3474 = vpop.f32.mrf.mxu0
        %3475 = vdwg.mxu0
        %3476 = vmatprep.subr.bf16.mxu0 %v2530
        %3477 = vmatpush1.bf16.msra.mxu0 %v2529
        %3478 = vmatprep.subr.bf16.mxu0 %v2526
        %3479 = vmatpush1.bf16.msra.mxu0 %v2525
        %3480 = vmatprep.subr.bf16.mxu0 %v2522
        %3481 = vmatpush1.bf16.msra.mxu0 %v2521
        %3482 = vmatprep.subr.bf16.mxu0 %v2518
        %3483 = vmatpush1.bf16.msra.mxu0 %v2517
        %3484 = vmatprep.subr.bf16.mxu0 %v2514
        %3485 = vmatpush1.bf16.msra.mxu0 %v2513
        %3486 = vmatprep.subr.bf16.mxu0 %v2510
        %3487 = vmatpush1.bf16.msra.mxu0 %v2509
        %3488 = vmatprep.subr.bf16.mxu0 %v2506
        %3489 = vmatpush1.bf16.msra.mxu0 %v2505
        %3490 = vmatprep.subr.bf16.mxu0 %v2502
        %3491 = vmatpush1.bf16.msra.mxu0 %v2501
        %3492 = vmatprep.subr.bf16.mxu0 %v2562
        %3493 = vmatpush2.bf16.msra.mxu0 %v2561
        %3494 = vmatprep.subr.bf16.mxu0 %v2558
        %3495 = vmatpush2.bf16.msra.mxu0 %v2557
        %3496 = vmatprep.subr.bf16.mxu0 %v2554
        %3497 = vmatpush2.bf16.msra.mxu0 %v2553
        %3498 = vmatprep.subr.bf16.mxu0 %v2550
        %3499 = vmatpush2.bf16.msra.mxu0 %v2549
        %3500 = vmatprep.subr.bf16.mxu0 %v2546
        %3501 = vmatpush2.bf16.msra.mxu0 %v2545
        %3502 = vmatprep.subr.bf16.mxu0 %v2542
        %3503 = vmatpush2.bf16.msra.mxu0 %v2541
        %3504 = vmatprep.subr.bf16.mxu0 %v2538
        %3505 = vmatpush2.bf16.msra.mxu0 %v2537
        %3506 = vmatprep.subr.bf16.mxu0 %v2534
        %3507 = vmatpush2.bf16.msra.mxu0 %v2533
        %3508 = vmatprep.mubr.bf16.mxu0 %v2979
        %3509 = vmatmul.mubr.bf16.gmra.mxu0 %v2965
        %v3510 = vpop.f32.mrf.mxu0
        %v3511 = vadd.f32 %v3470, %v3510
        %v3512 = vpop.f32.mrf.mxu0
        %v3513 = vadd.f32 %v3472, %v3512
        %v3514 = vpop.f32.mrf.mxu0
        %v3515 = vpop.f32.mrf.mxu0
        %3516 = vdwg.mxu0
        %3517 = vmatprep.subr.bf16.mxu0 %v2594
        %3518 = vmatpush1.bf16.msra.mxu0 %v2593
        %3519 = vmatprep.subr.bf16.mxu0 %v2590
        %3520 = vmatpush1.bf16.msra.mxu0 %v2589
        %3521 = vmatprep.subr.bf16.mxu0 %v2586
        %3522 = vmatpush1.bf16.msra.mxu0 %v2585
        %3523 = vmatprep.subr.bf16.mxu0 %v2582
        %3524 = vmatpush1.bf16.msra.mxu0 %v2581
        %3525 = vmatprep.subr.bf16.mxu0 %v2578
        %3526 = vmatpush1.bf16.msra.mxu0 %v2577
        %3527 = vmatprep.subr.bf16.mxu0 %v2574
        %3528 = vmatpush1.bf16.msra.mxu0 %v2573
        %3529 = vmatprep.subr.bf16.mxu0 %v2570
        %3530 = vmatpush1.bf16.msra.mxu0 %v2569
        %3531 = vmatprep.subr.bf16.mxu0 %v2566
        %3532 = vmatpush1.bf16.msra.mxu0 %v2565
        %3533 = vmatprep.subr.bf16.mxu0 %v2626
        %3534 = vmatpush2.bf16.msra.mxu0 %v2625
        %3535 = vmatprep.subr.bf16.mxu0 %v2622
        %3536 = vmatpush2.bf16.msra.mxu0 %v2621
        %3537 = vmatprep.subr.bf16.mxu0 %v2618
        %3538 = vmatpush2.bf16.msra.mxu0 %v2617
        %3539 = vmatprep.subr.bf16.mxu0 %v2614
        %3540 = vmatpush2.bf16.msra.mxu0 %v2613
        %3541 = vmatprep.subr.bf16.mxu0 %v2610
        %3542 = vmatpush2.bf16.msra.mxu0 %v2609
        %3543 = vmatprep.subr.bf16.mxu0 %v2606
        %3544 = vmatpush2.bf16.msra.mxu0 %v2605
        %3545 = vmatprep.subr.bf16.mxu0 %v2602
        %3546 = vmatpush2.bf16.msra.mxu0 %v2601
        %3547 = vmatprep.subr.bf16.mxu0 %v2598
        %3548 = vmatpush2.bf16.msra.mxu0 %v2597
        %3549 = vmatprep.mubr.bf16.mxu0 %v2983
        %3550 = vmatmul.mubr.bf16.gmra.mxu0 %v2981
        %v3551 = vpop.f32.mrf.mxu0
        %v3552 = vadd.f32 %v3511, %v3551
        %v3553 = vpop.f32.mrf.mxu0
        %v3554 = vadd.f32 %v3513, %v3553
        %v3555 = vpop.f32.mrf.mxu0
        %v3556 = vpop.f32.mrf.mxu0
        %3557 = vdwg.mxu0
        %3558 = vmatprep.subr.bf16.mxu0 %v2658
        %3559 = vmatpush1.bf16.msra.mxu0 %v2657
        %3560 = vmatprep.subr.bf16.mxu0 %v2654
        %3561 = vmatpush1.bf16.msra.mxu0 %v2653
        %3562 = vmatprep.subr.bf16.mxu0 %v2650
        %3563 = vmatpush1.bf16.msra.mxu0 %v2649
        %3564 = vmatprep.subr.bf16.mxu0 %v2646
        %3565 = vmatpush1.bf16.msra.mxu0 %v2645
        %3566 = vmatprep.subr.bf16.mxu0 %v2642
        %3567 = vmatpush1.bf16.msra.mxu0 %v2641
        %3568 = vmatprep.subr.bf16.mxu0 %v2638
        %3569 = vmatpush1.bf16.msra.mxu0 %v2637
        %3570 = vmatprep.subr.bf16.mxu0 %v2634
        %3571 = vmatpush1.bf16.msra.mxu0 %v2633
        %3572 = vmatprep.subr.bf16.mxu0 %v2630
        %3573 = vmatpush1.bf16.msra.mxu0 %v2629
        %3574 = vmatprep.subr.bf16.mxu0 %v2690
        %3575 = vmatpush2.bf16.msra.mxu0 %v2689
        %3576 = vmatprep.subr.bf16.mxu0 %v2686
        %3577 = vmatpush2.bf16.msra.mxu0 %v2685
        %3578 = vmatprep.subr.bf16.mxu0 %v2682
        %3579 = vmatpush2.bf16.msra.mxu0 %v2681
        %3580 = vmatprep.subr.bf16.mxu0 %v2678
        %3581 = vmatpush2.bf16.msra.mxu0 %v2677
        %3582 = vmatprep.subr.bf16.mxu0 %v2674
        %3583 = vmatpush2.bf16.msra.mxu0 %v2673
        %3584 = vmatprep.subr.bf16.mxu0 %v2670
        %3585 = vmatpush2.bf16.msra.mxu0 %v2669
        %3586 = vmatprep.subr.bf16.mxu0 %v2666
        %3587 = vmatpush2.bf16.msra.mxu0 %v2665
        %3588 = vmatprep.subr.bf16.mxu0 %v2662
        %3589 = vmatpush2.bf16.msra.mxu0 %v2661
        %3590 = vmatprep.mubr.bf16.mxu0 %v3021
        %3591 = vmatmul.mubr.bf16.gmra.mxu0 %v3007
        %v3592 = vpop.f32.mrf.mxu0
        %v3593 = vadd.f32 %v3552, %v3592
        %v3594 = vpop.f32.mrf.mxu0
        %v3595 = vadd.f32 %v3554, %v3594
        %v3596 = vpop.f32.mrf.mxu0
        %v3597 = vpop.f32.mrf.mxu0
        %3598 = vdwg.mxu0
        %3599 = vmatprep.subr.bf16.mxu0 %v2722
        %3600 = vmatpush1.bf16.msra.mxu0 %v2721
        %3601 = vmatprep.subr.bf16.mxu0 %v2718
        %3602 = vmatpush1.bf16.msra.mxu0 %v2717
        %3603 = vmatprep.subr.bf16.mxu0 %v2714
        %3604 = vmatpush1.bf16.msra.mxu0 %v2713
        %3605 = vmatprep.subr.bf16.mxu0 %v2710
        %3606 = vmatpush1.bf16.msra.mxu0 %v2709
        %3607 = vmatprep.subr.bf16.mxu0 %v2706
        %3608 = vmatpush1.bf16.msra.mxu0 %v2705
        %3609 = vmatprep.subr.bf16.mxu0 %v2702
        %3610 = vmatpush1.bf16.msra.mxu0 %v2701
        %3611 = vmatprep.subr.bf16.mxu0 %v2698
        %3612 = vmatpush1.bf16.msra.mxu0 %v2697
        %3613 = vmatprep.subr.bf16.mxu0 %v2694
        %3614 = vmatpush1.bf16.msra.mxu0 %v2693
        %3615 = vmatprep.subr.bf16.mxu0 %v2754
        %3616 = vmatpush2.bf16.msra.mxu0 %v2753
        %3617 = vmatprep.subr.bf16.mxu0 %v2750
        %3618 = vmatpush2.bf16.msra.mxu0 %v2749
        %3619 = vmatprep.subr.bf16.mxu0 %v2746
        %3620 = vmatpush2.bf16.msra.mxu0 %v2745
        %3621 = vmatprep.subr.bf16.mxu0 %v2742
        %3622 = vmatpush2.bf16.msra.mxu0 %v2741
        %3623 = vmatprep.subr.bf16.mxu0 %v2738
        %3624 = vmatpush2.bf16.msra.mxu0 %v2737
        %3625 = vmatprep.subr.bf16.mxu0 %v2734
        %3626 = vmatpush2.bf16.msra.mxu0 %v2733
        %3627 = vmatprep.subr.bf16.mxu0 %v2730
        %3628 = vmatpush2.bf16.msra.mxu0 %v2729
        %3629 = vmatprep.subr.bf16.mxu0 %v2726
        %3630 = vmatpush2.bf16.msra.mxu0 %v2725
        %3631 = vmatprep.mubr.bf16.mxu0 %v3031
        %3632 = vmatmul.mubr.bf16.gmra.mxu0 %v3029
        %v3633 = vpop.f32.mrf.mxu0
        %v3634 = vadd.f32 %v3593, %v3633
        %v3635 = vpop.f32.mrf.mxu0
        %v3636 = vadd.f32 %v3595, %v3635
        %v3637 = vpop.f32.mrf.mxu0
        %v3638 = vpop.f32.mrf.mxu0
        %3639 = vdwg.mxu0
        %3640 = vmatprep.subr.bf16.mxu0 %v2786
        %3641 = vmatpush1.bf16.msra.mxu0 %v2785
        %3642 = vmatprep.subr.bf16.mxu0 %v2782
        %3643 = vmatpush1.bf16.msra.mxu0 %v2781
        %3644 = vmatprep.subr.bf16.mxu0 %v2778
        %3645 = vmatpush1.bf16.msra.mxu0 %v2777
        %3646 = vmatprep.subr.bf16.mxu0 %v2774
        %3647 = vmatpush1.bf16.msra.mxu0 %v2773
        %3648 = vmatprep.subr.bf16.mxu0 %v2770
        %3649 = vmatpush1.bf16.msra.mxu0 %v2769
        %3650 = vmatprep.subr.bf16.mxu0 %v2766
        %3651 = vmatpush1.bf16.msra.mxu0 %v2765
        %3652 = vmatprep.subr.bf16.mxu0 %v2762
        %3653 = vmatpush1.bf16.msra.mxu0 %v2761
        %3654 = vmatprep.subr.bf16.mxu0 %v2758
        %3655 = vmatpush1.bf16.msra.mxu0 %v2757
        %3656 = vmatprep.subr.bf16.mxu0 %v2818
        %3657 = vmatpush2.bf16.msra.mxu0 %v2817
        %3658 = vmatprep.subr.bf16.mxu0 %v2814
        %3659 = vmatpush2.bf16.msra.mxu0 %v2813
        %3660 = vmatprep.subr.bf16.mxu0 %v2810
        %3661 = vmatpush2.bf16.msra.mxu0 %v2809
        %3662 = vmatprep.subr.bf16.mxu0 %v2806
        %3663 = vmatpush2.bf16.msra.mxu0 %v2805
        %3664 = vmatprep.subr.bf16.mxu0 %v2802
        %3665 = vmatpush2.bf16.msra.mxu0 %v2801
        %3666 = vmatprep.subr.bf16.mxu0 %v2798
        %3667 = vmatpush2.bf16.msra.mxu0 %v2797
        %3668 = vmatprep.subr.bf16.mxu0 %v2794
        %3669 = vmatpush2.bf16.msra.mxu0 %v2793
        %3670 = vmatprep.subr.bf16.mxu0 %v2790
        %3671 = vmatpush2.bf16.msra.mxu0 %v2789
        %3672 = vmatprep.mubr.bf16.mxu0 %v3028
        %3673 = vmatmul.mubr.bf16.gmra.mxu0 %v3014
        %v3674 = vpop.f32.mrf.mxu0
        %v3675 = vadd.f32 %v3634, %v3674
        %v3676 = vpop.f32.mrf.mxu0
        %v3677 = vadd.f32 %v3636, %v3676
        %v3678 = vpop.f32.mrf.mxu0
        %v3679 = vpop.f32.mrf.mxu0
        %3680 = vdwg.mxu0
        %3681 = vmatprep.subr.bf16.mxu0 0
        %3682 = vmatpush1.bf16.msra.mxu0 0
        %3683 = vmatprep.subr.bf16.mxu0 0
        %3684 = vmatpush1.bf16.msra.mxu0 0
        %3685 = vmatprep.subr.bf16.mxu0 0
        %3686 = vmatpush1.bf16.msra.mxu0 0
        %3687 = vmatprep.subr.bf16.mxu0 0
        %3688 = vmatpush1.bf16.msra.mxu0 0
        %3689 = vmatprep.subr.bf16.mxu0 0
        %3690 = vmatpush1.bf16.msra.mxu0 0
        %3691 = vmatprep.subr.bf16.mxu0 0
        %3692 = vmatpush1.bf16.msra.mxu0 0
        %3693 = vmatprep.subr.bf16.mxu0 %v2826
        %3694 = vmatpush1.bf16.msra.mxu0 %v2825
        %3695 = vmatprep.subr.bf16.mxu0 %v2822
        %3696 = vmatpush1.bf16.msra.mxu0 %v2821
        %3697 = vmatprep.subr.bf16.mxu0 0
        %3698 = vmatpush2.bf16.msra.mxu0 0
        %3699 = vmatprep.subr.bf16.mxu0 0
        %3700 = vmatpush2.bf16.msra.mxu0 0
        %3701 = vmatprep.subr.bf16.mxu0 0
        %3702 = vmatpush2.bf16.msra.mxu0 0
        %3703 = vmatprep.subr.bf16.mxu0 0
        %3704 = vmatpush2.bf16.msra.mxu0 0
        %3705 = vmatprep.subr.bf16.mxu0 0
        %3706 = vmatpush2.bf16.msra.mxu0 0
        %3707 = vmatprep.subr.bf16.mxu0 0
        %3708 = vmatpush2.bf16.msra.mxu0 0
        %3709 = vmatprep.subr.bf16.mxu0 0
        %3710 = vmatpush2.bf16.msra.mxu0 0
        %3711 = vmatprep.subr.bf16.mxu0 0
        %3712 = vmatpush2.bf16.msra.mxu0 0
        %3713 = vmatprep.mubr.bf16.mxu0 0
        %3714 = vmatmul.mubr.bf16.gmra.mxu0 %v3064
        %v3715 = vpop.f32.mrf.mxu0
        %v3716 = vadd.f32 %v3675, %v3715
        %v3717 = vpop.f32.mrf.mxu0
        %v3718 = vadd.f32 %v3677, %v3717
        %v3719 = vpop.f32.mrf.mxu0
        %v3720 = vpop.f32.mrf.mxu0
        %3721 = vdwg.mxu0
        %3722 = vmatprep.subr.bf16.mxu0 %v1892
        %3723 = vmatpush1.bf16.msra.mxu0 %v1891
        %3724 = vmatprep.subr.bf16.mxu0 %v1888
        %3725 = vmatpush1.bf16.msra.mxu0 %v1887
        %3726 = vmatprep.subr.bf16.mxu0 %v1884
        %3727 = vmatpush1.bf16.msra.mxu0 %v1883
        %3728 = vmatprep.subr.bf16.mxu0 %v1880
        %3729 = vmatpush1.bf16.msra.mxu0 %v1879
        %3730 = vmatprep.subr.bf16.mxu0 %v1876
        %3731 = vmatpush1.bf16.msra.mxu0 %v1875
        %3732 = vmatprep.subr.bf16.mxu0 %v1872
        %3733 = vmatpush1.bf16.msra.mxu0 %v1871
        %3734 = vmatprep.subr.bf16.mxu0 %v1868
        %3735 = vmatpush1.bf16.msra.mxu0 %v1867
        %3736 = vmatprep.subr.bf16.mxu0 %v1864
        %3737 = vmatpush1.bf16.msra.mxu0 %v1863
        %3738 = vmatprep.subr.bf16.mxu0 %v1924
        %3739 = vmatpush2.bf16.msra.mxu0 %v1923
        %3740 = vmatprep.subr.bf16.mxu0 %v1920
        %3741 = vmatpush2.bf16.msra.mxu0 %v1919
        %3742 = vmatprep.subr.bf16.mxu0 %v1916
        %3743 = vmatpush2.bf16.msra.mxu0 %v1915
        %3744 = vmatprep.subr.bf16.mxu0 %v1912
        %3745 = vmatpush2.bf16.msra.mxu0 %v1911
        %3746 = vmatprep.subr.bf16.mxu0 %v1908
        %3747 = vmatpush2.bf16.msra.mxu0 %v1907
        %3748 = vmatprep.subr.bf16.mxu0 %v1904
        %3749 = vmatpush2.bf16.msra.mxu0 %v1903
        %3750 = vmatprep.subr.bf16.mxu0 %v1900
        %3751 = vmatpush2.bf16.msra.mxu0 %v1899
        %3752 = vmatprep.subr.bf16.mxu0 %v1896
        %3753 = vmatpush2.bf16.msra.mxu0 %v1895
        %3754 = vmatprep.mubr.bf16.mxu0 %v2874
        %3755 = vmatmul.mubr.bf16.gmra.mxu0 %v2860
        %v3756 = vpop.f32.mrf.mxu0
        %v3757 = vadd.f32 0.0, %v3756
        %v3758 = vpop.f32.mrf.mxu0
        %v3759 = vadd.f32 0.0, %v3758
        %v3760 = vpop.f32.mrf.mxu0
        %v3761 = vpop.f32.mrf.mxu0
        %3762 = vdwg.mxu0
        %3763 = vmatprep.subr.bf16.mxu0 %v1956
        %3764 = vmatpush1.bf16.msra.mxu0 %v1955
        %3765 = vmatprep.subr.bf16.mxu0 %v1952
        %3766 = vmatpush1.bf16.msra.mxu0 %v1951
        %3767 = vmatprep.subr.bf16.mxu0 %v1948
        %3768 = vmatpush1.bf16.msra.mxu0 %v1947
        %3769 = vmatprep.subr.bf16.mxu0 %v1944
        %3770 = vmatpush1.bf16.msra.mxu0 %v1943
        %3771 = vmatprep.subr.bf16.mxu0 %v1940
        %3772 = vmatpush1.bf16.msra.mxu0 %v1939
        %3773 = vmatprep.subr.bf16.mxu0 %v1936
        %3774 = vmatpush1.bf16.msra.mxu0 %v1935
        %3775 = vmatprep.subr.bf16.mxu0 %v1932
        %3776 = vmatpush1.bf16.msra.mxu0 %v1931
        %3777 = vmatprep.subr.bf16.mxu0 %v1928
        %3778 = vmatpush1.bf16.msra.mxu0 %v1927
        %3779 = vmatprep.subr.bf16.mxu0 %v1988
        %3780 = vmatpush2.bf16.msra.mxu0 %v1987
        %3781 = vmatprep.subr.bf16.mxu0 %v1984
        %3782 = vmatpush2.bf16.msra.mxu0 %v1983
        %3783 = vmatprep.subr.bf16.mxu0 %v1980
        %3784 = vmatpush2.bf16.msra.mxu0 %v1979
        %3785 = vmatprep.subr.bf16.mxu0 %v1976
        %3786 = vmatpush2.bf16.msra.mxu0 %v1975
        %3787 = vmatprep.subr.bf16.mxu0 %v1972
        %3788 = vmatpush2.bf16.msra.mxu0 %v1971
        %3789 = vmatprep.subr.bf16.mxu0 %v1968
        %3790 = vmatpush2.bf16.msra.mxu0 %v1967
        %3791 = vmatprep.subr.bf16.mxu0 %v1964
        %3792 = vmatpush2.bf16.msra.mxu0 %v1963
        %3793 = vmatprep.subr.bf16.mxu0 %v1960
        %3794 = vmatpush2.bf16.msra.mxu0 %v1959
        %3795 = vmatprep.mubr.bf16.mxu0 %v2884
        %3796 = vmatmul.mubr.bf16.gmra.mxu0 %v2882
        %v3797 = vpop.f32.mrf.mxu0
        %v3798 = vadd.f32 %v3757, %v3797
        %v3799 = vpop.f32.mrf.mxu0
        %v3800 = vadd.f32 %v3759, %v3799
        %v3801 = vpop.f32.mrf.mxu0
        %v3802 = vpop.f32.mrf.mxu0
        %3803 = vdwg.mxu0
        %3804 = vmatprep.subr.bf16.mxu0 %v2020
        %3805 = vmatpush1.bf16.msra.mxu0 %v2019
        %3806 = vmatprep.subr.bf16.mxu0 %v2016
        %3807 = vmatpush1.bf16.msra.mxu0 %v2015
        %3808 = vmatprep.subr.bf16.mxu0 %v2012
        %3809 = vmatpush1.bf16.msra.mxu0 %v2011
        %3810 = vmatprep.subr.bf16.mxu0 %v2008
        %3811 = vmatpush1.bf16.msra.mxu0 %v2007
        %3812 = vmatprep.subr.bf16.mxu0 %v2004
        %3813 = vmatpush1.bf16.msra.mxu0 %v2003
        %3814 = vmatprep.subr.bf16.mxu0 %v2000
        %3815 = vmatpush1.bf16.msra.mxu0 %v1999
        %3816 = vmatprep.subr.bf16.mxu0 %v1996
        %3817 = vmatpush1.bf16.msra.mxu0 %v1995
        %3818 = vmatprep.subr.bf16.mxu0 %v1992
        %3819 = vmatpush1.bf16.msra.mxu0 %v1991
        %3820 = vmatprep.subr.bf16.mxu0 %v2052
        %3821 = vmatpush2.bf16.msra.mxu0 %v2051
        %3822 = vmatprep.subr.bf16.mxu0 %v2048
        %3823 = vmatpush2.bf16.msra.mxu0 %v2047
        %3824 = vmatprep.subr.bf16.mxu0 %v2044
        %3825 = vmatpush2.bf16.msra.mxu0 %v2043
        %3826 = vmatprep.subr.bf16.mxu0 %v2040
        %3827 = vmatpush2.bf16.msra.mxu0 %v2039
        %3828 = vmatprep.subr.bf16.mxu0 %v2036
        %3829 = vmatpush2.bf16.msra.mxu0 %v2035
        %3830 = vmatprep.subr.bf16.mxu0 %v2032
        %3831 = vmatpush2.bf16.msra.mxu0 %v2031
        %3832 = vmatprep.subr.bf16.mxu0 %v2028
        %3833 = vmatpush2.bf16.msra.mxu0 %v2027
        %3834 = vmatprep.subr.bf16.mxu0 %v2024
        %3835 = vmatpush2.bf16.msra.mxu0 %v2023
        %3836 = vmatprep.mubr.bf16.mxu0 %v2881
        %3837 = vmatmul.mubr.bf16.gmra.mxu0 %v2867
        %v3838 = vpop.f32.mrf.mxu0
        %v3839 = vadd.f32 %v3798, %v3838
        %v3840 = vpop.f32.mrf.mxu0
        %v3841 = vadd.f32 %v3800, %v3840
        %v3842 = vpop.f32.mrf.mxu0
        %v3843 = vpop.f32.mrf.mxu0
        %3844 = vdwg.mxu0
        %3845 = vmatprep.subr.bf16.mxu0 %v2084
        %3846 = vmatpush1.bf16.msra.mxu0 %v2083
        %3847 = vmatprep.subr.bf16.mxu0 %v2080
        %3848 = vmatpush1.bf16.msra.mxu0 %v2079
        %3849 = vmatprep.subr.bf16.mxu0 %v2076
        %3850 = vmatpush1.bf16.msra.mxu0 %v2075
        %3851 = vmatprep.subr.bf16.mxu0 %v2072
        %3852 = vmatpush1.bf16.msra.mxu0 %v2071
        %3853 = vmatprep.subr.bf16.mxu0 %v2068
        %3854 = vmatpush1.bf16.msra.mxu0 %v2067
        %3855 = vmatprep.subr.bf16.mxu0 %v2064
        %3856 = vmatpush1.bf16.msra.mxu0 %v2063
        %3857 = vmatprep.subr.bf16.mxu0 %v2060
        %3858 = vmatpush1.bf16.msra.mxu0 %v2059
        %3859 = vmatprep.subr.bf16.mxu0 %v2056
        %3860 = vmatpush1.bf16.msra.mxu0 %v2055
        %3861 = vmatprep.subr.bf16.mxu0 %v2116
        %3862 = vmatpush2.bf16.msra.mxu0 %v2115
        %3863 = vmatprep.subr.bf16.mxu0 %v2112
        %3864 = vmatpush2.bf16.msra.mxu0 %v2111
        %3865 = vmatprep.subr.bf16.mxu0 %v2108
        %3866 = vmatpush2.bf16.msra.mxu0 %v2107
        %3867 = vmatprep.subr.bf16.mxu0 %v2104
        %3868 = vmatpush2.bf16.msra.mxu0 %v2103
        %3869 = vmatprep.subr.bf16.mxu0 %v2100
        %3870 = vmatpush2.bf16.msra.mxu0 %v2099
        %3871 = vmatprep.subr.bf16.mxu0 %v2096
        %3872 = vmatpush2.bf16.msra.mxu0 %v2095
        %3873 = vmatprep.subr.bf16.mxu0 %v2092
        %3874 = vmatpush2.bf16.msra.mxu0 %v2091
        %3875 = vmatprep.subr.bf16.mxu0 %v2088
        %3876 = vmatpush2.bf16.msra.mxu0 %v2087
        %3877 = vmatprep.mubr.bf16.mxu0 %v2885
        %3878 = vmatmul.mubr.bf16.gmra.mxu0 %v2883
        %v3879 = vpop.f32.mrf.mxu0
        %v3880 = vadd.f32 %v3839, %v3879
        %v3881 = vpop.f32.mrf.mxu0
        %v3882 = vadd.f32 %v3841, %v3881
        %v3883 = vpop.f32.mrf.mxu0
        %v3884 = vpop.f32.mrf.mxu0
        %3885 = vdwg.mxu0
        %3886 = vmatprep.subr.bf16.mxu0 %v2148
        %3887 = vmatpush1.bf16.msra.mxu0 %v2147
        %3888 = vmatprep.subr.bf16.mxu0 %v2144
        %3889 = vmatpush1.bf16.msra.mxu0 %v2143
        %3890 = vmatprep.subr.bf16.mxu0 %v2140
        %3891 = vmatpush1.bf16.msra.mxu0 %v2139
        %3892 = vmatprep.subr.bf16.mxu0 %v2136
        %3893 = vmatpush1.bf16.msra.mxu0 %v2135
        %3894 = vmatprep.subr.bf16.mxu0 %v2132
        %3895 = vmatpush1.bf16.msra.mxu0 %v2131
        %3896 = vmatprep.subr.bf16.mxu0 %v2128
        %3897 = vmatpush1.bf16.msra.mxu0 %v2127
        %3898 = vmatprep.subr.bf16.mxu0 %v2124
        %3899 = vmatpush1.bf16.msra.mxu0 %v2123
        %3900 = vmatprep.subr.bf16.mxu0 %v2120
        %3901 = vmatpush1.bf16.msra.mxu0 %v2119
        %3902 = vmatprep.subr.bf16.mxu0 %v2180
        %3903 = vmatpush2.bf16.msra.mxu0 %v2179
        %3904 = vmatprep.subr.bf16.mxu0 %v2176
        %3905 = vmatpush2.bf16.msra.mxu0 %v2175
        %3906 = vmatprep.subr.bf16.mxu0 %v2172
        %3907 = vmatpush2.bf16.msra.mxu0 %v2171
        %3908 = vmatprep.subr.bf16.mxu0 %v2168
        %3909 = vmatpush2.bf16.msra.mxu0 %v2167
        %3910 = vmatprep.subr.bf16.mxu0 %v2164
        %3911 = vmatpush2.bf16.msra.mxu0 %v2163
        %3912 = vmatprep.subr.bf16.mxu0 %v2160
        %3913 = vmatpush2.bf16.msra.mxu0 %v2159
        %3914 = vmatprep.subr.bf16.mxu0 %v2156
        %3915 = vmatpush2.bf16.msra.mxu0 %v2155
        %3916 = vmatprep.subr.bf16.mxu0 %v2152
        %3917 = vmatpush2.bf16.msra.mxu0 %v2151
        %3918 = vmatprep.mubr.bf16.mxu0 %v2923
        %3919 = vmatmul.mubr.bf16.gmra.mxu0 %v2909
        %v3920 = vpop.f32.mrf.mxu0
        %v3921 = vadd.f32 %v3880, %v3920
        %v3922 = vpop.f32.mrf.mxu0
        %v3923 = vadd.f32 %v3882, %v3922
        %v3924 = vpop.f32.mrf.mxu0
        %v3925 = vpop.f32.mrf.mxu0
        %3926 = vdwg.mxu0
        %3927 = vmatprep.subr.bf16.mxu0 %v2212
        %3928 = vmatpush1.bf16.msra.mxu0 %v2211
        %3929 = vmatprep.subr.bf16.mxu0 %v2208
        %3930 = vmatpush1.bf16.msra.mxu0 %v2207
        %3931 = vmatprep.subr.bf16.mxu0 %v2204
        %3932 = vmatpush1.bf16.msra.mxu0 %v2203
        %3933 = vmatprep.subr.bf16.mxu0 %v2200
        %3934 = vmatpush1.bf16.msra.mxu0 %v2199
        %3935 = vmatprep.subr.bf16.mxu0 %v2196
        %3936 = vmatpush1.bf16.msra.mxu0 %v2195
        %3937 = vmatprep.subr.bf16.mxu0 %v2192
        %3938 = vmatpush1.bf16.msra.mxu0 %v2191
        %3939 = vmatprep.subr.bf16.mxu0 %v2188
        %3940 = vmatpush1.bf16.msra.mxu0 %v2187
        %3941 = vmatprep.subr.bf16.mxu0 %v2184
        %3942 = vmatpush1.bf16.msra.mxu0 %v2183
        %3943 = vmatprep.subr.bf16.mxu0 %v2244
        %3944 = vmatpush2.bf16.msra.mxu0 %v2243
        %3945 = vmatprep.subr.bf16.mxu0 %v2240
        %3946 = vmatpush2.bf16.msra.mxu0 %v2239
        %3947 = vmatprep.subr.bf16.mxu0 %v2236
        %3948 = vmatpush2.bf16.msra.mxu0 %v2235
        %3949 = vmatprep.subr.bf16.mxu0 %v2232
        %3950 = vmatpush2.bf16.msra.mxu0 %v2231
        %3951 = vmatprep.subr.bf16.mxu0 %v2228
        %3952 = vmatpush2.bf16.msra.mxu0 %v2227
        %3953 = vmatprep.subr.bf16.mxu0 %v2224
        %3954 = vmatpush2.bf16.msra.mxu0 %v2223
        %3955 = vmatprep.subr.bf16.mxu0 %v2220
        %3956 = vmatpush2.bf16.msra.mxu0 %v2219
        %3957 = vmatprep.subr.bf16.mxu0 %v2216
        %3958 = vmatpush2.bf16.msra.mxu0 %v2215
        %3959 = vmatprep.mubr.bf16.mxu0 %v2933
        %3960 = vmatmul.mubr.bf16.gmra.mxu0 %v2931
        %v3961 = vpop.f32.mrf.mxu0
        %v3962 = vadd.f32 %v3921, %v3961
        %v3963 = vpop.f32.mrf.mxu0
        %v3964 = vadd.f32 %v3923, %v3963
        %v3965 = vpop.f32.mrf.mxu0
        %v3966 = vpop.f32.mrf.mxu0
        %3967 = vdwg.mxu0
        %3968 = vmatprep.subr.bf16.mxu0 %v2276
        %3969 = vmatpush1.bf16.msra.mxu0 %v2275
        %3970 = vmatprep.subr.bf16.mxu0 %v2272
        %3971 = vmatpush1.bf16.msra.mxu0 %v2271
        %3972 = vmatprep.subr.bf16.mxu0 %v2268
        %3973 = vmatpush1.bf16.msra.mxu0 %v2267
        %3974 = vmatprep.subr.bf16.mxu0 %v2264
        %3975 = vmatpush1.bf16.msra.mxu0 %v2263
        %3976 = vmatprep.subr.bf16.mxu0 %v2260
        %3977 = vmatpush1.bf16.msra.mxu0 %v2259
        %3978 = vmatprep.subr.bf16.mxu0 %v2256
        %3979 = vmatpush1.bf16.msra.mxu0 %v2255
        %3980 = vmatprep.subr.bf16.mxu0 %v2252
        %3981 = vmatpush1.bf16.msra.mxu0 %v2251
        %3982 = vmatprep.subr.bf16.mxu0 %v2248
        %3983 = vmatpush1.bf16.msra.mxu0 %v2247
        %3984 = vmatprep.subr.bf16.mxu0 %v2308
        %3985 = vmatpush2.bf16.msra.mxu0 %v2307
        %3986 = vmatprep.subr.bf16.mxu0 %v2304
        %3987 = vmatpush2.bf16.msra.mxu0 %v2303
        %3988 = vmatprep.subr.bf16.mxu0 %v2300
        %3989 = vmatpush2.bf16.msra.mxu0 %v2299
        %3990 = vmatprep.subr.bf16.mxu0 %v2296
        %3991 = vmatpush2.bf16.msra.mxu0 %v2295
        %3992 = vmatprep.subr.bf16.mxu0 %v2292
        %3993 = vmatpush2.bf16.msra.mxu0 %v2291
        %3994 = vmatprep.subr.bf16.mxu0 %v2288
        %3995 = vmatpush2.bf16.msra.mxu0 %v2287
        %3996 = vmatprep.subr.bf16.mxu0 %v2284
        %3997 = vmatpush2.bf16.msra.mxu0 %v2283
        %3998 = vmatprep.subr.bf16.mxu0 %v2280
        %3999 = vmatpush2.bf16.msra.mxu0 %v2279
        %4000 = vmatprep.mubr.bf16.mxu0 %v2930
        %4001 = vmatmul.mubr.bf16.gmra.mxu0 %v2916
        %v4002 = vpop.f32.mrf.mxu0
        %v4003 = vadd.f32 %v3962, %v4002
        %v4004 = vpop.f32.mrf.mxu0
        %v4005 = vadd.f32 %v3964, %v4004
        %v4006 = vpop.f32.mrf.mxu0
        %v4007 = vpop.f32.mrf.mxu0
        %4008 = vdwg.mxu0
        %4009 = vmatprep.subr.bf16.mxu0 %v2340
        %4010 = vmatpush1.bf16.msra.mxu0 %v2339
        %4011 = vmatprep.subr.bf16.mxu0 %v2336
        %4012 = vmatpush1.bf16.msra.mxu0 %v2335
        %4013 = vmatprep.subr.bf16.mxu0 %v2332
        %4014 = vmatpush1.bf16.msra.mxu0 %v2331
        %4015 = vmatprep.subr.bf16.mxu0 %v2328
        %4016 = vmatpush1.bf16.msra.mxu0 %v2327
        %4017 = vmatprep.subr.bf16.mxu0 %v2324
        %4018 = vmatpush1.bf16.msra.mxu0 %v2323
        %4019 = vmatprep.subr.bf16.mxu0 %v2320
        %4020 = vmatpush1.bf16.msra.mxu0 %v2319
        %4021 = vmatprep.subr.bf16.mxu0 %v2316
        %4022 = vmatpush1.bf16.msra.mxu0 %v2315
        %4023 = vmatprep.subr.bf16.mxu0 %v2312
        %4024 = vmatpush1.bf16.msra.mxu0 %v2311
        %4025 = vmatprep.subr.bf16.mxu0 %v2372
        %4026 = vmatpush2.bf16.msra.mxu0 %v2371
        %4027 = vmatprep.subr.bf16.mxu0 %v2368
        %4028 = vmatpush2.bf16.msra.mxu0 %v2367
        %4029 = vmatprep.subr.bf16.mxu0 %v2364
        %4030 = vmatpush2.bf16.msra.mxu0 %v2363
        %4031 = vmatprep.subr.bf16.mxu0 %v2360
        %4032 = vmatpush2.bf16.msra.mxu0 %v2359
        %4033 = vmatprep.subr.bf16.mxu0 %v2356
        %4034 = vmatpush2.bf16.msra.mxu0 %v2355
        %4035 = vmatprep.subr.bf16.mxu0 %v2352
        %4036 = vmatpush2.bf16.msra.mxu0 %v2351
        %4037 = vmatprep.subr.bf16.mxu0 %v2348
        %4038 = vmatpush2.bf16.msra.mxu0 %v2347
        %4039 = vmatprep.subr.bf16.mxu0 %v2344
        %4040 = vmatpush2.bf16.msra.mxu0 %v2343
        %4041 = vmatprep.mubr.bf16.mxu0 %v2934
        %4042 = vmatmul.mubr.bf16.gmra.mxu0 %v2932
        %v4043 = vpop.f32.mrf.mxu0
        %v4044 = vadd.f32 %v4003, %v4043
        %v4045 = vpop.f32.mrf.mxu0
        %v4046 = vadd.f32 %v4005, %v4045
        %v4047 = vpop.f32.mrf.mxu0
        %v4048 = vpop.f32.mrf.mxu0
        %4049 = vdwg.mxu0
        %4050 = vmatprep.subr.bf16.mxu0 %v2404
        %4051 = vmatpush1.bf16.msra.mxu0 %v2403
        %4052 = vmatprep.subr.bf16.mxu0 %v2400
        %4053 = vmatpush1.bf16.msra.mxu0 %v2399
        %4054 = vmatprep.subr.bf16.mxu0 %v2396
        %4055 = vmatpush1.bf16.msra.mxu0 %v2395
        %4056 = vmatprep.subr.bf16.mxu0 %v2392
        %4057 = vmatpush1.bf16.msra.mxu0 %v2391
        %4058 = vmatprep.subr.bf16.mxu0 %v2388
        %4059 = vmatpush1.bf16.msra.mxu0 %v2387
        %4060 = vmatprep.subr.bf16.mxu0 %v2384
        %4061 = vmatpush1.bf16.msra.mxu0 %v2383
        %4062 = vmatprep.subr.bf16.mxu0 %v2380
        %4063 = vmatpush1.bf16.msra.mxu0 %v2379
        %4064 = vmatprep.subr.bf16.mxu0 %v2376
        %4065 = vmatpush1.bf16.msra.mxu0 %v2375
        %4066 = vmatprep.subr.bf16.mxu0 %v2436
        %4067 = vmatpush2.bf16.msra.mxu0 %v2435
        %4068 = vmatprep.subr.bf16.mxu0 %v2432
        %4069 = vmatpush2.bf16.msra.mxu0 %v2431
        %4070 = vmatprep.subr.bf16.mxu0 %v2428
        %4071 = vmatpush2.bf16.msra.mxu0 %v2427
        %4072 = vmatprep.subr.bf16.mxu0 %v2424
        %4073 = vmatpush2.bf16.msra.mxu0 %v2423
        %4074 = vmatprep.subr.bf16.mxu0 %v2420
        %4075 = vmatpush2.bf16.msra.mxu0 %v2419
        %4076 = vmatprep.subr.bf16.mxu0 %v2416
        %4077 = vmatpush2.bf16.msra.mxu0 %v2415
        %4078 = vmatprep.subr.bf16.mxu0 %v2412
        %4079 = vmatpush2.bf16.msra.mxu0 %v2411
        %4080 = vmatprep.subr.bf16.mxu0 %v2408
        %4081 = vmatpush2.bf16.msra.mxu0 %v2407
        %4082 = vmatprep.mubr.bf16.mxu0 %v2972
        %4083 = vmatmul.mubr.bf16.gmra.mxu0 %v2958
        %v4084 = vpop.f32.mrf.mxu0
        %v4085 = vadd.f32 %v4044, %v4084
        %v4086 = vpop.f32.mrf.mxu0
        %v4087 = vadd.f32 %v4046, %v4086
        %v4088 = vpop.f32.mrf.mxu0
        %v4089 = vpop.f32.mrf.mxu0
        %4090 = vdwg.mxu0
        %4091 = vmatprep.subr.bf16.mxu0 %v2468
        %4092 = vmatpush1.bf16.msra.mxu0 %v2467
        %4093 = vmatprep.subr.bf16.mxu0 %v2464
        %4094 = vmatpush1.bf16.msra.mxu0 %v2463
        %4095 = vmatprep.subr.bf16.mxu0 %v2460
        %4096 = vmatpush1.bf16.msra.mxu0 %v2459
        %4097 = vmatprep.subr.bf16.mxu0 %v2456
        %4098 = vmatpush1.bf16.msra.mxu0 %v2455
        %4099 = vmatprep.subr.bf16.mxu0 %v2452
        %4100 = vmatpush1.bf16.msra.mxu0 %v2451
        %4101 = vmatprep.subr.bf16.mxu0 %v2448
        %4102 = vmatpush1.bf16.msra.mxu0 %v2447
        %4103 = vmatprep.subr.bf16.mxu0 %v2444
        %4104 = vmatpush1.bf16.msra.mxu0 %v2443
        %4105 = vmatprep.subr.bf16.mxu0 %v2440
        %4106 = vmatpush1.bf16.msra.mxu0 %v2439
        %4107 = vmatprep.subr.bf16.mxu0 %v2500
        %4108 = vmatpush2.bf16.msra.mxu0 %v2499
        %4109 = vmatprep.subr.bf16.mxu0 %v2496
        %4110 = vmatpush2.bf16.msra.mxu0 %v2495
        %4111 = vmatprep.subr.bf16.mxu0 %v2492
        %4112 = vmatpush2.bf16.msra.mxu0 %v2491
        %4113 = vmatprep.subr.bf16.mxu0 %v2488
        %4114 = vmatpush2.bf16.msra.mxu0 %v2487
        %4115 = vmatprep.subr.bf16.mxu0 %v2484
        %4116 = vmatpush2.bf16.msra.mxu0 %v2483
        %4117 = vmatprep.subr.bf16.mxu0 %v2480
        %4118 = vmatpush2.bf16.msra.mxu0 %v2479
        %4119 = vmatprep.subr.bf16.mxu0 %v2476
        %4120 = vmatpush2.bf16.msra.mxu0 %v2475
        %4121 = vmatprep.subr.bf16.mxu0 %v2472
        %4122 = vmatpush2.bf16.msra.mxu0 %v2471
        %4123 = vmatprep.mubr.bf16.mxu0 %v2982
        %4124 = vmatmul.mubr.bf16.gmra.mxu0 %v2980
        %v4125 = vpop.f32.mrf.mxu0
        %v4126 = vadd.f32 %v4085, %v4125
        %v4127 = vpop.f32.mrf.mxu0
        %v4128 = vadd.f32 %v4087, %v4127
        %v4129 = vpop.f32.mrf.mxu0
        %v4130 = vpop.f32.mrf.mxu0
        %4131 = vdwg.mxu0
        %4132 = vmatprep.subr.bf16.mxu0 %v2532
        %4133 = vmatpush1.bf16.msra.mxu0 %v2531
        %4134 = vmatprep.subr.bf16.mxu0 %v2528
        %4135 = vmatpush1.bf16.msra.mxu0 %v2527
        %4136 = vmatprep.subr.bf16.mxu0 %v2524
        %4137 = vmatpush1.bf16.msra.mxu0 %v2523
        %4138 = vmatprep.subr.bf16.mxu0 %v2520
        %4139 = vmatpush1.bf16.msra.mxu0 %v2519
        %4140 = vmatprep.subr.bf16.mxu0 %v2516
        %4141 = vmatpush1.bf16.msra.mxu0 %v2515
        %4142 = vmatprep.subr.bf16.mxu0 %v2512
        %4143 = vmatpush1.bf16.msra.mxu0 %v2511
        %4144 = vmatprep.subr.bf16.mxu0 %v2508
        %4145 = vmatpush1.bf16.msra.mxu0 %v2507
        %4146 = vmatprep.subr.bf16.mxu0 %v2504
        %4147 = vmatpush1.bf16.msra.mxu0 %v2503
        %4148 = vmatprep.subr.bf16.mxu0 %v2564
        %4149 = vmatpush2.bf16.msra.mxu0 %v2563
        %4150 = vmatprep.subr.bf16.mxu0 %v2560
        %4151 = vmatpush2.bf16.msra.mxu0 %v2559
        %4152 = vmatprep.subr.bf16.mxu0 %v2556
        %4153 = vmatpush2.bf16.msra.mxu0 %v2555
        %4154 = vmatprep.subr.bf16.mxu0 %v2552
        %4155 = vmatpush2.bf16.msra.mxu0 %v2551
        %4156 = vmatprep.subr.bf16.mxu0 %v2548
        %4157 = vmatpush2.bf16.msra.mxu0 %v2547
        %4158 = vmatprep.subr.bf16.mxu0 %v2544
        %4159 = vmatpush2.bf16.msra.mxu0 %v2543
        %4160 = vmatprep.subr.bf16.mxu0 %v2540
        %4161 = vmatpush2.bf16.msra.mxu0 %v2539
        %4162 = vmatprep.subr.bf16.mxu0 %v2536
        %4163 = vmatpush2.bf16.msra.mxu0 %v2535
        %4164 = vmatprep.mubr.bf16.mxu0 %v2979
        %4165 = vmatmul.mubr.bf16.gmra.mxu0 %v2965
        %v4166 = vpop.f32.mrf.mxu0
        %v4167 = vadd.f32 %v4126, %v4166
        %v4168 = vpop.f32.mrf.mxu0
        %v4169 = vadd.f32 %v4128, %v4168
        %v4170 = vpop.f32.mrf.mxu0
        %v4171 = vpop.f32.mrf.mxu0
        %4172 = vdwg.mxu0
        %4173 = vmatprep.subr.bf16.mxu0 %v2596
        %4174 = vmatpush1.bf16.msra.mxu0 %v2595
        %4175 = vmatprep.subr.bf16.mxu0 %v2592
        %4176 = vmatpush1.bf16.msra.mxu0 %v2591
        %4177 = vmatprep.subr.bf16.mxu0 %v2588
        %4178 = vmatpush1.bf16.msra.mxu0 %v2587
        %4179 = vmatprep.subr.bf16.mxu0 %v2584
        %4180 = vmatpush1.bf16.msra.mxu0 %v2583
        %4181 = vmatprep.subr.bf16.mxu0 %v2580
        %4182 = vmatpush1.bf16.msra.mxu0 %v2579
        %4183 = vmatprep.subr.bf16.mxu0 %v2576
        %4184 = vmatpush1.bf16.msra.mxu0 %v2575
        %4185 = vmatprep.subr.bf16.mxu0 %v2572
        %4186 = vmatpush1.bf16.msra.mxu0 %v2571
        %4187 = vmatprep.subr.bf16.mxu0 %v2568
        %4188 = vmatpush1.bf16.msra.mxu0 %v2567
        %4189 = vmatprep.subr.bf16.mxu0 %v2628
        %4190 = vmatpush2.bf16.msra.mxu0 %v2627
        %4191 = vmatprep.subr.bf16.mxu0 %v2624
        %4192 = vmatpush2.bf16.msra.mxu0 %v2623
        %4193 = vmatprep.subr.bf16.mxu0 %v2620
        %4194 = vmatpush2.bf16.msra.mxu0 %v2619
        %4195 = vmatprep.subr.bf16.mxu0 %v2616
        %4196 = vmatpush2.bf16.msra.mxu0 %v2615
        %4197 = vmatprep.subr.bf16.mxu0 %v2612
        %4198 = vmatpush2.bf16.msra.mxu0 %v2611
        %4199 = vmatprep.subr.bf16.mxu0 %v2608
        %4200 = vmatpush2.bf16.msra.mxu0 %v2607
        %4201 = vmatprep.subr.bf16.mxu0 %v2604
        %4202 = vmatpush2.bf16.msra.mxu0 %v2603
        %4203 = vmatprep.subr.bf16.mxu0 %v2600
        %4204 = vmatpush2.bf16.msra.mxu0 %v2599
        %4205 = vmatprep.mubr.bf16.mxu0 %v2983
        %4206 = vmatmul.mubr.bf16.gmra.mxu0 %v2981
        %v4207 = vpop.f32.mrf.mxu0
        %v4208 = vadd.f32 %v4167, %v4207
        %v4209 = vpop.f32.mrf.mxu0
        %v4210 = vadd.f32 %v4169, %v4209
        %v4211 = vpop.f32.mrf.mxu0
        %v4212 = vpop.f32.mrf.mxu0
        %4213 = vdwg.mxu0
        %4214 = vmatprep.subr.bf16.mxu0 %v2660
        %4215 = vmatpush1.bf16.msra.mxu0 %v2659
        %4216 = vmatprep.subr.bf16.mxu0 %v2656
        %4217 = vmatpush1.bf16.msra.mxu0 %v2655
        %4218 = vmatprep.subr.bf16.mxu0 %v2652
        %4219 = vmatpush1.bf16.msra.mxu0 %v2651
        %4220 = vmatprep.subr.bf16.mxu0 %v2648
        %4221 = vmatpush1.bf16.msra.mxu0 %v2647
        %4222 = vmatprep.subr.bf16.mxu0 %v2644
        %4223 = vmatpush1.bf16.msra.mxu0 %v2643
        %4224 = vmatprep.subr.bf16.mxu0 %v2640
        %4225 = vmatpush1.bf16.msra.mxu0 %v2639
        %4226 = vmatprep.subr.bf16.mxu0 %v2636
        %4227 = vmatpush1.bf16.msra.mxu0 %v2635
        %4228 = vmatprep.subr.bf16.mxu0 %v2632
        %4229 = vmatpush1.bf16.msra.mxu0 %v2631
        %4230 = vmatprep.subr.bf16.mxu0 %v2692
        %4231 = vmatpush2.bf16.msra.mxu0 %v2691
        %4232 = vmatprep.subr.bf16.mxu0 %v2688
        %4233 = vmatpush2.bf16.msra.mxu0 %v2687
        %4234 = vmatprep.subr.bf16.mxu0 %v2684
        %4235 = vmatpush2.bf16.msra.mxu0 %v2683
        %4236 = vmatprep.subr.bf16.mxu0 %v2680
        %4237 = vmatpush2.bf16.msra.mxu0 %v2679
        %4238 = vmatprep.subr.bf16.mxu0 %v2676
        %4239 = vmatpush2.bf16.msra.mxu0 %v2675
        %4240 = vmatprep.subr.bf16.mxu0 %v2672
        %4241 = vmatpush2.bf16.msra.mxu0 %v2671
        %4242 = vmatprep.subr.bf16.mxu0 %v2668
        %4243 = vmatpush2.bf16.msra.mxu0 %v2667
        %4244 = vmatprep.subr.bf16.mxu0 %v2664
        %4245 = vmatpush2.bf16.msra.mxu0 %v2663
        %4246 = vmatprep.mubr.bf16.mxu0 %v3021
        %4247 = vmatmul.mubr.bf16.gmra.mxu0 %v3007
        %v4248 = vpop.f32.mrf.mxu0
        %v4249 = vadd.f32 %v4208, %v4248
        %v4250 = vpop.f32.mrf.mxu0
        %v4251 = vadd.f32 %v4210, %v4250
        %v4252 = vpop.f32.mrf.mxu0
        %v4253 = vpop.f32.mrf.mxu0
        %4254 = vdwg.mxu0
        %4255 = vmatprep.subr.bf16.mxu0 %v2724
        %4256 = vmatpush1.bf16.msra.mxu0 %v2723
        %4257 = vmatprep.subr.bf16.mxu0 %v2720
        %4258 = vmatpush1.bf16.msra.mxu0 %v2719
        %4259 = vmatprep.subr.bf16.mxu0 %v2716
        %4260 = vmatpush1.bf16.msra.mxu0 %v2715
        %4261 = vmatprep.subr.bf16.mxu0 %v2712
        %4262 = vmatpush1.bf16.msra.mxu0 %v2711
        %4263 = vmatprep.subr.bf16.mxu0 %v2708
        %4264 = vmatpush1.bf16.msra.mxu0 %v2707
        %4265 = vmatprep.subr.bf16.mxu0 %v2704
        %4266 = vmatpush1.bf16.msra.mxu0 %v2703
        %4267 = vmatprep.subr.bf16.mxu0 %v2700
        %4268 = vmatpush1.bf16.msra.mxu0 %v2699
        %4269 = vmatprep.subr.bf16.mxu0 %v2696
        %4270 = vmatpush1.bf16.msra.mxu0 %v2695
        %4271 = vmatprep.subr.bf16.mxu0 %v2756
        %4272 = vmatpush2.bf16.msra.mxu0 %v2755
        %4273 = vmatprep.subr.bf16.mxu0 %v2752
        %4274 = vmatpush2.bf16.msra.mxu0 %v2751
        %4275 = vmatprep.subr.bf16.mxu0 %v2748
        %4276 = vmatpush2.bf16.msra.mxu0 %v2747
        %4277 = vmatprep.subr.bf16.mxu0 %v2744
        %4278 = vmatpush2.bf16.msra.mxu0 %v2743
        %4279 = vmatprep.subr.bf16.mxu0 %v2740
        %4280 = vmatpush2.bf16.msra.mxu0 %v2739
        %4281 = vmatprep.subr.bf16.mxu0 %v2736
        %4282 = vmatpush2.bf16.msra.mxu0 %v2735
        %4283 = vmatprep.subr.bf16.mxu0 %v2732
        %4284 = vmatpush2.bf16.msra.mxu0 %v2731
        %4285 = vmatprep.subr.bf16.mxu0 %v2728
        %4286 = vmatpush2.bf16.msra.mxu0 %v2727
        %4287 = vmatprep.mubr.bf16.mxu0 %v3031
        %4288 = vmatmul.mubr.bf16.gmra.mxu0 %v3029
        %v4289 = vpop.f32.mrf.mxu0
        %v4290 = vadd.f32 %v4249, %v4289
        %v4291 = vpop.f32.mrf.mxu0
        %v4292 = vadd.f32 %v4251, %v4291
        %v4293 = vpop.f32.mrf.mxu0
        %v4294 = vpop.f32.mrf.mxu0
        %4295 = vdwg.mxu0
        %4296 = vmatprep.subr.bf16.mxu0 %v2788
        %4297 = vmatpush1.bf16.msra.mxu0 %v2787
        %4298 = vmatprep.subr.bf16.mxu0 %v2784
        %4299 = vmatpush1.bf16.msra.mxu0 %v2783
        %4300 = vmatprep.subr.bf16.mxu0 %v2780
        %4301 = vmatpush1.bf16.msra.mxu0 %v2779
        %4302 = vmatprep.subr.bf16.mxu0 %v2776
        %4303 = vmatpush1.bf16.msra.mxu0 %v2775
        %4304 = vmatprep.subr.bf16.mxu0 %v2772
        %4305 = vmatpush1.bf16.msra.mxu0 %v2771
        %4306 = vmatprep.subr.bf16.mxu0 %v2768
        %4307 = vmatpush1.bf16.msra.mxu0 %v2767
        %4308 = vmatprep.subr.bf16.mxu0 %v2764
        %4309 = vmatpush1.bf16.msra.mxu0 %v2763
        %4310 = vmatprep.subr.bf16.mxu0 %v2760
        %4311 = vmatpush1.bf16.msra.mxu0 %v2759
        %4312 = vmatprep.subr.bf16.mxu0 %v2820
        %4313 = vmatpush2.bf16.msra.mxu0 %v2819
        %4314 = vmatprep.subr.bf16.mxu0 %v2816
        %4315 = vmatpush2.bf16.msra.mxu0 %v2815
        %4316 = vmatprep.subr.bf16.mxu0 %v2812
        %4317 = vmatpush2.bf16.msra.mxu0 %v2811
        %4318 = vmatprep.subr.bf16.mxu0 %v2808
        %4319 = vmatpush2.bf16.msra.mxu0 %v2807
        %4320 = vmatprep.subr.bf16.mxu0 %v2804
        %4321 = vmatpush2.bf16.msra.mxu0 %v2803
        %4322 = vmatprep.subr.bf16.mxu0 %v2800
        %4323 = vmatpush2.bf16.msra.mxu0 %v2799
        %4324 = vmatprep.subr.bf16.mxu0 %v2796
        %4325 = vmatpush2.bf16.msra.mxu0 %v2795
        %4326 = vmatprep.subr.bf16.mxu0 %v2792
        %4327 = vmatpush2.bf16.msra.mxu0 %v2791
        %4328 = vmatprep.mubr.bf16.mxu0 %v3028
        %4329 = vmatmul.mubr.bf16.gmra.mxu0 %v3014
        %v4330 = vpop.f32.mrf.mxu0
        %v4331 = vadd.f32 %v4290, %v4330
        %v4332 = vpop.f32.mrf.mxu0
        %v4333 = vadd.f32 %v4292, %v4332
        %v4334 = vpop.f32.mrf.mxu0
        %v4335 = vpop.f32.mrf.mxu0
        %4336 = vdwg.mxu0
        %4337 = vmatprep.subr.bf16.mxu0 0
        %4338 = vmatpush1.bf16.msra.mxu0 0
        %4339 = vmatprep.subr.bf16.mxu0 0
        %4340 = vmatpush1.bf16.msra.mxu0 0
        %4341 = vmatprep.subr.bf16.mxu0 0
        %4342 = vmatpush1.bf16.msra.mxu0 0
        %4343 = vmatprep.subr.bf16.mxu0 0
        %4344 = vmatpush1.bf16.msra.mxu0 0
        %4345 = vmatprep.subr.bf16.mxu0 0
        %4346 = vmatpush1.bf16.msra.mxu0 0
        %4347 = vmatprep.subr.bf16.mxu0 0
        %4348 = vmatpush1.bf16.msra.mxu0 0
        %4349 = vmatprep.subr.bf16.mxu0 %v2828
        %4350 = vmatpush1.bf16.msra.mxu0 %v2827
        %4351 = vmatprep.subr.bf16.mxu0 %v2824
        %4352 = vmatpush1.bf16.msra.mxu0 %v2823
        %4353 = vmatprep.subr.bf16.mxu0 0
        %4354 = vmatpush2.bf16.msra.mxu0 0
        %4355 = vmatprep.subr.bf16.mxu0 0
        %4356 = vmatpush2.bf16.msra.mxu0 0
        %4357 = vmatprep.subr.bf16.mxu0 0
        %4358 = vmatpush2.bf16.msra.mxu0 0
        %4359 = vmatprep.subr.bf16.mxu0 0
        %4360 = vmatpush2.bf16.msra.mxu0 0
        %4361 = vmatprep.subr.bf16.mxu0 0
        %4362 = vmatpush2.bf16.msra.mxu0 0
        %4363 = vmatprep.subr.bf16.mxu0 0
        %4364 = vmatpush2.bf16.msra.mxu0 0
        %4365 = vmatprep.subr.bf16.mxu0 0
        %4366 = vmatpush2.bf16.msra.mxu0 0
        %4367 = vmatprep.subr.bf16.mxu0 0
        %4368 = vmatpush2.bf16.msra.mxu0 0
        %4369 = vmatprep.mubr.bf16.mxu0 0
        %4370 = vmatmul.mubr.bf16.gmra.mxu0 %v3064
        %v4371 = vpop.f32.mrf.mxu0
        %v4372 = vadd.f32 %v4331, %v4371
        %v4373 = vpop.f32.mrf.mxu0
        %v4374 = vadd.f32 %v4333, %v4373
        %v4375 = vpop.f32.mrf.mxu0
        %v4376 = vpop.f32.mrf.mxu0
        %4377 = vdwg.mxu0
        %v4378 = vld [vmem:[%s1356] sm:$0xf]
        %v4380 = vlaneseq
        %v4381 = vshrl.u32 %v4380, 7
        %v4382 = vsub.s32 0, %v4381
        %v4383 = vrot.slane %v4378, %v4382
        %v4384 = vlaneseq
        %v4385 = vshrl.u32 %v4384, 7
        %v4386 = vsub.s32 1, %v4385
        %v4387 = vrot.slane %v4378, %v4386
        %v4388 = vlaneseq
        %v4389 = vshrl.u32 %v4388, 7
        %v4390 = vsub.s32 2, %v4389
        %v4391 = vrot.slane %v4378, %v4390
        %v4392 = vlaneseq
        %v4393 = vshrl.u32 %v4392, 7
        %v4394 = vsub.s32 3, %v4393
        %v4395 = vrot.slane %v4378, %v4394
        %v4400 = vmul.f32 %v3716, %v4383
        %v4401 = vmul.f32 %v3718, %v4387
        %v4402 = vmul.f32 %v4372, %v4391
        %v4403 = vmul.f32 %v4374, %v4395
        %v4404 = vld [vmem:[%s1361] sm:$0xf]
        %v4406 = vlaneseq
        %v4407 = vshrl.u32 %v4406, 7
        %v4408 = vsub.s32 0, %v4407
        %v4409 = vrot.slane %v4404, %v4408
        %v4410 = vlaneseq
        %v4411 = vshrl.u32 %v4410, 7
        %v4412 = vsub.s32 1, %v4411
        %v4413 = vrot.slane %v4404, %v4412
        %v4414 = vlaneseq
        %v4415 = vshrl.u32 %v4414, 7
        %v4416 = vsub.s32 2, %v4415
        %v4417 = vrot.slane %v4404, %v4416
        %v4418 = vlaneseq
        %v4419 = vshrl.u32 %v4418, 7
        %v4420 = vsub.s32 3, %v4419
        %v4421 = vrot.slane %v4404, %v4420
        %v4426 = vadd.f32 %v4400, %v4409
        %v4427 = vadd.f32 %v4401, %v4413
        %v4428 = vadd.f32 %v4402, %v4417
        %v4429 = vadd.f32 %v4403, %v4421
        %v4430 = vld [vmem:[%s1368] sm:$0xff]
        %v4431 = vld [vmem:[%s1368 + $0x8] sm:$0xff]
        %v4432 = vld [vmem:[%s1368 + $0x10] sm:$0xff]
        %v4433 = vld [vmem:[%s1368 + $0x18] sm:$0xff]
        %v4434 = vld [vmem:[%s1368 + $0x20] sm:$0xff]
        %v4435 = vld [vmem:[%s1368 + $0x28] sm:$0xff]
        %v4436 = vld [vmem:[%s1368 + $0x30] sm:$0xff]
        %v4437 = vld [vmem:[%s1368 + $0x38] sm:$0xff]
        %v4438 = vld [vmem:[%s1368 + $0x40] sm:$0xff]
        %v4439 = vld [vmem:[%s1368 + $0x48] sm:$0xff]
        %v4440 = vld [vmem:[%s1368 + $0x50] sm:$0xff]
        %v4441 = vld [vmem:[%s1368 + $0x58] sm:$0xff]
        %v4442 = vld [vmem:[%s1368 + $0x60] sm:$0xff]
        %v4443 = vld [vmem:[%s1368 + $0x68] sm:$0xff]
        %v4444 = vld [vmem:[%s1368 + $0x70] sm:$0xff]
        %v4445 = vld [vmem:[%s1368 + $0x78] sm:$0xff]
        %v4446 = vld [vmem:[%s1368 + $0x80] sm:$0xff]
        %v4447 = vld [vmem:[%s1368 + $0x88] sm:$0xff]
        %v4448 = vld [vmem:[%s1368 + $0x90] sm:$0xff]
        %v4449 = vld [vmem:[%s1368 + $0x98] sm:$0xff]
        %v4450 = vld [vmem:[%s1368 + $0xa0] sm:$0xff]
        %v4451 = vld [vmem:[%s1368 + $0xa8] sm:$0xff]
        %v4452 = vld [vmem:[%s1368 + $0xb0] sm:$0xff]
        %v4453 = vld [vmem:[%s1368 + $0xb8] sm:$0xff]
        %v4454 = vld [vmem:[%s1368 + $0xc0] sm:$0xff]
        %v4455 = vld [vmem:[%s1368 + $0xc8] sm:$0xff]
        %v4456 = vld [vmem:[%s1368 + $0xd0] sm:$0xff]
        %v4457 = vld [vmem:[%s1368 + $0xd8] sm:$0xff]
        %v4458 = vld [vmem:[%s1368 + $0xe0] sm:$0xff]
        %v4459 = vld [vmem:[%s1368 + $0xe8] sm:$0xff]
        %v4460 = vld [vmem:[%s1368 + $0xf0] sm:$0xff]
        %v4461 = vld [vmem:[%s1368 + $0xf8] sm:$0xff]
        %v4462 = vld [vmem:[%s1368 + $0x100] sm:$0xff]
        %v4463 = vld [vmem:[%s1368 + $0x108] sm:$0xff]
        %v4464 = vld [vmem:[%s1368 + $0x110] sm:$0xff]
        %v4465 = vld [vmem:[%s1368 + $0x118] sm:$0xff]
        %v4466 = vld [vmem:[%s1368 + $0x120] sm:$0xff]
        %v4467 = vld [vmem:[%s1368 + $0x128] sm:$0xff]
        %v4468 = vld [vmem:[%s1368 + $0x130] sm:$0xff]
        %v4469 = vld [vmem:[%s1368 + $0x138] sm:$0xff]
        %v4470 = vld [vmem:[%s1368 + $0x140] sm:$0xff]
        %v4471 = vld [vmem:[%s1368 + $0x148] sm:$0xff]
        %v4472 = vld [vmem:[%s1368 + $0x150] sm:$0xff]
        %v4473 = vld [vmem:[%s1368 + $0x158] sm:$0xff]
        %v4474 = vld [vmem:[%s1368 + $0x160] sm:$0xff]
        %v4475 = vld [vmem:[%s1368 + $0x168] sm:$0xff]
        %v4476 = vld [vmem:[%s1368 + $0x170] sm:$0xff]
        %v4477 = vld [vmem:[%s1368 + $0x178] sm:$0xff]
        %v4478 = vld [vmem:[%s1368 + $0x180] sm:$0xff]
        %v4479 = vld [vmem:[%s1368 + $0x188] sm:$0xff]
        %v4480 = vld [vmem:[%s1368 + $0x190] sm:$0xff]
        %v4481 = vld [vmem:[%s1368 + $0x198] sm:$0xff]
        %v4482 = vld [vmem:[%s1368 + $0x1a0] sm:$0xff]
        %v4483 = vld [vmem:[%s1368 + $0x1a8] sm:$0xff]
        %v4484 = vld [vmem:[%s1368 + $0x1b0] sm:$0xff]
        %v4485 = vld [vmem:[%s1368 + $0x1b8] sm:$0xff]
        %v4486 = vld [vmem:[%s1368 + $0x1c0] sm:$0xff]
        %v4487 = vld [vmem:[%s1368 + $0x1c8] sm:$0xff]
        %v4488 = vld [vmem:[%s1368 + $0x1d0] sm:$0xff]
        %v4489 = vld [vmem:[%s1368 + $0x1d8] sm:$0xff]
        %v4490 = vld [vmem:[%s1368 + $0x1e0] sm:$0xff]
        %v4491 = vld [vmem:[%s1368 + $0x1e8] sm:$0xff]
        %v4492 = vld [vmem:[%s1368 + $0x1f0] sm:$0xff]
        %v4493 = vld [vmem:[%s1368 + $0x1f8] sm:$0xff]
        %v4494 = vld [vmem:[%s1368 + $0x200] sm:$0xff]
        %v4495 = vld [vmem:[%s1368 + $0x208] sm:$0xff]
        %v4496 = vld [vmem:[%s1368 + $0x210] sm:$0xff]
        %v4497 = vld [vmem:[%s1368 + $0x218] sm:$0xff]
        %v4498 = vld [vmem:[%s1368 + $0x220] sm:$0xff]
        %v4499 = vld [vmem:[%s1368 + $0x228] sm:$0xff]
        %v4500 = vld [vmem:[%s1368 + $0x230] sm:$0xff]
        %v4501 = vld [vmem:[%s1368 + $0x238] sm:$0xff]
        %v4502 = vld [vmem:[%s1368 + $0x240] sm:$0xff]
        %v4503 = vld [vmem:[%s1368 + $0x248] sm:$0xff]
        %v4504 = vld [vmem:[%s1368 + $0x250] sm:$0xff]
        %v4505 = vld [vmem:[%s1368 + $0x258] sm:$0xff]
        %v4506 = vld [vmem:[%s1368 + $0x260] sm:$0xff]
        %v4507 = vld [vmem:[%s1368 + $0x268] sm:$0xff]
        %v4508 = vld [vmem:[%s1368 + $0x270] sm:$0xff]
        %v4509 = vld [vmem:[%s1368 + $0x278] sm:$0xff]
        %v4510 = vld [vmem:[%s1368 + $0x280] sm:$0xff]
        %v4511 = vld [vmem:[%s1368 + $0x288] sm:$0xff]
        %v4512 = vld [vmem:[%s1368 + $0x290] sm:$0xff]
        %v4513 = vld [vmem:[%s1368 + $0x298] sm:$0xff]
        %v4514 = vld [vmem:[%s1368 + $0x2a0] sm:$0xff]
        %v4515 = vld [vmem:[%s1368 + $0x2a8] sm:$0xff]
        %v4516 = vld [vmem:[%s1368 + $0x2b0] sm:$0xff]
        %v4517 = vld [vmem:[%s1368 + $0x2b8] sm:$0xff]
        %v4518 = vld [vmem:[%s1368 + $0x2c0] sm:$0xff]
        %v4519 = vld [vmem:[%s1368 + $0x2c8] sm:$0xff]
        %v4520 = vld [vmem:[%s1368 + $0x2d0] sm:$0xff]
        %v4521 = vld [vmem:[%s1368 + $0x2d8] sm:$0xff]
        %v4522 = vld [vmem:[%s1368 + $0x2e0] sm:$0xff]
        %v4523 = vld [vmem:[%s1368 + $0x2e8] sm:$0xff]
        %v4524 = vld [vmem:[%s1368 + $0x2f0] sm:$0xff]
        %v4525 = vld [vmem:[%s1368 + $0x2f8] sm:$0xff]
        %v4526 = vld [vmem:[%s1368 + $0x300] sm:$0xff]
        %v4527 = vld [vmem:[%s1368 + $0x308] sm:$0xff]
        %v4528 = vld [vmem:[%s1368 + $0x310] sm:$0xff]
        %v4529 = vld [vmem:[%s1368 + $0x318] sm:$0xff]
        %v4530 = vld [vmem:[%s1368 + $0x320] sm:$0xff]
        %v4531 = vld [vmem:[%s1368 + $0x328] sm:$0xff]
        %v4532 = vld [vmem:[%s1368 + $0x330] sm:$0xff]
        %v4533 = vld [vmem:[%s1368 + $0x338] sm:$0xff]
        %v4534 = vld [vmem:[%s1368 + $0x340] sm:$0xff]
        %v4535 = vld [vmem:[%s1368 + $0x348] sm:$0xff]
        %v4536 = vld [vmem:[%s1368 + $0x350] sm:$0xff]
        %v4537 = vld [vmem:[%s1368 + $0x358] sm:$0xff]
        %v4538 = vld [vmem:[%s1368 + $0x360] sm:$0xff]
        %v4539 = vld [vmem:[%s1368 + $0x368] sm:$0xff]
        %v4540 = vld [vmem:[%s1368 + $0x370] sm:$0xff]
        %v4541 = vld [vmem:[%s1368 + $0x378] sm:$0xff]
        %v4542 = vld [vmem:[%s1368 + $0x380] sm:$0xff]
        %v4543 = vld [vmem:[%s1368 + $0x388] sm:$0xff]
        %v4544 = vld [vmem:[%s1368 + $0x390] sm:$0xff]
        %v4545 = vld [vmem:[%s1368 + $0x398] sm:$0xff]
        %v4546 = vld [vmem:[%s1368 + $0x3a0] sm:$0xff]
        %v4547 = vld [vmem:[%s1368 + $0x3a8] sm:$0xff]
        %v4548 = vld [vmem:[%s1368 + $0x3b0] sm:$0xff]
        %v4549 = vld [vmem:[%s1368 + $0x3b8] sm:$0xff]
        %v4550 = vld [vmem:[%s1368 + $0x3c0] sm:$0xff]
        %v4551 = vld [vmem:[%s1368 + $0x3c8] sm:$0xff]
        %v4552 = vld [vmem:[%s1368 + $0x3d0] sm:$0xff]
        %v4553 = vld [vmem:[%s1368 + $0x3d8] sm:$0xff]
        %v4554 = vld [vmem:[%s1368 + $0x3e0] sm:$0xff]
        %v4555 = vld [vmem:[%s1368 + $0x3e8] sm:$0xff]
        %v4556 = vld [vmem:[%s1368 + $0x3f0] sm:$0xff]
        %v4557 = vld [vmem:[%s1368 + $0x3f8] sm:$0xff]
        %v4558 = vunpack.c.l.s8.bf16 %v4430
        %v4559 = vunpack.c.l.s8.bf16 %v4431
        %v4560 = vunpack.c.l.s8.bf16 %v4432
        %v4561 = vunpack.c.l.s8.bf16 %v4433
        %v4562 = vunpack.c.l.s8.bf16 %v4434
        %v4563 = vunpack.c.l.s8.bf16 %v4435
        %v4564 = vunpack.c.l.s8.bf16 %v4436
        %v4565 = vunpack.c.l.s8.bf16 %v4437
        %v4566 = vunpack.c.h.s8.bf16 %v4430
        %v4567 = vunpack.c.h.s8.bf16 %v4431
        %v4568 = vunpack.c.h.s8.bf16 %v4432
        %v4569 = vunpack.c.h.s8.bf16 %v4433
        %v4570 = vunpack.c.h.s8.bf16 %v4434
        %v4571 = vunpack.c.h.s8.bf16 %v4435
        %v4572 = vunpack.c.h.s8.bf16 %v4436
        %v4573 = vunpack.c.h.s8.bf16 %v4437
        %v4574 = vunpack.c.l.s8.bf16 %v4438
        %v4575 = vunpack.c.l.s8.bf16 %v4439
        %v4576 = vunpack.c.l.s8.bf16 %v4440
        %v4577 = vunpack.c.l.s8.bf16 %v4441
        %v4578 = vunpack.c.l.s8.bf16 %v4442
        %v4579 = vunpack.c.l.s8.bf16 %v4443
        %v4580 = vunpack.c.l.s8.bf16 %v4444
        %v4581 = vunpack.c.l.s8.bf16 %v4445
        %v4582 = vunpack.c.h.s8.bf16 %v4438
        %v4583 = vunpack.c.h.s8.bf16 %v4439
        %v4584 = vunpack.c.h.s8.bf16 %v4440
        %v4585 = vunpack.c.h.s8.bf16 %v4441
        %v4586 = vunpack.c.h.s8.bf16 %v4442
        %v4587 = vunpack.c.h.s8.bf16 %v4443
        %v4588 = vunpack.c.h.s8.bf16 %v4444
        %v4589 = vunpack.c.h.s8.bf16 %v4445
        %v4590 = vunpack.c.l.s8.bf16 %v4446
        %v4591 = vunpack.c.l.s8.bf16 %v4447
        %v4592 = vunpack.c.l.s8.bf16 %v4448
        %v4593 = vunpack.c.l.s8.bf16 %v4449
        %v4594 = vunpack.c.l.s8.bf16 %v4450
        %v4595 = vunpack.c.l.s8.bf16 %v4451
        %v4596 = vunpack.c.l.s8.bf16 %v4452
        %v4597 = vunpack.c.l.s8.bf16 %v4453
        %v4598 = vunpack.c.h.s8.bf16 %v4446
        %v4599 = vunpack.c.h.s8.bf16 %v4447
        %v4600 = vunpack.c.h.s8.bf16 %v4448
        %v4601 = vunpack.c.h.s8.bf16 %v4449
        %v4602 = vunpack.c.h.s8.bf16 %v4450
        %v4603 = vunpack.c.h.s8.bf16 %v4451
        %v4604 = vunpack.c.h.s8.bf16 %v4452
        %v4605 = vunpack.c.h.s8.bf16 %v4453
        %v4606 = vunpack.c.l.s8.bf16 %v4454
        %v4607 = vunpack.c.l.s8.bf16 %v4455
        %v4608 = vunpack.c.l.s8.bf16 %v4456
        %v4609 = vunpack.c.l.s8.bf16 %v4457
        %v4610 = vunpack.c.l.s8.bf16 %v4458
        %v4611 = vunpack.c.l.s8.bf16 %v4459
        %v4612 = vunpack.c.l.s8.bf16 %v4460
        %v4613 = vunpack.c.l.s8.bf16 %v4461
        %v4614 = vunpack.c.h.s8.bf16 %v4454
        %v4615 = vunpack.c.h.s8.bf16 %v4455
        %v4616 = vunpack.c.h.s8.bf16 %v4456
        %v4617 = vunpack.c.h.s8.bf16 %v4457
        %v4618 = vunpack.c.h.s8.bf16 %v4458
        %v4619 = vunpack.c.h.s8.bf16 %v4459
        %v4620 = vunpack.c.h.s8.bf16 %v4460
        %v4621 = vunpack.c.h.s8.bf16 %v4461
        %v4622 = vunpack.c.l.s8.bf16 %v4462
        %v4623 = vunpack.c.l.s8.bf16 %v4463
        %v4624 = vunpack.c.l.s8.bf16 %v4464
        %v4625 = vunpack.c.l.s8.bf16 %v4465
        %v4626 = vunpack.c.l.s8.bf16 %v4466
        %v4627 = vunpack.c.l.s8.bf16 %v4467
        %v4628 = vunpack.c.l.s8.bf16 %v4468
        %v4629 = vunpack.c.l.s8.bf16 %v4469
        %v4630 = vunpack.c.h.s8.bf16 %v4462
        %v4631 = vunpack.c.h.s8.bf16 %v4463
        %v4632 = vunpack.c.h.s8.bf16 %v4464
        %v4633 = vunpack.c.h.s8.bf16 %v4465
        %v4634 = vunpack.c.h.s8.bf16 %v4466
        %v4635 = vunpack.c.h.s8.bf16 %v4467
        %v4636 = vunpack.c.h.s8.bf16 %v4468
        %v4637 = vunpack.c.h.s8.bf16 %v4469
        %v4638 = vunpack.c.l.s8.bf16 %v4470
        %v4639 = vunpack.c.l.s8.bf16 %v4471
        %v4640 = vunpack.c.l.s8.bf16 %v4472
        %v4641 = vunpack.c.l.s8.bf16 %v4473
        %v4642 = vunpack.c.l.s8.bf16 %v4474
        %v4643 = vunpack.c.l.s8.bf16 %v4475
        %v4644 = vunpack.c.l.s8.bf16 %v4476
        %v4645 = vunpack.c.l.s8.bf16 %v4477
        %v4646 = vunpack.c.h.s8.bf16 %v4470
        %v4647 = vunpack.c.h.s8.bf16 %v4471
        %v4648 = vunpack.c.h.s8.bf16 %v4472
        %v4649 = vunpack.c.h.s8.bf16 %v4473
        %v4650 = vunpack.c.h.s8.bf16 %v4474
        %v4651 = vunpack.c.h.s8.bf16 %v4475
        %v4652 = vunpack.c.h.s8.bf16 %v4476
        %v4653 = vunpack.c.h.s8.bf16 %v4477
        %v4654 = vunpack.c.l.s8.bf16 %v4478
        %v4655 = vunpack.c.l.s8.bf16 %v4479
        %v4656 = vunpack.c.l.s8.bf16 %v4480
        %v4657 = vunpack.c.l.s8.bf16 %v4481
        %v4658 = vunpack.c.l.s8.bf16 %v4482
        %v4659 = vunpack.c.l.s8.bf16 %v4483
        %v4660 = vunpack.c.l.s8.bf16 %v4484
        %v4661 = vunpack.c.l.s8.bf16 %v4485
        %v4662 = vunpack.c.h.s8.bf16 %v4478
        %v4663 = vunpack.c.h.s8.bf16 %v4479
        %v4664 = vunpack.c.h.s8.bf16 %v4480
        %v4665 = vunpack.c.h.s8.bf16 %v4481
        %v4666 = vunpack.c.h.s8.bf16 %v4482
        %v4667 = vunpack.c.h.s8.bf16 %v4483
        %v4668 = vunpack.c.h.s8.bf16 %v4484
        %v4669 = vunpack.c.h.s8.bf16 %v4485
        %v4670 = vunpack.c.l.s8.bf16 %v4486
        %v4671 = vunpack.c.l.s8.bf16 %v4487
        %v4672 = vunpack.c.l.s8.bf16 %v4488
        %v4673 = vunpack.c.l.s8.bf16 %v4489
        %v4674 = vunpack.c.l.s8.bf16 %v4490
        %v4675 = vunpack.c.l.s8.bf16 %v4491
        %v4676 = vunpack.c.l.s8.bf16 %v4492
        %v4677 = vunpack.c.l.s8.bf16 %v4493
        %v4678 = vunpack.c.h.s8.bf16 %v4486
        %v4679 = vunpack.c.h.s8.bf16 %v4487
        %v4680 = vunpack.c.h.s8.bf16 %v4488
        %v4681 = vunpack.c.h.s8.bf16 %v4489
        %v4682 = vunpack.c.h.s8.bf16 %v4490
        %v4683 = vunpack.c.h.s8.bf16 %v4491
        %v4684 = vunpack.c.h.s8.bf16 %v4492
        %v4685 = vunpack.c.h.s8.bf16 %v4493
        %v4686 = vunpack.c.l.s8.bf16 %v4494
        %v4687 = vunpack.c.l.s8.bf16 %v4495
        %v4688 = vunpack.c.l.s8.bf16 %v4496
        %v4689 = vunpack.c.l.s8.bf16 %v4497
        %v4690 = vunpack.c.l.s8.bf16 %v4498
        %v4691 = vunpack.c.l.s8.bf16 %v4499
        %v4692 = vunpack.c.l.s8.bf16 %v4500
        %v4693 = vunpack.c.l.s8.bf16 %v4501
        %v4694 = vunpack.c.h.s8.bf16 %v4494
        %v4695 = vunpack.c.h.s8.bf16 %v4495
        %v4696 = vunpack.c.h.s8.bf16 %v4496
        %v4697 = vunpack.c.h.s8.bf16 %v4497
        %v4698 = vunpack.c.h.s8.bf16 %v4498
        %v4699 = vunpack.c.h.s8.bf16 %v4499
        %v4700 = vunpack.c.h.s8.bf16 %v4500
        %v4701 = vunpack.c.h.s8.bf16 %v4501
        %v4702 = vunpack.c.l.s8.bf16 %v4502
        %v4703 = vunpack.c.l.s8.bf16 %v4503
        %v4704 = vunpack.c.l.s8.bf16 %v4504
        %v4705 = vunpack.c.l.s8.bf16 %v4505
        %v4706 = vunpack.c.l.s8.bf16 %v4506
        %v4707 = vunpack.c.l.s8.bf16 %v4507
        %v4708 = vunpack.c.l.s8.bf16 %v4508
        %v4709 = vunpack.c.l.s8.bf16 %v4509
        %v4710 = vunpack.c.h.s8.bf16 %v4502
        %v4711 = vunpack.c.h.s8.bf16 %v4503
        %v4712 = vunpack.c.h.s8.bf16 %v4504
        %v4713 = vunpack.c.h.s8.bf16 %v4505
        %v4714 = vunpack.c.h.s8.bf16 %v4506
        %v4715 = vunpack.c.h.s8.bf16 %v4507
        %v4716 = vunpack.c.h.s8.bf16 %v4508
        %v4717 = vunpack.c.h.s8.bf16 %v4509
        %v4718 = vunpack.c.l.s8.bf16 %v4510
        %v4719 = vunpack.c.l.s8.bf16 %v4511
        %v4720 = vunpack.c.l.s8.bf16 %v4512
        %v4721 = vunpack.c.l.s8.bf16 %v4513
        %v4722 = vunpack.c.l.s8.bf16 %v4514
        %v4723 = vunpack.c.l.s8.bf16 %v4515
        %v4724 = vunpack.c.l.s8.bf16 %v4516
        %v4725 = vunpack.c.l.s8.bf16 %v4517
        %v4726 = vunpack.c.h.s8.bf16 %v4510
        %v4727 = vunpack.c.h.s8.bf16 %v4511
        %v4728 = vunpack.c.h.s8.bf16 %v4512
        %v4729 = vunpack.c.h.s8.bf16 %v4513
        %v4730 = vunpack.c.h.s8.bf16 %v4514
        %v4731 = vunpack.c.h.s8.bf16 %v4515
        %v4732 = vunpack.c.h.s8.bf16 %v4516
        %v4733 = vunpack.c.h.s8.bf16 %v4517
        %v4734 = vunpack.c.l.s8.bf16 %v4518
        %v4735 = vunpack.c.l.s8.bf16 %v4519
        %v4736 = vunpack.c.l.s8.bf16 %v4520
        %v4737 = vunpack.c.l.s8.bf16 %v4521
        %v4738 = vunpack.c.l.s8.bf16 %v4522
        %v4739 = vunpack.c.l.s8.bf16 %v4523
        %v4740 = vunpack.c.l.s8.bf16 %v4524
        %v4741 = vunpack.c.l.s8.bf16 %v4525
        %v4742 = vunpack.c.h.s8.bf16 %v4518
        %v4743 = vunpack.c.h.s8.bf16 %v4519
        %v4744 = vunpack.c.h.s8.bf16 %v4520
        %v4745 = vunpack.c.h.s8.bf16 %v4521
        %v4746 = vunpack.c.h.s8.bf16 %v4522
        %v4747 = vunpack.c.h.s8.bf16 %v4523
        %v4748 = vunpack.c.h.s8.bf16 %v4524
        %v4749 = vunpack.c.h.s8.bf16 %v4525
        %v4750 = vunpack.c.l.s8.bf16 %v4526
        %v4751 = vunpack.c.l.s8.bf16 %v4527
        %v4752 = vunpack.c.l.s8.bf16 %v4528
        %v4753 = vunpack.c.l.s8.bf16 %v4529
        %v4754 = vunpack.c.l.s8.bf16 %v4530
        %v4755 = vunpack.c.l.s8.bf16 %v4531
        %v4756 = vunpack.c.l.s8.bf16 %v4532
        %v4757 = vunpack.c.l.s8.bf16 %v4533
        %v4758 = vunpack.c.h.s8.bf16 %v4526
        %v4759 = vunpack.c.h.s8.bf16 %v4527
        %v4760 = vunpack.c.h.s8.bf16 %v4528
        %v4761 = vunpack.c.h.s8.bf16 %v4529
        %v4762 = vunpack.c.h.s8.bf16 %v4530
        %v4763 = vunpack.c.h.s8.bf16 %v4531
        %v4764 = vunpack.c.h.s8.bf16 %v4532
        %v4765 = vunpack.c.h.s8.bf16 %v4533
        %v4766 = vunpack.c.l.s8.bf16 %v4534
        %v4767 = vunpack.c.l.s8.bf16 %v4535
        %v4768 = vunpack.c.l.s8.bf16 %v4536
        %v4769 = vunpack.c.l.s8.bf16 %v4537
        %v4770 = vunpack.c.l.s8.bf16 %v4538
        %v4771 = vunpack.c.l.s8.bf16 %v4539
        %v4772 = vunpack.c.l.s8.bf16 %v4540
        %v4773 = vunpack.c.l.s8.bf16 %v4541
        %v4774 = vunpack.c.h.s8.bf16 %v4534
        %v4775 = vunpack.c.h.s8.bf16 %v4535
        %v4776 = vunpack.c.h.s8.bf16 %v4536
        %v4777 = vunpack.c.h.s8.bf16 %v4537
        %v4778 = vunpack.c.h.s8.bf16 %v4538
        %v4779 = vunpack.c.h.s8.bf16 %v4539
        %v4780 = vunpack.c.h.s8.bf16 %v4540
        %v4781 = vunpack.c.h.s8.bf16 %v4541
        %v4782 = vunpack.c.l.s8.bf16 %v4542
        %v4783 = vunpack.c.l.s8.bf16 %v4543
        %v4784 = vunpack.c.l.s8.bf16 %v4544
        %v4785 = vunpack.c.l.s8.bf16 %v4545
        %v4786 = vunpack.c.l.s8.bf16 %v4546
        %v4787 = vunpack.c.l.s8.bf16 %v4547
        %v4788 = vunpack.c.l.s8.bf16 %v4548
        %v4789 = vunpack.c.l.s8.bf16 %v4549
        %v4790 = vunpack.c.h.s8.bf16 %v4542
        %v4791 = vunpack.c.h.s8.bf16 %v4543
        %v4792 = vunpack.c.h.s8.bf16 %v4544
        %v4793 = vunpack.c.h.s8.bf16 %v4545
        %v4794 = vunpack.c.h.s8.bf16 %v4546
        %v4795 = vunpack.c.h.s8.bf16 %v4547
        %v4796 = vunpack.c.h.s8.bf16 %v4548
        %v4797 = vunpack.c.h.s8.bf16 %v4549
        %v4798 = vunpack.c.l.s8.bf16 %v4550
        %v4799 = vunpack.c.l.s8.bf16 %v4551
        %v4800 = vunpack.c.l.s8.bf16 %v4552
        %v4801 = vunpack.c.l.s8.bf16 %v4553
        %v4802 = vunpack.c.l.s8.bf16 %v4554
        %v4803 = vunpack.c.l.s8.bf16 %v4555
        %v4804 = vunpack.c.l.s8.bf16 %v4556
        %v4805 = vunpack.c.l.s8.bf16 %v4557
        %v4806 = vunpack.c.h.s8.bf16 %v4550
        %v4807 = vunpack.c.h.s8.bf16 %v4551
        %v4808 = vunpack.c.h.s8.bf16 %v4552
        %v4809 = vunpack.c.h.s8.bf16 %v4553
        %v4810 = vunpack.c.h.s8.bf16 %v4554
        %v4811 = vunpack.c.h.s8.bf16 %v4555
        %v4812 = vunpack.c.h.s8.bf16 %v4556
        %v4813 = vunpack.c.h.s8.bf16 %v4557
        %v4814 = vld [vmem:[#allocation2] sm:$0xff]
        %v4815 = vld [vmem:[#allocation2 + $0x8] sm:$0xff]
        %v4816 = vpack.c.bf16 %v4426, %v4426
        %v4817 = vpack.c.bf16 %v4427, %v4427
        %v4818 = vpack.c.bf16 %v4428, %v4428
        %v4819 = vpack.c.bf16 %v4429, %v4429
        %4820 = vmatprep.subr.bf16.mxu0 %v4615
        %4821 = vmatpush1.bf16.msra.mxu0 %v4614
        %4822 = vmatprep.subr.bf16.mxu0 %v4607
        %4823 = vmatpush1.bf16.msra.mxu0 %v4606
        %4824 = vmatprep.subr.bf16.mxu0 %v4599
        %4825 = vmatpush1.bf16.msra.mxu0 %v4598
        %4826 = vmatprep.subr.bf16.mxu0 %v4591
        %4827 = vmatpush1.bf16.msra.mxu0 %v4590
        %4828 = vmatprep.subr.bf16.mxu0 %v4583
        %4829 = vmatpush1.bf16.msra.mxu0 %v4582
        %4830 = vmatprep.subr.bf16.mxu0 %v4575
        %4831 = vmatpush1.bf16.msra.mxu0 %v4574
        %4832 = vmatprep.subr.bf16.mxu0 %v4567
        %4833 = vmatpush1.bf16.msra.mxu0 %v4566
        %4834 = vmatprep.subr.bf16.mxu0 %v4559
        %4835 = vmatpush1.bf16.msra.mxu0 %v4558
        %4836 = vmatprep.subr.bf16.mxu0 %v4679
        %4837 = vmatpush2.bf16.msra.mxu0 %v4678
        %4838 = vmatprep.subr.bf16.mxu0 %v4671
        %4839 = vmatpush2.bf16.msra.mxu0 %v4670
        %4840 = vmatprep.subr.bf16.mxu0 %v4663
        %4841 = vmatpush2.bf16.msra.mxu0 %v4662
        %4842 = vmatprep.subr.bf16.mxu0 %v4655
        %4843 = vmatpush2.bf16.msra.mxu0 %v4654
        %4844 = vmatprep.subr.bf16.mxu0 %v4647
        %4845 = vmatpush2.bf16.msra.mxu0 %v4646
        %4846 = vmatprep.subr.bf16.mxu0 %v4639
        %4847 = vmatpush2.bf16.msra.mxu0 %v4638
        %4848 = vmatprep.subr.bf16.mxu0 %v4631
        %4849 = vmatpush2.bf16.msra.mxu0 %v4630
        %4850 = vmatprep.subr.bf16.mxu0 %v4623
        %4851 = vmatpush2.bf16.msra.mxu0 %v4622
        %4852 = vmatprep.mubr.bf16.mxu0 %v4817
        %4853 = vmatmul.mubr.bf16.gmra.mxu0 %v4816
        %v4854 = vpop.f32.mrf.mxu0
        %v4855 = vadd.f32 0.0, %v4854
        %v4856 = vpop.f32.mrf.mxu0
        %v4857 = vadd.f32 0.0, %v4856
        %v4858 = vpop.f32.mrf.mxu0
        %v4859 = vpop.f32.mrf.mxu0
        %4860 = vdwg.mxu0
        %4861 = vmatprep.subr.bf16.mxu0 %v4743
        %4862 = vmatpush1.bf16.msra.mxu0 %v4742
        %4863 = vmatprep.subr.bf16.mxu0 %v4735
        %4864 = vmatpush1.bf16.msra.mxu0 %v4734
        %4865 = vmatprep.subr.bf16.mxu0 %v4727
        %4866 = vmatpush1.bf16.msra.mxu0 %v4726
        %4867 = vmatprep.subr.bf16.mxu0 %v4719
        %4868 = vmatpush1.bf16.msra.mxu0 %v4718
        %4869 = vmatprep.subr.bf16.mxu0 %v4711
        %4870 = vmatpush1.bf16.msra.mxu0 %v4710
        %4871 = vmatprep.subr.bf16.mxu0 %v4703
        %4872 = vmatpush1.bf16.msra.mxu0 %v4702
        %4873 = vmatprep.subr.bf16.mxu0 %v4695
        %4874 = vmatpush1.bf16.msra.mxu0 %v4694
        %4875 = vmatprep.subr.bf16.mxu0 %v4687
        %4876 = vmatpush1.bf16.msra.mxu0 %v4686
        %4877 = vmatprep.subr.bf16.mxu0 %v4807
        %4878 = vmatpush2.bf16.msra.mxu0 %v4806
        %4879 = vmatprep.subr.bf16.mxu0 %v4799
        %4880 = vmatpush2.bf16.msra.mxu0 %v4798
        %4881 = vmatprep.subr.bf16.mxu0 %v4791
        %4882 = vmatpush2.bf16.msra.mxu0 %v4790
        %4883 = vmatprep.subr.bf16.mxu0 %v4783
        %4884 = vmatpush2.bf16.msra.mxu0 %v4782
        %4885 = vmatprep.subr.bf16.mxu0 %v4775
        %4886 = vmatpush2.bf16.msra.mxu0 %v4774
        %4887 = vmatprep.subr.bf16.mxu0 %v4767
        %4888 = vmatpush2.bf16.msra.mxu0 %v4766
        %4889 = vmatprep.subr.bf16.mxu0 %v4759
        %4890 = vmatpush2.bf16.msra.mxu0 %v4758
        %4891 = vmatprep.subr.bf16.mxu0 %v4751
        %4892 = vmatpush2.bf16.msra.mxu0 %v4750
        %4893 = vmatprep.mubr.bf16.mxu0 %v4819
        %4894 = vmatmul.mubr.bf16.gmra.mxu0 %v4818
        %v4895 = vpop.f32.mrf.mxu0
        %v4896 = vadd.f32 %v4855, %v4895
        %v4897 = vpop.f32.mrf.mxu0
        %v4898 = vadd.f32 %v4857, %v4897
        %v4899 = vpop.f32.mrf.mxu0
        %v4900 = vpop.f32.mrf.mxu0
        %4901 = vdwg.mxu0
        %4902 = vmatprep.subr.bf16.mxu0 %v4617
        %4903 = vmatpush1.bf16.msra.mxu0 %v4616
        %4904 = vmatprep.subr.bf16.mxu0 %v4609
        %4905 = vmatpush1.bf16.msra.mxu0 %v4608
        %4906 = vmatprep.subr.bf16.mxu0 %v4601
        %4907 = vmatpush1.bf16.msra.mxu0 %v4600
        %4908 = vmatprep.subr.bf16.mxu0 %v4593
        %4909 = vmatpush1.bf16.msra.mxu0 %v4592
        %4910 = vmatprep.subr.bf16.mxu0 %v4585
        %4911 = vmatpush1.bf16.msra.mxu0 %v4584
        %4912 = vmatprep.subr.bf16.mxu0 %v4577
        %4913 = vmatpush1.bf16.msra.mxu0 %v4576
        %4914 = vmatprep.subr.bf16.mxu0 %v4569
        %4915 = vmatpush1.bf16.msra.mxu0 %v4568
        %4916 = vmatprep.subr.bf16.mxu0 %v4561
        %4917 = vmatpush1.bf16.msra.mxu0 %v4560
        %4918 = vmatprep.subr.bf16.mxu0 %v4681
        %4919 = vmatpush2.bf16.msra.mxu0 %v4680
        %4920 = vmatprep.subr.bf16.mxu0 %v4673
        %4921 = vmatpush2.bf16.msra.mxu0 %v4672
        %4922 = vmatprep.subr.bf16.mxu0 %v4665
        %4923 = vmatpush2.bf16.msra.mxu0 %v4664
        %4924 = vmatprep.subr.bf16.mxu0 %v4657
        %4925 = vmatpush2.bf16.msra.mxu0 %v4656
        %4926 = vmatprep.subr.bf16.mxu0 %v4649
        %4927 = vmatpush2.bf16.msra.mxu0 %v4648
        %4928 = vmatprep.subr.bf16.mxu0 %v4641
        %4929 = vmatpush2.bf16.msra.mxu0 %v4640
        %4930 = vmatprep.subr.bf16.mxu0 %v4633
        %4931 = vmatpush2.bf16.msra.mxu0 %v4632
        %4932 = vmatprep.subr.bf16.mxu0 %v4625
        %4933 = vmatpush2.bf16.msra.mxu0 %v4624
        %4934 = vmatprep.mubr.bf16.mxu0 %v4817
        %4935 = vmatmul.mubr.bf16.gmra.mxu0 %v4816
        %v4936 = vpop.f32.mrf.mxu0
        %v4937 = vadd.f32 0.0, %v4936
        %v4938 = vpop.f32.mrf.mxu0
        %v4939 = vadd.f32 0.0, %v4938
        %v4940 = vpop.f32.mrf.mxu0
        %v4941 = vpop.f32.mrf.mxu0
        %4942 = vdwg.mxu0
        %4943 = vmatprep.subr.bf16.mxu0 %v4745
        %4944 = vmatpush1.bf16.msra.mxu0 %v4744
        %4945 = vmatprep.subr.bf16.mxu0 %v4737
        %4946 = vmatpush1.bf16.msra.mxu0 %v4736
        %4947 = vmatprep.subr.bf16.mxu0 %v4729
        %4948 = vmatpush1.bf16.msra.mxu0 %v4728
        %4949 = vmatprep.subr.bf16.mxu0 %v4721
        %4950 = vmatpush1.bf16.msra.mxu0 %v4720
        %4951 = vmatprep.subr.bf16.mxu0 %v4713
        %4952 = vmatpush1.bf16.msra.mxu0 %v4712
        %4953 = vmatprep.subr.bf16.mxu0 %v4705
        %4954 = vmatpush1.bf16.msra.mxu0 %v4704
        %4955 = vmatprep.subr.bf16.mxu0 %v4697
        %4956 = vmatpush1.bf16.msra.mxu0 %v4696
        %4957 = vmatprep.subr.bf16.mxu0 %v4689
        %4958 = vmatpush1.bf16.msra.mxu0 %v4688
        %4959 = vmatprep.subr.bf16.mxu0 %v4809
        %4960 = vmatpush2.bf16.msra.mxu0 %v4808
        %4961 = vmatprep.subr.bf16.mxu0 %v4801
        %4962 = vmatpush2.bf16.msra.mxu0 %v4800
        %4963 = vmatprep.subr.bf16.mxu0 %v4793
        %4964 = vmatpush2.bf16.msra.mxu0 %v4792
        %4965 = vmatprep.subr.bf16.mxu0 %v4785
        %4966 = vmatpush2.bf16.msra.mxu0 %v4784
        %4967 = vmatprep.subr.bf16.mxu0 %v4777
        %4968 = vmatpush2.bf16.msra.mxu0 %v4776
        %4969 = vmatprep.subr.bf16.mxu0 %v4769
        %4970 = vmatpush2.bf16.msra.mxu0 %v4768
        %4971 = vmatprep.subr.bf16.mxu0 %v4761
        %4972 = vmatpush2.bf16.msra.mxu0 %v4760
        %4973 = vmatprep.subr.bf16.mxu0 %v4753
        %4974 = vmatpush2.bf16.msra.mxu0 %v4752
        %4975 = vmatprep.mubr.bf16.mxu0 %v4819
        %4976 = vmatmul.mubr.bf16.gmra.mxu0 %v4818
        %v4977 = vpop.f32.mrf.mxu0
        %v4978 = vadd.f32 %v4937, %v4977
        %v4979 = vpop.f32.mrf.mxu0
        %v4980 = vadd.f32 %v4939, %v4979
        %v4981 = vpop.f32.mrf.mxu0
        %v4982 = vpop.f32.mrf.mxu0
        %4983 = vdwg.mxu0
        %4984 = vmatprep.subr.bf16.mxu0 %v4619
        %4985 = vmatpush1.bf16.msra.mxu0 %v4618
        %4986 = vmatprep.subr.bf16.mxu0 %v4611
        %4987 = vmatpush1.bf16.msra.mxu0 %v4610
        %4988 = vmatprep.subr.bf16.mxu0 %v4603
        %4989 = vmatpush1.bf16.msra.mxu0 %v4602
        %4990 = vmatprep.subr.bf16.mxu0 %v4595
        %4991 = vmatpush1.bf16.msra.mxu0 %v4594
        %4992 = vmatprep.subr.bf16.mxu0 %v4587
        %4993 = vmatpush1.bf16.msra.mxu0 %v4586
        %4994 = vmatprep.subr.bf16.mxu0 %v4579
        %4995 = vmatpush1.bf16.msra.mxu0 %v4578
        %4996 = vmatprep.subr.bf16.mxu0 %v4571
        %4997 = vmatpush1.bf16.msra.mxu0 %v4570
        %4998 = vmatprep.subr.bf16.mxu0 %v4563
        %4999 = vmatpush1.bf16.msra.mxu0 %v4562
        %5000 = vmatprep.subr.bf16.mxu0 %v4683
        %5001 = vmatpush2.bf16.msra.mxu0 %v4682
        %5002 = vmatprep.subr.bf16.mxu0 %v4675
        %5003 = vmatpush2.bf16.msra.mxu0 %v4674
        %5004 = vmatprep.subr.bf16.mxu0 %v4667
        %5005 = vmatpush2.bf16.msra.mxu0 %v4666
        %5006 = vmatprep.subr.bf16.mxu0 %v4659
        %5007 = vmatpush2.bf16.msra.mxu0 %v4658
        %5008 = vmatprep.subr.bf16.mxu0 %v4651
        %5009 = vmatpush2.bf16.msra.mxu0 %v4650
        %5010 = vmatprep.subr.bf16.mxu0 %v4643
        %5011 = vmatpush2.bf16.msra.mxu0 %v4642
        %5012 = vmatprep.subr.bf16.mxu0 %v4635
        %5013 = vmatpush2.bf16.msra.mxu0 %v4634
        %5014 = vmatprep.subr.bf16.mxu0 %v4627
        %5015 = vmatpush2.bf16.msra.mxu0 %v4626
        %5016 = vmatprep.mubr.bf16.mxu0 %v4817
        %5017 = vmatmul.mubr.bf16.gmra.mxu0 %v4816
        %v5018 = vpop.f32.mrf.mxu0
        %v5019 = vadd.f32 0.0, %v5018
        %v5020 = vpop.f32.mrf.mxu0
        %v5021 = vadd.f32 0.0, %v5020
        %v5022 = vpop.f32.mrf.mxu0
        %v5023 = vpop.f32.mrf.mxu0
        %5024 = vdwg.mxu0
        %5025 = vmatprep.subr.bf16.mxu0 %v4747
        %5026 = vmatpush1.bf16.msra.mxu0 %v4746
        %5027 = vmatprep.subr.bf16.mxu0 %v4739
        %5028 = vmatpush1.bf16.msra.mxu0 %v4738
        %5029 = vmatprep.subr.bf16.mxu0 %v4731
        %5030 = vmatpush1.bf16.msra.mxu0 %v4730
        %5031 = vmatprep.subr.bf16.mxu0 %v4723
        %5032 = vmatpush1.bf16.msra.mxu0 %v4722
        %5033 = vmatprep.subr.bf16.mxu0 %v4715
        %5034 = vmatpush1.bf16.msra.mxu0 %v4714
        %5035 = vmatprep.subr.bf16.mxu0 %v4707
        %5036 = vmatpush1.bf16.msra.mxu0 %v4706
        %5037 = vmatprep.subr.bf16.mxu0 %v4699
        %5038 = vmatpush1.bf16.msra.mxu0 %v4698
        %5039 = vmatprep.subr.bf16.mxu0 %v4691
        %5040 = vmatpush1.bf16.msra.mxu0 %v4690
        %5041 = vmatprep.subr.bf16.mxu0 %v4811
        %5042 = vmatpush2.bf16.msra.mxu0 %v4810
        %5043 = vmatprep.subr.bf16.mxu0 %v4803
        %5044 = vmatpush2.bf16.msra.mxu0 %v4802
        %5045 = vmatprep.subr.bf16.mxu0 %v4795
        %5046 = vmatpush2.bf16.msra.mxu0 %v4794
        %5047 = vmatprep.subr.bf16.mxu0 %v4787
        %5048 = vmatpush2.bf16.msra.mxu0 %v4786
        %5049 = vmatprep.subr.bf16.mxu0 %v4779
        %5050 = vmatpush2.bf16.msra.mxu0 %v4778
        %5051 = vmatprep.subr.bf16.mxu0 %v4771
        %5052 = vmatpush2.bf16.msra.mxu0 %v4770
        %5053 = vmatprep.subr.bf16.mxu0 %v4763
        %5054 = vmatpush2.bf16.msra.mxu0 %v4762
        %5055 = vmatprep.subr.bf16.mxu0 %v4755
        %5056 = vmatpush2.bf16.msra.mxu0 %v4754
        %5057 = vmatprep.mubr.bf16.mxu0 %v4819
        %5058 = vmatmul.mubr.bf16.gmra.mxu0 %v4818
        %v5059 = vpop.f32.mrf.mxu0
        %v5060 = vadd.f32 %v5019, %v5059
        %v5061 = vpop.f32.mrf.mxu0
        %v5062 = vadd.f32 %v5021, %v5061
        %v5063 = vpop.f32.mrf.mxu0
        %v5064 = vpop.f32.mrf.mxu0
        %5065 = vdwg.mxu0
        %5066 = vmatprep.subr.bf16.mxu0 %v4621
        %5067 = vmatpush1.bf16.msra.mxu0 %v4620
        %5068 = vmatprep.subr.bf16.mxu0 %v4613
        %5069 = vmatpush1.bf16.msra.mxu0 %v4612
        %5070 = vmatprep.subr.bf16.mxu0 %v4605
        %5071 = vmatpush1.bf16.msra.mxu0 %v4604
        %5072 = vmatprep.subr.bf16.mxu0 %v4597
        %5073 = vmatpush1.bf16.msra.mxu0 %v4596
        %5074 = vmatprep.subr.bf16.mxu0 %v4589
        %5075 = vmatpush1.bf16.msra.mxu0 %v4588
        %5076 = vmatprep.subr.bf16.mxu0 %v4581
        %5077 = vmatpush1.bf16.msra.mxu0 %v4580
        %5078 = vmatprep.subr.bf16.mxu0 %v4573
        %5079 = vmatpush1.bf16.msra.mxu0 %v4572
        %5080 = vmatprep.subr.bf16.mxu0 %v4565
        %5081 = vmatpush1.bf16.msra.mxu0 %v4564
        %5082 = vmatprep.subr.bf16.mxu0 %v4685
        %5083 = vmatpush2.bf16.msra.mxu0 %v4684
        %5084 = vmatprep.subr.bf16.mxu0 %v4677
        %5085 = vmatpush2.bf16.msra.mxu0 %v4676
        %5086 = vmatprep.subr.bf16.mxu0 %v4669
        %5087 = vmatpush2.bf16.msra.mxu0 %v4668
        %5088 = vmatprep.subr.bf16.mxu0 %v4661
        %5089 = vmatpush2.bf16.msra.mxu0 %v4660
        %5090 = vmatprep.subr.bf16.mxu0 %v4653
        %5091 = vmatpush2.bf16.msra.mxu0 %v4652
        %5092 = vmatprep.subr.bf16.mxu0 %v4645
        %5093 = vmatpush2.bf16.msra.mxu0 %v4644
        %5094 = vmatprep.subr.bf16.mxu0 %v4637
        %5095 = vmatpush2.bf16.msra.mxu0 %v4636
        %5096 = vmatprep.subr.bf16.mxu0 %v4629
        %5097 = vmatpush2.bf16.msra.mxu0 %v4628
        %5098 = vmatprep.mubr.bf16.mxu0 %v4817
        %5099 = vmatmul.mubr.bf16.gmra.mxu0 %v4816
        %v5100 = vpop.f32.mrf.mxu0
        %v5101 = vadd.f32 0.0, %v5100
        %v5102 = vpop.f32.mrf.mxu0
        %v5103 = vadd.f32 0.0, %v5102
        %v5104 = vpop.f32.mrf.mxu0
        %v5105 = vpop.f32.mrf.mxu0
        %5106 = vdwg.mxu0
        %5107 = vmatprep.subr.bf16.mxu0 %v4749
        %5108 = vmatpush1.bf16.msra.mxu0 %v4748
        %5109 = vmatprep.subr.bf16.mxu0 %v4741
        %5110 = vmatpush1.bf16.msra.mxu0 %v4740
        %5111 = vmatprep.subr.bf16.mxu0 %v4733
        %5112 = vmatpush1.bf16.msra.mxu0 %v4732
        %5113 = vmatprep.subr.bf16.mxu0 %v4725
        %5114 = vmatpush1.bf16.msra.mxu0 %v4724
        %5115 = vmatprep.subr.bf16.mxu0 %v4717
        %5116 = vmatpush1.bf16.msra.mxu0 %v4716
        %5117 = vmatprep.subr.bf16.mxu0 %v4709
        %5118 = vmatpush1.bf16.msra.mxu0 %v4708
        %5119 = vmatprep.subr.bf16.mxu0 %v4701
        %5120 = vmatpush1.bf16.msra.mxu0 %v4700
        %5121 = vmatprep.subr.bf16.mxu0 %v4693
        %5122 = vmatpush1.bf16.msra.mxu0 %v4692
        %5123 = vmatprep.subr.bf16.mxu0 %v4813
        %5124 = vmatpush2.bf16.msra.mxu0 %v4812
        %5125 = vmatprep.subr.bf16.mxu0 %v4805
        %5126 = vmatpush2.bf16.msra.mxu0 %v4804
        %5127 = vmatprep.subr.bf16.mxu0 %v4797
        %5128 = vmatpush2.bf16.msra.mxu0 %v4796
        %5129 = vmatprep.subr.bf16.mxu0 %v4789
        %5130 = vmatpush2.bf16.msra.mxu0 %v4788
        %5131 = vmatprep.subr.bf16.mxu0 %v4781
        %5132 = vmatpush2.bf16.msra.mxu0 %v4780
        %5133 = vmatprep.subr.bf16.mxu0 %v4773
        %5134 = vmatpush2.bf16.msra.mxu0 %v4772
        %5135 = vmatprep.subr.bf16.mxu0 %v4765
        %5136 = vmatpush2.bf16.msra.mxu0 %v4764
        %5137 = vmatprep.subr.bf16.mxu0 %v4757
        %5138 = vmatpush2.bf16.msra.mxu0 %v4756
        %5139 = vmatprep.mubr.bf16.mxu0 %v4819
        %5140 = vmatmul.mubr.bf16.gmra.mxu0 %v4818
        %v5141 = vpop.f32.mrf.mxu0
        %v5142 = vadd.f32 %v5101, %v5141
        %v5143 = vpop.f32.mrf.mxu0
        %v5144 = vadd.f32 %v5103, %v5143
        %v5145 = vpop.f32.mrf.mxu0
        %v5146 = vpop.f32.mrf.mxu0
        %5147 = vdwg.mxu0
        %v5156 = vcombine.low %v4896, %v4898
        %v5157 = vcombine.low %v4978, %v4980
        %v5159 = vunpack.c.l.s4 1983009808
        %v5160 = vunpack.c.0.s8 %v5159
        %v5161 = vlaneseq
        %v5162 = vshrl.u32 %v5161, 7
        %v5163 = vsub.s32 %v5160, %v5162
        %v5164 = vrot.slane %v5156, %v5163
        %v5166 = vunpack.c.l.s4 1983009808
        %v5167 = vunpack.c.0.s8 %v5166
        %v5168 = vlaneseq
        %v5169 = vshrl.u32 %v5168, 7
        %v5170 = vsub.s32 %v5167, %v5169
        %v5171 = vrot.slane %v5157, %v5170
        %v5172 = vcombine.low %v5164, %v5171
        %v5173 = vcombine.low %v5060, %v5062
        %v5174 = vcombine.low %v5142, %v5144
        %v5176 = vunpack.c.l.s4 1983009808
        %v5177 = vunpack.c.0.s8 %v5176
        %v5178 = vlaneseq
        %v5179 = vshrl.u32 %v5178, 7
        %v5180 = vsub.s32 %v5177, %v5179
        %v5181 = vrot.slane %v5173, %v5180
        %v5183 = vunpack.c.l.s4 1983009808
        %v5184 = vunpack.c.0.s8 %v5183
        %v5185 = vlaneseq
        %v5186 = vshrl.u32 %v5185, 7
        %v5187 = vsub.s32 %v5184, %v5186
        %v5188 = vrot.slane %v5174, %v5187
        %v5189 = vcombine.low %v5181, %v5188
        %v5192 = vadd.f32 %v4814, %v5172
        %v5193 = vadd.f32 %v4815, %v5189
        %5194 = vst [vmem:[#allocation2] sm:$0xff] %v5192
        %5195 = vst [vmem:[#allocation2 + $0x8] sm:$0xff] %v5193
        %p5196 = scmp.eq.s32.totalorder %s22, 1
        // Predicated region
        $region84: #{forward.5} parent=74 // pred_check
          %p5197 = pneg %p5196
        $region85: #{forward.5} parent=74 // pred_check_branch
          %5199 = sbr.rel (%p5197) target = $region87
        $region86: #{forward.5} parent=74 // pred_region
          %v5200 = vld [vmem:[#allocation2] sm:$0xff]
          %v5201 = vld [vmem:[#allocation2 + $0x8] sm:$0xff]
          %v5202 = vld [vmem:[%s5] sm:$0xff]
          %v5204 = vlaneseq
          %v5205 = vshrl.u32 %v5204, 7
          %v5206 = vsub.s32 0, %v5205
          %v5207 = vrot.slane %v5202, %v5206
          %v5208 = vlaneseq
          %v5209 = vshrl.u32 %v5208, 7
          %v5210 = vsub.s32 1, %v5209
          %v5211 = vrot.slane %v5202, %v5210
          %v5212 = vlaneseq
          %v5213 = vshrl.u32 %v5212, 7
          %v5214 = vsub.s32 2, %v5213
          %v5215 = vrot.slane %v5202, %v5214
          %v5216 = vlaneseq
          %v5217 = vshrl.u32 %v5216, 7
          %v5218 = vsub.s32 3, %v5217
          %v5219 = vrot.slane %v5202, %v5218
          %v5220 = vlaneseq
          %v5221 = vshrl.u32 %v5220, 7
          %v5222 = vsub.s32 4, %v5221
          %v5223 = vrot.slane %v5202, %v5222
          %v5224 = vlaneseq
          %v5225 = vshrl.u32 %v5224, 7
          %v5226 = vsub.s32 5, %v5225
          %v5227 = vrot.slane %v5202, %v5226
          %v5228 = vlaneseq
          %v5229 = vshrl.u32 %v5228, 7
          %v5230 = vsub.s32 6, %v5229
          %v5231 = vrot.slane %v5202, %v5230
          %v5232 = vlaneseq
          %v5233 = vshrl.u32 %v5232, 7
          %v5234 = vsub.s32 7, %v5233
          %v5235 = vrot.slane %v5202, %v5234
          %v5236 = vcombine.low %v5207, %v5211
          %v5237 = vcombine.low %v5215, %v5219
          %v5239 = vunpack.c.l.s4 1983009808
          %v5240 = vunpack.c.0.s8 %v5239
          %v5241 = vlaneseq
          %v5242 = vshrl.u32 %v5241, 7
          %v5243 = vsub.s32 %v5240, %v5242
          %v5244 = vrot.slane %v5236, %v5243
          %v5246 = vunpack.c.l.s4 1983009808
          %v5247 = vunpack.c.0.s8 %v5246
          %v5248 = vlaneseq
          %v5249 = vshrl.u32 %v5248, 7
          %v5250 = vsub.s32 %v5247, %v5249
          %v5251 = vrot.slane %v5237, %v5250
          %v5252 = vcombine.low %v5244, %v5251
          %v5253 = vcombine.low %v5223, %v5227
          %v5254 = vcombine.low %v5231, %v5235
          %v5256 = vunpack.c.l.s4 1983009808
          %v5257 = vunpack.c.0.s8 %v5256
          %v5258 = vlaneseq
          %v5259 = vshrl.u32 %v5258, 7
          %v5260 = vsub.s32 %v5257, %v5259
          %v5261 = vrot.slane %v5253, %v5260
          %v5263 = vunpack.c.l.s4 1983009808
          %v5264 = vunpack.c.0.s8 %v5263
          %v5265 = vlaneseq
          %v5266 = vshrl.u32 %v5265, 7
          %v5267 = vsub.s32 %v5264, %v5266
          %v5268 = vrot.slane %v5254, %v5267
          %v5269 = vcombine.low %v5261, %v5268
          %v5272 = vmul.f32 %v5200, %v5252
          %v5273 = vmul.f32 %v5201, %v5269
          %v5274 = vld [vmem:[%s6] sm:$0xff]
          %v5276 = vlaneseq
          %v5277 = vshrl.u32 %v5276, 7
          %v5278 = vsub.s32 0, %v5277
          %v5279 = vrot.slane %v5274, %v5278
          %v5280 = vlaneseq
          %v5281 = vshrl.u32 %v5280, 7
          %v5282 = vsub.s32 1, %v5281
          %v5283 = vrot.slane %v5274, %v5282
          %v5284 = vlaneseq
          %v5285 = vshrl.u32 %v5284, 7
          %v5286 = vsub.s32 2, %v5285
          %v5287 = vrot.slane %v5274, %v5286
          %v5288 = vlaneseq
          %v5289 = vshrl.u32 %v5288, 7
          %v5290 = vsub.s32 3, %v5289
          %v5291 = vrot.slane %v5274, %v5290
          %v5292 = vlaneseq
          %v5293 = vshrl.u32 %v5292, 7
          %v5294 = vsub.s32 4, %v5293
          %v5295 = vrot.slane %v5274, %v5294
          %v5296 = vlaneseq
          %v5297 = vshrl.u32 %v5296, 7
          %v5298 = vsub.s32 5, %v5297
          %v5299 = vrot.slane %v5274, %v5298
          %v5300 = vlaneseq
          %v5301 = vshrl.u32 %v5300, 7
          %v5302 = vsub.s32 6, %v5301
          %v5303 = vrot.slane %v5274, %v5302
          %v5304 = vlaneseq
          %v5305 = vshrl.u32 %v5304, 7
          %v5306 = vsub.s32 7, %v5305
          %v5307 = vrot.slane %v5274, %v5306
          %v5308 = vcombine.low %v5279, %v5283
          %v5309 = vcombine.low %v5287, %v5291
          %v5311 = vunpack.c.l.s4 1983009808
          %v5312 = vunpack.c.0.s8 %v5311
          %v5313 = vlaneseq
          %v5314 = vshrl.u32 %v5313, 7
          %v5315 = vsub.s32 %v5312, %v5314
          %v5316 = vrot.slane %v5308, %v5315
          %v5318 = vunpack.c.l.s4 1983009808
          %v5319 = vunpack.c.0.s8 %v5318
          %v5320 = vlaneseq
          %v5321 = vshrl.u32 %v5320, 7
          %v5322 = vsub.s32 %v5319, %v5321
          %v5323 = vrot.slane %v5309, %v5322
          %v5324 = vcombine.low %v5316, %v5323
          %v5325 = vcombine.low %v5295, %v5299
          %v5326 = vcombine.low %v5303, %v5307
          %v5328 = vunpack.c.l.s4 1983009808
          %v5329 = vunpack.c.0.s8 %v5328
          %v5330 = vlaneseq
          %v5331 = vshrl.u32 %v5330, 7
          %v5332 = vsub.s32 %v5329, %v5331
          %v5333 = vrot.slane %v5325, %v5332
          %v5335 = vunpack.c.l.s4 1983009808
          %v5336 = vunpack.c.0.s8 %v5335
          %v5337 = vlaneseq
          %v5338 = vshrl.u32 %v5337, 7
          %v5339 = vsub.s32 %v5336, %v5338
          %v5340 = vrot.slane %v5326, %v5339
          %v5341 = vcombine.low %v5333, %v5340
          %v5344 = vadd.f32 %v5272, %v5324
          %v5345 = vadd.f32 %v5273, %v5341
          %v5346 = vld [vmem:[%s7] sm:$0xff]
          %v5347 = vld [vmem:[%s7 + $0x8] sm:$0xff]
          %v5348 = vld [vmem:[%s7 + $0x10] sm:$0xff]
          %v5349 = vld [vmem:[%s7 + $0x18] sm:$0xff]
          %v5350 = vld [vmem:[%s7 + $0x20] sm:$0xff]
          %v5351 = vld [vmem:[%s7 + $0x28] sm:$0xff]
          %v5352 = vld [vmem:[%s7 + $0x30] sm:$0xff]
          %v5353 = vld [vmem:[%s7 + $0x38] sm:$0xff]
          %v5354 = vld [vmem:[%s7 + $0x40] sm:$0xff]
          %v5355 = vld [vmem:[%s7 + $0x48] sm:$0xff]
          %v5356 = vld [vmem:[%s7 + $0x50] sm:$0xff]
          %v5357 = vld [vmem:[%s7 + $0x58] sm:$0xff]
          %v5358 = vld [vmem:[%s7 + $0x60] sm:$0xff]
          %v5359 = vld [vmem:[%s7 + $0x68] sm:$0xff]
          %v5360 = vld [vmem:[%s7 + $0x70] sm:$0xff]
          %v5361 = vld [vmem:[%s7 + $0x78] sm:$0xff]
          %v5362 = vld [vmem:[%s7 + $0x80] sm:$0xff]
          %v5363 = vld [vmem:[%s7 + $0x88] sm:$0xff]
          %v5364 = vld [vmem:[%s7 + $0x90] sm:$0xff]
          %v5365 = vld [vmem:[%s7 + $0x98] sm:$0xff]
          %v5366 = vld [vmem:[%s7 + $0xa0] sm:$0xff]
          %v5367 = vld [vmem:[%s7 + $0xa8] sm:$0xff]
          %v5368 = vld [vmem:[%s7 + $0xb0] sm:$0xff]
          %v5369 = vld [vmem:[%s7 + $0xb8] sm:$0xff]
          %v5370 = vld [vmem:[%s7 + $0xc0] sm:$0xff]
          %v5371 = vld [vmem:[%s7 + $0xc8] sm:$0xff]
          %v5372 = vld [vmem:[%s7 + $0xd0] sm:$0xff]
          %v5373 = vld [vmem:[%s7 + $0xd8] sm:$0xff]
          %v5374 = vld [vmem:[%s7 + $0xe0] sm:$0xff]
          %v5375 = vld [vmem:[%s7 + $0xe8] sm:$0xff]
          %v5376 = vld [vmem:[%s7 + $0xf0] sm:$0xff]
          %v5377 = vld [vmem:[%s7 + $0xf8] sm:$0xff]
          %v5378 = vld [vmem:[%s7 + $0x100] sm:$0xff]
          %v5379 = vld [vmem:[%s7 + $0x108] sm:$0xff]
          %v5380 = vld [vmem:[%s7 + $0x110] sm:$0xff]
          %v5381 = vld [vmem:[%s7 + $0x118] sm:$0xff]
          %v5382 = vld [vmem:[%s7 + $0x120] sm:$0xff]
          %v5383 = vld [vmem:[%s7 + $0x128] sm:$0xff]
          %v5384 = vld [vmem:[%s7 + $0x130] sm:$0xff]
          %v5385 = vld [vmem:[%s7 + $0x138] sm:$0xff]
          %v5386 = vld [vmem:[%s7 + $0x140] sm:$0xff]
          %v5387 = vld [vmem:[%s7 + $0x148] sm:$0xff]
          %v5388 = vld [vmem:[%s7 + $0x150] sm:$0xff]
          %v5389 = vld [vmem:[%s7 + $0x158] sm:$0xff]
          %v5390 = vld [vmem:[%s7 + $0x160] sm:$0xff]
          %v5391 = vld [vmem:[%s7 + $0x168] sm:$0xff]
          %v5392 = vld [vmem:[%s7 + $0x170] sm:$0xff]
          %v5393 = vld [vmem:[%s7 + $0x178] sm:$0xff]
          %v5394 = vld [vmem:[%s7 + $0x180] sm:$0xff]
          %v5395 = vld [vmem:[%s7 + $0x188] sm:$0xff]
          %v5396 = vld [vmem:[%s7 + $0x190] sm:$0xff]
          %v5397 = vld [vmem:[%s7 + $0x198] sm:$0xff]
          %v5398 = vld [vmem:[%s7 + $0x1a0] sm:$0xff]
          %v5399 = vld [vmem:[%s7 + $0x1a8] sm:$0xff]
          %v5400 = vld [vmem:[%s7 + $0x1b0] sm:$0xff]
          %v5401 = vld [vmem:[%s7 + $0x1b8] sm:$0xff]
          %v5402 = vld [vmem:[%s7 + $0x1c0] sm:$0xff]
          %v5403 = vld [vmem:[%s7 + $0x1c8] sm:$0xff]
          %v5404 = vld [vmem:[%s7 + $0x1d0] sm:$0xff]
          %v5405 = vld [vmem:[%s7 + $0x1d8] sm:$0xff]
          %v5406 = vld [vmem:[%s7 + $0x1e0] sm:$0xff]
          %v5407 = vld [vmem:[%s7 + $0x1e8] sm:$0xff]
          %v5408 = vld [vmem:[%s7 + $0x1f0] sm:$0xff]
          %v5409 = vld [vmem:[%s7 + $0x1f8] sm:$0xff]
          %v5410 = vld [vmem:[%s7 + $0x200] sm:$0xff]
          %v5411 = vld [vmem:[%s7 + $0x208] sm:$0xff]
          %v5412 = vld [vmem:[%s7 + $0x210] sm:$0xff]
          %v5413 = vld [vmem:[%s7 + $0x218] sm:$0xff]
          %v5414 = vld [vmem:[%s7 + $0x220] sm:$0xff]
          %v5415 = vld [vmem:[%s7 + $0x228] sm:$0xff]
          %v5416 = vld [vmem:[%s7 + $0x230] sm:$0xff]
          %v5417 = vld [vmem:[%s7 + $0x238] sm:$0xff]
          %v5418 = vld [vmem:[%s7 + $0x240] sm:$0xff]
          %v5419 = vld [vmem:[%s7 + $0x248] sm:$0xff]
          %v5420 = vld [vmem:[%s7 + $0x250] sm:$0xff]
          %v5421 = vld [vmem:[%s7 + $0x258] sm:$0xff]
          %v5422 = vld [vmem:[%s7 + $0x260] sm:$0xff]
          %v5423 = vld [vmem:[%s7 + $0x268] sm:$0xff]
          %v5424 = vld [vmem:[%s7 + $0x270] sm:$0xff]
          %v5425 = vld [vmem:[%s7 + $0x278] sm:$0xff]
          %v5426 = vld [vmem:[%s7 + $0x280] sm:$0xff]
          %v5427 = vld [vmem:[%s7 + $0x288] sm:$0xff]
          %v5428 = vld [vmem:[%s7 + $0x290] sm:$0xff]
          %v5429 = vld [vmem:[%s7 + $0x298] sm:$0xff]
          %v5430 = vld [vmem:[%s7 + $0x2a0] sm:$0xff]
          %v5431 = vld [vmem:[%s7 + $0x2a8] sm:$0xff]
          %v5432 = vld [vmem:[%s7 + $0x2b0] sm:$0xff]
          %v5433 = vld [vmem:[%s7 + $0x2b8] sm:$0xff]
          %v5434 = vld [vmem:[%s7 + $0x2c0] sm:$0xff]
          %v5435 = vld [vmem:[%s7 + $0x2c8] sm:$0xff]
          %v5436 = vld [vmem:[%s7 + $0x2d0] sm:$0xff]
          %v5437 = vld [vmem:[%s7 + $0x2d8] sm:$0xff]
          %v5438 = vld [vmem:[%s7 + $0x2e0] sm:$0xff]
          %v5439 = vld [vmem:[%s7 + $0x2e8] sm:$0xff]
          %v5440 = vld [vmem:[%s7 + $0x2f0] sm:$0xff]
          %v5441 = vld [vmem:[%s7 + $0x2f8] sm:$0xff]
          %v5442 = vld [vmem:[%s7 + $0x300] sm:$0xff]
          %v5443 = vld [vmem:[%s7 + $0x308] sm:$0xff]
          %v5444 = vld [vmem:[%s7 + $0x310] sm:$0xff]
          %v5445 = vld [vmem:[%s7 + $0x318] sm:$0xff]
          %v5446 = vld [vmem:[%s7 + $0x320] sm:$0xff]
          %v5447 = vld [vmem:[%s7 + $0x328] sm:$0xff]
          %v5448 = vld [vmem:[%s7 + $0x330] sm:$0xff]
          %v5449 = vld [vmem:[%s7 + $0x338] sm:$0xff]
          %v5450 = vld [vmem:[%s7 + $0x340] sm:$0xff]
          %v5451 = vld [vmem:[%s7 + $0x348] sm:$0xff]
          %v5452 = vld [vmem:[%s7 + $0x350] sm:$0xff]
          %v5453 = vld [vmem:[%s7 + $0x358] sm:$0xff]
          %v5454 = vld [vmem:[%s7 + $0x360] sm:$0xff]
          %v5455 = vld [vmem:[%s7 + $0x368] sm:$0xff]
          %v5456 = vld [vmem:[%s7 + $0x370] sm:$0xff]
          %v5457 = vld [vmem:[%s7 + $0x378] sm:$0xff]
          %v5458 = vld [vmem:[%s7 + $0x380] sm:$0xff]
          %v5459 = vld [vmem:[%s7 + $0x388] sm:$0xff]
          %v5460 = vld [vmem:[%s7 + $0x390] sm:$0xff]
          %v5461 = vld [vmem:[%s7 + $0x398] sm:$0xff]
          %v5462 = vld [vmem:[%s7 + $0x3a0] sm:$0xff]
          %v5463 = vld [vmem:[%s7 + $0x3a8] sm:$0xff]
          %v5464 = vld [vmem:[%s7 + $0x3b0] sm:$0xff]
          %v5465 = vld [vmem:[%s7 + $0x3b8] sm:$0xff]
          %v5466 = vld [vmem:[%s7 + $0x3c0] sm:$0xff]
          %v5467 = vld [vmem:[%s7 + $0x3c8] sm:$0xff]
          %v5468 = vld [vmem:[%s7 + $0x3d0] sm:$0xff]
          %v5469 = vld [vmem:[%s7 + $0x3d8] sm:$0xff]
          %v5470 = vld [vmem:[%s7 + $0x3e0] sm:$0xff]
          %v5471 = vld [vmem:[%s7 + $0x3e8] sm:$0xff]
          %v5472 = vld [vmem:[%s7 + $0x3f0] sm:$0xff]
          %v5473 = vld [vmem:[%s7 + $0x3f8] sm:$0xff]
          %v5474 = vld [vmem:[#allocation3] sm:$0x1]
          %v5476 = vlaneseq
          %v5477 = vshrl.u32 %v5476, 7
          %v5478 = vsub.s32 0, %v5477
          %v5479 = vrot.slane %v5474, %v5478
          %v5483 = vcombine.high %v5344, %v5344
          %v5485 = vunpack.c.l.s4 1983009808
          %v5486 = vunpack.c.0.s8 %v5485
          %v5487 = vlaneseq
          %v5488 = vshrl.u32 %v5487, 7
          %v5489 = vsub.s32 %v5486, %v5488
          %v5490 = vrot.slane %v5344, %v5489
          %v5492 = vunpack.c.l.s4 1983009808
          %v5493 = vunpack.c.0.s8 %v5492
          %v5494 = vlaneseq
          %v5495 = vshrl.u32 %v5494, 7
          %v5496 = vsub.s32 %v5493, %v5495
          %v5497 = vrot.slane %v5483, %v5496
          %v5498 = vcombine.high %v5490, %v5490
          %v5499 = vcombine.high %v5497, %v5497
          %v5500 = vcombine.high %v5345, %v5345
          %v5502 = vunpack.c.l.s4 1983009808
          %v5503 = vunpack.c.0.s8 %v5502
          %v5504 = vlaneseq
          %v5505 = vshrl.u32 %v5504, 7
          %v5506 = vsub.s32 %v5503, %v5505
          %v5507 = vrot.slane %v5345, %v5506
          %v5509 = vunpack.c.l.s4 1983009808
          %v5510 = vunpack.c.0.s8 %v5509
          %v5511 = vlaneseq
          %v5512 = vshrl.u32 %v5511, 7
          %v5513 = vsub.s32 %v5510, %v5512
          %v5514 = vrot.slane %v5500, %v5513
          %v5515 = vcombine.high %v5507, %v5507
          %v5516 = vcombine.high %v5514, %v5514
          %5525 = vmatprep.subr.mxu0 0.0
          %5526 = vmatpush1.msra.mxu0 %v5361
          %5527 = vmatprep.subr.mxu0 0.0
          %5528 = vmatpush1.msra.mxu0 %v5360
          %5529 = vmatprep.subr.mxu0 0.0
          %5530 = vmatpush1.msra.mxu0 %v5359
          %5531 = vmatprep.subr.mxu0 0.0
          %5532 = vmatpush1.msra.mxu0 %v5358
          %5533 = vmatprep.subr.mxu0 0.0
          %5534 = vmatpush1.msra.mxu0 %v5357
          %5535 = vmatprep.subr.mxu0 0.0
          %5536 = vmatpush1.msra.mxu0 %v5356
          %5537 = vmatprep.subr.mxu0 0.0
          %5538 = vmatpush1.msra.mxu0 %v5355
          %5539 = vmatprep.subr.mxu0 0.0
          %5540 = vmatpush1.msra.mxu0 %v5354
          %5541 = vmatprep.subr.mxu0 0.0
          %5542 = vmatpush1.msra.mxu0 %v5353
          %5543 = vmatprep.subr.mxu0 0.0
          %5544 = vmatpush1.msra.mxu0 %v5352
          %5545 = vmatprep.subr.mxu0 0.0
          %5546 = vmatpush1.msra.mxu0 %v5351
          %5547 = vmatprep.subr.mxu0 0.0
          %5548 = vmatpush1.msra.mxu0 %v5350
          %5549 = vmatprep.subr.mxu0 0.0
          %5550 = vmatpush1.msra.mxu0 %v5349
          %5551 = vmatprep.subr.mxu0 0.0
          %5552 = vmatpush1.msra.mxu0 %v5348
          %5553 = vmatprep.subr.mxu0 0.0
          %5554 = vmatpush1.msra.mxu0 %v5347
          %5555 = vmatprep.subr.mxu0 0.0
          %5556 = vmatpush1.msra.mxu0 %v5346
          %5557 = vmatprep.subr.mxu0 0.0
          %5558 = vmatpush2.msra.mxu0 %v5377
          %5559 = vmatprep.subr.mxu0 0.0
          %5560 = vmatpush2.msra.mxu0 %v5376
          %5561 = vmatprep.subr.mxu0 0.0
          %5562 = vmatpush2.msra.mxu0 %v5375
          %5563 = vmatprep.subr.mxu0 0.0
          %5564 = vmatpush2.msra.mxu0 %v5374
          %5565 = vmatprep.subr.mxu0 0.0
          %5566 = vmatpush2.msra.mxu0 %v5373
          %5567 = vmatprep.subr.mxu0 0.0
          %5568 = vmatpush2.msra.mxu0 %v5372
          %5569 = vmatprep.subr.mxu0 0.0
          %5570 = vmatpush2.msra.mxu0 %v5371
          %5571 = vmatprep.subr.mxu0 0.0
          %5572 = vmatpush2.msra.mxu0 %v5370
          %5573 = vmatprep.subr.mxu0 0.0
          %5574 = vmatpush2.msra.mxu0 %v5369
          %5575 = vmatprep.subr.mxu0 0.0
          %5576 = vmatpush2.msra.mxu0 %v5368
          %5577 = vmatprep.subr.mxu0 0.0
          %5578 = vmatpush2.msra.mxu0 %v5367
          %5579 = vmatprep.subr.mxu0 0.0
          %5580 = vmatpush2.msra.mxu0 %v5366
          %5581 = vmatprep.subr.mxu0 0.0
          %5582 = vmatpush2.msra.mxu0 %v5365
          %5583 = vmatprep.subr.mxu0 0.0
          %5584 = vmatpush2.msra.mxu0 %v5364
          %5585 = vmatprep.subr.mxu0 0.0
          %5586 = vmatpush2.msra.mxu0 %v5363
          %5587 = vmatprep.subr.mxu0 0.0
          %5588 = vmatpush2.msra.mxu0 %v5362
          %5589 = vmatprep.mubr.f32.mxu0 %v5498
          %5590 = vmatmul.mubr.f32.gmra.mxu0 %v5490
          %v5591 = vpop.f32.mrf.mxu0
          %v5592 = vadd.f32 %v5479, %v5591
          %v5593 = vpop.f32.mrf.mxu0
          %5594 = vdwg.mxu0
          %5595 = vmatprep.subr.mxu0 0.0
          %5596 = vmatpush1.msra.mxu0 %v5393
          %5597 = vmatprep.subr.mxu0 0.0
          %5598 = vmatpush1.msra.mxu0 %v5392
          %5599 = vmatprep.subr.mxu0 0.0
          %5600 = vmatpush1.msra.mxu0 %v5391
          %5601 = vmatprep.subr.mxu0 0.0
          %5602 = vmatpush1.msra.mxu0 %v5390
          %5603 = vmatprep.subr.mxu0 0.0
          %5604 = vmatpush1.msra.mxu0 %v5389
          %5605 = vmatprep.subr.mxu0 0.0
          %5606 = vmatpush1.msra.mxu0 %v5388
          %5607 = vmatprep.subr.mxu0 0.0
          %5608 = vmatpush1.msra.mxu0 %v5387
          %5609 = vmatprep.subr.mxu0 0.0
          %5610 = vmatpush1.msra.mxu0 %v5386
          %5611 = vmatprep.subr.mxu0 0.0
          %5612 = vmatpush1.msra.mxu0 %v5385
          %5613 = vmatprep.subr.mxu0 0.0
          %5614 = vmatpush1.msra.mxu0 %v5384
          %5615 = vmatprep.subr.mxu0 0.0
          %5616 = vmatpush1.msra.mxu0 %v5383
          %5617 = vmatprep.subr.mxu0 0.0
          %5618 = vmatpush1.msra.mxu0 %v5382
          %5619 = vmatprep.subr.mxu0 0.0
          %5620 = vmatpush1.msra.mxu0 %v5381
          %5621 = vmatprep.subr.mxu0 0.0
          %5622 = vmatpush1.msra.mxu0 %v5380
          %5623 = vmatprep.subr.mxu0 0.0
          %5624 = vmatpush1.msra.mxu0 %v5379
          %5625 = vmatprep.subr.mxu0 0.0
          %5626 = vmatpush1.msra.mxu0 %v5378
          %5627 = vmatprep.subr.mxu0 0.0
          %5628 = vmatpush2.msra.mxu0 %v5409
          %5629 = vmatprep.subr.mxu0 0.0
          %5630 = vmatpush2.msra.mxu0 %v5408
          %5631 = vmatprep.subr.mxu0 0.0
          %5632 = vmatpush2.msra.mxu0 %v5407
          %5633 = vmatprep.subr.mxu0 0.0
          %5634 = vmatpush2.msra.mxu0 %v5406
          %5635 = vmatprep.subr.mxu0 0.0
          %5636 = vmatpush2.msra.mxu0 %v5405
          %5637 = vmatprep.subr.mxu0 0.0
          %5638 = vmatpush2.msra.mxu0 %v5404
          %5639 = vmatprep.subr.mxu0 0.0
          %5640 = vmatpush2.msra.mxu0 %v5403
          %5641 = vmatprep.subr.mxu0 0.0
          %5642 = vmatpush2.msra.mxu0 %v5402
          %5643 = vmatprep.subr.mxu0 0.0
          %5644 = vmatpush2.msra.mxu0 %v5401
          %5645 = vmatprep.subr.mxu0 0.0
          %5646 = vmatpush2.msra.mxu0 %v5400
          %5647 = vmatprep.subr.mxu0 0.0
          %5648 = vmatpush2.msra.mxu0 %v5399
          %5649 = vmatprep.subr.mxu0 0.0
          %5650 = vmatpush2.msra.mxu0 %v5398
          %5651 = vmatprep.subr.mxu0 0.0
          %5652 = vmatpush2.msra.mxu0 %v5397
          %5653 = vmatprep.subr.mxu0 0.0
          %5654 = vmatpush2.msra.mxu0 %v5396
          %5655 = vmatprep.subr.mxu0 0.0
          %5656 = vmatpush2.msra.mxu0 %v5395
          %5657 = vmatprep.subr.mxu0 0.0
          %5658 = vmatpush2.msra.mxu0 %v5394
          %5659 = vmatprep.mubr.f32.mxu0 %v5499
          %5660 = vmatmul.mubr.f32.gmra.mxu0 %v5497
          %v5661 = vpop.f32.mrf.mxu0
          %v5662 = vadd.f32 %v5592, %v5661
          %v5663 = vpop.f32.mrf.mxu0
          %5664 = vdwg.mxu0
          %5665 = vmatprep.subr.mxu0 0.0
          %5666 = vmatpush1.msra.mxu0 %v5425
          %5667 = vmatprep.subr.mxu0 0.0
          %5668 = vmatpush1.msra.mxu0 %v5424
          %5669 = vmatprep.subr.mxu0 0.0
          %5670 = vmatpush1.msra.mxu0 %v5423
          %5671 = vmatprep.subr.mxu0 0.0
          %5672 = vmatpush1.msra.mxu0 %v5422
          %5673 = vmatprep.subr.mxu0 0.0
          %5674 = vmatpush1.msra.mxu0 %v5421
          %5675 = vmatprep.subr.mxu0 0.0
          %5676 = vmatpush1.msra.mxu0 %v5420
          %5677 = vmatprep.subr.mxu0 0.0
          %5678 = vmatpush1.msra.mxu0 %v5419
          %5679 = vmatprep.subr.mxu0 0.0
          %5680 = vmatpush1.msra.mxu0 %v5418
          %5681 = vmatprep.subr.mxu0 0.0
          %5682 = vmatpush1.msra.mxu0 %v5417
          %5683 = vmatprep.subr.mxu0 0.0
          %5684 = vmatpush1.msra.mxu0 %v5416
          %5685 = vmatprep.subr.mxu0 0.0
          %5686 = vmatpush1.msra.mxu0 %v5415
          %5687 = vmatprep.subr.mxu0 0.0
          %5688 = vmatpush1.msra.mxu0 %v5414
          %5689 = vmatprep.subr.mxu0 0.0
          %5690 = vmatpush1.msra.mxu0 %v5413
          %5691 = vmatprep.subr.mxu0 0.0
          %5692 = vmatpush1.msra.mxu0 %v5412
          %5693 = vmatprep.subr.mxu0 0.0
          %5694 = vmatpush1.msra.mxu0 %v5411
          %5695 = vmatprep.subr.mxu0 0.0
          %5696 = vmatpush1.msra.mxu0 %v5410
          %5697 = vmatprep.subr.mxu0 0.0
          %5698 = vmatpush2.msra.mxu0 %v5441
          %5699 = vmatprep.subr.mxu0 0.0
          %5700 = vmatpush2.msra.mxu0 %v5440
          %5701 = vmatprep.subr.mxu0 0.0
          %5702 = vmatpush2.msra.mxu0 %v5439
          %5703 = vmatprep.subr.mxu0 0.0
          %5704 = vmatpush2.msra.mxu0 %v5438
          %5705 = vmatprep.subr.mxu0 0.0
          %5706 = vmatpush2.msra.mxu0 %v5437
          %5707 = vmatprep.subr.mxu0 0.0
          %5708 = vmatpush2.msra.mxu0 %v5436
          %5709 = vmatprep.subr.mxu0 0.0
          %5710 = vmatpush2.msra.mxu0 %v5435
          %5711 = vmatprep.subr.mxu0 0.0
          %5712 = vmatpush2.msra.mxu0 %v5434
          %5713 = vmatprep.subr.mxu0 0.0
          %5714 = vmatpush2.msra.mxu0 %v5433
          %5715 = vmatprep.subr.mxu0 0.0
          %5716 = vmatpush2.msra.mxu0 %v5432
          %5717 = vmatprep.subr.mxu0 0.0
          %5718 = vmatpush2.msra.mxu0 %v5431
          %5719 = vmatprep.subr.mxu0 0.0
          %5720 = vmatpush2.msra.mxu0 %v5430
          %5721 = vmatprep.subr.mxu0 0.0
          %5722 = vmatpush2.msra.mxu0 %v5429
          %5723 = vmatprep.subr.mxu0 0.0
          %5724 = vmatpush2.msra.mxu0 %v5428
          %5725 = vmatprep.subr.mxu0 0.0
          %5726 = vmatpush2.msra.mxu0 %v5427
          %5727 = vmatprep.subr.mxu0 0.0
          %5728 = vmatpush2.msra.mxu0 %v5426
          %5729 = vmatprep.mubr.f32.mxu0 %v5515
          %5730 = vmatmul.mubr.f32.gmra.mxu0 %v5507
          %v5731 = vpop.f32.mrf.mxu0
          %v5732 = vadd.f32 %v5662, %v5731
          %v5733 = vpop.f32.mrf.mxu0
          %5734 = vdwg.mxu0
          %5735 = vmatprep.subr.mxu0 0.0
          %5736 = vmatpush1.msra.mxu0 %v5457
          %5737 = vmatprep.subr.mxu0 0.0
          %5738 = vmatpush1.msra.mxu0 %v5456
          %5739 = vmatprep.subr.mxu0 0.0
          %5740 = vmatpush1.msra.mxu0 %v5455
          %5741 = vmatprep.subr.mxu0 0.0
          %5742 = vmatpush1.msra.mxu0 %v5454
          %5743 = vmatprep.subr.mxu0 0.0
          %5744 = vmatpush1.msra.mxu0 %v5453
          %5745 = vmatprep.subr.mxu0 0.0
          %5746 = vmatpush1.msra.mxu0 %v5452
          %5747 = vmatprep.subr.mxu0 0.0
          %5748 = vmatpush1.msra.mxu0 %v5451
          %5749 = vmatprep.subr.mxu0 0.0
          %5750 = vmatpush1.msra.mxu0 %v5450
          %5751 = vmatprep.subr.mxu0 0.0
          %5752 = vmatpush1.msra.mxu0 %v5449
          %5753 = vmatprep.subr.mxu0 0.0
          %5754 = vmatpush1.msra.mxu0 %v5448
          %5755 = vmatprep.subr.mxu0 0.0
          %5756 = vmatpush1.msra.mxu0 %v5447
          %5757 = vmatprep.subr.mxu0 0.0
          %5758 = vmatpush1.msra.mxu0 %v5446
          %5759 = vmatprep.subr.mxu0 0.0
          %5760 = vmatpush1.msra.mxu0 %v5445
          %5761 = vmatprep.subr.mxu0 0.0
          %5762 = vmatpush1.msra.mxu0 %v5444
          %5763 = vmatprep.subr.mxu0 0.0
          %5764 = vmatpush1.msra.mxu0 %v5443
          %5765 = vmatprep.subr.mxu0 0.0
          %5766 = vmatpush1.msra.mxu0 %v5442
          %5767 = vmatprep.subr.mxu0 0.0
          %5768 = vmatpush2.msra.mxu0 %v5473
          %5769 = vmatprep.subr.mxu0 0.0
          %5770 = vmatpush2.msra.mxu0 %v5472
          %5771 = vmatprep.subr.mxu0 0.0
          %5772 = vmatpush2.msra.mxu0 %v5471
          %5773 = vmatprep.subr.mxu0 0.0
          %5774 = vmatpush2.msra.mxu0 %v5470
          %5775 = vmatprep.subr.mxu0 0.0
          %5776 = vmatpush2.msra.mxu0 %v5469
          %5777 = vmatprep.subr.mxu0 0.0
          %5778 = vmatpush2.msra.mxu0 %v5468
          %5779 = vmatprep.subr.mxu0 0.0
          %5780 = vmatpush2.msra.mxu0 %v5467
          %5781 = vmatprep.subr.mxu0 0.0
          %5782 = vmatpush2.msra.mxu0 %v5466
          %5783 = vmatprep.subr.mxu0 0.0
          %5784 = vmatpush2.msra.mxu0 %v5465
          %5785 = vmatprep.subr.mxu0 0.0
          %5786 = vmatpush2.msra.mxu0 %v5464
          %5787 = vmatprep.subr.mxu0 0.0
          %5788 = vmatpush2.msra.mxu0 %v5463
          %5789 = vmatprep.subr.mxu0 0.0
          %5790 = vmatpush2.msra.mxu0 %v5462
          %5791 = vmatprep.subr.mxu0 0.0
          %5792 = vmatpush2.msra.mxu0 %v5461
          %5793 = vmatprep.subr.mxu0 0.0
          %5794 = vmatpush2.msra.mxu0 %v5460
          %5795 = vmatprep.subr.mxu0 0.0
          %5796 = vmatpush2.msra.mxu0 %v5459
          %5797 = vmatprep.subr.mxu0 0.0
          %5798 = vmatpush2.msra.mxu0 %v5458
          %5799 = vmatprep.mubr.f32.mxu0 %v5516
          %5800 = vmatmul.mubr.f32.gmra.mxu0 %v5514
          %v5801 = vpop.f32.mrf.mxu0
          %v5802 = vadd.f32 %v5732, %v5801
          %v5803 = vpop.f32.mrf.mxu0
          %5804 = vdwg.mxu0
          %vm5805 = vcmask 1024
          %5806 = vst.msk [vmem:[%s9] sm:$0x3] %vm5805, %v5802
        $region87: #{forward.5} parent=74 // pred_fallthru
          _
        // Predicated region
        $region88: #{forward.5} parent=74 // pred_check
          %p5807 = pneg %p244
        $region89: #{forward.5} parent=74 // pred_check_branch
          %5809 = sbr.rel (%p5807) target = $region91
        $region90: #{forward.5} parent=74 // pred_region
          _
        $region91: #{forward.5} parent=74 // pred_fallthru
          _
        // Predicated region
        $region92: #{forward.5} parent=74 // pred_check
          %p5810 = pneg %p244
        $region93: #{forward.5} parent=74 // pred_check_branch
          %5812 = sbr.rel (%p5810) target = $region95
        $region94: #{forward.5} parent=74 // pred_region
          _
        $region95: #{forward.5} parent=74 // pred_fallthru
          _
      $region75: #{forward.5} parent=5 // pred_fallthru
        _
      %p5813 = scmp.le.s32.totalorder 2, %s17
      // Predicated region
      $region96: #{forward.5} parent=5 // pred_check
        %p5814 = pneg %p5813
      $region97: #{forward.5} parent=5 // pred_check_branch
        %5816 = sbr.rel (%p5814) target = $region99
      $region98: #{forward.5} parent=5 // pred_region
        %s5817 = ssub.s32 %s17, 2
      $region99: #{forward.5} parent=5 // pred_fallthru
        _
    $region6: #{forward.5} parent=1 // loop_footer
      %s21 = sadd.s32 1, %s17
    $region7: #{forward.5} parent=1 // loop_footer_branch
      %16 = sbr.rel target = $region3
    $region8: #{forward.5} parent=1 // loop_exit
      _

</llo_original>
